<compile_context>
chip_gen: v6e
topology: v6e:2x2x1
jax: 0.10.0
libtpu: 0.0.40
codegen_flags: <defaults>
</compile_context>

<pallas_src>
import functools

import numpy as np
import jax
import jax.numpy as jnp
from jax import lax
from jax.experimental import pallas as pl
from jax.experimental.pallas import tpu as pltpu


def _drnn_kernel(lam, t_blk, share_fb, *refs):
    if share_fb:
        (xr_ref, xi_ref, ph_re_ref, ph_im_ref, f_ref,
         tf_re_ref, tf_im_ref, out_ref, h_re_ref, h_im_ref) = refs
        fb_ref = f_ref                                  # b_blk == 1: column DFT == F
    else:
        (xr_ref, xi_ref, ph_re_ref, ph_im_ref, f_ref, fb_ref,
         tf_re_ref, tf_im_ref, out_ref, h_re_ref, h_im_ref) = refs

    tb = pl.program_id(1)
    n_tb = pl.num_programs(1)

    f32 = jnp.float32
    bf16 = jnp.bfloat16
    dot_kw = dict(preferred_element_type=f32)

    # Constant DFT operands (bf16): f_ref = [Re, Im, Re+Im, Re-Im] of the symmetric
    # (H,H) DFT matrix; fb_ref = [Re, Im, Re+Im] of kron(I_bblk, F).
    f_r, f_i, f_s, f_d = f_ref[0], f_ref[1], f_ref[2], f_ref[3]
    fb_r, fb_i, fb_s = fb_ref[0], fb_ref[1], fb_ref[2]

    def row_dft(ur, ui, inverse):
        # F @ U (or conj(F) @ U): Karatsuba 3-mult complex matmul, f32 accumulation.
        a_r = ur.astype(bf16)
        a_i = ui.astype(bf16)
        a_s = (ur + ui).astype(bf16)
        p1 = jnp.dot(f_r, a_r, **dot_kw)
        p2 = jnp.dot(f_i, a_i, **dot_kw)
        if inverse:                                   # conjugation folded into signs
            p3 = jnp.dot(f_d, a_s, **dot_kw)
            return p1 + p2, p3 - p1 + p2
        p3 = jnp.dot(f_s, a_s, **dot_kw)
        return p1 - p2, p3 - p1 - p2

    def col_dft(ur, ui, inverse):
        # U @ Fb (or U @ conj(Fb)); Fb block-diagonal when the batch is lane-packed.
        a_r = ur.astype(bf16)
        a_i = ui.astype(bf16)
        p1 = jnp.dot(a_r, fb_r, **dot_kw)
        p2 = jnp.dot(a_i, fb_i, **dot_kw)
        if inverse:
            a_d = (ur - ui).astype(bf16)
            p3 = jnp.dot(a_d, fb_s, **dot_kw)
            return p1 + p2, p1 - p2 - p3
        a_s = (ur + ui).astype(bf16)
        p3 = jnp.dot(a_s, fb_s, **dot_kw)
        return p1 - p2, p3 - p1 - p2

    def cmul(ar, ai, br, bi):                         # elementwise complex multiply (VPU)
        return ar * br - ai * bi, ar * bi + ai * br

    def free_space(ur, ui, tr, ti):
        sr, si = row_dft(ur, ui, inverse=False)       # forward 2-D DFT
        sr, si = col_dft(sr, si, inverse=False)
        sr, si = cmul(sr, si, tr, ti)                 # transfer fn (1/(H*W) folded in)
        rr, ri = row_dft(sr, si, inverse=True)        # inverse 2-D DFT (conjugate)
        rr, ri = col_dft(rr, ri, inverse=True)
        return rr, ri

    @pl.when(tb == 0)
    def _():
        h_re_ref[...] = jnp.zeros_like(h_re_ref)
        h_im_ref[...] = jnp.zeros_like(h_im_ref)

    p_in_r, p_in_i = ph_re_ref[0], ph_im_ref[0]
    p_mem_r, p_mem_i = ph_re_ref[1], ph_im_ref[1]
    tf2_r, tf2_i = tf_re_ref[0], tf_im_ref[0]

    def step(k, carry):
        hr, hi = carry
        xr = xr_ref[0, k].astype(f32)                 # one timestep of the block
        xi = xi_ref[0, k].astype(f32)
        ir, ii = cmul(xr, xi, p_in_r, p_in_i)         # read-in phase
        mr, mi = cmul(hr, hi, p_mem_r, p_mem_i)       # memory phase
        ur = lam * mr + (1.0 - lam) * ir
        ui = lam * mi + (1.0 - lam) * ii
        # one fused propagation == FS(lam*FS(h*p_mem) + (1-lam)*FS(x*p_in))
        return free_space(ur, ui, tf2_r, tf2_i)

    hr, hi = lax.fori_loop(0, t_blk, step,
                           (h_re_ref[...], h_im_ref[...]), unroll=True)
    h_re_ref[...] = hr
    h_im_ref[...] = hi

    @pl.when(tb == n_tb - 1)
    def _():
        orr, oii = cmul(hr, hi, ph_re_ref[2], ph_im_ref[2])          # read-out phase
        orr, oii = free_space(orr, oii, tf_re_ref[1], tf_im_ref[1])  # single TF (slot 1)
        out_ref[0] = orr * orr + oii * oii                           # intensity detector


def _largest_divisor_leq(n, cap):
    cap = max(1, min(int(cap), int(n)))
    for d in range(cap, 0, -1):
        if n % d == 0:
            return d
    return 1


@functools.partial(jax.jit, static_argnums=(8,),
                   static_argnames=("lane_target", "min_groups", "t_block"))
def drnn_forward(x_re, x_im, ph_re, ph_im, F_re, F_im, TF_re, TF_im,
                 fusing_coeff, *, lane_target=256, min_groups=2, t_block=8):
    """Pallas forward of DiffractiveRNN.

    x_re/x_im   : (B, T, H, W) real/imag parts of the input wavefront sequence
    ph_re/ph_im : (3, H, W) exp(i*phi) for [read_in, memory, read_out]
    F_re/F_im   : (H, H) symmetric unnormalized DFT matrix (H == W)
    TF_re/TF_im : (H, W) angular-spectrum transfer function (fft frequency order)
    lane_target : target lane width BW = b_blk*W (one MXU width: 128 v5e, 256 v6e/v7x)
    min_groups  : min number of batch groups on the "parallel" grid axis (>=2 for v7x)
    t_block     : max timesteps processed per grid step (amortizes grid overhead)
    returns (B, H, W) float32 detector intensity.
    """
    B, T, H, W = x_re.shape
    assert H == W, "kernel assumes square wavefronts (single DFT matrix reused)"
    lam = float(fusing_coeff)
    bf16 = jnp.bfloat16

    # ---- batch lane packing (capped at one MXU width and at >= min_groups groups) ----
    b_blk = max(1, min(lane_target // W, B, max(1, -(-B // min_groups))))
    G = -(-B // b_blk)                                  # cdiv
    b_pad = G * b_blk
    if b_pad != B:
        pad = ((0, b_pad - B), (0, 0), (0, 0), (0, 0))
        x_re = jnp.pad(x_re, pad)
        x_im = jnp.pad(x_im, pad)
    BW = b_blk * W
    share_fb = (b_blk == 1)

    # ---- time blocking ----
    t_blk = _largest_divisor_leq(T, t_block)
    n_tblocks = T // t_blk

    def pack(x):                                        # (b_pad,T,H,W) -> (G,T,H,b_blk*W)
        x = x.reshape(G, b_blk, T, H, W)
        x = jnp.transpose(x, (0, 2, 3, 1, 4))
        return x.reshape(G, T, H, BW).astype(bf16)

    xr_p, xi_p = pack(x_re), pack(x_im)

    # lane-tiled constant phase masks (bf16; elementwise ops promote to f32 in-kernel)
    phs_re = jnp.tile(ph_re, (1, 1, b_blk)).astype(bf16)              # (3, H, BW)
    phs_im = jnp.tile(ph_im, (1, 1, b_blk)).astype(bf16)

    # transfer functions: slot 0 = TF^2 (fused double propagation), slot 1 = TF
    # (readout); IDFT2 normalisation 1/(H*W) folded in so the kernel only conjugates F.
    norm = 1.0 / (H * W)
    tf2_re = TF_re * TF_re - TF_im * TF_im
    tf2_im = 2.0 * TF_re * TF_im
    tfs_re = jnp.tile(jnp.stack([tf2_re, TF_re]) * norm, (1, 1, b_blk)).astype(bf16)
    tfs_im = jnp.tile(jnp.stack([tf2_im, TF_im]) * norm, (1, 1, b_blk)).astype(bf16)

    # Karatsuba operand pack of the row-axis DFT matrix: [Re, Im, Re+Im, Re-Im]
    f_pack = jnp.stack([F_re, F_im, F_re + F_im, F_re - F_im]).astype(bf16)

    const3 = lambda g, t: (0, 0, 0)

    in_specs = [
        pl.BlockSpec((1, t_blk, H, BW), lambda g, t: (g, t, 0, 0)),   # x_re block
        pl.BlockSpec((1, t_blk, H, BW), lambda g, t: (g, t, 0, 0)),   # x_im block
        pl.BlockSpec((3, H, BW), const3),                             # phase masks re
        pl.BlockSpec((3, H, BW), const3),                             # phase masks im
        pl.BlockSpec((4, H, H), const3),                              # F Karatsuba pack
    ]
    inputs = [xr_p, xi_p, phs_re, phs_im, f_pack]

    if not share_fb:
        eye = jnp.eye(b_blk, dtype=F_re.dtype)
        Fb_re = jnp.kron(eye, F_re)                                   # (BW, BW)
        Fb_im = jnp.kron(eye, F_im)
        fb_pack = jnp.stack([Fb_re, Fb_im, Fb_re + Fb_im]).astype(bf16)
        in_specs.append(pl.BlockSpec((3, BW, BW), const3))            # kron(I, F) pack
        inputs.append(fb_pack)

    in_specs += [
        pl.BlockSpec((2, H, BW), const3),                             # [TF^2, TF] re
        pl.BlockSpec((2, H, BW), const3),                             # [TF^2, TF] im
    ]
    inputs += [tfs_re, tfs_im]

    # ---- VMEM budget: double-buffered blocks + scratch + live f32 temporaries ----
    blk_bytes = 2 * (2 * t_blk * H * BW * 2          # x re+im (bf16)
                     + 2 * 3 * H * BW * 2            # phase masks
                     + 4 * H * H * 2                 # F pack
                     + (0 if share_fb else 3 * BW * BW * 2)
                     + 2 * 2 * H * BW * 2            # transfer functions
                     + H * BW * 4)                   # output block
    blk_bytes += 2 * H * BW * 4                      # hidden-state scratch
    blk_bytes += 12 * H * BW * 4                     # free_space live temporaries
    vmem_limit = int(min(64 * 2**20, max(32 * 2**20, 2 * blk_bytes)))

    grid_spec = pltpu.PrefetchScalarGridSpec(
        num_scalar_prefetch=0,
        grid=(G, n_tblocks),                         # time sequential, batch groups parallel
        in_specs=in_specs,
        out_specs=pl.BlockSpec((1, H, BW), lambda g, t: (g, 0, 0)),
        scratch_shapes=[pltpu.VMEM((H, BW), jnp.float32),             # hidden state re
                        pltpu.VMEM((H, BW), jnp.float32)],            # hidden state im
    )

    out_packed = pl.pallas_call(
        functools.partial(_drnn_kernel, lam, t_blk, share_fb),
        grid_spec=grid_spec,
        out_shape=jax.ShapeDtypeStruct((G, H, BW), jnp.float32),
        compiler_params=pltpu.CompilerParams(
            dimension_semantics=("parallel", "arbitrary"),
            vmem_limit_bytes=vmem_limit),
    )(*inputs)

    # unpack (G, H, b_blk*W) -> (B, H, W)
    out = out_packed.reshape(G, H, b_blk, W)
    out = jnp.transpose(out, (0, 2, 1, 3)).reshape(b_pad, H, W)
    return out[:B]


def reference_forward(x, p_in, p_mem, p_out, tf, lam):
    """Pure-JAX reference (complex dtype + FFT) of the same forward pass."""
    B, T, H, W = x.shape

    def fs(u):
        return jnp.fft.ifft2(jnp.fft.fft2(u, axes=(-2, -1)) * tf, axes=(-2, -1))

    h = jnp.zeros((B, H, W), jnp.complex64)
    for t in range(T):
        i_t = fs(x[:, t] * p_in)
        m_t = fs(h * p_mem)
        h = lam * m_t + (1.0 - lam) * i_t
        h = fs(h)
    out = fs(h * p_out)
    return jnp.abs(out) ** 2


if __name__ == "__main__":
    B, T, H, W = 2, 8, 16, 16          # batch, sequence_size, sim H, sim W
    fusing_coeff = 0.7

    key = jax.random.PRNGKey(0)
    k1, k2, k3 = jax.random.split(key, 3)
    x_re = jax.random.normal(k1, (B, T, H, W), jnp.float32)
    x_im = jax.random.normal(k2, (B, T, H, W), jnp.float32)

    # deterministic "trained" constant-phase masks for [read_in, memory, read_out]
    phases = jax.random.uniform(k3, (3, H, W), jnp.float32, 0.0, 2.0 * np.pi)
    ph_re = jnp.cos(phases)
    ph_im = jnp.sin(phases)

    # symmetric unnormalized DFT matrix (H == W); inverse derived in-kernel as conj(F)
    n = np.arange(H)
    F = np.exp(-2j * np.pi * np.outer(n, n) / H)
    F_re = jnp.asarray(F.real, jnp.float32)
    F_im = jnp.asarray(F.imag, jnp.float32)

    # angular-spectrum transfer function exp(i * kz * z), fft frequency order
    wavelength, dx, z = 532e-9, 10e-6, 1e-3
    fx = np.fft.fftfreq(H, d=dx)
    fy = np.fft.fftfreq(W, d=dx)
    kx = 2.0 * np.pi * fx[:, None]
    ky = 2.0 * np.pi * fy[None, :]
    k0 = 2.0 * np.pi / wavelength
    kz2 = k0 ** 2 - kx ** 2 - ky ** 2
    prop = np.where(kz2 > 0.0,
                    np.exp(1j * z * np.sqrt(np.maximum(kz2, 0.0))),
                    0.0 + 0.0j)
    TF_re = jnp.asarray(prop.real, jnp.float32)
    TF_im = jnp.asarray(prop.imag, jnp.float32)

    # float32 FFT reference
    x_c = (x_re + 1j * x_im).astype(jnp.complex64)
    p_c = (ph_re + 1j * ph_im).astype(jnp.complex64)
    tf_c = (TF_re + 1j * TF_im).astype(jnp.complex64)
    ref = jax.block_until_ready(
        reference_forward(x_c, p_c[0], p_c[1], p_c[2], tf_c, fusing_coeff))

    # bf16 MXU operands compound ~1e-3 error per matmul through the T-step recurrent
    # double-DFT chain, so the bf16 path is validated with an RMS-relative bound
    # (the f32/Precision.HIGH variant of the same kernel matches to <1e-3).
    def rms_rel_err(a, b):
        return float(jnp.linalg.norm((a - b).ravel()) /
                     (jnp.linalg.norm(b.ravel()) + 1e-12))

    # config 1 (default): b_blk == 1 -> column DFT reuses F, >= 2 batch groups (megacore)
    out = drnn_forward(x_re, x_im, ph_re, ph_im, F_re, F_im, TF_re, TF_im,
                       fusing_coeff)
    out = jax.block_until_ready(out)
    assert out.shape == (B, H, W), out.shape
    err1 = rms_rel_err(out, ref)
    assert np.isfinite(err1) and err1 < 0.1, f"mismatch vs reference: {err1}"

    # config 2: lane-packed batch (b_blk == 2) exercising the kron(I, F) column-DFT path
    out2 = drnn_forward(x_re, x_im, ph_re, ph_im, F_re, F_im, TF_re, TF_im,
                        fusing_coeff, lane_target=2 * W, min_groups=1)
    out2 = jax.block_until_ready(out2)
    err2 = rms_rel_err(out2, ref)
    assert np.isfinite(err2) and err2 < 0.1, f"mismatch vs reference (kron path): {err2}"

    print("KERNEL_OK")
</pallas_src>

<mosaic_0001>
module attributes {stable_mosaic.version = 11 : i64} {
  func.func @_drnn_kernel(%arg0: i32, %arg1: i32, %arg2: memref<1x8x16x16xbf16, #tpu.memory_space<vmem>>, %arg3: memref<1x8x16x16xbf16, #tpu.memory_space<vmem>>, %arg4: memref<3x16x16xbf16, #tpu.memory_space<vmem>>, %arg5: memref<3x16x16xbf16, #tpu.memory_space<vmem>>, %arg6: memref<4x16x16xbf16, #tpu.memory_space<vmem>>, %arg7: memref<2x16x16xbf16, #tpu.memory_space<vmem>>, %arg8: memref<2x16x16xbf16, #tpu.memory_space<vmem>>, %arg9: memref<1x16x16xf32, #tpu.memory_space<vmem>>, %arg10: memref<16x16xf32, #tpu.memory_space<vmem>>, %arg11: memref<16x16xf32, #tpu.memory_space<vmem>>) attributes {dimension_semantics = [#tpu.dimension_semantics<parallel>, #tpu.dimension_semantics<arbitrary>], iteration_bounds = array<i64: 2, 1>, scalar_prefetch = 0 : i64, scratch_operands = 2 : i64, tpu.core_type = #tpu.core_type<tc>, window_params = [{transform_indices = @transform_0, window_bounds = array<i64: 1, 8, 16, 16>}, {transform_indices = @transform_1, window_bounds = array<i64: 1, 8, 16, 16>}, {pipeline_mode = #tpu.pipeline_mode<synchronous>, transform_indices = @transform_2, window_bounds = array<i64: 3, 16, 16>}, {pipeline_mode = #tpu.pipeline_mode<synchronous>, transform_indices = @transform_3, window_bounds = array<i64: 3, 16, 16>}, {pipeline_mode = #tpu.pipeline_mode<synchronous>, transform_indices = @transform_4, window_bounds = array<i64: 4, 16, 16>}, {pipeline_mode = #tpu.pipeline_mode<synchronous>, transform_indices = @transform_5, window_bounds = array<i64: 2, 16, 16>}, {pipeline_mode = #tpu.pipeline_mode<synchronous>, transform_indices = @transform_6, window_bounds = array<i64: 2, 16, 16>}, {transform_indices = @transform_7, window_bounds = array<i64: 1, 16, 16>}]} {
    %c0 = arith.constant 0 : index
    %c0_0 = arith.constant 0 : index
    %c0_1 = arith.constant 0 : index
    %0 = vector.load %arg6[%c0, %c0_0, %c0_1] : memref<4x16x16xbf16, #tpu.memory_space<vmem>>, vector<1x16x16xbf16>
    %1 = vector.shape_cast %0 : vector<1x16x16xbf16> to vector<16x16xbf16>
    %c1 = arith.constant 1 : index
    %c0_2 = arith.constant 0 : index
    %c0_3 = arith.constant 0 : index
    %2 = vector.load %arg6[%c1, %c0_2, %c0_3] : memref<4x16x16xbf16, #tpu.memory_space<vmem>>, vector<1x16x16xbf16>
    %3 = vector.shape_cast %2 : vector<1x16x16xbf16> to vector<16x16xbf16>
    %c2 = arith.constant 2 : index
    %c0_4 = arith.constant 0 : index
    %c0_5 = arith.constant 0 : index
    %4 = vector.load %arg6[%c2, %c0_4, %c0_5] : memref<4x16x16xbf16, #tpu.memory_space<vmem>>, vector<1x16x16xbf16>
    %5 = vector.shape_cast %4 : vector<1x16x16xbf16> to vector<16x16xbf16>
    %c3 = arith.constant 3 : index
    %c0_6 = arith.constant 0 : index
    %c0_7 = arith.constant 0 : index
    %6 = vector.load %arg6[%c3, %c0_6, %c0_7] : memref<4x16x16xbf16, #tpu.memory_space<vmem>>, vector<1x16x16xbf16>
    %7 = vector.shape_cast %6 : vector<1x16x16xbf16> to vector<16x16xbf16>
    %c0_8 = arith.constant 0 : index
    %c0_9 = arith.constant 0 : index
    %c0_10 = arith.constant 0 : index
    %8 = vector.load %arg6[%c0_8, %c0_9, %c0_10] : memref<4x16x16xbf16, #tpu.memory_space<vmem>>, vector<1x16x16xbf16>
    %9 = vector.shape_cast %8 : vector<1x16x16xbf16> to vector<16x16xbf16>
    %c1_11 = arith.constant 1 : index
    %c0_12 = arith.constant 0 : index
    %c0_13 = arith.constant 0 : index
    %10 = vector.load %arg6[%c1_11, %c0_12, %c0_13] : memref<4x16x16xbf16, #tpu.memory_space<vmem>>, vector<1x16x16xbf16>
    %11 = vector.shape_cast %10 : vector<1x16x16xbf16> to vector<16x16xbf16>
    %c2_14 = arith.constant 2 : index
    %c0_15 = arith.constant 0 : index
    %c0_16 = arith.constant 0 : index
    %12 = vector.load %arg6[%c2_14, %c0_15, %c0_16] : memref<4x16x16xbf16, #tpu.memory_space<vmem>>, vector<1x16x16xbf16>
    %13 = vector.shape_cast %12 : vector<1x16x16xbf16> to vector<16x16xbf16>
    %c0_i32 = arith.constant 0 : i32
    %14 = arith.cmpi eq, %arg1, %c0_i32 : i32
    %15 = arith.extui %14 : i1 to i32
    %c0_i32_17 = arith.constant 0 : i32
    %16 = arith.cmpi ne, %15, %c0_i32_17 : i32
    scf.if %16 {
      %cst_222 = arith.constant 0.000000e+00 : f32
      %740 = vector.broadcast %cst_222 : f32 to vector<16x16xf32>
      %c0_223 = arith.constant 0 : index
      %c0_224 = arith.constant 0 : index
      %741 = vector.load %arg10[%c0_223, %c0_224] : memref<16x16xf32, #tpu.memory_space<vmem>>, vector<16x16xf32>
      tpu.vector_store %arg10[%c0_223, %c0_224], %740 {strides = array<i32>} : memref<16x16xf32, #tpu.memory_space<vmem>>, vector<16x16xf32>,
      %cst_225 = arith.constant 0.000000e+00 : f32
      %742 = vector.broadcast %cst_225 : f32 to vector<16x16xf32>
      %c0_226 = arith.constant 0 : index
      %c0_227 = arith.constant 0 : index
      %743 = vector.load %arg11[%c0_226, %c0_227] : memref<16x16xf32, #tpu.memory_space<vmem>>, vector<16x16xf32>
      tpu.vector_store %arg11[%c0_226, %c0_227], %742 {strides = array<i32>} : memref<16x16xf32, #tpu.memory_space<vmem>>, vector<16x16xf32>,
    } else {
    }
    %c0_18 = arith.constant 0 : index
    %c0_19 = arith.constant 0 : index
    %c0_20 = arith.constant 0 : index
    %17 = vector.load %arg4[%c0_18, %c0_19, %c0_20] : memref<3x16x16xbf16, #tpu.memory_space<vmem>>, vector<1x16x16xbf16>
    %18 = vector.shape_cast %17 : vector<1x16x16xbf16> to vector<16x16xbf16>
    %c0_21 = arith.constant 0 : index
    %c0_22 = arith.constant 0 : index
    %c0_23 = arith.constant 0 : index
    %19 = vector.load %arg5[%c0_21, %c0_22, %c0_23] : memref<3x16x16xbf16, #tpu.memory_space<vmem>>, vector<1x16x16xbf16>
    %20 = vector.shape_cast %19 : vector<1x16x16xbf16> to vector<16x16xbf16>
    %c1_24 = arith.constant 1 : index
    %c0_25 = arith.constant 0 : index
    %c0_26 = arith.constant 0 : index
    %21 = vector.load %arg4[%c1_24, %c0_25, %c0_26] : memref<3x16x16xbf16, #tpu.memory_space<vmem>>, vector<1x16x16xbf16>
    %22 = vector.shape_cast %21 : vector<1x16x16xbf16> to vector<16x16xbf16>
    %c1_27 = arith.constant 1 : index
    %c0_28 = arith.constant 0 : index
    %c0_29 = arith.constant 0 : index
    %23 = vector.load %arg5[%c1_27, %c0_28, %c0_29] : memref<3x16x16xbf16, #tpu.memory_space<vmem>>, vector<1x16x16xbf16>
    %24 = vector.shape_cast %23 : vector<1x16x16xbf16> to vector<16x16xbf16>
    %c0_30 = arith.constant 0 : index
    %c0_31 = arith.constant 0 : index
    %c0_32 = arith.constant 0 : index
    %25 = vector.load %arg7[%c0_30, %c0_31, %c0_32] : memref<2x16x16xbf16, #tpu.memory_space<vmem>>, vector<1x16x16xbf16>
    %26 = vector.shape_cast %25 : vector<1x16x16xbf16> to vector<16x16xbf16>
    %c0_33 = arith.constant 0 : index
    %c0_34 = arith.constant 0 : index
    %c0_35 = arith.constant 0 : index
    %27 = vector.load %arg8[%c0_33, %c0_34, %c0_35] : memref<2x16x16xbf16, #tpu.memory_space<vmem>>, vector<1x16x16xbf16>
    %28 = vector.shape_cast %27 : vector<1x16x16xbf16> to vector<16x16xbf16>
    %c0_36 = arith.constant 0 : index
    %c0_37 = arith.constant 0 : index
    %29 = vector.load %arg10[%c0_36, %c0_37] : memref<16x16xf32, #tpu.memory_space<vmem>>, vector<16x16xf32>
    %c0_38 = arith.constant 0 : index
    %c0_39 = arith.constant 0 : index
    %30 = vector.load %arg11[%c0_38, %c0_39] : memref<16x16xf32, #tpu.memory_space<vmem>>, vector<16x16xf32>
    %c0_i32_40 = arith.constant 0 : i32
    %c0_41 = arith.constant 0 : index
    %31 = arith.index_cast %c0_i32_40 : i32 to index
    %c0_42 = arith.constant 0 : index
    %c0_43 = arith.constant 0 : index
    %32 = vector.load %arg2[%c0_41, %31, %c0_42, %c0_43] : memref<1x8x16x16xbf16, #tpu.memory_space<vmem>>, vector<1x1x16x16xbf16>
    %33 = vector.shape_cast %32 : vector<1x1x16x16xbf16> to vector<16x16xbf16>
    %34 = arith.extf %33 : vector<16x16xbf16> to vector<16x16xf32>
    %c0_44 = arith.constant 0 : index
    %35 = arith.index_cast %c0_i32_40 : i32 to index
    %c0_45 = arith.constant 0 : index
    %c0_46 = arith.constant 0 : index
    %36 = vector.load %arg3[%c0_44, %35, %c0_45, %c0_46] : memref<1x8x16x16xbf16, #tpu.memory_space<vmem>>, vector<1x1x16x16xbf16>
    %37 = vector.shape_cast %36 : vector<1x1x16x16xbf16> to vector<16x16xbf16>
    %38 = arith.extf %37 : vector<16x16xbf16> to vector<16x16xf32>
    %39 = arith.extf %18 : vector<16x16xbf16> to vector<16x16xf32>
    %40 = arith.mulf %34, %39 : vector<16x16xf32>
    %41 = arith.extf %20 : vector<16x16xbf16> to vector<16x16xf32>
    %42 = arith.mulf %38, %41 : vector<16x16xf32>
    %43 = arith.subf %40, %42 : vector<16x16xf32>
    %44 = arith.extf %20 : vector<16x16xbf16> to vector<16x16xf32>
    %45 = arith.mulf %34, %44 : vector<16x16xf32>
    %46 = arith.extf %18 : vector<16x16xbf16> to vector<16x16xf32>
    %47 = arith.mulf %38, %46 : vector<16x16xf32>
    %48 = arith.addf %45, %47 : vector<16x16xf32>
    %49 = arith.extf %22 : vector<16x16xbf16> to vector<16x16xf32>
    %50 = arith.mulf %29, %49 : vector<16x16xf32>
    %51 = arith.extf %24 : vector<16x16xbf16> to vector<16x16xf32>
    %52 = arith.mulf %30, %51 : vector<16x16xf32>
    %53 = arith.subf %50, %52 : vector<16x16xf32>
    %54 = arith.extf %24 : vector<16x16xbf16> to vector<16x16xf32>
    %55 = arith.mulf %29, %54 : vector<16x16xf32>
    %56 = arith.extf %22 : vector<16x16xbf16> to vector<16x16xf32>
    %57 = arith.mulf %30, %56 : vector<16x16xf32>
    %58 = arith.addf %55, %57 : vector<16x16xf32>
    %cst = arith.constant 0.699999988 : f32
    %59 = vector.broadcast %cst : f32 to vector<16x16xf32>
    %60 = arith.mulf %59, %53 : vector<16x16xf32>
    %cst_47 = arith.constant 3.000000e-01 : f32
    %61 = vector.broadcast %cst_47 : f32 to vector<16x16xf32>
    %62 = arith.mulf %61, %43 : vector<16x16xf32>
    %63 = arith.addf %60, %62 : vector<16x16xf32>
    %cst_48 = arith.constant 0.699999988 : f32
    %64 = vector.broadcast %cst_48 : f32 to vector<16x16xf32>
    %65 = arith.mulf %64, %58 : vector<16x16xf32>
    %cst_49 = arith.constant 3.000000e-01 : f32
    %66 = vector.broadcast %cst_49 : f32 to vector<16x16xf32>
    %67 = arith.mulf %66, %48 : vector<16x16xf32>
    %68 = arith.addf %65, %67 : vector<16x16xf32>
    %69 = arith.truncf %63 : vector<16x16xf32> to vector<16x16xbf16>
    %70 = arith.truncf %68 : vector<16x16xf32> to vector<16x16xbf16>
    %71 = arith.addf %63, %68 : vector<16x16xf32>
    %72 = arith.truncf %71 : vector<16x16xf32> to vector<16x16xbf16>
    %cst_50 = arith.constant dense<0.000000e+00> : vector<16x16xf32>
    %73 = tpu.matmul %1, %69, %cst_50 {dimension_numbers = #tpu.dot_dimension_numbers<[1], [0], [0], [1], [0, 0, 1, 1], [], []>} : vector<16x16xbf16>, vector<16x16xbf16>, vector<16x16xf32> -> vector<16x16xf32>
    %cst_51 = arith.constant dense<0.000000e+00> : vector<16x16xf32>
    %74 = tpu.matmul %3, %70, %cst_51 {dimension_numbers = #tpu.dot_dimension_numbers<[1], [0], [0], [1], [0, 0, 1, 1], [], []>} : vector<16x16xbf16>, vector<16x16xbf16>, vector<16x16xf32> -> vector<16x16xf32>
    %cst_52 = arith.constant dense<0.000000e+00> : vector<16x16xf32>
    %75 = tpu.matmul %5, %72, %cst_52 {dimension_numbers = #tpu.dot_dimension_numbers<[1], [0], [0], [1], [0, 0, 1, 1], [], []>} : vector<16x16xbf16>, vector<16x16xbf16>, vector<16x16xf32> -> vector<16x16xf32>
    %76 = arith.subf %73, %74 : vector<16x16xf32>
    %77 = arith.subf %75, %73 : vector<16x16xf32>
    %78 = arith.subf %77, %74 : vector<16x16xf32>
    %79 = arith.truncf %76 : vector<16x16xf32> to vector<16x16xbf16>
    %80 = arith.truncf %78 : vector<16x16xf32> to vector<16x16xbf16>
    %cst_53 = arith.constant dense<0.000000e+00> : vector<16x16xf32>
    %81 = tpu.matmul %79, %9, %cst_53 {dimension_numbers = #tpu.dot_dimension_numbers<[1], [0], [0], [1], [0, 0, 1, 1], [], []>} : vector<16x16xbf16>, vector<16x16xbf16>, vector<16x16xf32> -> vector<16x16xf32>
    %cst_54 = arith.constant dense<0.000000e+00> : vector<16x16xf32>
    %82 = tpu.matmul %80, %11, %cst_54 {dimension_numbers = #tpu.dot_dimension_numbers<[1], [0], [0], [1], [0, 0, 1, 1], [], []>} : vector<16x16xbf16>, vector<16x16xbf16>, vector<16x16xf32> -> vector<16x16xf32>
    %83 = arith.addf %76, %78 : vector<16x16xf32>
    %84 = arith.truncf %83 : vector<16x16xf32> to vector<16x16xbf16>
    %cst_55 = arith.constant dense<0.000000e+00> : vector<16x16xf32>
    %85 = tpu.matmul %84, %13, %cst_55 {dimension_numbers = #tpu.dot_dimension_numbers<[1], [0], [0], [1], [0, 0, 1, 1], [], []>} : vector<16x16xbf16>, vector<16x16xbf16>, vector<16x16xf32> -> vector<16x16xf32>
    %86 = arith.subf %81, %82 : vector<16x16xf32>
    %87 = arith.subf %85, %81 : vector<16x16xf32>
    %88 = arith.subf %87, %82 : vector<16x16xf32>
    %89 = arith.extf %26 : vector<16x16xbf16> to vector<16x16xf32>
    %90 = arith.mulf %86, %89 : vector<16x16xf32>
    %91 = arith.extf %28 : vector<16x16xbf16> to vector<16x16xf32>
    %92 = arith.mulf %88, %91 : vector<16x16xf32>
    %93 = arith.subf %90, %92 : vector<16x16xf32>
    %94 = arith.extf %28 : vector<16x16xbf16> to vector<16x16xf32>
    %95 = arith.mulf %86, %94 : vector<16x16xf32>
    %96 = arith.extf %26 : vector<16x16xbf16> to vector<16x16xf32>
    %97 = arith.mulf %88, %96 : vector<16x16xf32>
    %98 = arith.addf %95, %97 : vector<16x16xf32>
    %99 = arith.truncf %93 : vector<16x16xf32> to vector<16x16xbf16>
    %100 = arith.truncf %98 : vector<16x16xf32> to vector<16x16xbf16>
    %101 = arith.addf %93, %98 : vector<16x16xf32>
    %102 = arith.truncf %101 : vector<16x16xf32> to vector<16x16xbf16>
    %cst_56 = arith.constant dense<0.000000e+00> : vector<16x16xf32>
    %103 = tpu.matmul %1, %99, %cst_56 {dimension_numbers = #tpu.dot_dimension_numbers<[1], [0], [0], [1], [0, 0, 1, 1], [], []>} : vector<16x16xbf16>, vector<16x16xbf16>, vector<16x16xf32> -> vector<16x16xf32>
    %cst_57 = arith.constant dense<0.000000e+00> : vector<16x16xf32>
    %104 = tpu.matmul %3, %100, %cst_57 {dimension_numbers = #tpu.dot_dimension_numbers<[1], [0], [0], [1], [0, 0, 1, 1], [], []>} : vector<16x16xbf16>, vector<16x16xbf16>, vector<16x16xf32> -> vector<16x16xf32>
    %cst_58 = arith.constant dense<0.000000e+00> : vector<16x16xf32>
    %105 = tpu.matmul %7, %102, %cst_58 {dimension_numbers = #tpu.dot_dimension_numbers<[1], [0], [0], [1], [0, 0, 1, 1], [], []>} : vector<16x16xbf16>, vector<16x16xbf16>, vector<16x16xf32> -> vector<16x16xf32>
    %106 = arith.addf %103, %104 : vector<16x16xf32>
    %107 = arith.subf %105, %103 : vector<16x16xf32>
    %108 = arith.addf %107, %104 : vector<16x16xf32>
    %109 = arith.truncf %106 : vector<16x16xf32> to vector<16x16xbf16>
    %110 = arith.truncf %108 : vector<16x16xf32> to vector<16x16xbf16>
    %cst_59 = arith.constant dense<0.000000e+00> : vector<16x16xf32>
    %111 = tpu.matmul %109, %9, %cst_59 {dimension_numbers = #tpu.dot_dimension_numbers<[1], [0], [0], [1], [0, 0, 1, 1], [], []>} : vector<16x16xbf16>, vector<16x16xbf16>, vector<16x16xf32> -> vector<16x16xf32>
    %cst_60 = arith.constant dense<0.000000e+00> : vector<16x16xf32>
    %112 = tpu.matmul %110, %11, %cst_60 {dimension_numbers = #tpu.dot_dimension_numbers<[1], [0], [0], [1], [0, 0, 1, 1], [], []>} : vector<16x16xbf16>, vector<16x16xbf16>, vector<16x16xf32> -> vector<16x16xf32>
    %113 = arith.subf %106, %108 : vector<16x16xf32>
    %114 = arith.truncf %113 : vector<16x16xf32> to vector<16x16xbf16>
    %cst_61 = arith.constant dense<0.000000e+00> : vector<16x16xf32>
    %115 = tpu.matmul %114, %13, %cst_61 {dimension_numbers = #tpu.dot_dimension_numbers<[1], [0], [0], [1], [0, 0, 1, 1], [], []>} : vector<16x16xbf16>, vector<16x16xbf16>, vector<16x16xf32> -> vector<16x16xf32>
    %116 = arith.addf %111, %112 : vector<16x16xf32>
    %117 = arith.subf %111, %112 : vector<16x16xf32>
    %118 = arith.subf %117, %115 : vector<16x16xf32>
    %c1_i32 = arith.constant 1 : i32
    %c0_62 = arith.constant 0 : index
    %119 = arith.index_cast %c1_i32 : i32 to index
    %c0_63 = arith.constant 0 : index
    %c0_64 = arith.constant 0 : index
    %120 = vector.load %arg2[%c0_62, %119, %c0_63, %c0_64] : memref<1x8x16x16xbf16, #tpu.memory_space<vmem>>, vector<1x1x16x16xbf16>
    %121 = vector.shape_cast %120 : vector<1x1x16x16xbf16> to vector<16x16xbf16>
    %122 = arith.extf %121 : vector<16x16xbf16> to vector<16x16xf32>
    %c0_65 = arith.constant 0 : index
    %123 = arith.index_cast %c1_i32 : i32 to index
    %c0_66 = arith.constant 0 : index
    %c0_67 = arith.constant 0 : index
    %124 = vector.load %arg3[%c0_65, %123, %c0_66, %c0_67] : memref<1x8x16x16xbf16, #tpu.memory_space<vmem>>, vector<1x1x16x16xbf16>
    %125 = vector.shape_cast %124 : vector<1x1x16x16xbf16> to vector<16x16xbf16>
    %126 = arith.extf %125 : vector<16x16xbf16> to vector<16x16xf32>
    %127 = arith.extf %18 : vector<16x16xbf16> to vector<16x16xf32>
    %128 = arith.mulf %122, %127 : vector<16x16xf32>
    %129 = arith.extf %20 : vector<16x16xbf16> to vector<16x16xf32>
    %130 = arith.mulf %126, %129 : vector<16x16xf32>
    %131 = arith.subf %128, %130 : vector<16x16xf32>
    %132 = arith.extf %20 : vector<16x16xbf16> to vector<16x16xf32>
    %133 = arith.mulf %122, %132 : vector<16x16xf32>
    %134 = arith.extf %18 : vector<16x16xbf16> to vector<16x16xf32>
    %135 = arith.mulf %126, %134 : vector<16x16xf32>
    %136 = arith.addf %133, %135 : vector<16x16xf32>
    %137 = arith.extf %22 : vector<16x16xbf16> to vector<16x16xf32>
    %138 = arith.mulf %116, %137 : vector<16x16xf32>
    %139 = arith.extf %24 : vector<16x16xbf16> to vector<16x16xf32>
    %140 = arith.mulf %118, %139 : vector<16x16xf32>
    %141 = arith.subf %138, %140 : vector<16x16xf32>
    %142 = arith.extf %24 : vector<16x16xbf16> to vector<16x16xf32>
    %143 = arith.mulf %116, %142 : vector<16x16xf32>
    %144 = arith.extf %22 : vector<16x16xbf16> to vector<16x16xf32>
    %145 = arith.mulf %118, %144 : vector<16x16xf32>
    %146 = arith.addf %143, %145 : vector<16x16xf32>
    %cst_68 = arith.constant 0.699999988 : f32
    %147 = vector.broadcast %cst_68 : f32 to vector<16x16xf32>
    %148 = arith.mulf %147, %141 : vector<16x16xf32>
    %cst_69 = arith.constant 3.000000e-01 : f32
    %149 = vector.broadcast %cst_69 : f32 to vector<16x16xf32>
    %150 = arith.mulf %149, %131 : vector<16x16xf32>
    %151 = arith.addf %148, %150 : vector<16x16xf32>
    %cst_70 = arith.constant 0.699999988 : f32
    %152 = vector.broadcast %cst_70 : f32 to vector<16x16xf32>
    %153 = arith.mulf %152, %146 : vector<16x16xf32>
    %cst_71 = arith.constant 3.000000e-01 : f32
    %154 = vector.broadcast %cst_71 : f32 to vector<16x16xf32>
    %155 = arith.mulf %154, %136 : vector<16x16xf32>
    %156 = arith.addf %153, %155 : vector<16x16xf32>
    %157 = arith.truncf %151 : vector<16x16xf32> to vector<16x16xbf16>
    %158 = arith.truncf %156 : vector<16x16xf32> to vector<16x16xbf16>
    %159 = arith.addf %151, %156 : vector<16x16xf32>
    %160 = arith.truncf %159 : vector<16x16xf32> to vector<16x16xbf16>
    %cst_72 = arith.constant dense<0.000000e+00> : vector<16x16xf32>
    %161 = tpu.matmul %1, %157, %cst_72 {dimension_numbers = #tpu.dot_dimension_numbers<[1], [0], [0], [1], [0, 0, 1, 1], [], []>} : vector<16x16xbf16>, vector<16x16xbf16>, vector<16x16xf32> -> vector<16x16xf32>
    %cst_73 = arith.constant dense<0.000000e+00> : vector<16x16xf32>
    %162 = tpu.matmul %3, %158, %cst_73 {dimension_numbers = #tpu.dot_dimension_numbers<[1], [0], [0], [1], [0, 0, 1, 1], [], []>} : vector<16x16xbf16>, vector<16x16xbf16>, vector<16x16xf32> -> vector<16x16xf32>
    %cst_74 = arith.constant dense<0.000000e+00> : vector<16x16xf32>
    %163 = tpu.matmul %5, %160, %cst_74 {dimension_numbers = #tpu.dot_dimension_numbers<[1], [0], [0], [1], [0, 0, 1, 1], [], []>} : vector<16x16xbf16>, vector<16x16xbf16>, vector<16x16xf32> -> vector<16x16xf32>
    %164 = arith.subf %161, %162 : vector<16x16xf32>
    %165 = arith.subf %163, %161 : vector<16x16xf32>
    %166 = arith.subf %165, %162 : vector<16x16xf32>
    %167 = arith.truncf %164 : vector<16x16xf32> to vector<16x16xbf16>
    %168 = arith.truncf %166 : vector<16x16xf32> to vector<16x16xbf16>
    %cst_75 = arith.constant dense<0.000000e+00> : vector<16x16xf32>
    %169 = tpu.matmul %167, %9, %cst_75 {dimension_numbers = #tpu.dot_dimension_numbers<[1], [0], [0], [1], [0, 0, 1, 1], [], []>} : vector<16x16xbf16>, vector<16x16xbf16>, vector<16x16xf32> -> vector<16x16xf32>
    %cst_76 = arith.constant dense<0.000000e+00> : vector<16x16xf32>
    %170 = tpu.matmul %168, %11, %cst_76 {dimension_numbers = #tpu.dot_dimension_numbers<[1], [0], [0], [1], [0, 0, 1, 1], [], []>} : vector<16x16xbf16>, vector<16x16xbf16>, vector<16x16xf32> -> vector<16x16xf32>
    %171 = arith.addf %164, %166 : vector<16x16xf32>
    %172 = arith.truncf %171 : vector<16x16xf32> to vector<16x16xbf16>
    %cst_77 = arith.constant dense<0.000000e+00> : vector<16x16xf32>
    %173 = tpu.matmul %172, %13, %cst_77 {dimension_numbers = #tpu.dot_dimension_numbers<[1], [0], [0], [1], [0, 0, 1, 1], [], []>} : vector<16x16xbf16>, vector<16x16xbf16>, vector<16x16xf32> -> vector<16x16xf32>
    %174 = arith.subf %169, %170 : vector<16x16xf32>
    %175 = arith.subf %173, %169 : vector<16x16xf32>
    %176 = arith.subf %175, %170 : vector<16x16xf32>
    %177 = arith.extf %26 : vector<16x16xbf16> to vector<16x16xf32>
    %178 = arith.mulf %174, %177 : vector<16x16xf32>
    %179 = arith.extf %28 : vector<16x16xbf16> to vector<16x16xf32>
    %180 = arith.mulf %176, %179 : vector<16x16xf32>
    %181 = arith.subf %178, %180 : vector<16x16xf32>
    %182 = arith.extf %28 : vector<16x16xbf16> to vector<16x16xf32>
    %183 = arith.mulf %174, %182 : vector<16x16xf32>
    %184 = arith.extf %26 : vector<16x16xbf16> to vector<16x16xf32>
    %185 = arith.mulf %176, %184 : vector<16x16xf32>
    %186 = arith.addf %183, %185 : vector<16x16xf32>
    %187 = arith.truncf %181 : vector<16x16xf32> to vector<16x16xbf16>
    %188 = arith.truncf %186 : vector<16x16xf32> to vector<16x16xbf16>
    %189 = arith.addf %181, %186 : vector<16x16xf32>
    %190 = arith.truncf %189 : vector<16x16xf32> to vector<16x16xbf16>
    %cst_78 = arith.constant dense<0.000000e+00> : vector<16x16xf32>
    %191 = tpu.matmul %1, %187, %cst_78 {dimension_numbers = #tpu.dot_dimension_numbers<[1], [0], [0], [1], [0, 0, 1, 1], [], []>} : vector<16x16xbf16>, vector<16x16xbf16>, vector<16x16xf32> -> vector<16x16xf32>
    %cst_79 = arith.constant dense<0.000000e+00> : vector<16x16xf32>
    %192 = tpu.matmul %3, %188, %cst_79 {dimension_numbers = #tpu.dot_dimension_numbers<[1], [0], [0], [1], [0, 0, 1, 1], [], []>} : vector<16x16xbf16>, vector<16x16xbf16>, vector<16x16xf32> -> vector<16x16xf32>
    %cst_80 = arith.constant dense<0.000000e+00> : vector<16x16xf32>
    %193 = tpu.matmul %7, %190, %cst_80 {dimension_numbers = #tpu.dot_dimension_numbers<[1], [0], [0], [1], [0, 0, 1, 1], [], []>} : vector<16x16xbf16>, vector<16x16xbf16>, vector<16x16xf32> -> vector<16x16xf32>
    %194 = arith.addf %191, %192 : vector<16x16xf32>
    %195 = arith.subf %193, %191 : vector<16x16xf32>
    %196 = arith.addf %195, %192 : vector<16x16xf32>
    %197 = arith.truncf %194 : vector<16x16xf32> to vector<16x16xbf16>
    %198 = arith.truncf %196 : vector<16x16xf32> to vector<16x16xbf16>
    %cst_81 = arith.constant dense<0.000000e+00> : vector<16x16xf32>
    %199 = tpu.matmul %197, %9, %cst_81 {dimension_numbers = #tpu.dot_dimension_numbers<[1], [0], [0], [1], [0, 0, 1, 1], [], []>} : vector<16x16xbf16>, vector<16x16xbf16>, vector<16x16xf32> -> vector<16x16xf32>
    %cst_82 = arith.constant dense<0.000000e+00> : vector<16x16xf32>
    %200 = tpu.matmul %198, %11, %cst_82 {dimension_numbers = #tpu.dot_dimension_numbers<[1], [0], [0], [1], [0, 0, 1, 1], [], []>} : vector<16x16xbf16>, vector<16x16xbf16>, vector<16x16xf32> -> vector<16x16xf32>
    %201 = arith.subf %194, %196 : vector<16x16xf32>
    %202 = arith.truncf %201 : vector<16x16xf32> to vector<16x16xbf16>
    %cst_83 = arith.constant dense<0.000000e+00> : vector<16x16xf32>
    %203 = tpu.matmul %202, %13, %cst_83 {dimension_numbers = #tpu.dot_dimension_numbers<[1], [0], [0], [1], [0, 0, 1, 1], [], []>} : vector<16x16xbf16>, vector<16x16xbf16>, vector<16x16xf32> -> vector<16x16xf32>
    %204 = arith.addf %199, %200 : vector<16x16xf32>
    %205 = arith.subf %199, %200 : vector<16x16xf32>
    %206 = arith.subf %205, %203 : vector<16x16xf32>
    %c2_i32 = arith.constant 2 : i32
    %c0_84 = arith.constant 0 : index
    %207 = arith.index_cast %c2_i32 : i32 to index
    %c0_85 = arith.constant 0 : index
    %c0_86 = arith.constant 0 : index
    %208 = vector.load %arg2[%c0_84, %207, %c0_85, %c0_86] : memref<1x8x16x16xbf16, #tpu.memory_space<vmem>>, vector<1x1x16x16xbf16>
    %209 = vector.shape_cast %208 : vector<1x1x16x16xbf16> to vector<16x16xbf16>
    %210 = arith.extf %209 : vector<16x16xbf16> to vector<16x16xf32>
    %c0_87 = arith.constant 0 : index
    %211 = arith.index_cast %c2_i32 : i32 to index
    %c0_88 = arith.constant 0 : index
    %c0_89 = arith.constant 0 : index
    %212 = vector.load %arg3[%c0_87, %211, %c0_88, %c0_89] : memref<1x8x16x16xbf16, #tpu.memory_space<vmem>>, vector<1x1x16x16xbf16>
    %213 = vector.shape_cast %212 : vector<1x1x16x16xbf16> to vector<16x16xbf16>
    %214 = arith.extf %213 : vector<16x16xbf16> to vector<16x16xf32>
    %215 = arith.extf %18 : vector<16x16xbf16> to vector<16x16xf32>
    %216 = arith.mulf %210, %215 : vector<16x16xf32>
    %217 = arith.extf %20 : vector<16x16xbf16> to vector<16x16xf32>
    %218 = arith.mulf %214, %217 : vector<16x16xf32>
    %219 = arith.subf %216, %218 : vector<16x16xf32>
    %220 = arith.extf %20 : vector<16x16xbf16> to vector<16x16xf32>
    %221 = arith.mulf %210, %220 : vector<16x16xf32>
    %222 = arith.extf %18 : vector<16x16xbf16> to vector<16x16xf32>
    %223 = arith.mulf %214, %222 : vector<16x16xf32>
    %224 = arith.addf %221, %223 : vector<16x16xf32>
    %225 = arith.extf %22 : vector<16x16xbf16> to vector<16x16xf32>
    %226 = arith.mulf %204, %225 : vector<16x16xf32>
    %227 = arith.extf %24 : vector<16x16xbf16> to vector<16x16xf32>
    %228 = arith.mulf %206, %227 : vector<16x16xf32>
    %229 = arith.subf %226, %228 : vector<16x16xf32>
    %230 = arith.extf %24 : vector<16x16xbf16> to vector<16x16xf32>
    %231 = arith.mulf %204, %230 : vector<16x16xf32>
    %232 = arith.extf %22 : vector<16x16xbf16> to vector<16x16xf32>
    %233 = arith.mulf %206, %232 : vector<16x16xf32>
    %234 = arith.addf %231, %233 : vector<16x16xf32>
    %cst_90 = arith.constant 0.699999988 : f32
    %235 = vector.broadcast %cst_90 : f32 to vector<16x16xf32>
    %236 = arith.mulf %235, %229 : vector<16x16xf32>
    %cst_91 = arith.constant 3.000000e-01 : f32
    %237 = vector.broadcast %cst_91 : f32 to vector<16x16xf32>
    %238 = arith.mulf %237, %219 : vector<16x16xf32>
    %239 = arith.addf %236, %238 : vector<16x16xf32>
    %cst_92 = arith.constant 0.699999988 : f32
    %240 = vector.broadcast %cst_92 : f32 to vector<16x16xf32>
    %241 = arith.mulf %240, %234 : vector<16x16xf32>
    %cst_93 = arith.constant 3.000000e-01 : f32
    %242 = vector.broadcast %cst_93 : f32 to vector<16x16xf32>
    %243 = arith.mulf %242, %224 : vector<16x16xf32>
    %244 = arith.addf %241, %243 : vector<16x16xf32>
    %245 = arith.truncf %239 : vector<16x16xf32> to vector<16x16xbf16>
    %246 = arith.truncf %244 : vector<16x16xf32> to vector<16x16xbf16>
    %247 = arith.addf %239, %244 : vector<16x16xf32>
    %248 = arith.truncf %247 : vector<16x16xf32> to vector<16x16xbf16>
    %cst_94 = arith.constant dense<0.000000e+00> : vector<16x16xf32>
    %249 = tpu.matmul %1, %245, %cst_94 {dimension_numbers = #tpu.dot_dimension_numbers<[1], [0], [0], [1], [0, 0, 1, 1], [], []>} : vector<16x16xbf16>, vector<16x16xbf16>, vector<16x16xf32> -> vector<16x16xf32>
    %cst_95 = arith.constant dense<0.000000e+00> : vector<16x16xf32>
    %250 = tpu.matmul %3, %246, %cst_95 {dimension_numbers = #tpu.dot_dimension_numbers<[1], [0], [0], [1], [0, 0, 1, 1], [], []>} : vector<16x16xbf16>, vector<16x16xbf16>, vector<16x16xf32> -> vector<16x16xf32>
    %cst_96 = arith.constant dense<0.000000e+00> : vector<16x16xf32>
    %251 = tpu.matmul %5, %248, %cst_96 {dimension_numbers = #tpu.dot_dimension_numbers<[1], [0], [0], [1], [0, 0, 1, 1], [], []>} : vector<16x16xbf16>, vector<16x16xbf16>, vector<16x16xf32> -> vector<16x16xf32>
    %252 = arith.subf %249, %250 : vector<16x16xf32>
    %253 = arith.subf %251, %249 : vector<16x16xf32>
    %254 = arith.subf %253, %250 : vector<16x16xf32>
    %255 = arith.truncf %252 : vector<16x16xf32> to vector<16x16xbf16>
    %256 = arith.truncf %254 : vector<16x16xf32> to vector<16x16xbf16>
    %cst_97 = arith.constant dense<0.000000e+00> : vector<16x16xf32>
    %257 = tpu.matmul %255, %9, %cst_97 {dimension_numbers = #tpu.dot_dimension_numbers<[1], [0], [0], [1], [0, 0, 1, 1], [], []>} : vector<16x16xbf16>, vector<16x16xbf16>, vector<16x16xf32> -> vector<16x16xf32>
    %cst_98 = arith.constant dense<0.000000e+00> : vector<16x16xf32>
    %258 = tpu.matmul %256, %11, %cst_98 {dimension_numbers = #tpu.dot_dimension_numbers<[1], [0], [0], [1], [0, 0, 1, 1], [], []>} : vector<16x16xbf16>, vector<16x16xbf16>, vector<16x16xf32> -> vector<16x16xf32>
    %259 = arith.addf %252, %254 : vector<16x16xf32>
    %260 = arith.truncf %259 : vector<16x16xf32> to vector<16x16xbf16>
    %cst_99 = arith.constant dense<0.000000e+00> : vector<16x16xf32>
    %261 = tpu.matmul %260, %13, %cst_99 {dimension_numbers = #tpu.dot_dimension_numbers<[1], [0], [0], [1], [0, 0, 1, 1], [], []>} : vector<16x16xbf16>, vector<16x16xbf16>, vector<16x16xf32> -> vector<16x16xf32>
    %262 = arith.subf %257, %258 : vector<16x16xf32>
    %263 = arith.subf %261, %257 : vector<16x16xf32>
    %264 = arith.subf %263, %258 : vector<16x16xf32>
    %265 = arith.extf %26 : vector<16x16xbf16> to vector<16x16xf32>
    %266 = arith.mulf %262, %265 : vector<16x16xf32>
    %267 = arith.extf %28 : vector<16x16xbf16> to vector<16x16xf32>
    %268 = arith.mulf %264, %267 : vector<16x16xf32>
    %269 = arith.subf %266, %268 : vector<16x16xf32>
    %270 = arith.extf %28 : vector<16x16xbf16> to vector<16x16xf32>
    %271 = arith.mulf %262, %270 : vector<16x16xf32>
    %272 = arith.extf %26 : vector<16x16xbf16> to vector<16x16xf32>
    %273 = arith.mulf %264, %272 : vector<16x16xf32>
    %274 = arith.addf %271, %273 : vector<16x16xf32>
    %275 = arith.truncf %269 : vector<16x16xf32> to vector<16x16xbf16>
    %276 = arith.truncf %274 : vector<16x16xf32> to vector<16x16xbf16>
    %277 = arith.addf %269, %274 : vector<16x16xf32>
    %278 = arith.truncf %277 : vector<16x16xf32> to vector<16x16xbf16>
    %cst_100 = arith.constant dense<0.000000e+00> : vector<16x16xf32>
    %279 = tpu.matmul %1, %275, %cst_100 {dimension_numbers = #tpu.dot_dimension_numbers<[1], [0], [0], [1], [0, 0, 1, 1], [], []>} : vector<16x16xbf16>, vector<16x16xbf16>, vector<16x16xf32> -> vector<16x16xf32>
    %cst_101 = arith.constant dense<0.000000e+00> : vector<16x16xf32>
    %280 = tpu.matmul %3, %276, %cst_101 {dimension_numbers = #tpu.dot_dimension_numbers<[1], [0], [0], [1], [0, 0, 1, 1], [], []>} : vector<16x16xbf16>, vector<16x16xbf16>, vector<16x16xf32> -> vector<16x16xf32>
    %cst_102 = arith.constant dense<0.000000e+00> : vector<16x16xf32>
    %281 = tpu.matmul %7, %278, %cst_102 {dimension_numbers = #tpu.dot_dimension_numbers<[1], [0], [0], [1], [0, 0, 1, 1], [], []>} : vector<16x16xbf16>, vector<16x16xbf16>, vector<16x16xf32> -> vector<16x16xf32>
    %282 = arith.addf %279, %280 : vector<16x16xf32>
    %283 = arith.subf %281, %279 : vector<16x16xf32>
    %284 = arith.addf %283, %280 : vector<16x16xf32>
    %285 = arith.truncf %282 : vector<16x16xf32> to vector<16x16xbf16>
    %286 = arith.truncf %284 : vector<16x16xf32> to vector<16x16xbf16>
    %cst_103 = arith.constant dense<0.000000e+00> : vector<16x16xf32>
    %287 = tpu.matmul %285, %9, %cst_103 {dimension_numbers = #tpu.dot_dimension_numbers<[1], [0], [0], [1], [0, 0, 1, 1], [], []>} : vector<16x16xbf16>, vector<16x16xbf16>, vector<16x16xf32> -> vector<16x16xf32>
    %cst_104 = arith.constant dense<0.000000e+00> : vector<16x16xf32>
    %288 = tpu.matmul %286, %11, %cst_104 {dimension_numbers = #tpu.dot_dimension_numbers<[1], [0], [0], [1], [0, 0, 1, 1], [], []>} : vector<16x16xbf16>, vector<16x16xbf16>, vector<16x16xf32> -> vector<16x16xf32>
    %289 = arith.subf %282, %284 : vector<16x16xf32>
    %290 = arith.truncf %289 : vector<16x16xf32> to vector<16x16xbf16>
    %cst_105 = arith.constant dense<0.000000e+00> : vector<16x16xf32>
    %291 = tpu.matmul %290, %13, %cst_105 {dimension_numbers = #tpu.dot_dimension_numbers<[1], [0], [0], [1], [0, 0, 1, 1], [], []>} : vector<16x16xbf16>, vector<16x16xbf16>, vector<16x16xf32> -> vector<16x16xf32>
    %292 = arith.addf %287, %288 : vector<16x16xf32>
    %293 = arith.subf %287, %288 : vector<16x16xf32>
    %294 = arith.subf %293, %291 : vector<16x16xf32>
    %c3_i32 = arith.constant 3 : i32
    %c0_106 = arith.constant 0 : index
    %295 = arith.index_cast %c3_i32 : i32 to index
    %c0_107 = arith.constant 0 : index
    %c0_108 = arith.constant 0 : index
    %296 = vector.load %arg2[%c0_106, %295, %c0_107, %c0_108] : memref<1x8x16x16xbf16, #tpu.memory_space<vmem>>, vector<1x1x16x16xbf16>
    %297 = vector.shape_cast %296 : vector<1x1x16x16xbf16> to vector<16x16xbf16>
    %298 = arith.extf %297 : vector<16x16xbf16> to vector<16x16xf32>
    %c0_109 = arith.constant 0 : index
    %299 = arith.index_cast %c3_i32 : i32 to index
    %c0_110 = arith.constant 0 : index
    %c0_111 = arith.constant 0 : index
    %300 = vector.load %arg3[%c0_109, %299, %c0_110, %c0_111] : memref<1x8x16x16xbf16, #tpu.memory_space<vmem>>, vector<1x1x16x16xbf16>
    %301 = vector.shape_cast %300 : vector<1x1x16x16xbf16> to vector<16x16xbf16>
    %302 = arith.extf %301 : vector<16x16xbf16> to vector<16x16xf32>
    %303 = arith.extf %18 : vector<16x16xbf16> to vector<16x16xf32>
    %304 = arith.mulf %298, %303 : vector<16x16xf32>
    %305 = arith.extf %20 : vector<16x16xbf16> to vector<16x16xf32>
    %306 = arith.mulf %302, %305 : vector<16x16xf32>
    %307 = arith.subf %304, %306 : vector<16x16xf32>
    %308 = arith.extf %20 : vector<16x16xbf16> to vector<16x16xf32>
    %309 = arith.mulf %298, %308 : vector<16x16xf32>
    %310 = arith.extf %18 : vector<16x16xbf16> to vector<16x16xf32>
    %311 = arith.mulf %302, %310 : vector<16x16xf32>
    %312 = arith.addf %309, %311 : vector<16x16xf32>
    %313 = arith.extf %22 : vector<16x16xbf16> to vector<16x16xf32>
    %314 = arith.mulf %292, %313 : vector<16x16xf32>
    %315 = arith.extf %24 : vector<16x16xbf16> to vector<16x16xf32>
    %316 = arith.mulf %294, %315 : vector<16x16xf32>
    %317 = arith.subf %314, %316 : vector<16x16xf32>
    %318 = arith.extf %24 : vector<16x16xbf16> to vector<16x16xf32>
    %319 = arith.mulf %292, %318 : vector<16x16xf32>
    %320 = arith.extf %22 : vector<16x16xbf16> to vector<16x16xf32>
    %321 = arith.mulf %294, %320 : vector<16x16xf32>
    %322 = arith.addf %319, %321 : vector<16x16xf32>
    %cst_112 = arith.constant 0.699999988 : f32
    %323 = vector.broadcast %cst_112 : f32 to vector<16x16xf32>
    %324 = arith.mulf %323, %317 : vector<16x16xf32>
    %cst_113 = arith.constant 3.000000e-01 : f32
    %325 = vector.broadcast %cst_113 : f32 to vector<16x16xf32>
    %326 = arith.mulf %325, %307 : vector<16x16xf32>
    %327 = arith.addf %324, %326 : vector<16x16xf32>
    %cst_114 = arith.constant 0.699999988 : f32
    %328 = vector.broadcast %cst_114 : f32 to vector<16x16xf32>
    %329 = arith.mulf %328, %322 : vector<16x16xf32>
    %cst_115 = arith.constant 3.000000e-01 : f32
    %330 = vector.broadcast %cst_115 : f32 to vector<16x16xf32>
    %331 = arith.mulf %330, %312 : vector<16x16xf32>
    %332 = arith.addf %329, %331 : vector<16x16xf32>
    %333 = arith.truncf %327 : vector<16x16xf32> to vector<16x16xbf16>
    %334 = arith.truncf %332 : vector<16x16xf32> to vector<16x16xbf16>
    %335 = arith.addf %327, %332 : vector<16x16xf32>
    %336 = arith.truncf %335 : vector<16x16xf32> to vector<16x16xbf16>
    %cst_116 = arith.constant dense<0.000000e+00> : vector<16x16xf32>
    %337 = tpu.matmul %1, %333, %cst_116 {dimension_numbers = #tpu.dot_dimension_numbers<[1], [0], [0], [1], [0, 0, 1, 1], [], []>} : vector<16x16xbf16>, vector<16x16xbf16>, vector<16x16xf32> -> vector<16x16xf32>
    %cst_117 = arith.constant dense<0.000000e+00> : vector<16x16xf32>
    %338 = tpu.matmul %3, %334, %cst_117 {dimension_numbers = #tpu.dot_dimension_numbers<[1], [0], [0], [1], [0, 0, 1, 1], [], []>} : vector<16x16xbf16>, vector<16x16xbf16>, vector<16x16xf32> -> vector<16x16xf32>
    %cst_118 = arith.constant dense<0.000000e+00> : vector<16x16xf32>
    %339 = tpu.matmul %5, %336, %cst_118 {dimension_numbers = #tpu.dot_dimension_numbers<[1], [0], [0], [1], [0, 0, 1, 1], [], []>} : vector<16x16xbf16>, vector<16x16xbf16>, vector<16x16xf32> -> vector<16x16xf32>
    %340 = arith.subf %337, %338 : vector<16x16xf32>
    %341 = arith.subf %339, %337 : vector<16x16xf32>
    %342 = arith.subf %341, %338 : vector<16x16xf32>
    %343 = arith.truncf %340 : vector<16x16xf32> to vector<16x16xbf16>
    %344 = arith.truncf %342 : vector<16x16xf32> to vector<16x16xbf16>
    %cst_119 = arith.constant dense<0.000000e+00> : vector<16x16xf32>
    %345 = tpu.matmul %343, %9, %cst_119 {dimension_numbers = #tpu.dot_dimension_numbers<[1], [0], [0], [1], [0, 0, 1, 1], [], []>} : vector<16x16xbf16>, vector<16x16xbf16>, vector<16x16xf32> -> vector<16x16xf32>
    %cst_120 = arith.constant dense<0.000000e+00> : vector<16x16xf32>
    %346 = tpu.matmul %344, %11, %cst_120 {dimension_numbers = #tpu.dot_dimension_numbers<[1], [0], [0], [1], [0, 0, 1, 1], [], []>} : vector<16x16xbf16>, vector<16x16xbf16>, vector<16x16xf32> -> vector<16x16xf32>
    %347 = arith.addf %340, %342 : vector<16x16xf32>
    %348 = arith.truncf %347 : vector<16x16xf32> to vector<16x16xbf16>
    %cst_121 = arith.constant dense<0.000000e+00> : vector<16x16xf32>
    %349 = tpu.matmul %348, %13, %cst_121 {dimension_numbers = #tpu.dot_dimension_numbers<[1], [0], [0], [1], [0, 0, 1, 1], [], []>} : vector<16x16xbf16>, vector<16x16xbf16>, vector<16x16xf32> -> vector<16x16xf32>
    %350 = arith.subf %345, %346 : vector<16x16xf32>
    %351 = arith.subf %349, %345 : vector<16x16xf32>
    %352 = arith.subf %351, %346 : vector<16x16xf32>
    %353 = arith.extf %26 : vector<16x16xbf16> to vector<16x16xf32>
    %354 = arith.mulf %350, %353 : vector<16x16xf32>
    %355 = arith.extf %28 : vector<16x16xbf16> to vector<16x16xf32>
    %356 = arith.mulf %352, %355 : vector<16x16xf32>
    %357 = arith.subf %354, %356 : vector<16x16xf32>
    %358 = arith.extf %28 : vector<16x16xbf16> to vector<16x16xf32>
    %359 = arith.mulf %350, %358 : vector<16x16xf32>
    %360 = arith.extf %26 : vector<16x16xbf16> to vector<16x16xf32>
    %361 = arith.mulf %352, %360 : vector<16x16xf32>
    %362 = arith.addf %359, %361 : vector<16x16xf32>
    %363 = arith.truncf %357 : vector<16x16xf32> to vector<16x16xbf16>
    %364 = arith.truncf %362 : vector<16x16xf32> to vector<16x16xbf16>
    %365 = arith.addf %357, %362 : vector<16x16xf32>
    %366 = arith.truncf %365 : vector<16x16xf32> to vector<16x16xbf16>
    %cst_122 = arith.constant dense<0.000000e+00> : vector<16x16xf32>
    %367 = tpu.matmul %1, %363, %cst_122 {dimension_numbers = #tpu.dot_dimension_numbers<[1], [0], [0], [1], [0, 0, 1, 1], [], []>} : vector<16x16xbf16>, vector<16x16xbf16>, vector<16x16xf32> -> vector<16x16xf32>
    %cst_123 = arith.constant dense<0.000000e+00> : vector<16x16xf32>
    %368 = tpu.matmul %3, %364, %cst_123 {dimension_numbers = #tpu.dot_dimension_numbers<[1], [0], [0], [1], [0, 0, 1, 1], [], []>} : vector<16x16xbf16>, vector<16x16xbf16>, vector<16x16xf32> -> vector<16x16xf32>
    %cst_124 = arith.constant dense<0.000000e+00> : vector<16x16xf32>
    %369 = tpu.matmul %7, %366, %cst_124 {dimension_numbers = #tpu.dot_dimension_numbers<[1], [0], [0], [1], [0, 0, 1, 1], [], []>} : vector<16x16xbf16>, vector<16x16xbf16>, vector<16x16xf32> -> vector<16x16xf32>
    %370 = arith.addf %367, %368 : vector<16x16xf32>
    %371 = arith.subf %369, %367 : vector<16x16xf32>
    %372 = arith.addf %371, %368 : vector<16x16xf32>
    %373 = arith.truncf %370 : vector<16x16xf32> to vector<16x16xbf16>
    %374 = arith.truncf %372 : vector<16x16xf32> to vector<16x16xbf16>
    %cst_125 = arith.constant dense<0.000000e+00> : vector<16x16xf32>
    %375 = tpu.matmul %373, %9, %cst_125 {dimension_numbers = #tpu.dot_dimension_numbers<[1], [0], [0], [1], [0, 0, 1, 1], [], []>} : vector<16x16xbf16>, vector<16x16xbf16>, vector<16x16xf32> -> vector<16x16xf32>
    %cst_126 = arith.constant dense<0.000000e+00> : vector<16x16xf32>
    %376 = tpu.matmul %374, %11, %cst_126 {dimension_numbers = #tpu.dot_dimension_numbers<[1], [0], [0], [1], [0, 0, 1, 1], [], []>} : vector<16x16xbf16>, vector<16x16xbf16>, vector<16x16xf32> -> vector<16x16xf32>
    %377 = arith.subf %370, %372 : vector<16x16xf32>
    %378 = arith.truncf %377 : vector<16x16xf32> to vector<16x16xbf16>
    %cst_127 = arith.constant dense<0.000000e+00> : vector<16x16xf32>
    %379 = tpu.matmul %378, %13, %cst_127 {dimension_numbers = #tpu.dot_dimension_numbers<[1], [0], [0], [1], [0, 0, 1, 1], [], []>} : vector<16x16xbf16>, vector<16x16xbf16>, vector<16x16xf32> -> vector<16x16xf32>
    %380 = arith.addf %375, %376 : vector<16x16xf32>
    %381 = arith.subf %375, %376 : vector<16x16xf32>
    %382 = arith.subf %381, %379 : vector<16x16xf32>
    %c4_i32 = arith.constant 4 : i32
    %c0_128 = arith.constant 0 : index
    %383 = arith.index_cast %c4_i32 : i32 to index
    %c0_129 = arith.constant 0 : index
    %c0_130 = arith.constant 0 : index
    %384 = vector.load %arg2[%c0_128, %383, %c0_129, %c0_130] : memref<1x8x16x16xbf16, #tpu.memory_space<vmem>>, vector<1x1x16x16xbf16>
    %385 = vector.shape_cast %384 : vector<1x1x16x16xbf16> to vector<16x16xbf16>
    %386 = arith.extf %385 : vector<16x16xbf16> to vector<16x16xf32>
    %c0_131 = arith.constant 0 : index
    %387 = arith.index_cast %c4_i32 : i32 to index
    %c0_132 = arith.constant 0 : index
    %c0_133 = arith.constant 0 : index
    %388 = vector.load %arg3[%c0_131, %387, %c0_132, %c0_133] : memref<1x8x16x16xbf16, #tpu.memory_space<vmem>>, vector<1x1x16x16xbf16>
    %389 = vector.shape_cast %388 : vector<1x1x16x16xbf16> to vector<16x16xbf16>
    %390 = arith.extf %389 : vector<16x16xbf16> to vector<16x16xf32>
    %391 = arith.extf %18 : vector<16x16xbf16> to vector<16x16xf32>
    %392 = arith.mulf %386, %391 : vector<16x16xf32>
    %393 = arith.extf %20 : vector<16x16xbf16> to vector<16x16xf32>
    %394 = arith.mulf %390, %393 : vector<16x16xf32>
    %395 = arith.subf %392, %394 : vector<16x16xf32>
    %396 = arith.extf %20 : vector<16x16xbf16> to vector<16x16xf32>
    %397 = arith.mulf %386, %396 : vector<16x16xf32>
    %398 = arith.extf %18 : vector<16x16xbf16> to vector<16x16xf32>
    %399 = arith.mulf %390, %398 : vector<16x16xf32>
    %400 = arith.addf %397, %399 : vector<16x16xf32>
    %401 = arith.extf %22 : vector<16x16xbf16> to vector<16x16xf32>
    %402 = arith.mulf %380, %401 : vector<16x16xf32>
    %403 = arith.extf %24 : vector<16x16xbf16> to vector<16x16xf32>
    %404 = arith.mulf %382, %403 : vector<16x16xf32>
    %405 = arith.subf %402, %404 : vector<16x16xf32>
    %406 = arith.extf %24 : vector<16x16xbf16> to vector<16x16xf32>
    %407 = arith.mulf %380, %406 : vector<16x16xf32>
    %408 = arith.extf %22 : vector<16x16xbf16> to vector<16x16xf32>
    %409 = arith.mulf %382, %408 : vector<16x16xf32>
    %410 = arith.addf %407, %409 : vector<16x16xf32>
    %cst_134 = arith.constant 0.699999988 : f32
    %411 = vector.broadcast %cst_134 : f32 to vector<16x16xf32>
    %412 = arith.mulf %411, %405 : vector<16x16xf32>
    %cst_135 = arith.constant 3.000000e-01 : f32
    %413 = vector.broadcast %cst_135 : f32 to vector<16x16xf32>
    %414 = arith.mulf %413, %395 : vector<16x16xf32>
    %415 = arith.addf %412, %414 : vector<16x16xf32>
    %cst_136 = arith.constant 0.699999988 : f32
    %416 = vector.broadcast %cst_136 : f32 to vector<16x16xf32>
    %417 = arith.mulf %416, %410 : vector<16x16xf32>
    %cst_137 = arith.constant 3.000000e-01 : f32
    %418 = vector.broadcast %cst_137 : f32 to vector<16x16xf32>
    %419 = arith.mulf %418, %400 : vector<16x16xf32>
    %420 = arith.addf %417, %419 : vector<16x16xf32>
    %421 = arith.truncf %415 : vector<16x16xf32> to vector<16x16xbf16>
    %422 = arith.truncf %420 : vector<16x16xf32> to vector<16x16xbf16>
    %423 = arith.addf %415, %420 : vector<16x16xf32>
    %424 = arith.truncf %423 : vector<16x16xf32> to vector<16x16xbf16>
    %cst_138 = arith.constant dense<0.000000e+00> : vector<16x16xf32>
    %425 = tpu.matmul %1, %421, %cst_138 {dimension_numbers = #tpu.dot_dimension_numbers<[1], [0], [0], [1], [0, 0, 1, 1], [], []>} : vector<16x16xbf16>, vector<16x16xbf16>, vector<16x16xf32> -> vector<16x16xf32>
    %cst_139 = arith.constant dense<0.000000e+00> : vector<16x16xf32>
    %426 = tpu.matmul %3, %422, %cst_139 {dimension_numbers = #tpu.dot_dimension_numbers<[1], [0], [0], [1], [0, 0, 1, 1], [], []>} : vector<16x16xbf16>, vector<16x16xbf16>, vector<16x16xf32> -> vector<16x16xf32>
    %cst_140 = arith.constant dense<0.000000e+00> : vector<16x16xf32>
    %427 = tpu.matmul %5, %424, %cst_140 {dimension_numbers = #tpu.dot_dimension_numbers<[1], [0], [0], [1], [0, 0, 1, 1], [], []>} : vector<16x16xbf16>, vector<16x16xbf16>, vector<16x16xf32> -> vector<16x16xf32>
    %428 = arith.subf %425, %426 : vector<16x16xf32>
    %429 = arith.subf %427, %425 : vector<16x16xf32>
    %430 = arith.subf %429, %426 : vector<16x16xf32>
    %431 = arith.truncf %428 : vector<16x16xf32> to vector<16x16xbf16>
    %432 = arith.truncf %430 : vector<16x16xf32> to vector<16x16xbf16>
    %cst_141 = arith.constant dense<0.000000e+00> : vector<16x16xf32>
    %433 = tpu.matmul %431, %9, %cst_141 {dimension_numbers = #tpu.dot_dimension_numbers<[1], [0], [0], [1], [0, 0, 1, 1], [], []>} : vector<16x16xbf16>, vector<16x16xbf16>, vector<16x16xf32> -> vector<16x16xf32>
    %cst_142 = arith.constant dense<0.000000e+00> : vector<16x16xf32>
    %434 = tpu.matmul %432, %11, %cst_142 {dimension_numbers = #tpu.dot_dimension_numbers<[1], [0], [0], [1], [0, 0, 1, 1], [], []>} : vector<16x16xbf16>, vector<16x16xbf16>, vector<16x16xf32> -> vector<16x16xf32>
    %435 = arith.addf %428, %430 : vector<16x16xf32>
    %436 = arith.truncf %435 : vector<16x16xf32> to vector<16x16xbf16>
    %cst_143 = arith.constant dense<0.000000e+00> : vector<16x16xf32>
    %437 = tpu.matmul %436, %13, %cst_143 {dimension_numbers = #tpu.dot_dimension_numbers<[1], [0], [0], [1], [0, 0, 1, 1], [], []>} : vector<16x16xbf16>, vector<16x16xbf16>, vector<16x16xf32> -> vector<16x16xf32>
    %438 = arith.subf %433, %434 : vector<16x16xf32>
    %439 = arith.subf %437, %433 : vector<16x16xf32>
    %440 = arith.subf %439, %434 : vector<16x16xf32>
    %441 = arith.extf %26 : vector<16x16xbf16> to vector<16x16xf32>
    %442 = arith.mulf %438, %441 : vector<16x16xf32>
    %443 = arith.extf %28 : vector<16x16xbf16> to vector<16x16xf32>
    %444 = arith.mulf %440, %443 : vector<16x16xf32>
    %445 = arith.subf %442, %444 : vector<16x16xf32>
    %446 = arith.extf %28 : vector<16x16xbf16> to vector<16x16xf32>
    %447 = arith.mulf %438, %446 : vector<16x16xf32>
    %448 = arith.extf %26 : vector<16x16xbf16> to vector<16x16xf32>
    %449 = arith.mulf %440, %448 : vector<16x16xf32>
    %450 = arith.addf %447, %449 : vector<16x16xf32>
    %451 = arith.truncf %445 : vector<16x16xf32> to vector<16x16xbf16>
    %452 = arith.truncf %450 : vector<16x16xf32> to vector<16x16xbf16>
    %453 = arith.addf %445, %450 : vector<16x16xf32>
    %454 = arith.truncf %453 : vector<16x16xf32> to vector<16x16xbf16>
    %cst_144 = arith.constant dense<0.000000e+00> : vector<16x16xf32>
    %455 = tpu.matmul %1, %451, %cst_144 {dimension_numbers = #tpu.dot_dimension_numbers<[1], [0], [0], [1], [0, 0, 1, 1], [], []>} : vector<16x16xbf16>, vector<16x16xbf16>, vector<16x16xf32> -> vector<16x16xf32>
    %cst_145 = arith.constant dense<0.000000e+00> : vector<16x16xf32>
    %456 = tpu.matmul %3, %452, %cst_145 {dimension_numbers = #tpu.dot_dimension_numbers<[1], [0], [0], [1], [0, 0, 1, 1], [], []>} : vector<16x16xbf16>, vector<16x16xbf16>, vector<16x16xf32> -> vector<16x16xf32>
    %cst_146 = arith.constant dense<0.000000e+00> : vector<16x16xf32>
    %457 = tpu.matmul %7, %454, %cst_146 {dimension_numbers = #tpu.dot_dimension_numbers<[1], [0], [0], [1], [0, 0, 1, 1], [], []>} : vector<16x16xbf16>, vector<16x16xbf16>, vector<16x16xf32> -> vector<16x16xf32>
    %458 = arith.addf %455, %456 : vector<16x16xf32>
    %459 = arith.subf %457, %455 : vector<16x16xf32>
    %460 = arith.addf %459, %456 : vector<16x16xf32>
    %461 = arith.truncf %458 : vector<16x16xf32> to vector<16x16xbf16>
    %462 = arith.truncf %460 : vector<16x16xf32> to vector<16x16xbf16>
    %cst_147 = arith.constant dense<0.000000e+00> : vector<16x16xf32>
    %463 = tpu.matmul %461, %9, %cst_147 {dimension_numbers = #tpu.dot_dimension_numbers<[1], [0], [0], [1], [0, 0, 1, 1], [], []>} : vector<16x16xbf16>, vector<16x16xbf16>, vector<16x16xf32> -> vector<16x16xf32>
    %cst_148 = arith.constant dense<0.000000e+00> : vector<16x16xf32>
    %464 = tpu.matmul %462, %11, %cst_148 {dimension_numbers = #tpu.dot_dimension_numbers<[1], [0], [0], [1], [0, 0, 1, 1], [], []>} : vector<16x16xbf16>, vector<16x16xbf16>, vector<16x16xf32> -> vector<16x16xf32>
    %465 = arith.subf %458, %460 : vector<16x16xf32>
    %466 = arith.truncf %465 : vector<16x16xf32> to vector<16x16xbf16>
    %cst_149 = arith.constant dense<0.000000e+00> : vector<16x16xf32>
    %467 = tpu.matmul %466, %13, %cst_149 {dimension_numbers = #tpu.dot_dimension_numbers<[1], [0], [0], [1], [0, 0, 1, 1], [], []>} : vector<16x16xbf16>, vector<16x16xbf16>, vector<16x16xf32> -> vector<16x16xf32>
    %468 = arith.addf %463, %464 : vector<16x16xf32>
    %469 = arith.subf %463, %464 : vector<16x16xf32>
    %470 = arith.subf %469, %467 : vector<16x16xf32>
    %c5_i32 = arith.constant 5 : i32
    %c0_150 = arith.constant 0 : index
    %471 = arith.index_cast %c5_i32 : i32 to index
    %c0_151 = arith.constant 0 : index
    %c0_152 = arith.constant 0 : index
    %472 = vector.load %arg2[%c0_150, %471, %c0_151, %c0_152] : memref<1x8x16x16xbf16, #tpu.memory_space<vmem>>, vector<1x1x16x16xbf16>
    %473 = vector.shape_cast %472 : vector<1x1x16x16xbf16> to vector<16x16xbf16>
    %474 = arith.extf %473 : vector<16x16xbf16> to vector<16x16xf32>
    %c0_153 = arith.constant 0 : index
    %475 = arith.index_cast %c5_i32 : i32 to index
    %c0_154 = arith.constant 0 : index
    %c0_155 = arith.constant 0 : index
    %476 = vector.load %arg3[%c0_153, %475, %c0_154, %c0_155] : memref<1x8x16x16xbf16, #tpu.memory_space<vmem>>, vector<1x1x16x16xbf16>
    %477 = vector.shape_cast %476 : vector<1x1x16x16xbf16> to vector<16x16xbf16>
    %478 = arith.extf %477 : vector<16x16xbf16> to vector<16x16xf32>
    %479 = arith.extf %18 : vector<16x16xbf16> to vector<16x16xf32>
    %480 = arith.mulf %474, %479 : vector<16x16xf32>
    %481 = arith.extf %20 : vector<16x16xbf16> to vector<16x16xf32>
    %482 = arith.mulf %478, %481 : vector<16x16xf32>
    %483 = arith.subf %480, %482 : vector<16x16xf32>
    %484 = arith.extf %20 : vector<16x16xbf16> to vector<16x16xf32>
    %485 = arith.mulf %474, %484 : vector<16x16xf32>
    %486 = arith.extf %18 : vector<16x16xbf16> to vector<16x16xf32>
    %487 = arith.mulf %478, %486 : vector<16x16xf32>
    %488 = arith.addf %485, %487 : vector<16x16xf32>
    %489 = arith.extf %22 : vector<16x16xbf16> to vector<16x16xf32>
    %490 = arith.mulf %468, %489 : vector<16x16xf32>
    %491 = arith.extf %24 : vector<16x16xbf16> to vector<16x16xf32>
    %492 = arith.mulf %470, %491 : vector<16x16xf32>
    %493 = arith.subf %490, %492 : vector<16x16xf32>
    %494 = arith.extf %24 : vector<16x16xbf16> to vector<16x16xf32>
    %495 = arith.mulf %468, %494 : vector<16x16xf32>
    %496 = arith.extf %22 : vector<16x16xbf16> to vector<16x16xf32>
    %497 = arith.mulf %470, %496 : vector<16x16xf32>
    %498 = arith.addf %495, %497 : vector<16x16xf32>
    %cst_156 = arith.constant 0.699999988 : f32
    %499 = vector.broadcast %cst_156 : f32 to vector<16x16xf32>
    %500 = arith.mulf %499, %493 : vector<16x16xf32>
    %cst_157 = arith.constant 3.000000e-01 : f32
    %501 = vector.broadcast %cst_157 : f32 to vector<16x16xf32>
    %502 = arith.mulf %501, %483 : vector<16x16xf32>
    %503 = arith.addf %500, %502 : vector<16x16xf32>
    %cst_158 = arith.constant 0.699999988 : f32
    %504 = vector.broadcast %cst_158 : f32 to vector<16x16xf32>
    %505 = arith.mulf %504, %498 : vector<16x16xf32>
    %cst_159 = arith.constant 3.000000e-01 : f32
    %506 = vector.broadcast %cst_159 : f32 to vector<16x16xf32>
    %507 = arith.mulf %506, %488 : vector<16x16xf32>
    %508 = arith.addf %505, %507 : vector<16x16xf32>
    %509 = arith.truncf %503 : vector<16x16xf32> to vector<16x16xbf16>
    %510 = arith.truncf %508 : vector<16x16xf32> to vector<16x16xbf16>
    %511 = arith.addf %503, %508 : vector<16x16xf32>
    %512 = arith.truncf %511 : vector<16x16xf32> to vector<16x16xbf16>
    %cst_160 = arith.constant dense<0.000000e+00> : vector<16x16xf32>
    %513 = tpu.matmul %1, %509, %cst_160 {dimension_numbers = #tpu.dot_dimension_numbers<[1], [0], [0], [1], [0, 0, 1, 1], [], []>} : vector<16x16xbf16>, vector<16x16xbf16>, vector<16x16xf32> -> vector<16x16xf32>
    %cst_161 = arith.constant dense<0.000000e+00> : vector<16x16xf32>
    %514 = tpu.matmul %3, %510, %cst_161 {dimension_numbers = #tpu.dot_dimension_numbers<[1], [0], [0], [1], [0, 0, 1, 1], [], []>} : vector<16x16xbf16>, vector<16x16xbf16>, vector<16x16xf32> -> vector<16x16xf32>
    %cst_162 = arith.constant dense<0.000000e+00> : vector<16x16xf32>
    %515 = tpu.matmul %5, %512, %cst_162 {dimension_numbers = #tpu.dot_dimension_numbers<[1], [0], [0], [1], [0, 0, 1, 1], [], []>} : vector<16x16xbf16>, vector<16x16xbf16>, vector<16x16xf32> -> vector<16x16xf32>
    %516 = arith.subf %513, %514 : vector<16x16xf32>
    %517 = arith.subf %515, %513 : vector<16x16xf32>
    %518 = arith.subf %517, %514 : vector<16x16xf32>
    %519 = arith.truncf %516 : vector<16x16xf32> to vector<16x16xbf16>
    %520 = arith.truncf %518 : vector<16x16xf32> to vector<16x16xbf16>
    %cst_163 = arith.constant dense<0.000000e+00> : vector<16x16xf32>
    %521 = tpu.matmul %519, %9, %cst_163 {dimension_numbers = #tpu.dot_dimension_numbers<[1], [0], [0], [1], [0, 0, 1, 1], [], []>} : vector<16x16xbf16>, vector<16x16xbf16>, vector<16x16xf32> -> vector<16x16xf32>
    %cst_164 = arith.constant dense<0.000000e+00> : vector<16x16xf32>
    %522 = tpu.matmul %520, %11, %cst_164 {dimension_numbers = #tpu.dot_dimension_numbers<[1], [0], [0], [1], [0, 0, 1, 1], [], []>} : vector<16x16xbf16>, vector<16x16xbf16>, vector<16x16xf32> -> vector<16x16xf32>
    %523 = arith.addf %516, %518 : vector<16x16xf32>
    %524 = arith.truncf %523 : vector<16x16xf32> to vector<16x16xbf16>
    %cst_165 = arith.constant dense<0.000000e+00> : vector<16x16xf32>
    %525 = tpu.matmul %524, %13, %cst_165 {dimension_numbers = #tpu.dot_dimension_numbers<[1], [0], [0], [1], [0, 0, 1, 1], [], []>} : vector<16x16xbf16>, vector<16x16xbf16>, vector<16x16xf32> -> vector<16x16xf32>
    %526 = arith.subf %521, %522 : vector<16x16xf32>
    %527 = arith.subf %525, %521 : vector<16x16xf32>
    %528 = arith.subf %527, %522 : vector<16x16xf32>
    %529 = arith.extf %26 : vector<16x16xbf16> to vector<16x16xf32>
    %530 = arith.mulf %526, %529 : vector<16x16xf32>
    %531 = arith.extf %28 : vector<16x16xbf16> to vector<16x16xf32>
    %532 = arith.mulf %528, %531 : vector<16x16xf32>
    %533 = arith.subf %530, %532 : vector<16x16xf32>
    %534 = arith.extf %28 : vector<16x16xbf16> to vector<16x16xf32>
    %535 = arith.mulf %526, %534 : vector<16x16xf32>
    %536 = arith.extf %26 : vector<16x16xbf16> to vector<16x16xf32>
    %537 = arith.mulf %528, %536 : vector<16x16xf32>
    %538 = arith.addf %535, %537 : vector<16x16xf32>
    %539 = arith.truncf %533 : vector<16x16xf32> to vector<16x16xbf16>
    %540 = arith.truncf %538 : vector<16x16xf32> to vector<16x16xbf16>
    %541 = arith.addf %533, %538 : vector<16x16xf32>
    %542 = arith.truncf %541 : vector<16x16xf32> to vector<16x16xbf16>
    %cst_166 = arith.constant dense<0.000000e+00> : vector<16x16xf32>
    %543 = tpu.matmul %1, %539, %cst_166 {dimension_numbers = #tpu.dot_dimension_numbers<[1], [0], [0], [1], [0, 0, 1, 1], [], []>} : vector<16x16xbf16>, vector<16x16xbf16>, vector<16x16xf32> -> vector<16x16xf32>
    %cst_167 = arith.constant dense<0.000000e+00> : vector<16x16xf32>
    %544 = tpu.matmul %3, %540, %cst_167 {dimension_numbers = #tpu.dot_dimension_numbers<[1], [0], [0], [1], [0, 0, 1, 1], [], []>} : vector<16x16xbf16>, vector<16x16xbf16>, vector<16x16xf32> -> vector<16x16xf32>
    %cst_168 = arith.constant dense<0.000000e+00> : vector<16x16xf32>
    %545 = tpu.matmul %7, %542, %cst_168 {dimension_numbers = #tpu.dot_dimension_numbers<[1], [0], [0], [1], [0, 0, 1, 1], [], []>} : vector<16x16xbf16>, vector<16x16xbf16>, vector<16x16xf32> -> vector<16x16xf32>
    %546 = arith.addf %543, %544 : vector<16x16xf32>
    %547 = arith.subf %545, %543 : vector<16x16xf32>
    %548 = arith.addf %547, %544 : vector<16x16xf32>
    %549 = arith.truncf %546 : vector<16x16xf32> to vector<16x16xbf16>
    %550 = arith.truncf %548 : vector<16x16xf32> to vector<16x16xbf16>
    %cst_169 = arith.constant dense<0.000000e+00> : vector<16x16xf32>
    %551 = tpu.matmul %549, %9, %cst_169 {dimension_numbers = #tpu.dot_dimension_numbers<[1], [0], [0], [1], [0, 0, 1, 1], [], []>} : vector<16x16xbf16>, vector<16x16xbf16>, vector<16x16xf32> -> vector<16x16xf32>
    %cst_170 = arith.constant dense<0.000000e+00> : vector<16x16xf32>
    %552 = tpu.matmul %550, %11, %cst_170 {dimension_numbers = #tpu.dot_dimension_numbers<[1], [0], [0], [1], [0, 0, 1, 1], [], []>} : vector<16x16xbf16>, vector<16x16xbf16>, vector<16x16xf32> -> vector<16x16xf32>
    %553 = arith.subf %546, %548 : vector<16x16xf32>
    %554 = arith.truncf %553 : vector<16x16xf32> to vector<16x16xbf16>
    %cst_171 = arith.constant dense<0.000000e+00> : vector<16x16xf32>
    %555 = tpu.matmul %554, %13, %cst_171 {dimension_numbers = #tpu.dot_dimension_numbers<[1], [0], [0], [1], [0, 0, 1, 1], [], []>} : vector<16x16xbf16>, vector<16x16xbf16>, vector<16x16xf32> -> vector<16x16xf32>
    %556 = arith.addf %551, %552 : vector<16x16xf32>
    %557 = arith.subf %551, %552 : vector<16x16xf32>
    %558 = arith.subf %557, %555 : vector<16x16xf32>
    %c6_i32 = arith.constant 6 : i32
    %c0_172 = arith.constant 0 : index
    %559 = arith.index_cast %c6_i32 : i32 to index
    %c0_173 = arith.constant 0 : index
    %c0_174 = arith.constant 0 : index
    %560 = vector.load %arg2[%c0_172, %559, %c0_173, %c0_174] : memref<1x8x16x16xbf16, #tpu.memory_space<vmem>>, vector<1x1x16x16xbf16>
    %561 = vector.shape_cast %560 : vector<1x1x16x16xbf16> to vector<16x16xbf16>
    %562 = arith.extf %561 : vector<16x16xbf16> to vector<16x16xf32>
    %c0_175 = arith.constant 0 : index
    %563 = arith.index_cast %c6_i32 : i32 to index
    %c0_176 = arith.constant 0 : index
    %c0_177 = arith.constant 0 : index
    %564 = vector.load %arg3[%c0_175, %563, %c0_176, %c0_177] : memref<1x8x16x16xbf16, #tpu.memory_space<vmem>>, vector<1x1x16x16xbf16>
    %565 = vector.shape_cast %564 : vector<1x1x16x16xbf16> to vector<16x16xbf16>
    %566 = arith.extf %565 : vector<16x16xbf16> to vector<16x16xf32>
    %567 = arith.extf %18 : vector<16x16xbf16> to vector<16x16xf32>
    %568 = arith.mulf %562, %567 : vector<16x16xf32>
    %569 = arith.extf %20 : vector<16x16xbf16> to vector<16x16xf32>
    %570 = arith.mulf %566, %569 : vector<16x16xf32>
    %571 = arith.subf %568, %570 : vector<16x16xf32>
    %572 = arith.extf %20 : vector<16x16xbf16> to vector<16x16xf32>
    %573 = arith.mulf %562, %572 : vector<16x16xf32>
    %574 = arith.extf %18 : vector<16x16xbf16> to vector<16x16xf32>
    %575 = arith.mulf %566, %574 : vector<16x16xf32>
    %576 = arith.addf %573, %575 : vector<16x16xf32>
    %577 = arith.extf %22 : vector<16x16xbf16> to vector<16x16xf32>
    %578 = arith.mulf %556, %577 : vector<16x16xf32>
    %579 = arith.extf %24 : vector<16x16xbf16> to vector<16x16xf32>
    %580 = arith.mulf %558, %579 : vector<16x16xf32>
    %581 = arith.subf %578, %580 : vector<16x16xf32>
    %582 = arith.extf %24 : vector<16x16xbf16> to vector<16x16xf32>
    %583 = arith.mulf %556, %582 : vector<16x16xf32>
    %584 = arith.extf %22 : vector<16x16xbf16> to vector<16x16xf32>
    %585 = arith.mulf %558, %584 : vector<16x16xf32>
    %586 = arith.addf %583, %585 : vector<16x16xf32>
    %cst_178 = arith.constant 0.699999988 : f32
    %587 = vector.broadcast %cst_178 : f32 to vector<16x16xf32>
    %588 = arith.mulf %587, %581 : vector<16x16xf32>
    %cst_179 = arith.constant 3.000000e-01 : f32
    %589 = vector.broadcast %cst_179 : f32 to vector<16x16xf32>
    %590 = arith.mulf %589, %571 : vector<16x16xf32>
    %591 = arith.addf %588, %590 : vector<16x16xf32>
    %cst_180 = arith.constant 0.699999988 : f32
    %592 = vector.broadcast %cst_180 : f32 to vector<16x16xf32>
    %593 = arith.mulf %592, %586 : vector<16x16xf32>
    %cst_181 = arith.constant 3.000000e-01 : f32
    %594 = vector.broadcast %cst_181 : f32 to vector<16x16xf32>
    %595 = arith.mulf %594, %576 : vector<16x16xf32>
    %596 = arith.addf %593, %595 : vector<16x16xf32>
    %597 = arith.truncf %591 : vector<16x16xf32> to vector<16x16xbf16>
    %598 = arith.truncf %596 : vector<16x16xf32> to vector<16x16xbf16>
    %599 = arith.addf %591, %596 : vector<16x16xf32>
    %600 = arith.truncf %599 : vector<16x16xf32> to vector<16x16xbf16>
    %cst_182 = arith.constant dense<0.000000e+00> : vector<16x16xf32>
    %601 = tpu.matmul %1, %597, %cst_182 {dimension_numbers = #tpu.dot_dimension_numbers<[1], [0], [0], [1], [0, 0, 1, 1], [], []>} : vector<16x16xbf16>, vector<16x16xbf16>, vector<16x16xf32> -> vector<16x16xf32>
    %cst_183 = arith.constant dense<0.000000e+00> : vector<16x16xf32>
    %602 = tpu.matmul %3, %598, %cst_183 {dimension_numbers = #tpu.dot_dimension_numbers<[1], [0], [0], [1], [0, 0, 1, 1], [], []>} : vector<16x16xbf16>, vector<16x16xbf16>, vector<16x16xf32> -> vector<16x16xf32>
    %cst_184 = arith.constant dense<0.000000e+00> : vector<16x16xf32>
    %603 = tpu.matmul %5, %600, %cst_184 {dimension_numbers = #tpu.dot_dimension_numbers<[1], [0], [0], [1], [0, 0, 1, 1], [], []>} : vector<16x16xbf16>, vector<16x16xbf16>, vector<16x16xf32> -> vector<16x16xf32>
    %604 = arith.subf %601, %602 : vector<16x16xf32>
    %605 = arith.subf %603, %601 : vector<16x16xf32>
    %606 = arith.subf %605, %602 : vector<16x16xf32>
    %607 = arith.truncf %604 : vector<16x16xf32> to vector<16x16xbf16>
    %608 = arith.truncf %606 : vector<16x16xf32> to vector<16x16xbf16>
    %cst_185 = arith.constant dense<0.000000e+00> : vector<16x16xf32>
    %609 = tpu.matmul %607, %9, %cst_185 {dimension_numbers = #tpu.dot_dimension_numbers<[1], [0], [0], [1], [0, 0, 1, 1], [], []>} : vector<16x16xbf16>, vector<16x16xbf16>, vector<16x16xf32> -> vector<16x16xf32>
    %cst_186 = arith.constant dense<0.000000e+00> : vector<16x16xf32>
    %610 = tpu.matmul %608, %11, %cst_186 {dimension_numbers = #tpu.dot_dimension_numbers<[1], [0], [0], [1], [0, 0, 1, 1], [], []>} : vector<16x16xbf16>, vector<16x16xbf16>, vector<16x16xf32> -> vector<16x16xf32>
    %611 = arith.addf %604, %606 : vector<16x16xf32>
    %612 = arith.truncf %611 : vector<16x16xf32> to vector<16x16xbf16>
    %cst_187 = arith.constant dense<0.000000e+00> : vector<16x16xf32>
    %613 = tpu.matmul %612, %13, %cst_187 {dimension_numbers = #tpu.dot_dimension_numbers<[1], [0], [0], [1], [0, 0, 1, 1], [], []>} : vector<16x16xbf16>, vector<16x16xbf16>, vector<16x16xf32> -> vector<16x16xf32>
    %614 = arith.subf %609, %610 : vector<16x16xf32>
    %615 = arith.subf %613, %609 : vector<16x16xf32>
    %616 = arith.subf %615, %610 : vector<16x16xf32>
    %617 = arith.extf %26 : vector<16x16xbf16> to vector<16x16xf32>
    %618 = arith.mulf %614, %617 : vector<16x16xf32>
    %619 = arith.extf %28 : vector<16x16xbf16> to vector<16x16xf32>
    %620 = arith.mulf %616, %619 : vector<16x16xf32>
    %621 = arith.subf %618, %620 : vector<16x16xf32>
    %622 = arith.extf %28 : vector<16x16xbf16> to vector<16x16xf32>
    %623 = arith.mulf %614, %622 : vector<16x16xf32>
    %624 = arith.extf %26 : vector<16x16xbf16> to vector<16x16xf32>
    %625 = arith.mulf %616, %624 : vector<16x16xf32>
    %626 = arith.addf %623, %625 : vector<16x16xf32>
    %627 = arith.truncf %621 : vector<16x16xf32> to vector<16x16xbf16>
    %628 = arith.truncf %626 : vector<16x16xf32> to vector<16x16xbf16>
    %629 = arith.addf %621, %626 : vector<16x16xf32>
    %630 = arith.truncf %629 : vector<16x16xf32> to vector<16x16xbf16>
    %cst_188 = arith.constant dense<0.000000e+00> : vector<16x16xf32>
    %631 = tpu.matmul %1, %627, %cst_188 {dimension_numbers = #tpu.dot_dimension_numbers<[1], [0], [0], [1], [0, 0, 1, 1], [], []>} : vector<16x16xbf16>, vector<16x16xbf16>, vector<16x16xf32> -> vector<16x16xf32>
    %cst_189 = arith.constant dense<0.000000e+00> : vector<16x16xf32>
    %632 = tpu.matmul %3, %628, %cst_189 {dimension_numbers = #tpu.dot_dimension_numbers<[1], [0], [0], [1], [0, 0, 1, 1], [], []>} : vector<16x16xbf16>, vector<16x16xbf16>, vector<16x16xf32> -> vector<16x16xf32>
    %cst_190 = arith.constant dense<0.000000e+00> : vector<16x16xf32>
    %633 = tpu.matmul %7, %630, %cst_190 {dimension_numbers = #tpu.dot_dimension_numbers<[1], [0], [0], [1], [0, 0, 1, 1], [], []>} : vector<16x16xbf16>, vector<16x16xbf16>, vector<16x16xf32> -> vector<16x16xf32>
    %634 = arith.addf %631, %632 : vector<16x16xf32>
    %635 = arith.subf %633, %631 : vector<16x16xf32>
    %636 = arith.addf %635, %632 : vector<16x16xf32>
    %637 = arith.truncf %634 : vector<16x16xf32> to vector<16x16xbf16>
    %638 = arith.truncf %636 : vector<16x16xf32> to vector<16x16xbf16>
    %cst_191 = arith.constant dense<0.000000e+00> : vector<16x16xf32>
    %639 = tpu.matmul %637, %9, %cst_191 {dimension_numbers = #tpu.dot_dimension_numbers<[1], [0], [0], [1], [0, 0, 1, 1], [], []>} : vector<16x16xbf16>, vector<16x16xbf16>, vector<16x16xf32> -> vector<16x16xf32>
    %cst_192 = arith.constant dense<0.000000e+00> : vector<16x16xf32>
    %640 = tpu.matmul %638, %11, %cst_192 {dimension_numbers = #tpu.dot_dimension_numbers<[1], [0], [0], [1], [0, 0, 1, 1], [], []>} : vector<16x16xbf16>, vector<16x16xbf16>, vector<16x16xf32> -> vector<16x16xf32>
    %641 = arith.subf %634, %636 : vector<16x16xf32>
    %642 = arith.truncf %641 : vector<16x16xf32> to vector<16x16xbf16>
    %cst_193 = arith.constant dense<0.000000e+00> : vector<16x16xf32>
    %643 = tpu.matmul %642, %13, %cst_193 {dimension_numbers = #tpu.dot_dimension_numbers<[1], [0], [0], [1], [0, 0, 1, 1], [], []>} : vector<16x16xbf16>, vector<16x16xbf16>, vector<16x16xf32> -> vector<16x16xf32>
    %644 = arith.addf %639, %640 : vector<16x16xf32>
    %645 = arith.subf %639, %640 : vector<16x16xf32>
    %646 = arith.subf %645, %643 : vector<16x16xf32>
    %c7_i32 = arith.constant 7 : i32
    %c0_194 = arith.constant 0 : index
    %647 = arith.index_cast %c7_i32 : i32 to index
    %c0_195 = arith.constant 0 : index
    %c0_196 = arith.constant 0 : index
    %648 = vector.load %arg2[%c0_194, %647, %c0_195, %c0_196] : memref<1x8x16x16xbf16, #tpu.memory_space<vmem>>, vector<1x1x16x16xbf16>
    %649 = vector.shape_cast %648 : vector<1x1x16x16xbf16> to vector<16x16xbf16>
    %650 = arith.extf %649 : vector<16x16xbf16> to vector<16x16xf32>
    %c0_197 = arith.constant 0 : index
    %651 = arith.index_cast %c7_i32 : i32 to index
    %c0_198 = arith.constant 0 : index
    %c0_199 = arith.constant 0 : index
    %652 = vector.load %arg3[%c0_197, %651, %c0_198, %c0_199] : memref<1x8x16x16xbf16, #tpu.memory_space<vmem>>, vector<1x1x16x16xbf16>
    %653 = vector.shape_cast %652 : vector<1x1x16x16xbf16> to vector<16x16xbf16>
    %654 = arith.extf %653 : vector<16x16xbf16> to vector<16x16xf32>
    %655 = arith.extf %18 : vector<16x16xbf16> to vector<16x16xf32>
    %656 = arith.mulf %650, %655 : vector<16x16xf32>
    %657 = arith.extf %20 : vector<16x16xbf16> to vector<16x16xf32>
    %658 = arith.mulf %654, %657 : vector<16x16xf32>
    %659 = arith.subf %656, %658 : vector<16x16xf32>
    %660 = arith.extf %20 : vector<16x16xbf16> to vector<16x16xf32>
    %661 = arith.mulf %650, %660 : vector<16x16xf32>
    %662 = arith.extf %18 : vector<16x16xbf16> to vector<16x16xf32>
    %663 = arith.mulf %654, %662 : vector<16x16xf32>
    %664 = arith.addf %661, %663 : vector<16x16xf32>
    %665 = arith.extf %22 : vector<16x16xbf16> to vector<16x16xf32>
    %666 = arith.mulf %644, %665 : vector<16x16xf32>
    %667 = arith.extf %24 : vector<16x16xbf16> to vector<16x16xf32>
    %668 = arith.mulf %646, %667 : vector<16x16xf32>
    %669 = arith.subf %666, %668 : vector<16x16xf32>
    %670 = arith.extf %24 : vector<16x16xbf16> to vector<16x16xf32>
    %671 = arith.mulf %644, %670 : vector<16x16xf32>
    %672 = arith.extf %22 : vector<16x16xbf16> to vector<16x16xf32>
    %673 = arith.mulf %646, %672 : vector<16x16xf32>
    %674 = arith.addf %671, %673 : vector<16x16xf32>
    %cst_200 = arith.constant 0.699999988 : f32
    %675 = vector.broadcast %cst_200 : f32 to vector<16x16xf32>
    %676 = arith.mulf %675, %669 : vector<16x16xf32>
    %cst_201 = arith.constant 3.000000e-01 : f32
    %677 = vector.broadcast %cst_201 : f32 to vector<16x16xf32>
    %678 = arith.mulf %677, %659 : vector<16x16xf32>
    %679 = arith.addf %676, %678 : vector<16x16xf32>
    %cst_202 = arith.constant 0.699999988 : f32
    %680 = vector.broadcast %cst_202 : f32 to vector<16x16xf32>
    %681 = arith.mulf %680, %674 : vector<16x16xf32>
    %cst_203 = arith.constant 3.000000e-01 : f32
    %682 = vector.broadcast %cst_203 : f32 to vector<16x16xf32>
    %683 = arith.mulf %682, %664 : vector<16x16xf32>
    %684 = arith.addf %681, %683 : vector<16x16xf32>
    %685 = arith.truncf %679 : vector<16x16xf32> to vector<16x16xbf16>
    %686 = arith.truncf %684 : vector<16x16xf32> to vector<16x16xbf16>
    %687 = arith.addf %679, %684 : vector<16x16xf32>
    %688 = arith.truncf %687 : vector<16x16xf32> to vector<16x16xbf16>
    %cst_204 = arith.constant dense<0.000000e+00> : vector<16x16xf32>
    %689 = tpu.matmul %1, %685, %cst_204 {dimension_numbers = #tpu.dot_dimension_numbers<[1], [0], [0], [1], [0, 0, 1, 1], [], []>} : vector<16x16xbf16>, vector<16x16xbf16>, vector<16x16xf32> -> vector<16x16xf32>
    %cst_205 = arith.constant dense<0.000000e+00> : vector<16x16xf32>
    %690 = tpu.matmul %3, %686, %cst_205 {dimension_numbers = #tpu.dot_dimension_numbers<[1], [0], [0], [1], [0, 0, 1, 1], [], []>} : vector<16x16xbf16>, vector<16x16xbf16>, vector<16x16xf32> -> vector<16x16xf32>
    %cst_206 = arith.constant dense<0.000000e+00> : vector<16x16xf32>
    %691 = tpu.matmul %5, %688, %cst_206 {dimension_numbers = #tpu.dot_dimension_numbers<[1], [0], [0], [1], [0, 0, 1, 1], [], []>} : vector<16x16xbf16>, vector<16x16xbf16>, vector<16x16xf32> -> vector<16x16xf32>
    %692 = arith.subf %689, %690 : vector<16x16xf32>
    %693 = arith.subf %691, %689 : vector<16x16xf32>
    %694 = arith.subf %693, %690 : vector<16x16xf32>
    %695 = arith.truncf %692 : vector<16x16xf32> to vector<16x16xbf16>
    %696 = arith.truncf %694 : vector<16x16xf32> to vector<16x16xbf16>
    %cst_207 = arith.constant dense<0.000000e+00> : vector<16x16xf32>
    %697 = tpu.matmul %695, %9, %cst_207 {dimension_numbers = #tpu.dot_dimension_numbers<[1], [0], [0], [1], [0, 0, 1, 1], [], []>} : vector<16x16xbf16>, vector<16x16xbf16>, vector<16x16xf32> -> vector<16x16xf32>
    %cst_208 = arith.constant dense<0.000000e+00> : vector<16x16xf32>
    %698 = tpu.matmul %696, %11, %cst_208 {dimension_numbers = #tpu.dot_dimension_numbers<[1], [0], [0], [1], [0, 0, 1, 1], [], []>} : vector<16x16xbf16>, vector<16x16xbf16>, vector<16x16xf32> -> vector<16x16xf32>
    %699 = arith.addf %692, %694 : vector<16x16xf32>
    %700 = arith.truncf %699 : vector<16x16xf32> to vector<16x16xbf16>
    %cst_209 = arith.constant dense<0.000000e+00> : vector<16x16xf32>
    %701 = tpu.matmul %700, %13, %cst_209 {dimension_numbers = #tpu.dot_dimension_numbers<[1], [0], [0], [1], [0, 0, 1, 1], [], []>} : vector<16x16xbf16>, vector<16x16xbf16>, vector<16x16xf32> -> vector<16x16xf32>
    %702 = arith.subf %697, %698 : vector<16x16xf32>
    %703 = arith.subf %701, %697 : vector<16x16xf32>
    %704 = arith.subf %703, %698 : vector<16x16xf32>
    %705 = arith.extf %26 : vector<16x16xbf16> to vector<16x16xf32>
    %706 = arith.mulf %702, %705 : vector<16x16xf32>
    %707 = arith.extf %28 : vector<16x16xbf16> to vector<16x16xf32>
    %708 = arith.mulf %704, %707 : vector<16x16xf32>
    %709 = arith.subf %706, %708 : vector<16x16xf32>
    %710 = arith.extf %28 : vector<16x16xbf16> to vector<16x16xf32>
    %711 = arith.mulf %702, %710 : vector<16x16xf32>
    %712 = arith.extf %26 : vector<16x16xbf16> to vector<16x16xf32>
    %713 = arith.mulf %704, %712 : vector<16x16xf32>
    %714 = arith.addf %711, %713 : vector<16x16xf32>
    %715 = arith.truncf %709 : vector<16x16xf32> to vector<16x16xbf16>
    %716 = arith.truncf %714 : vector<16x16xf32> to vector<16x16xbf16>
    %717 = arith.addf %709, %714 : vector<16x16xf32>
    %718 = arith.truncf %717 : vector<16x16xf32> to vector<16x16xbf16>
    %cst_210 = arith.constant dense<0.000000e+00> : vector<16x16xf32>
    %719 = tpu.matmul %1, %715, %cst_210 {dimension_numbers = #tpu.dot_dimension_numbers<[1], [0], [0], [1], [0, 0, 1, 1], [], []>} : vector<16x16xbf16>, vector<16x16xbf16>, vector<16x16xf32> -> vector<16x16xf32>
    %cst_211 = arith.constant dense<0.000000e+00> : vector<16x16xf32>
    %720 = tpu.matmul %3, %716, %cst_211 {dimension_numbers = #tpu.dot_dimension_numbers<[1], [0], [0], [1], [0, 0, 1, 1], [], []>} : vector<16x16xbf16>, vector<16x16xbf16>, vector<16x16xf32> -> vector<16x16xf32>
    %cst_212 = arith.constant dense<0.000000e+00> : vector<16x16xf32>
    %721 = tpu.matmul %7, %718, %cst_212 {dimension_numbers = #tpu.dot_dimension_numbers<[1], [0], [0], [1], [0, 0, 1, 1], [], []>} : vector<16x16xbf16>, vector<16x16xbf16>, vector<16x16xf32> -> vector<16x16xf32>
    %722 = arith.addf %719, %720 : vector<16x16xf32>
    %723 = arith.subf %721, %719 : vector<16x16xf32>
    %724 = arith.addf %723, %720 : vector<16x16xf32>
    %725 = arith.truncf %722 : vector<16x16xf32> to vector<16x16xbf16>
    %726 = arith.truncf %724 : vector<16x16xf32> to vector<16x16xbf16>
    %cst_213 = arith.constant dense<0.000000e+00> : vector<16x16xf32>
    %727 = tpu.matmul %725, %9, %cst_213 {dimension_numbers = #tpu.dot_dimension_numbers<[1], [0], [0], [1], [0, 0, 1, 1], [], []>} : vector<16x16xbf16>, vector<16x16xbf16>, vector<16x16xf32> -> vector<16x16xf32>
    %cst_214 = arith.constant dense<0.000000e+00> : vector<16x16xf32>
    %728 = tpu.matmul %726, %11, %cst_214 {dimension_numbers = #tpu.dot_dimension_numbers<[1], [0], [0], [1], [0, 0, 1, 1], [], []>} : vector<16x16xbf16>, vector<16x16xbf16>, vector<16x16xf32> -> vector<16x16xf32>
    %729 = arith.subf %722, %724 : vector<16x16xf32>
    %730 = arith.truncf %729 : vector<16x16xf32> to vector<16x16xbf16>
    %cst_215 = arith.constant dense<0.000000e+00> : vector<16x16xf32>
    %731 = tpu.matmul %730, %13, %cst_215 {dimension_numbers = #tpu.dot_dimension_numbers<[1], [0], [0], [1], [0, 0, 1, 1], [], []>} : vector<16x16xbf16>, vector<16x16xbf16>, vector<16x16xf32> -> vector<16x16xf32>
    %732 = arith.addf %727, %728 : vector<16x16xf32>
    %733 = arith.subf %727, %728 : vector<16x16xf32>
    %734 = arith.subf %733, %731 : vector<16x16xf32>
    %c8_i32 = arith.constant 8 : i32
    %c0_216 = arith.constant 0 : index
    %c0_217 = arith.constant 0 : index
    %735 = vector.load %arg10[%c0_216, %c0_217] : memref<16x16xf32, #tpu.memory_space<vmem>>, vector<16x16xf32>
    tpu.vector_store %arg10[%c0_216, %c0_217], %732 {strides = array<i32>} : memref<16x16xf32, #tpu.memory_space<vmem>>, vector<16x16xf32>,
    %c0_218 = arith.constant 0 : index
    %c0_219 = arith.constant 0 : index
    %736 = vector.load %arg11[%c0_218, %c0_219] : memref<16x16xf32, #tpu.memory_space<vmem>>, vector<16x16xf32>
    tpu.vector_store %arg11[%c0_218, %c0_219], %734 {strides = array<i32>} : memref<16x16xf32, #tpu.memory_space<vmem>>, vector<16x16xf32>,
    %c0_i32_220 = arith.constant 0 : i32
    %737 = arith.cmpi eq, %arg1, %c0_i32_220 : i32
    %738 = arith.extui %737 : i1 to i32
    %c0_i32_221 = arith.constant 0 : i32
    %739 = arith.cmpi ne, %738, %c0_i32_221 : i32
    scf.if %739 {
      %c2_222 = arith.constant 2 : index
      %c0_223 = arith.constant 0 : index
      %c0_224 = arith.constant 0 : index
      %740 = vector.load %arg4[%c2_222, %c0_223, %c0_224] : memref<3x16x16xbf16, #tpu.memory_space<vmem>>, vector<1x16x16xbf16>
      %741 = vector.shape_cast %740 : vector<1x16x16xbf16> to vector<16x16xbf16>
      %c2_225 = arith.constant 2 : index
      %c0_226 = arith.constant 0 : index
      %c0_227 = arith.constant 0 : index
      %742 = vector.load %arg5[%c2_225, %c0_226, %c0_227] : memref<3x16x16xbf16, #tpu.memory_space<vmem>>, vector<1x16x16xbf16>
      %743 = vector.shape_cast %742 : vector<1x16x16xbf16> to vector<16x16xbf16>
      %744 = arith.extf %741 : vector<16x16xbf16> to vector<16x16xf32>
      %745 = arith.mulf %732, %744 : vector<16x16xf32>
      %746 = arith.extf %743 : vector<16x16xbf16> to vector<16x16xf32>
      %747 = arith.mulf %734, %746 : vector<16x16xf32>
      %748 = arith.subf %745, %747 : vector<16x16xf32>
      %749 = arith.extf %743 : vector<16x16xbf16> to vector<16x16xf32>
      %750 = arith.mulf %732, %749 : vector<16x16xf32>
      %751 = arith.extf %741 : vector<16x16xbf16> to vector<16x16xf32>
      %752 = arith.mulf %734, %751 : vector<16x16xf32>
      %753 = arith.addf %750, %752 : vector<16x16xf32>
      %c1_228 = arith.constant 1 : index
      %c0_229 = arith.constant 0 : index
      %c0_230 = arith.constant 0 : index
      %754 = vector.load %arg7[%c1_228, %c0_229, %c0_230] : memref<2x16x16xbf16, #tpu.memory_space<vmem>>, vector<1x16x16xbf16>
      %755 = vector.shape_cast %754 : vector<1x16x16xbf16> to vector<16x16xbf16>
      %c1_231 = arith.constant 1 : index
      %c0_232 = arith.constant 0 : index
      %c0_233 = arith.constant 0 : index
      %756 = vector.load %arg8[%c1_231, %c0_232, %c0_233] : memref<2x16x16xbf16, #tpu.memory_space<vmem>>, vector<1x16x16xbf16>
      %757 = vector.shape_cast %756 : vector<1x16x16xbf16> to vector<16x16xbf16>
      %758 = arith.truncf %748 : vector<16x16xf32> to vector<16x16xbf16>
      %759 = arith.truncf %753 : vector<16x16xf32> to vector<16x16xbf16>
      %760 = arith.addf %748, %753 : vector<16x16xf32>
      %761 = arith.truncf %760 : vector<16x16xf32> to vector<16x16xbf16>
      %cst_234 = arith.constant dense<0.000000e+00> : vector<16x16xf32>
      %762 = tpu.matmul %1, %758, %cst_234 {dimension_numbers = #tpu.dot_dimension_numbers<[1], [0], [0], [1], [0, 0, 1, 1], [], []>} : vector<16x16xbf16>, vector<16x16xbf16>, vector<16x16xf32> -> vector<16x16xf32>
      %cst_235 = arith.constant dense<0.000000e+00> : vector<16x16xf32>
      %763 = tpu.matmul %3, %759, %cst_235 {dimension_numbers = #tpu.dot_dimension_numbers<[1], [0], [0], [1], [0, 0, 1, 1], [], []>} : vector<16x16xbf16>, vector<16x16xbf16>, vector<16x16xf32> -> vector<16x16xf32>
      %cst_236 = arith.constant dense<0.000000e+00> : vector<16x16xf32>
      %764 = tpu.matmul %5, %761, %cst_236 {dimension_numbers = #tpu.dot_dimension_numbers<[1], [0], [0], [1], [0, 0, 1, 1], [], []>} : vector<16x16xbf16>, vector<16x16xbf16>, vector<16x16xf32> -> vector<16x16xf32>
      %765 = arith.subf %762, %763 : vector<16x16xf32>
      %766 = arith.subf %764, %762 : vector<16x16xf32>
      %767 = arith.subf %766, %763 : vector<16x16xf32>
      %768 = arith.truncf %765 : vector<16x16xf32> to vector<16x16xbf16>
      %769 = arith.truncf %767 : vector<16x16xf32> to vector<16x16xbf16>
      %cst_237 = arith.constant dense<0.000000e+00> : vector<16x16xf32>
      %770 = tpu.matmul %768, %9, %cst_237 {dimension_numbers = #tpu.dot_dimension_numbers<[1], [0], [0], [1], [0, 0, 1, 1], [], []>} : vector<16x16xbf16>, vector<16x16xbf16>, vector<16x16xf32> -> vector<16x16xf32>
      %cst_238 = arith.constant dense<0.000000e+00> : vector<16x16xf32>
      %771 = tpu.matmul %769, %11, %cst_238 {dimension_numbers = #tpu.dot_dimension_numbers<[1], [0], [0], [1], [0, 0, 1, 1], [], []>} : vector<16x16xbf16>, vector<16x16xbf16>, vector<16x16xf32> -> vector<16x16xf32>
      %772 = arith.addf %765, %767 : vector<16x16xf32>
      %773 = arith.truncf %772 : vector<16x16xf32> to vector<16x16xbf16>
      %cst_239 = arith.constant dense<0.000000e+00> : vector<16x16xf32>
      %774 = tpu.matmul %773, %13, %cst_239 {dimension_numbers = #tpu.dot_dimension_numbers<[1], [0], [0], [1], [0, 0, 1, 1], [], []>} : vector<16x16xbf16>, vector<16x16xbf16>, vector<16x16xf32> -> vector<16x16xf32>
      %775 = arith.subf %770, %771 : vector<16x16xf32>
      %776 = arith.subf %774, %770 : vector<16x16xf32>
      %777 = arith.subf %776, %771 : vector<16x16xf32>
      %778 = arith.extf %755 : vector<16x16xbf16> to vector<16x16xf32>
      %779 = arith.mulf %775, %778 : vector<16x16xf32>
      %780 = arith.extf %757 : vector<16x16xbf16> to vector<16x16xf32>
      %781 = arith.mulf %777, %780 : vector<16x16xf32>
      %782 = arith.subf %779, %781 : vector<16x16xf32>
      %783 = arith.extf %757 : vector<16x16xbf16> to vector<16x16xf32>
      %784 = arith.mulf %775, %783 : vector<16x16xf32>
      %785 = arith.extf %755 : vector<16x16xbf16> to vector<16x16xf32>
      %786 = arith.mulf %777, %785 : vector<16x16xf32>
      %787 = arith.addf %784, %786 : vector<16x16xf32>
      %788 = arith.truncf %782 : vector<16x16xf32> to vector<16x16xbf16>
      %789 = arith.truncf %787 : vector<16x16xf32> to vector<16x16xbf16>
      %790 = arith.addf %782, %787 : vector<16x16xf32>
      %791 = arith.truncf %790 : vector<16x16xf32> to vector<16x16xbf16>
      %cst_240 = arith.constant dense<0.000000e+00> : vector<16x16xf32>
      %792 = tpu.matmul %1, %788, %cst_240 {dimension_numbers = #tpu.dot_dimension_numbers<[1], [0], [0], [1], [0, 0, 1, 1], [], []>} : vector<16x16xbf16>, vector<16x16xbf16>, vector<16x16xf32> -> vector<16x16xf32>
      %cst_241 = arith.constant dense<0.000000e+00> : vector<16x16xf32>
      %793 = tpu.matmul %3, %789, %cst_241 {dimension_numbers = #tpu.dot_dimension_numbers<[1], [0], [0], [1], [0, 0, 1, 1], [], []>} : vector<16x16xbf16>, vector<16x16xbf16>, vector<16x16xf32> -> vector<16x16xf32>
      %cst_242 = arith.constant dense<0.000000e+00> : vector<16x16xf32>
      %794 = tpu.matmul %7, %791, %cst_242 {dimension_numbers = #tpu.dot_dimension_numbers<[1], [0], [0], [1], [0, 0, 1, 1], [], []>} : vector<16x16xbf16>, vector<16x16xbf16>, vector<16x16xf32> -> vector<16x16xf32>
      %795 = arith.addf %792, %793 : vector<16x16xf32>
      %796 = arith.subf %794, %792 : vector<16x16xf32>
      %797 = arith.addf %796, %793 : vector<16x16xf32>
      %798 = arith.truncf %795 : vector<16x16xf32> to vector<16x16xbf16>
      %799 = arith.truncf %797 : vector<16x16xf32> to vector<16x16xbf16>
      %cst_243 = arith.constant dense<0.000000e+00> : vector<16x16xf32>
      %800 = tpu.matmul %798, %9, %cst_243 {dimension_numbers = #tpu.dot_dimension_numbers<[1], [0], [0], [1], [0, 0, 1, 1], [], []>} : vector<16x16xbf16>, vector<16x16xbf16>, vector<16x16xf32> -> vector<16x16xf32>
      %cst_244 = arith.constant dense<0.000000e+00> : vector<16x16xf32>
      %801 = tpu.matmul %799, %11, %cst_244 {dimension_numbers = #tpu.dot_dimension_numbers<[1], [0], [0], [1], [0, 0, 1, 1], [], []>} : vector<16x16xbf16>, vector<16x16xbf16>, vector<16x16xf32> -> vector<16x16xf32>
      %802 = arith.subf %795, %797 : vector<16x16xf32>
      %803 = arith.truncf %802 : vector<16x16xf32> to vector<16x16xbf16>
      %cst_245 = arith.constant dense<0.000000e+00> : vector<16x16xf32>
      %804 = tpu.matmul %803, %13, %cst_245 {dimension_numbers = #tpu.dot_dimension_numbers<[1], [0], [0], [1], [0, 0, 1, 1], [], []>} : vector<16x16xbf16>, vector<16x16xbf16>, vector<16x16xf32> -> vector<16x16xf32>
      %805 = arith.addf %800, %801 : vector<16x16xf32>
      %806 = arith.subf %800, %801 : vector<16x16xf32>
      %807 = arith.subf %806, %804 : vector<16x16xf32>
      %808 = arith.mulf %805, %805 : vector<16x16xf32>
      %809 = arith.mulf %807, %807 : vector<16x16xf32>
      %810 = arith.addf %808, %809 : vector<16x16xf32>
      %c0_246 = arith.constant 0 : index
      %c0_247 = arith.constant 0 : index
      %c0_248 = arith.constant 0 : index
      %811 = vector.load %arg9[%c0_246, %c0_247, %c0_248] : memref<1x16x16xf32, #tpu.memory_space<vmem>>, vector<1x16x16xf32>
      %812 = vector.shape_cast %811 : vector<1x16x16xf32> to vector<16x16xf32>
      %813 = vector.shape_cast %810 : vector<16x16xf32> to vector<1x16x16xf32>
      tpu.vector_store %arg9[%c0_246, %c0_247, %c0_248], %813 {strides = array<i32>} : memref<1x16x16xf32, #tpu.memory_space<vmem>>, vector<1x16x16xf32>,
    } else {
    }
    return
  }
  func.func @transform_0(%arg0: i32, %arg1: i32) -> (i32, i32, i32, i32) {
    %c0_i32 = arith.constant 0 : i32
    %c0_i32_0 = arith.constant 0 : i32
    %c0_i32_1 = arith.constant 0 : i32
    return %arg0, %arg1, %c0_i32, %c0_i32_0 : i32, i32, i32, i32
  }
  func.func @transform_1(%arg0: i32, %arg1: i32) -> (i32, i32, i32, i32) {
    %c0_i32 = arith.constant 0 : i32
    %c0_i32_0 = arith.constant 0 : i32
    %c0_i32_1 = arith.constant 0 : i32
    return %arg0, %arg1, %c0_i32, %c0_i32_0 : i32, i32, i32, i32
  }
  func.func @transform_2(%arg0: i32, %arg1: i32) -> (i32, i32, i32) {
    %c0_i32 = arith.constant 0 : i32
    %c0_i32_0 = arith.constant 0 : i32
    %c0_i32_1 = arith.constant 0 : i32
    %c0_i32_2 = arith.constant 0 : i32
    return %c0_i32, %c0_i32_0, %c0_i32_1 : i32, i32, i32
  }
  func.func @transform_3(%arg0: i32, %arg1: i32) -> (i32, i32, i32) {
    %c0_i32 = arith.constant 0 : i32
    %c0_i32_0 = arith.constant 0 : i32
    %c0_i32_1 = arith.constant 0 : i32
    %c0_i32_2 = arith.constant 0 : i32
    return %c0_i32, %c0_i32_0, %c0_i32_1 : i32, i32, i32
  }
  func.func @transform_4(%arg0: i32, %arg1: i32) -> (i32, i32, i32) {
    %c0_i32 = arith.constant 0 : i32
    %c0_i32_0 = arith.constant 0 : i32
    %c0_i32_1 = arith.constant 0 : i32
    %c0_i32_2 = arith.constant 0 : i32
    return %c0_i32, %c0_i32_0, %c0_i32_1 : i32, i32, i32
  }
  func.func @transform_5(%arg0: i32, %arg1: i32) -> (i32, i32, i32) {
    %c0_i32 = arith.constant 0 : i32
    %c0_i32_0 = arith.constant 0 : i32
    %c0_i32_1 = arith.constant 0 : i32
    %c0_i32_2 = arith.constant 0 : i32
    return %c0_i32, %c0_i32_0, %c0_i32_1 : i32, i32, i32
  }
  func.func @transform_6(%arg0: i32, %arg1: i32) -> (i32, i32, i32) {
    %c0_i32 = arith.constant 0 : i32
    %c0_i32_0 = arith.constant 0 : i32
    %c0_i32_1 = arith.constant 0 : i32
    %c0_i32_2 = arith.constant 0 : i32
    return %c0_i32, %c0_i32_0, %c0_i32_1 : i32, i32, i32
  }
  func.func @transform_7(%arg0: i32, %arg1: i32) -> (i32, i32, i32) {
    %c0_i32 = arith.constant 0 : i32
    %c0_i32_0 = arith.constant 0 : i32
    %c0_i32_1 = arith.constant 0 : i32
    return %arg0, %c0_i32, %c0_i32_0 : i32, i32, i32
  }
}

</mosaic_0001>

<llo_original>
// kernel: drnn_forward.1
$region0: #{drnn_forward.1}
  #allocation0 [shape = 'u32[]', space=smem, size = 0x4, offset = 0x4, fixed_abs, tag = 'smem constant byte address 0x4 - core index']
  #allocation1 [shape = 'u32[144,128]{1,0:T(1,128)}', space=vmem, size = 0x12000, scoped, tag = 'internal scratch']
  #allocation2 [shape = 'f32[16,16]{1,0:T(8,128)}', space=vmem, size = 0x2000, scoped, tag = 'scratch operand']
  #allocation3 [shape = 'f32[16,16]{1,0:T(8,128)}', space=vmem, size = 0x2000, scoped, tag = 'scratch operand']
  %s0 = inlined_call_operand.vmem [shape: bf16[2,8,16,16], index: 0, kind: input, shape index: {}]
  %s1 = inlined_call_operand.vmem [shape: bf16[2,8,16,16], index: 1, kind: input, shape index: {}]
  %s2 = inlined_call_operand.vmem [shape: bf16[3,16,16], index: 2, kind: input, shape index: {}]
  %s3 = inlined_call_operand.vmem [shape: bf16[3,16,16], index: 3, kind: input, shape index: {}]
  %s4 = inlined_call_operand.vmem [shape: bf16[4,16,16], index: 4, kind: input, shape index: {}]
  %s5 = inlined_call_operand.vmem [shape: bf16[2,16,16], index: 5, kind: input, shape index: {}]
  %s6 = inlined_call_operand.vmem [shape: bf16[2,16,16], index: 6, kind: input, shape index: {}]
  %s7 = inlined_call_operand.hbm [shape: f32[2,16,16], index: 7, kind: output, shape index: {}]
  %s8 = sld [smem:[#allocation0]]
  $region69: #{drnn_forward.1} parent=0
    _
  %s10 = ssub.s32 1, %s8
  %s11 = scalar_select 0, %s10, %s8
  $region1: #{drnn_forward.1} parent=0
    #allocation4 [shape = 'u8[16384]{0}', space=vmem, size = 0x4000, scoped, tag = 'output window, operand 0']
    #allocation5 [shape = 's32[2]{0}', space=sflag, size = 0x8, scoped, tag = 'scoped memory for drnn_forward.1']
    %12 = vsyncpa [#allocation5], 0
    %s13 = scalar_lea.sflag [#allocation5], 1
    %14 = vsyncpa %s13, 0
    loop: start=0, step=1, limit=4
    $region2: #{drnn_forward.1} parent=1 // loop_pre_header
      _
    $region3: #{drnn_forward.1} parent=1 // loop_header
      %s16 = sphi 0, %s20
      %p17 = scmp.ge.s32.totalorder %s16, 4
      %s23 = sphi 0, %s35
      %s24 = sphi 0, %s31
      %s25 = sphi 0, %s23
      %s26 = sphi 0, %s24
      %s27 = sphi 0, %s25
      %s28 = sphi 0, %s26
      %s40 = sphi 0, %s42
      %s43 = sphi 0, %s40
      %s44 = sphi 0, %s43
      %s60 = sphi 0, %s44
      %s68 = sphi 0, %s70
      %s71 = sphi 0, %s68
      %s72 = sphi 0, %s71
      %s88 = sphi 0, %s72
      %s92 = sphi 0, %s92
      %s94 = sphi 0, %s92
      %s95 = sphi 0, %s94
      %s109 = sphi 0, %s95
      %s113 = sphi 0, %s113
      %s115 = sphi 0, %s113
      %s116 = sphi 0, %s115
      %s130 = sphi 0, %s116
      %s134 = sphi 0, %s134
      %s136 = sphi 0, %s134
      %s137 = sphi 0, %s136
      %s151 = sphi 0, %s137
      %s155 = sphi 0, %s155
      %s157 = sphi 0, %s155
      %s158 = sphi 0, %s157
      %s172 = sphi 0, %s158
      %s176 = sphi 0, %s176
      %s178 = sphi 0, %s176
      %s179 = sphi 0, %s178
      %s193 = sphi 0, %s179
      %s199 = sphi 0, %s201
      %s202 = sphi 0, %s199
      %s203 = sphi 0, %s202
      %s219 = sphi 0, %s203
    $region4: #{drnn_forward.1} parent=1 // loop_header_branch
      %19 = sbr.rel (%p17) target = $region8
    $region5: #{drnn_forward.1} parent=1 // loop_body
      %s21 = ssub.s32 %s16, 1
      %s22 = ssub.s32 %s16, 2
      %s29 = sadd.s32 1, %s24
      %p30 = scmp.ge.s32.totalorder %s29, 1
      %s31 = scalar_select %p30, 0, %s29
      %s32 = sadd.s32 1, %s23
      %s33 = scalar_select %p30, %s32, %s23
      %p34 = scmp.ge.s32.totalorder %s33, 2
      %s35 = scalar_select %p34, 0, %s33
      %s36 = ssub.s32 %s23, %s35
      %s37 = ssub.s32 %s24, %s31
      %s38 = sor.u32 %s36, %s37
      %p39 = scmp.eq.s32.totalorder %s38, 0
      %s41 = sadd.s32 %s40, 1
      %s42 = scalar_select %p39, %s40, %s41
      %p45 = pneg %p39
      %p46 = scmp.eq.s32.totalorder %s16, 1
      %p47 = por %p45, %p46
      %p48 = scmp.ne.s32.totalorder %s40, %s43
      %p49 = scmp.eq.s32.totalorder %s16, 0
      %p50 = por %p48, %p49
      %p51 = scmp.ne.s32.totalorder %s40, %s43
      %p52 = scmp.eq.s32.totalorder %s21, 1
      %p53 = por %p51, %p52
      %p54 = scmp.ne.s32.totalorder %s43, %s44
      %p55 = scmp.eq.s32.totalorder %s21, 0
      %p56 = por %p54, %p55
      %p57 = scmp.ne.s32.totalorder %s43, %s44
      %p58 = scmp.eq.s32.totalorder %s22, 1
      %p59 = por %p57, %p58
      %p61 = scmp.ne.s32.totalorder %s44, %s60
      %p62 = scmp.eq.s32.totalorder %s22, 0
      %p63 = por %p61, %p62
      %s64 = ssub.s32 %s23, %s35
      %s65 = ssub.s32 %s24, %s31
      %s66 = sor.u32 %s64, %s65
      %p67 = scmp.eq.s32.totalorder %s66, 0
      %s69 = sadd.s32 %s68, 1
      %s70 = scalar_select %p67, %s68, %s69
      %p73 = pneg %p67
      %p74 = scmp.eq.s32.totalorder %s16, 1
      %p75 = por %p73, %p74
      %p76 = scmp.ne.s32.totalorder %s68, %s71
      %p77 = scmp.eq.s32.totalorder %s16, 0
      %p78 = por %p76, %p77
      %p79 = scmp.ne.s32.totalorder %s68, %s71
      %p80 = scmp.eq.s32.totalorder %s21, 1
      %p81 = por %p79, %p80
      %p82 = scmp.ne.s32.totalorder %s71, %s72
      %p83 = scmp.eq.s32.totalorder %s21, 0
      %p84 = por %p82, %p83
      %p85 = scmp.ne.s32.totalorder %s71, %s72
      %p86 = scmp.eq.s32.totalorder %s22, 1
      %p87 = por %p85, %p86
      %p89 = scmp.ne.s32.totalorder %s72, %s88
      %p90 = scmp.eq.s32.totalorder %s22, 0
      %p91 = por %p89, %p90
      %s93 = sadd.s32 %s92, 1
      %p96 = scmp.eq.s32.totalorder %s16, 1
      %p97 = scmp.ne.s32.totalorder %s92, %s94
      %p98 = scmp.eq.s32.totalorder %s16, 0
      %p99 = por %p97, %p98
      %p100 = scmp.ne.s32.totalorder %s92, %s94
      %p101 = scmp.eq.s32.totalorder %s21, 1
      %p102 = por %p100, %p101
      %p103 = scmp.ne.s32.totalorder %s94, %s95
      %p104 = scmp.eq.s32.totalorder %s21, 0
      %p105 = por %p103, %p104
      %p106 = scmp.ne.s32.totalorder %s94, %s95
      %p107 = scmp.eq.s32.totalorder %s22, 1
      %p108 = por %p106, %p107
      %p110 = scmp.ne.s32.totalorder %s95, %s109
      %p111 = scmp.eq.s32.totalorder %s22, 0
      %p112 = por %p110, %p111
      %s114 = sadd.s32 %s113, 1
      %p117 = scmp.eq.s32.totalorder %s16, 1
      %p118 = scmp.ne.s32.totalorder %s113, %s115
      %p119 = scmp.eq.s32.totalorder %s16, 0
      %p120 = por %p118, %p119
      %p121 = scmp.ne.s32.totalorder %s113, %s115
      %p122 = scmp.eq.s32.totalorder %s21, 1
      %p123 = por %p121, %p122
      %p124 = scmp.ne.s32.totalorder %s115, %s116
      %p125 = scmp.eq.s32.totalorder %s21, 0
      %p126 = por %p124, %p125
      %p127 = scmp.ne.s32.totalorder %s115, %s116
      %p128 = scmp.eq.s32.totalorder %s22, 1
      %p129 = por %p127, %p128
      %p131 = scmp.ne.s32.totalorder %s116, %s130
      %p132 = scmp.eq.s32.totalorder %s22, 0
      %p133 = por %p131, %p132
      %s135 = sadd.s32 %s134, 1
      %p138 = scmp.eq.s32.totalorder %s16, 1
      %p139 = scmp.ne.s32.totalorder %s134, %s136
      %p140 = scmp.eq.s32.totalorder %s16, 0
      %p141 = por %p139, %p140
      %p142 = scmp.ne.s32.totalorder %s134, %s136
      %p143 = scmp.eq.s32.totalorder %s21, 1
      %p144 = por %p142, %p143
      %p145 = scmp.ne.s32.totalorder %s136, %s137
      %p146 = scmp.eq.s32.totalorder %s21, 0
      %p147 = por %p145, %p146
      %p148 = scmp.ne.s32.totalorder %s136, %s137
      %p149 = scmp.eq.s32.totalorder %s22, 1
      %p150 = por %p148, %p149
      %p152 = scmp.ne.s32.totalorder %s137, %s151
      %p153 = scmp.eq.s32.totalorder %s22, 0
      %p154 = por %p152, %p153
      %s156 = sadd.s32 %s155, 1
      %p159 = scmp.eq.s32.totalorder %s16, 1
      %p160 = scmp.ne.s32.totalorder %s155, %s157
      %p161 = scmp.eq.s32.totalorder %s16, 0
      %p162 = por %p160, %p161
      %p163 = scmp.ne.s32.totalorder %s155, %s157
      %p164 = scmp.eq.s32.totalorder %s21, 1
      %p165 = por %p163, %p164
      %p166 = scmp.ne.s32.totalorder %s157, %s158
      %p167 = scmp.eq.s32.totalorder %s21, 0
      %p168 = por %p166, %p167
      %p169 = scmp.ne.s32.totalorder %s157, %s158
      %p170 = scmp.eq.s32.totalorder %s22, 1
      %p171 = por %p169, %p170
      %p173 = scmp.ne.s32.totalorder %s158, %s172
      %p174 = scmp.eq.s32.totalorder %s22, 0
      %p175 = por %p173, %p174
      %s177 = sadd.s32 %s176, 1
      %p180 = scmp.eq.s32.totalorder %s16, 1
      %p181 = scmp.ne.s32.totalorder %s176, %s178
      %p182 = scmp.eq.s32.totalorder %s16, 0
      %p183 = por %p181, %p182
      %p184 = scmp.ne.s32.totalorder %s176, %s178
      %p185 = scmp.eq.s32.totalorder %s21, 1
      %p186 = por %p184, %p185
      %p187 = scmp.ne.s32.totalorder %s178, %s179
      %p188 = scmp.eq.s32.totalorder %s21, 0
      %p189 = por %p187, %p188
      %p190 = scmp.ne.s32.totalorder %s178, %s179
      %p191 = scmp.eq.s32.totalorder %s22, 1
      %p192 = por %p190, %p191
      %p194 = scmp.ne.s32.totalorder %s179, %s193
      %p195 = scmp.eq.s32.totalorder %s22, 0
      %p196 = por %p194, %p195
      %s197 = ssub.s32 %s23, %s35
      %p198 = scmp.eq.s32.totalorder %s197, 0
      %s200 = sadd.s32 %s199, 1
      %s201 = scalar_select %p198, %s199, %s200
      %p204 = pneg %p198
      %p205 = scmp.eq.s32.totalorder %s16, 1
      %p206 = por %p204, %p205
      %p207 = scmp.ne.s32.totalorder %s199, %s202
      %p208 = scmp.eq.s32.totalorder %s16, 0
      %p209 = por %p207, %p208
      %p210 = scmp.ne.s32.totalorder %s199, %s202
      %p211 = scmp.eq.s32.totalorder %s21, 1
      %p212 = por %p210, %p211
      %p213 = scmp.ne.s32.totalorder %s202, %s203
      %p214 = scmp.eq.s32.totalorder %s21, 0
      %p215 = por %p213, %p214
      %p216 = scmp.ne.s32.totalorder %s202, %s203
      %p217 = scmp.eq.s32.totalorder %s22, 1
      %p218 = por %p216, %p217
      %p220 = scmp.ne.s32.totalorder %s203, %s219
      %p221 = scmp.eq.s32.totalorder %s22, 0
      %p222 = por %p220, %p221
      %p223 = scmp.le.s32.totalorder 1, %s16
      %p224 = scmp.lt.s32.totalorder %s16, 3
      %p225 = pnand %p223, %p224
      %p226 = pneg %p225
      // Predicated region
      $region9: #{drnn_forward.1} parent=5 // pred_check
        _
      $region10: #{drnn_forward.1} parent=5 // pred_check_branch
        %228 = sbr.rel (%p225) target = $region12
      $region11: #{drnn_forward.1} parent=5 // pred_region
        %s229 = ssub.s32 %s16, 1
        // Predicated region
        $region13: #{drnn_forward.1} parent=11 // pred_check
          %p230 = pneg %p105
        $region14: #{drnn_forward.1} parent=11 // pred_check_branch
          %232 = sbr.rel (%p230) target = $region16
        $region15: #{drnn_forward.1} parent=11 // pred_region
          _
        $region16: #{drnn_forward.1} parent=11 // pred_fallthru
          _
        // Predicated region
        $region17: #{drnn_forward.1} parent=11 // pred_check
          %p233 = pneg %p126
        $region18: #{drnn_forward.1} parent=11 // pred_check_branch
          %235 = sbr.rel (%p233) target = $region20
        $region19: #{drnn_forward.1} parent=11 // pred_region
          _
        $region20: #{drnn_forward.1} parent=11 // pred_fallthru
          _
        // Predicated region
        $region21: #{drnn_forward.1} parent=11 // pred_check
          %p236 = pneg %p147
        $region22: #{drnn_forward.1} parent=11 // pred_check_branch
          %238 = sbr.rel (%p236) target = $region24
        $region23: #{drnn_forward.1} parent=11 // pred_region
          _
        $region24: #{drnn_forward.1} parent=11 // pred_fallthru
          _
        // Predicated region
        $region25: #{drnn_forward.1} parent=11 // pred_check
          %p239 = pneg %p168
        $region26: #{drnn_forward.1} parent=11 // pred_check_branch
          %241 = sbr.rel (%p239) target = $region28
        $region27: #{drnn_forward.1} parent=11 // pred_region
          _
        $region28: #{drnn_forward.1} parent=11 // pred_fallthru
          _
        // Predicated region
        $region29: #{drnn_forward.1} parent=11 // pred_check
          %p242 = pneg %p189
        $region30: #{drnn_forward.1} parent=11 // pred_check_branch
          %244 = sbr.rel (%p242) target = $region32
        $region31: #{drnn_forward.1} parent=11 // pred_region
          _
        $region32: #{drnn_forward.1} parent=11 // pred_fallthru
          _
      $region12: #{drnn_forward.1} parent=5 // pred_fallthru
        _
      %p245 = scmp.lt.s32.totalorder %s16, 2
      // Predicated region
      $region33: #{drnn_forward.1} parent=5 // pred_check
        %p246 = pneg %p245
      $region34: #{drnn_forward.1} parent=5 // pred_check_branch
        %248 = sbr.rel (%p246) target = $region36
      $region35: #{drnn_forward.1} parent=5 // pred_region
        // Predicated region
        $region37: #{drnn_forward.1} parent=35 // pred_check
          %p249 = pneg %p50
        $region38: #{drnn_forward.1} parent=35 // pred_check_branch
          %251 = sbr.rel (%p249) target = $region40
        $region39: #{drnn_forward.1} parent=35 // pred_region
          %s252 = smul.u32 8, %s24
          %p253 = scmp.lt.s32.totalorder %s23, 1
          %s254 = scalar_select %p253, %s23, 1
          %p255 = scmp.lt.s32.totalorder %s252, 7
          %s256 = scalar_select %p255, %s252, 7
          %s257 = smul.addr %s256, 2
          %s258 = smul.addr %s254, 16
          %s259 = sadd.s32 %s257, %s258
          %s260 = smul.addr %s259, 4
          %s261 = scalar_lea.vmem %s0, %s260
          %s262 = smul.u32 8, %s24
        $region40: #{drnn_forward.1} parent=35 // pred_fallthru
          _
        // Predicated region
        $region41: #{drnn_forward.1} parent=35 // pred_check
          %p263 = pneg %p78
        $region42: #{drnn_forward.1} parent=35 // pred_check_branch
          %265 = sbr.rel (%p263) target = $region44
        $region43: #{drnn_forward.1} parent=35 // pred_region
          %s266 = smul.u32 8, %s24
          %p267 = scmp.lt.s32.totalorder %s23, 1
          %s268 = scalar_select %p267, %s23, 1
          %p269 = scmp.lt.s32.totalorder %s266, 7
          %s270 = scalar_select %p269, %s266, 7
          %s271 = smul.addr %s270, 2
          %s272 = smul.addr %s268, 16
          %s273 = sadd.s32 %s271, %s272
          %s274 = smul.addr %s273, 4
          %s275 = scalar_lea.vmem %s1, %s274
          %s276 = smul.u32 8, %s24
        $region44: #{drnn_forward.1} parent=35 // pred_fallthru
          _
      $region36: #{drnn_forward.1} parent=5 // pred_fallthru
        _
      %p277 = scmp.le.s32.totalorder 1, %s16
      %p278 = scmp.lt.s32.totalorder %s16, 3
      %p279 = pnand %p277, %p278
      %p280 = pneg %p279
      // Predicated region
      $region45: #{drnn_forward.1} parent=5 // pred_check
        _
      $region46: #{drnn_forward.1} parent=5 // pred_check_branch
        %282 = sbr.rel (%p279) target = $region48
      $region47: #{drnn_forward.1} parent=5 // pred_region
        %s283 = ssub.s32 %s16, 1
        %s284 = smul.u32 8, %s26
        %p285 = scmp.lt.s32.totalorder %s25, 1
        %s286 = scalar_select %p285, %s25, 1
        %p287 = scmp.lt.s32.totalorder %s284, 7
        %s288 = scalar_select %p287, %s284, 7
        %s289 = smul.addr %s288, 2
        %s290 = smul.addr %s286, 16
        %s291 = sadd.s32 %s289, %s290
        %s292 = smul.addr %s291, 4
        %s293 = scalar_lea.vmem %s0, %s292
        %p294 = pneg %p56
        %p295 = pneg %p53
        %s296 = smul.u32 8, %s26
        %p297 = scmp.lt.s32.totalorder %s25, 1
        %s298 = scalar_select %p297, %s25, 1
        %p299 = scmp.lt.s32.totalorder %s296, 7
        %s300 = scalar_select %p299, %s296, 7
        %s301 = smul.addr %s300, 2
        %s302 = smul.addr %s298, 16
        %s303 = sadd.s32 %s301, %s302
        %s304 = smul.addr %s303, 4
        %s305 = scalar_lea.vmem %s1, %s304
        %p306 = pneg %p84
        %p307 = pneg %p81
        %p308 = pneg %p105
        %p309 = pneg %p102
        %p310 = pneg %p126
        %p311 = pneg %p123
        %p312 = pneg %p147
        %p313 = pneg %p144
        %p314 = pneg %p168
        %p315 = pneg %p165
        %p316 = pneg %p189
        %p317 = pneg %p186
        %p318 = pneg %p215
        %p319 = pneg %p212
        %s320 = sand.u32 %s202, 1
        %s321 = scalar_lea.sflag [#allocation5], %s320
        %s322 = sand.u32 %s202, 1
        %s323 = smul.addr %s322, 16
        %s324 = scalar_lea.vmem [#allocation4], %s323
        %s325 = smul.u32 8, %s26
        %p326 = scmp.lt.s32.totalorder %s25, 1
        %s327 = scalar_select %p326, %s25, 1
        %p328 = scmp.lt.s32.totalorder %s325, 7
        %s329 = scalar_select %p328, %s325, 7
        %s330 = smul.addr %s329, 2
        %s331 = smul.addr %s327, 16
        %s332 = sadd.s32 %s330, %s331
        %s333 = smul.addr %s332, 4
        %s334 = scalar_lea.vmem %s0, %s333
        %s335 = smul.u32 8, %s26
        %s336 = smul.u32 8, %s26
        %p337 = scmp.lt.s32.totalorder %s25, 1
        %s338 = scalar_select %p337, %s25, 1
        %p339 = scmp.lt.s32.totalorder %s336, 7
        %s340 = scalar_select %p339, %s336, 7
        %s341 = smul.addr %s340, 2
        %s342 = smul.addr %s338, 16
        %s343 = sadd.s32 %s341, %s342
        %s344 = smul.addr %s343, 4
        %s345 = scalar_lea.vmem %s1, %s344
        %s346 = smul.u32 8, %s26
        %v348 = vld [vmem:[%s4] sm:$0xf]
        %v349 = vld [vmem:[%s4 + $0x4] sm:$0xf]
        %s350 = scalar_lea.vmem %s4, 8
        %v351 = vld [vmem:[%s350] sm:$0xf]
        %v352 = vld [vmem:[%s350 + $0x4] sm:$0xf]
        %s353 = scalar_lea.vmem %s4, 16
        %v354 = vld [vmem:[%s353] sm:$0xf]
        %v355 = vld [vmem:[%s353 + $0x4] sm:$0xf]
        %s356 = scalar_lea.vmem %s4, 24
        %v357 = vld [vmem:[%s356] sm:$0xf]
        %v358 = vld [vmem:[%s356 + $0x4] sm:$0xf]
        %p359 = scmp.eq.s32.totalorder %s26, 0
        // Predicated region
        $region49: #{drnn_forward.1} parent=47 // pred_check
          %p360 = pneg %p359
        $region50: #{drnn_forward.1} parent=47 // pred_check_branch
          %362 = sbr.rel (%p360) target = $region52
        $region51: #{drnn_forward.1} parent=47 // pred_region
          %vm363 = vcmask 130048
          %364 = vst.msk [vmem:[#allocation2] sm:$0xff] %vm363, 0.0
          %365 = vst.msk [vmem:[#allocation2 + $0x8] sm:$0xff] %vm363, 0.0
          %366 = vst.msk [vmem:[#allocation3] sm:$0xff] %vm363, 0.0
          %367 = vst.msk [vmem:[#allocation3 + $0x8] sm:$0xff] %vm363, 0.0
        $region52: #{drnn_forward.1} parent=47 // pred_fallthru
          _
        %v368 = vld [vmem:[%s2] sm:$0xf]
        %v369 = vld [vmem:[%s2 + $0x4] sm:$0xf]
        %v370 = vld [vmem:[%s3] sm:$0xf]
        %v371 = vld [vmem:[%s3 + $0x4] sm:$0xf]
        %s372 = scalar_lea.vmem %s2, 8
        %v373 = vld [vmem:[%s372] sm:$0xf]
        %v374 = vld [vmem:[%s372 + $0x4] sm:$0xf]
        %s375 = scalar_lea.vmem %s3, 8
        %v376 = vld [vmem:[%s375] sm:$0xf]
        %v377 = vld [vmem:[%s375 + $0x4] sm:$0xf]
        %v378 = vld [vmem:[%s5] sm:$0xf]
        %v379 = vld [vmem:[%s5 + $0x4] sm:$0xf]
        %v380 = vld [vmem:[%s6] sm:$0xf]
        %v381 = vld [vmem:[%s6 + $0x4] sm:$0xf]
        %v382 = vld [vmem:[#allocation2] sm:$0xff]
        %v383 = vld [vmem:[#allocation2 + $0x8] sm:$0xff]
        %v384 = vld [vmem:[#allocation3] sm:$0xff]
        %v385 = vld [vmem:[#allocation3 + $0x8] sm:$0xff]
        %v386 = vld [vmem:[%s334] sm:$0xf]
        %v387 = vld [vmem:[%s334 + $0x4] sm:$0xf]
        %v388 = vunpack.c.l.bf16 %v386
        %v389 = vunpack.c.l.bf16 %v387
        %v390 = vld [vmem:[%s345] sm:$0xf]
        %v391 = vld [vmem:[%s345 + $0x4] sm:$0xf]
        %v392 = vunpack.c.l.bf16 %v390
        %v393 = vunpack.c.l.bf16 %v391
        %v394 = vunpack.c.l.bf16 %v368
        %v395 = vunpack.c.l.bf16 %v369
        %v396 = vmul.f32 %v388, %v394
        %v397 = vmul.f32 %v389, %v395
        %v398 = vunpack.c.l.bf16 %v370
        %v399 = vunpack.c.l.bf16 %v371
        %v400 = vmul.f32 %v392, %v398
        %v401 = vmul.f32 %v393, %v399
        %v402 = vsub.f32 %v396, %v400
        %v403 = vsub.f32 %v397, %v401
        %v404 = vmul.f32 %v388, %v398
        %v405 = vmul.f32 %v389, %v399
        %v406 = vmul.f32 %v392, %v394
        %v407 = vmul.f32 %v393, %v395
        %v408 = vadd.f32 %v404, %v406
        %v409 = vadd.f32 %v405, %v407
        %v410 = vunpack.c.l.bf16 %v373
        %v411 = vunpack.c.l.bf16 %v374
        %v412 = vmul.f32 %v382, %v410
        %v413 = vmul.f32 %v383, %v411
        %v414 = vunpack.c.l.bf16 %v376
        %v415 = vunpack.c.l.bf16 %v377
        %v416 = vmul.f32 %v384, %v414
        %v417 = vmul.f32 %v385, %v415
        %v418 = vsub.f32 %v412, %v416
        %v419 = vsub.f32 %v413, %v417
        %v420 = vmul.f32 %v382, %v414
        %v421 = vmul.f32 %v383, %v415
        %v422 = vmul.f32 %v384, %v410
        %v423 = vmul.f32 %v385, %v411
        %v424 = vadd.f32 %v420, %v422
        %v425 = vadd.f32 %v421, %v423
        %v426 = vmul.f32 %v418, 0.7
        %v427 = vmul.f32 %v419, 0.7
        %v428 = vmul.f32 %v402, 0.3
        %v429 = vmul.f32 %v403, 0.3
        %v430 = vadd.f32 %v426, %v428
        %v431 = vadd.f32 %v427, %v429
        %v432 = vmul.f32 %v424, 0.7
        %v433 = vmul.f32 %v425, 0.7
        %v434 = vmul.f32 %v408, 0.3
        %v435 = vmul.f32 %v409, 0.3
        %v436 = vadd.f32 %v432, %v434
        %v437 = vadd.f32 %v433, %v435
        %v438 = vpack.c.bf16 %v431, %v430
        %v439 = vpack.c.bf16 %v437, %v436
        %v440 = vadd.f32 %v430, %v436
        %v441 = vadd.f32 %v431, %v437
        %v442 = vpack.c.bf16 %v441, %v440
        %v445 = vunpack.c.l.b16 %v348
        %v446 = vunpack.c.l.b16 %v349
        %v447 = vpack.c.b16 %v446, %v445
        %vm448 = vcmask 130048
        %v450 = vsel %vm448, %v447, 0
        %452 = vmatprep.subr.bf16.mxu0 0
        %453 = vmatpush1.bf16.msra.mxu0 0
        %454 = vmatprep.subr.bf16.mxu0 0
        %455 = vmatpush1.bf16.msra.mxu0 0
        %456 = vmatprep.subr.bf16.mxu0 0
        %457 = vmatpush1.bf16.msra.mxu0 0
        %458 = vmatprep.subr.bf16.mxu0 0
        %459 = vmatpush1.bf16.msra.mxu0 0
        %460 = vmatprep.subr.bf16.mxu0 0
        %461 = vmatpush1.bf16.msra.mxu0 0
        %462 = vmatprep.subr.bf16.mxu0 0
        %463 = vmatpush1.bf16.msra.mxu0 0
        %464 = vmatprep.subr.bf16.mxu0 0
        %465 = vmatpush1.bf16.msra.mxu0 0
        %466 = vmatprep.subr.bf16.mxu0 0
        %467 = vmatpush1.bf16.msra.mxu0 %v438
        %468 = vmatprep.subr.bf16.mxu0 0
        %469 = vmatpush2.bf16.msra.mxu0 0
        %470 = vmatprep.subr.bf16.mxu0 0
        %471 = vmatpush2.bf16.msra.mxu0 0
        %472 = vmatprep.subr.bf16.mxu0 0
        %473 = vmatpush2.bf16.msra.mxu0 0
        %474 = vmatprep.subr.bf16.mxu0 0
        %475 = vmatpush2.bf16.msra.mxu0 0
        %476 = vmatprep.subr.bf16.mxu0 0
        %477 = vmatpush2.bf16.msra.mxu0 0
        %478 = vmatprep.subr.bf16.mxu0 0
        %479 = vmatpush2.bf16.msra.mxu0 0
        %480 = vmatprep.subr.bf16.mxu0 0
        %481 = vmatpush2.bf16.msra.mxu0 0
        %482 = vmatprep.subr.bf16.mxu0 0
        %483 = vmatpush2.bf16.msra.mxu0 0
        %484 = vmatprep.mubr.bf16.mxu0 0
        %485 = vmatmul.mubr.bf16.gmra.mxu0 %v450
        %v486 = vpop.f32.mrf.mxu0
        %v487 = vadd.f32 0.0, %v486
        %v488 = vpop.f32.mrf.mxu0
        %v489 = vpop.f32.mrf.mxu0
        %v490 = vadd.f32 0.0, %v489
        %v491 = vpop.f32.mrf.mxu0
        %492 = vdwg.mxu0
        %v495 = vunpack.c.l.b16 %v351
        %v496 = vunpack.c.l.b16 %v352
        %v497 = vpack.c.b16 %v496, %v495
        %v499 = vsel %vm448, %v497, 0
        %501 = vmatprep.subr.bf16.mxu0 0
        %502 = vmatpush1.bf16.msra.mxu0 0
        %503 = vmatprep.subr.bf16.mxu0 0
        %504 = vmatpush1.bf16.msra.mxu0 0
        %505 = vmatprep.subr.bf16.mxu0 0
        %506 = vmatpush1.bf16.msra.mxu0 0
        %507 = vmatprep.subr.bf16.mxu0 0
        %508 = vmatpush1.bf16.msra.mxu0 0
        %509 = vmatprep.subr.bf16.mxu0 0
        %510 = vmatpush1.bf16.msra.mxu0 0
        %511 = vmatprep.subr.bf16.mxu0 0
        %512 = vmatpush1.bf16.msra.mxu0 0
        %513 = vmatprep.subr.bf16.mxu0 0
        %514 = vmatpush1.bf16.msra.mxu0 0
        %515 = vmatprep.subr.bf16.mxu0 0
        %516 = vmatpush1.bf16.msra.mxu0 %v439
        %517 = vmatprep.subr.bf16.mxu0 0
        %518 = vmatpush2.bf16.msra.mxu0 0
        %519 = vmatprep.subr.bf16.mxu0 0
        %520 = vmatpush2.bf16.msra.mxu0 0
        %521 = vmatprep.subr.bf16.mxu0 0
        %522 = vmatpush2.bf16.msra.mxu0 0
        %523 = vmatprep.subr.bf16.mxu0 0
        %524 = vmatpush2.bf16.msra.mxu0 0
        %525 = vmatprep.subr.bf16.mxu0 0
        %526 = vmatpush2.bf16.msra.mxu0 0
        %527 = vmatprep.subr.bf16.mxu0 0
        %528 = vmatpush2.bf16.msra.mxu0 0
        %529 = vmatprep.subr.bf16.mxu0 0
        %530 = vmatpush2.bf16.msra.mxu0 0
        %531 = vmatprep.subr.bf16.mxu0 0
        %532 = vmatpush2.bf16.msra.mxu0 0
        %533 = vmatprep.mubr.bf16.mxu0 0
        %534 = vmatmul.mubr.bf16.gmra.mxu0 %v499
        %v535 = vpop.f32.mrf.mxu0
        %v536 = vadd.f32 0.0, %v535
        %v537 = vpop.f32.mrf.mxu0
        %v538 = vpop.f32.mrf.mxu0
        %v539 = vadd.f32 0.0, %v538
        %v540 = vpop.f32.mrf.mxu0
        %541 = vdwg.mxu0
        %v544 = vunpack.c.l.b16 %v354
        %v545 = vunpack.c.l.b16 %v355
        %v546 = vpack.c.b16 %v545, %v544
        %v548 = vsel %vm448, %v546, 0
        %550 = vmatprep.subr.bf16.mxu0 0
        %551 = vmatpush1.bf16.msra.mxu0 0
        %552 = vmatprep.subr.bf16.mxu0 0
        %553 = vmatpush1.bf16.msra.mxu0 0
        %554 = vmatprep.subr.bf16.mxu0 0
        %555 = vmatpush1.bf16.msra.mxu0 0
        %556 = vmatprep.subr.bf16.mxu0 0
        %557 = vmatpush1.bf16.msra.mxu0 0
        %558 = vmatprep.subr.bf16.mxu0 0
        %559 = vmatpush1.bf16.msra.mxu0 0
        %560 = vmatprep.subr.bf16.mxu0 0
        %561 = vmatpush1.bf16.msra.mxu0 0
        %562 = vmatprep.subr.bf16.mxu0 0
        %563 = vmatpush1.bf16.msra.mxu0 0
        %564 = vmatprep.subr.bf16.mxu0 0
        %565 = vmatpush1.bf16.msra.mxu0 %v442
        %566 = vmatprep.subr.bf16.mxu0 0
        %567 = vmatpush2.bf16.msra.mxu0 0
        %568 = vmatprep.subr.bf16.mxu0 0
        %569 = vmatpush2.bf16.msra.mxu0 0
        %570 = vmatprep.subr.bf16.mxu0 0
        %571 = vmatpush2.bf16.msra.mxu0 0
        %572 = vmatprep.subr.bf16.mxu0 0
        %573 = vmatpush2.bf16.msra.mxu0 0
        %574 = vmatprep.subr.bf16.mxu0 0
        %575 = vmatpush2.bf16.msra.mxu0 0
        %576 = vmatprep.subr.bf16.mxu0 0
        %577 = vmatpush2.bf16.msra.mxu0 0
        %578 = vmatprep.subr.bf16.mxu0 0
        %579 = vmatpush2.bf16.msra.mxu0 0
        %580 = vmatprep.subr.bf16.mxu0 0
        %581 = vmatpush2.bf16.msra.mxu0 0
        %582 = vmatprep.mubr.bf16.mxu0 0
        %583 = vmatmul.mubr.bf16.gmra.mxu0 %v548
        %v584 = vpop.f32.mrf.mxu0
        %v585 = vadd.f32 0.0, %v584
        %v586 = vpop.f32.mrf.mxu0
        %v587 = vpop.f32.mrf.mxu0
        %v588 = vadd.f32 0.0, %v587
        %v589 = vpop.f32.mrf.mxu0
        %590 = vdwg.mxu0
        %v591 = vsub.f32 %v487, %v536
        %v592 = vsub.f32 %v490, %v539
        %v593 = vsub.f32 %v585, %v487
        %v594 = vsub.f32 %v588, %v490
        %v595 = vsub.f32 %v593, %v536
        %v596 = vsub.f32 %v594, %v539
        %v597 = vpack.c.bf16 %v592, %v591
        %v598 = vpack.c.bf16 %v596, %v595
        %v601 = vsel %vm448, %v597, 0
        %603 = vmatprep.subr.bf16.mxu0 0
        %604 = vmatpush1.bf16.msra.mxu0 0
        %605 = vmatprep.subr.bf16.mxu0 0
        %606 = vmatpush1.bf16.msra.mxu0 0
        %607 = vmatprep.subr.bf16.mxu0 0
        %608 = vmatpush1.bf16.msra.mxu0 0
        %609 = vmatprep.subr.bf16.mxu0 0
        %610 = vmatpush1.bf16.msra.mxu0 0
        %611 = vmatprep.subr.bf16.mxu0 0
        %612 = vmatpush1.bf16.msra.mxu0 0
        %613 = vmatprep.subr.bf16.mxu0 0
        %614 = vmatpush1.bf16.msra.mxu0 0
        %615 = vmatprep.subr.bf16.mxu0 0
        %616 = vmatpush1.bf16.msra.mxu0 0
        %617 = vmatprep.subr.bf16.mxu0 0
        %618 = vmatpush1.bf16.msra.mxu0 %v447
        %619 = vmatprep.subr.bf16.mxu0 0
        %620 = vmatpush2.bf16.msra.mxu0 0
        %621 = vmatprep.subr.bf16.mxu0 0
        %622 = vmatpush2.bf16.msra.mxu0 0
        %623 = vmatprep.subr.bf16.mxu0 0
        %624 = vmatpush2.bf16.msra.mxu0 0
        %625 = vmatprep.subr.bf16.mxu0 0
        %626 = vmatpush2.bf16.msra.mxu0 0
        %627 = vmatprep.subr.bf16.mxu0 0
        %628 = vmatpush2.bf16.msra.mxu0 0
        %629 = vmatprep.subr.bf16.mxu0 0
        %630 = vmatpush2.bf16.msra.mxu0 0
        %631 = vmatprep.subr.bf16.mxu0 0
        %632 = vmatpush2.bf16.msra.mxu0 0
        %633 = vmatprep.subr.bf16.mxu0 0
        %634 = vmatpush2.bf16.msra.mxu0 0
        %635 = vmatprep.mubr.bf16.mxu0 0
        %636 = vmatmul.mubr.bf16.gmra.mxu0 %v601
        %v637 = vpop.f32.mrf.mxu0
        %v638 = vadd.f32 0.0, %v637
        %v639 = vpop.f32.mrf.mxu0
        %v640 = vpop.f32.mrf.mxu0
        %v641 = vadd.f32 0.0, %v640
        %v642 = vpop.f32.mrf.mxu0
        %643 = vdwg.mxu0
        %v646 = vsel %vm448, %v598, 0
        %648 = vmatprep.subr.bf16.mxu0 0
        %649 = vmatpush1.bf16.msra.mxu0 0
        %650 = vmatprep.subr.bf16.mxu0 0
        %651 = vmatpush1.bf16.msra.mxu0 0
        %652 = vmatprep.subr.bf16.mxu0 0
        %653 = vmatpush1.bf16.msra.mxu0 0
        %654 = vmatprep.subr.bf16.mxu0 0
        %655 = vmatpush1.bf16.msra.mxu0 0
        %656 = vmatprep.subr.bf16.mxu0 0
        %657 = vmatpush1.bf16.msra.mxu0 0
        %658 = vmatprep.subr.bf16.mxu0 0
        %659 = vmatpush1.bf16.msra.mxu0 0
        %660 = vmatprep.subr.bf16.mxu0 0
        %661 = vmatpush1.bf16.msra.mxu0 0
        %662 = vmatprep.subr.bf16.mxu0 0
        %663 = vmatpush1.bf16.msra.mxu0 %v497
        %664 = vmatprep.subr.bf16.mxu0 0
        %665 = vmatpush2.bf16.msra.mxu0 0
        %666 = vmatprep.subr.bf16.mxu0 0
        %667 = vmatpush2.bf16.msra.mxu0 0
        %668 = vmatprep.subr.bf16.mxu0 0
        %669 = vmatpush2.bf16.msra.mxu0 0
        %670 = vmatprep.subr.bf16.mxu0 0
        %671 = vmatpush2.bf16.msra.mxu0 0
        %672 = vmatprep.subr.bf16.mxu0 0
        %673 = vmatpush2.bf16.msra.mxu0 0
        %674 = vmatprep.subr.bf16.mxu0 0
        %675 = vmatpush2.bf16.msra.mxu0 0
        %676 = vmatprep.subr.bf16.mxu0 0
        %677 = vmatpush2.bf16.msra.mxu0 0
        %678 = vmatprep.subr.bf16.mxu0 0
        %679 = vmatpush2.bf16.msra.mxu0 0
        %680 = vmatprep.mubr.bf16.mxu0 0
        %681 = vmatmul.mubr.bf16.gmra.mxu0 %v646
        %v682 = vpop.f32.mrf.mxu0
        %v683 = vadd.f32 0.0, %v682
        %v684 = vpop.f32.mrf.mxu0
        %v685 = vpop.f32.mrf.mxu0
        %v686 = vadd.f32 0.0, %v685
        %v687 = vpop.f32.mrf.mxu0
        %688 = vdwg.mxu0
        %v689 = vadd.f32 %v591, %v595
        %v690 = vadd.f32 %v592, %v596
        %v691 = vpack.c.bf16 %v690, %v689
        %v694 = vsel %vm448, %v691, 0
        %696 = vmatprep.subr.bf16.mxu0 0
        %697 = vmatpush1.bf16.msra.mxu0 0
        %698 = vmatprep.subr.bf16.mxu0 0
        %699 = vmatpush1.bf16.msra.mxu0 0
        %700 = vmatprep.subr.bf16.mxu0 0
        %701 = vmatpush1.bf16.msra.mxu0 0
        %702 = vmatprep.subr.bf16.mxu0 0
        %703 = vmatpush1.bf16.msra.mxu0 0
        %704 = vmatprep.subr.bf16.mxu0 0
        %705 = vmatpush1.bf16.msra.mxu0 0
        %706 = vmatprep.subr.bf16.mxu0 0
        %707 = vmatpush1.bf16.msra.mxu0 0
        %708 = vmatprep.subr.bf16.mxu0 0
        %709 = vmatpush1.bf16.msra.mxu0 0
        %710 = vmatprep.subr.bf16.mxu0 0
        %711 = vmatpush1.bf16.msra.mxu0 %v546
        %712 = vmatprep.subr.bf16.mxu0 0
        %713 = vmatpush2.bf16.msra.mxu0 0
        %714 = vmatprep.subr.bf16.mxu0 0
        %715 = vmatpush2.bf16.msra.mxu0 0
        %716 = vmatprep.subr.bf16.mxu0 0
        %717 = vmatpush2.bf16.msra.mxu0 0
        %718 = vmatprep.subr.bf16.mxu0 0
        %719 = vmatpush2.bf16.msra.mxu0 0
        %720 = vmatprep.subr.bf16.mxu0 0
        %721 = vmatpush2.bf16.msra.mxu0 0
        %722 = vmatprep.subr.bf16.mxu0 0
        %723 = vmatpush2.bf16.msra.mxu0 0
        %724 = vmatprep.subr.bf16.mxu0 0
        %725 = vmatpush2.bf16.msra.mxu0 0
        %726 = vmatprep.subr.bf16.mxu0 0
        %727 = vmatpush2.bf16.msra.mxu0 0
        %728 = vmatprep.mubr.bf16.mxu0 0
        %729 = vmatmul.mubr.bf16.gmra.mxu0 %v694
        %v730 = vpop.f32.mrf.mxu0
        %v731 = vadd.f32 0.0, %v730
        %v732 = vpop.f32.mrf.mxu0
        %v733 = vpop.f32.mrf.mxu0
        %v734 = vadd.f32 0.0, %v733
        %v735 = vpop.f32.mrf.mxu0
        %736 = vdwg.mxu0
        %v737 = vsub.f32 %v638, %v683
        %v738 = vsub.f32 %v641, %v686
        %v739 = vsub.f32 %v731, %v638
        %v740 = vsub.f32 %v734, %v641
        %v741 = vsub.f32 %v739, %v683
        %v742 = vsub.f32 %v740, %v686
        %v743 = vunpack.c.l.bf16 %v378
        %v744 = vunpack.c.l.bf16 %v379
        %v745 = vmul.f32 %v737, %v743
        %v746 = vmul.f32 %v738, %v744
        %v747 = vunpack.c.l.bf16 %v380
        %v748 = vunpack.c.l.bf16 %v381
        %v749 = vmul.f32 %v741, %v747
        %v750 = vmul.f32 %v742, %v748
        %v751 = vsub.f32 %v745, %v749
        %v752 = vsub.f32 %v746, %v750
        %v753 = vmul.f32 %v737, %v747
        %v754 = vmul.f32 %v738, %v748
        %v755 = vmul.f32 %v741, %v743
        %v756 = vmul.f32 %v742, %v744
        %v757 = vadd.f32 %v753, %v755
        %v758 = vadd.f32 %v754, %v756
        %v759 = vpack.c.bf16 %v752, %v751
        %v760 = vpack.c.bf16 %v758, %v757
        %v761 = vadd.f32 %v751, %v757
        %v762 = vadd.f32 %v752, %v758
        %v763 = vpack.c.bf16 %v762, %v761
        %764 = vmatprep.subr.bf16.mxu0 0
        %765 = vmatpush1.bf16.msra.mxu0 0
        %766 = vmatprep.subr.bf16.mxu0 0
        %767 = vmatpush1.bf16.msra.mxu0 0
        %768 = vmatprep.subr.bf16.mxu0 0
        %769 = vmatpush1.bf16.msra.mxu0 0
        %770 = vmatprep.subr.bf16.mxu0 0
        %771 = vmatpush1.bf16.msra.mxu0 0
        %772 = vmatprep.subr.bf16.mxu0 0
        %773 = vmatpush1.bf16.msra.mxu0 0
        %774 = vmatprep.subr.bf16.mxu0 0
        %775 = vmatpush1.bf16.msra.mxu0 0
        %776 = vmatprep.subr.bf16.mxu0 0
        %777 = vmatpush1.bf16.msra.mxu0 0
        %778 = vmatprep.subr.bf16.mxu0 0
        %779 = vmatpush1.bf16.msra.mxu0 %v759
        %780 = vmatprep.subr.bf16.mxu0 0
        %781 = vmatpush2.bf16.msra.mxu0 0
        %782 = vmatprep.subr.bf16.mxu0 0
        %783 = vmatpush2.bf16.msra.mxu0 0
        %784 = vmatprep.subr.bf16.mxu0 0
        %785 = vmatpush2.bf16.msra.mxu0 0
        %786 = vmatprep.subr.bf16.mxu0 0
        %787 = vmatpush2.bf16.msra.mxu0 0
        %788 = vmatprep.subr.bf16.mxu0 0
        %789 = vmatpush2.bf16.msra.mxu0 0
        %790 = vmatprep.subr.bf16.mxu0 0
        %791 = vmatpush2.bf16.msra.mxu0 0
        %792 = vmatprep.subr.bf16.mxu0 0
        %793 = vmatpush2.bf16.msra.mxu0 0
        %794 = vmatprep.subr.bf16.mxu0 0
        %795 = vmatpush2.bf16.msra.mxu0 0
        %796 = vmatprep.mubr.bf16.mxu0 0
        %797 = vmatmul.mubr.bf16.gmra.mxu0 %v450
        %v798 = vpop.f32.mrf.mxu0
        %v799 = vadd.f32 0.0, %v798
        %v800 = vpop.f32.mrf.mxu0
        %v801 = vpop.f32.mrf.mxu0
        %v802 = vadd.f32 0.0, %v801
        %v803 = vpop.f32.mrf.mxu0
        %804 = vdwg.mxu0
        %805 = vmatprep.subr.bf16.mxu0 0
        %806 = vmatpush1.bf16.msra.mxu0 0
        %807 = vmatprep.subr.bf16.mxu0 0
        %808 = vmatpush1.bf16.msra.mxu0 0
        %809 = vmatprep.subr.bf16.mxu0 0
        %810 = vmatpush1.bf16.msra.mxu0 0
        %811 = vmatprep.subr.bf16.mxu0 0
        %812 = vmatpush1.bf16.msra.mxu0 0
        %813 = vmatprep.subr.bf16.mxu0 0
        %814 = vmatpush1.bf16.msra.mxu0 0
        %815 = vmatprep.subr.bf16.mxu0 0
        %816 = vmatpush1.bf16.msra.mxu0 0
        %817 = vmatprep.subr.bf16.mxu0 0
        %818 = vmatpush1.bf16.msra.mxu0 0
        %819 = vmatprep.subr.bf16.mxu0 0
        %820 = vmatpush1.bf16.msra.mxu0 %v760
        %821 = vmatprep.subr.bf16.mxu0 0
        %822 = vmatpush2.bf16.msra.mxu0 0
        %823 = vmatprep.subr.bf16.mxu0 0
        %824 = vmatpush2.bf16.msra.mxu0 0
        %825 = vmatprep.subr.bf16.mxu0 0
        %826 = vmatpush2.bf16.msra.mxu0 0
        %827 = vmatprep.subr.bf16.mxu0 0
        %828 = vmatpush2.bf16.msra.mxu0 0
        %829 = vmatprep.subr.bf16.mxu0 0
        %830 = vmatpush2.bf16.msra.mxu0 0
        %831 = vmatprep.subr.bf16.mxu0 0
        %832 = vmatpush2.bf16.msra.mxu0 0
        %833 = vmatprep.subr.bf16.mxu0 0
        %834 = vmatpush2.bf16.msra.mxu0 0
        %835 = vmatprep.subr.bf16.mxu0 0
        %836 = vmatpush2.bf16.msra.mxu0 0
        %837 = vmatprep.mubr.bf16.mxu0 0
        %838 = vmatmul.mubr.bf16.gmra.mxu0 %v499
        %v839 = vpop.f32.mrf.mxu0
        %v840 = vadd.f32 0.0, %v839
        %v841 = vpop.f32.mrf.mxu0
        %v842 = vpop.f32.mrf.mxu0
        %v843 = vadd.f32 0.0, %v842
        %v844 = vpop.f32.mrf.mxu0
        %845 = vdwg.mxu0
        %v848 = vunpack.c.l.b16 %v357
        %v849 = vunpack.c.l.b16 %v358
        %v850 = vpack.c.b16 %v849, %v848
        %v852 = vsel %vm448, %v850, 0
        %854 = vmatprep.subr.bf16.mxu0 0
        %855 = vmatpush1.bf16.msra.mxu0 0
        %856 = vmatprep.subr.bf16.mxu0 0
        %857 = vmatpush1.bf16.msra.mxu0 0
        %858 = vmatprep.subr.bf16.mxu0 0
        %859 = vmatpush1.bf16.msra.mxu0 0
        %860 = vmatprep.subr.bf16.mxu0 0
        %861 = vmatpush1.bf16.msra.mxu0 0
        %862 = vmatprep.subr.bf16.mxu0 0
        %863 = vmatpush1.bf16.msra.mxu0 0
        %864 = vmatprep.subr.bf16.mxu0 0
        %865 = vmatpush1.bf16.msra.mxu0 0
        %866 = vmatprep.subr.bf16.mxu0 0
        %867 = vmatpush1.bf16.msra.mxu0 0
        %868 = vmatprep.subr.bf16.mxu0 0
        %869 = vmatpush1.bf16.msra.mxu0 %v763
        %870 = vmatprep.subr.bf16.mxu0 0
        %871 = vmatpush2.bf16.msra.mxu0 0
        %872 = vmatprep.subr.bf16.mxu0 0
        %873 = vmatpush2.bf16.msra.mxu0 0
        %874 = vmatprep.subr.bf16.mxu0 0
        %875 = vmatpush2.bf16.msra.mxu0 0
        %876 = vmatprep.subr.bf16.mxu0 0
        %877 = vmatpush2.bf16.msra.mxu0 0
        %878 = vmatprep.subr.bf16.mxu0 0
        %879 = vmatpush2.bf16.msra.mxu0 0
        %880 = vmatprep.subr.bf16.mxu0 0
        %881 = vmatpush2.bf16.msra.mxu0 0
        %882 = vmatprep.subr.bf16.mxu0 0
        %883 = vmatpush2.bf16.msra.mxu0 0
        %884 = vmatprep.subr.bf16.mxu0 0
        %885 = vmatpush2.bf16.msra.mxu0 0
        %886 = vmatprep.mubr.bf16.mxu0 0
        %887 = vmatmul.mubr.bf16.gmra.mxu0 %v852
        %v888 = vpop.f32.mrf.mxu0
        %v889 = vadd.f32 0.0, %v888
        %v890 = vpop.f32.mrf.mxu0
        %v891 = vpop.f32.mrf.mxu0
        %v892 = vadd.f32 0.0, %v891
        %v893 = vpop.f32.mrf.mxu0
        %894 = vdwg.mxu0
        %v895 = vadd.f32 %v799, %v840
        %v896 = vadd.f32 %v802, %v843
        %v897 = vsub.f32 %v889, %v799
        %v898 = vsub.f32 %v892, %v802
        %v899 = vadd.f32 %v897, %v840
        %v900 = vadd.f32 %v898, %v843
        %v901 = vpack.c.bf16 %v896, %v895
        %v902 = vpack.c.bf16 %v900, %v899
        %v904 = vsel %vm448, %v901, 0
        %906 = vmatprep.subr.bf16.mxu0 0
        %907 = vmatpush1.bf16.msra.mxu0 0
        %908 = vmatprep.subr.bf16.mxu0 0
        %909 = vmatpush1.bf16.msra.mxu0 0
        %910 = vmatprep.subr.bf16.mxu0 0
        %911 = vmatpush1.bf16.msra.mxu0 0
        %912 = vmatprep.subr.bf16.mxu0 0
        %913 = vmatpush1.bf16.msra.mxu0 0
        %914 = vmatprep.subr.bf16.mxu0 0
        %915 = vmatpush1.bf16.msra.mxu0 0
        %916 = vmatprep.subr.bf16.mxu0 0
        %917 = vmatpush1.bf16.msra.mxu0 0
        %918 = vmatprep.subr.bf16.mxu0 0
        %919 = vmatpush1.bf16.msra.mxu0 0
        %920 = vmatprep.subr.bf16.mxu0 0
        %921 = vmatpush1.bf16.msra.mxu0 %v447
        %922 = vmatprep.subr.bf16.mxu0 0
        %923 = vmatpush2.bf16.msra.mxu0 0
        %924 = vmatprep.subr.bf16.mxu0 0
        %925 = vmatpush2.bf16.msra.mxu0 0
        %926 = vmatprep.subr.bf16.mxu0 0
        %927 = vmatpush2.bf16.msra.mxu0 0
        %928 = vmatprep.subr.bf16.mxu0 0
        %929 = vmatpush2.bf16.msra.mxu0 0
        %930 = vmatprep.subr.bf16.mxu0 0
        %931 = vmatpush2.bf16.msra.mxu0 0
        %932 = vmatprep.subr.bf16.mxu0 0
        %933 = vmatpush2.bf16.msra.mxu0 0
        %934 = vmatprep.subr.bf16.mxu0 0
        %935 = vmatpush2.bf16.msra.mxu0 0
        %936 = vmatprep.subr.bf16.mxu0 0
        %937 = vmatpush2.bf16.msra.mxu0 0
        %938 = vmatprep.mubr.bf16.mxu0 0
        %939 = vmatmul.mubr.bf16.gmra.mxu0 %v904
        %v940 = vpop.f32.mrf.mxu0
        %v941 = vadd.f32 0.0, %v940
        %v942 = vpop.f32.mrf.mxu0
        %v943 = vpop.f32.mrf.mxu0
        %v944 = vadd.f32 0.0, %v943
        %v945 = vpop.f32.mrf.mxu0
        %946 = vdwg.mxu0
        %v948 = vsel %vm448, %v902, 0
        %950 = vmatprep.subr.bf16.mxu0 0
        %951 = vmatpush1.bf16.msra.mxu0 0
        %952 = vmatprep.subr.bf16.mxu0 0
        %953 = vmatpush1.bf16.msra.mxu0 0
        %954 = vmatprep.subr.bf16.mxu0 0
        %955 = vmatpush1.bf16.msra.mxu0 0
        %956 = vmatprep.subr.bf16.mxu0 0
        %957 = vmatpush1.bf16.msra.mxu0 0
        %958 = vmatprep.subr.bf16.mxu0 0
        %959 = vmatpush1.bf16.msra.mxu0 0
        %960 = vmatprep.subr.bf16.mxu0 0
        %961 = vmatpush1.bf16.msra.mxu0 0
        %962 = vmatprep.subr.bf16.mxu0 0
        %963 = vmatpush1.bf16.msra.mxu0 0
        %964 = vmatprep.subr.bf16.mxu0 0
        %965 = vmatpush1.bf16.msra.mxu0 %v497
        %966 = vmatprep.subr.bf16.mxu0 0
        %967 = vmatpush2.bf16.msra.mxu0 0
        %968 = vmatprep.subr.bf16.mxu0 0
        %969 = vmatpush2.bf16.msra.mxu0 0
        %970 = vmatprep.subr.bf16.mxu0 0
        %971 = vmatpush2.bf16.msra.mxu0 0
        %972 = vmatprep.subr.bf16.mxu0 0
        %973 = vmatpush2.bf16.msra.mxu0 0
        %974 = vmatprep.subr.bf16.mxu0 0
        %975 = vmatpush2.bf16.msra.mxu0 0
        %976 = vmatprep.subr.bf16.mxu0 0
        %977 = vmatpush2.bf16.msra.mxu0 0
        %978 = vmatprep.subr.bf16.mxu0 0
        %979 = vmatpush2.bf16.msra.mxu0 0
        %980 = vmatprep.subr.bf16.mxu0 0
        %981 = vmatpush2.bf16.msra.mxu0 0
        %982 = vmatprep.mubr.bf16.mxu0 0
        %983 = vmatmul.mubr.bf16.gmra.mxu0 %v948
        %v984 = vpop.f32.mrf.mxu0
        %v985 = vadd.f32 0.0, %v984
        %v986 = vpop.f32.mrf.mxu0
        %v987 = vpop.f32.mrf.mxu0
        %v988 = vadd.f32 0.0, %v987
        %v989 = vpop.f32.mrf.mxu0
        %990 = vdwg.mxu0
        %v991 = vsub.f32 %v895, %v899
        %v992 = vsub.f32 %v896, %v900
        %v993 = vpack.c.bf16 %v992, %v991
        %v995 = vsel %vm448, %v993, 0
        %997 = vmatprep.subr.bf16.mxu0 0
        %998 = vmatpush1.bf16.msra.mxu0 0
        %999 = vmatprep.subr.bf16.mxu0 0
        %1000 = vmatpush1.bf16.msra.mxu0 0
        %1001 = vmatprep.subr.bf16.mxu0 0
        %1002 = vmatpush1.bf16.msra.mxu0 0
        %1003 = vmatprep.subr.bf16.mxu0 0
        %1004 = vmatpush1.bf16.msra.mxu0 0
        %1005 = vmatprep.subr.bf16.mxu0 0
        %1006 = vmatpush1.bf16.msra.mxu0 0
        %1007 = vmatprep.subr.bf16.mxu0 0
        %1008 = vmatpush1.bf16.msra.mxu0 0
        %1009 = vmatprep.subr.bf16.mxu0 0
        %1010 = vmatpush1.bf16.msra.mxu0 0
        %1011 = vmatprep.subr.bf16.mxu0 0
        %1012 = vmatpush1.bf16.msra.mxu0 %v546
        %1013 = vmatprep.subr.bf16.mxu0 0
        %1014 = vmatpush2.bf16.msra.mxu0 0
        %1015 = vmatprep.subr.bf16.mxu0 0
        %1016 = vmatpush2.bf16.msra.mxu0 0
        %1017 = vmatprep.subr.bf16.mxu0 0
        %1018 = vmatpush2.bf16.msra.mxu0 0
        %1019 = vmatprep.subr.bf16.mxu0 0
        %1020 = vmatpush2.bf16.msra.mxu0 0
        %1021 = vmatprep.subr.bf16.mxu0 0
        %1022 = vmatpush2.bf16.msra.mxu0 0
        %1023 = vmatprep.subr.bf16.mxu0 0
        %1024 = vmatpush2.bf16.msra.mxu0 0
        %1025 = vmatprep.subr.bf16.mxu0 0
        %1026 = vmatpush2.bf16.msra.mxu0 0
        %1027 = vmatprep.subr.bf16.mxu0 0
        %1028 = vmatpush2.bf16.msra.mxu0 0
        %1029 = vmatprep.mubr.bf16.mxu0 0
        %1030 = vmatmul.mubr.bf16.gmra.mxu0 %v995
        %v1031 = vpop.f32.mrf.mxu0
        %v1032 = vadd.f32 0.0, %v1031
        %v1033 = vpop.f32.mrf.mxu0
        %v1034 = vpop.f32.mrf.mxu0
        %v1035 = vadd.f32 0.0, %v1034
        %v1036 = vpop.f32.mrf.mxu0
        %1037 = vdwg.mxu0
        %v1038 = vadd.f32 %v941, %v985
        %v1039 = vadd.f32 %v944, %v988
        %v1040 = vsub.f32 %v941, %v985
        %v1041 = vsub.f32 %v944, %v988
        %v1042 = vsub.f32 %v1040, %v1032
        %v1043 = vsub.f32 %v1041, %v1035
        %s1044 = scalar_lea.vmem %s334, 8
        %v1045 = vld [vmem:[%s1044] sm:$0xf]
        %v1046 = vld [vmem:[%s1044 + $0x4] sm:$0xf]
        %v1047 = vunpack.c.l.bf16 %v1045
        %v1048 = vunpack.c.l.bf16 %v1046
        %s1049 = scalar_lea.vmem %s345, 8
        %v1050 = vld [vmem:[%s1049] sm:$0xf]
        %v1051 = vld [vmem:[%s1049 + $0x4] sm:$0xf]
        %v1052 = vunpack.c.l.bf16 %v1050
        %v1053 = vunpack.c.l.bf16 %v1051
        %v1054 = vmul.f32 %v1047, %v394
        %v1055 = vmul.f32 %v1048, %v395
        %v1056 = vmul.f32 %v1052, %v398
        %v1057 = vmul.f32 %v1053, %v399
        %v1058 = vsub.f32 %v1054, %v1056
        %v1059 = vsub.f32 %v1055, %v1057
        %v1060 = vmul.f32 %v1047, %v398
        %v1061 = vmul.f32 %v1048, %v399
        %v1062 = vmul.f32 %v1052, %v394
        %v1063 = vmul.f32 %v1053, %v395
        %v1064 = vadd.f32 %v1060, %v1062
        %v1065 = vadd.f32 %v1061, %v1063
        %v1066 = vmul.f32 %v1038, %v410
        %v1067 = vmul.f32 %v1039, %v411
        %v1068 = vmul.f32 %v1042, %v414
        %v1069 = vmul.f32 %v1043, %v415
        %v1070 = vsub.f32 %v1066, %v1068
        %v1071 = vsub.f32 %v1067, %v1069
        %v1072 = vmul.f32 %v1038, %v414
        %v1073 = vmul.f32 %v1039, %v415
        %v1074 = vmul.f32 %v1042, %v410
        %v1075 = vmul.f32 %v1043, %v411
        %v1076 = vadd.f32 %v1072, %v1074
        %v1077 = vadd.f32 %v1073, %v1075
        %v1078 = vmul.f32 %v1070, 0.7
        %v1079 = vmul.f32 %v1071, 0.7
        %v1080 = vmul.f32 %v1058, 0.3
        %v1081 = vmul.f32 %v1059, 0.3
        %v1082 = vadd.f32 %v1078, %v1080
        %v1083 = vadd.f32 %v1079, %v1081
        %v1084 = vmul.f32 %v1076, 0.7
        %v1085 = vmul.f32 %v1077, 0.7
        %v1086 = vmul.f32 %v1064, 0.3
        %v1087 = vmul.f32 %v1065, 0.3
        %v1088 = vadd.f32 %v1084, %v1086
        %v1089 = vadd.f32 %v1085, %v1087
        %v1090 = vpack.c.bf16 %v1083, %v1082
        %v1091 = vpack.c.bf16 %v1089, %v1088
        %v1092 = vadd.f32 %v1082, %v1088
        %v1093 = vadd.f32 %v1083, %v1089
        %v1094 = vpack.c.bf16 %v1093, %v1092
        %1095 = vmatprep.subr.bf16.mxu0 0
        %1096 = vmatpush1.bf16.msra.mxu0 0
        %1097 = vmatprep.subr.bf16.mxu0 0
        %1098 = vmatpush1.bf16.msra.mxu0 0
        %1099 = vmatprep.subr.bf16.mxu0 0
        %1100 = vmatpush1.bf16.msra.mxu0 0
        %1101 = vmatprep.subr.bf16.mxu0 0
        %1102 = vmatpush1.bf16.msra.mxu0 0
        %1103 = vmatprep.subr.bf16.mxu0 0
        %1104 = vmatpush1.bf16.msra.mxu0 0
        %1105 = vmatprep.subr.bf16.mxu0 0
        %1106 = vmatpush1.bf16.msra.mxu0 0
        %1107 = vmatprep.subr.bf16.mxu0 0
        %1108 = vmatpush1.bf16.msra.mxu0 0
        %1109 = vmatprep.subr.bf16.mxu0 0
        %1110 = vmatpush1.bf16.msra.mxu0 %v1090
        %1111 = vmatprep.subr.bf16.mxu0 0
        %1112 = vmatpush2.bf16.msra.mxu0 0
        %1113 = vmatprep.subr.bf16.mxu0 0
        %1114 = vmatpush2.bf16.msra.mxu0 0
        %1115 = vmatprep.subr.bf16.mxu0 0
        %1116 = vmatpush2.bf16.msra.mxu0 0
        %1117 = vmatprep.subr.bf16.mxu0 0
        %1118 = vmatpush2.bf16.msra.mxu0 0
        %1119 = vmatprep.subr.bf16.mxu0 0
        %1120 = vmatpush2.bf16.msra.mxu0 0
        %1121 = vmatprep.subr.bf16.mxu0 0
        %1122 = vmatpush2.bf16.msra.mxu0 0
        %1123 = vmatprep.subr.bf16.mxu0 0
        %1124 = vmatpush2.bf16.msra.mxu0 0
        %1125 = vmatprep.subr.bf16.mxu0 0
        %1126 = vmatpush2.bf16.msra.mxu0 0
        %1127 = vmatprep.mubr.bf16.mxu0 0
        %1128 = vmatmul.mubr.bf16.gmra.mxu0 %v450
        %v1129 = vpop.f32.mrf.mxu0
        %v1130 = vadd.f32 0.0, %v1129
        %v1131 = vpop.f32.mrf.mxu0
        %v1132 = vpop.f32.mrf.mxu0
        %v1133 = vadd.f32 0.0, %v1132
        %v1134 = vpop.f32.mrf.mxu0
        %1135 = vdwg.mxu0
        %1136 = vmatprep.subr.bf16.mxu0 0
        %1137 = vmatpush1.bf16.msra.mxu0 0
        %1138 = vmatprep.subr.bf16.mxu0 0
        %1139 = vmatpush1.bf16.msra.mxu0 0
        %1140 = vmatprep.subr.bf16.mxu0 0
        %1141 = vmatpush1.bf16.msra.mxu0 0
        %1142 = vmatprep.subr.bf16.mxu0 0
        %1143 = vmatpush1.bf16.msra.mxu0 0
        %1144 = vmatprep.subr.bf16.mxu0 0
        %1145 = vmatpush1.bf16.msra.mxu0 0
        %1146 = vmatprep.subr.bf16.mxu0 0
        %1147 = vmatpush1.bf16.msra.mxu0 0
        %1148 = vmatprep.subr.bf16.mxu0 0
        %1149 = vmatpush1.bf16.msra.mxu0 0
        %1150 = vmatprep.subr.bf16.mxu0 0
        %1151 = vmatpush1.bf16.msra.mxu0 %v1091
        %1152 = vmatprep.subr.bf16.mxu0 0
        %1153 = vmatpush2.bf16.msra.mxu0 0
        %1154 = vmatprep.subr.bf16.mxu0 0
        %1155 = vmatpush2.bf16.msra.mxu0 0
        %1156 = vmatprep.subr.bf16.mxu0 0
        %1157 = vmatpush2.bf16.msra.mxu0 0
        %1158 = vmatprep.subr.bf16.mxu0 0
        %1159 = vmatpush2.bf16.msra.mxu0 0
        %1160 = vmatprep.subr.bf16.mxu0 0
        %1161 = vmatpush2.bf16.msra.mxu0 0
        %1162 = vmatprep.subr.bf16.mxu0 0
        %1163 = vmatpush2.bf16.msra.mxu0 0
        %1164 = vmatprep.subr.bf16.mxu0 0
        %1165 = vmatpush2.bf16.msra.mxu0 0
        %1166 = vmatprep.subr.bf16.mxu0 0
        %1167 = vmatpush2.bf16.msra.mxu0 0
        %1168 = vmatprep.mubr.bf16.mxu0 0
        %1169 = vmatmul.mubr.bf16.gmra.mxu0 %v499
        %v1170 = vpop.f32.mrf.mxu0
        %v1171 = vadd.f32 0.0, %v1170
        %v1172 = vpop.f32.mrf.mxu0
        %v1173 = vpop.f32.mrf.mxu0
        %v1174 = vadd.f32 0.0, %v1173
        %v1175 = vpop.f32.mrf.mxu0
        %1176 = vdwg.mxu0
        %1177 = vmatprep.subr.bf16.mxu0 0
        %1178 = vmatpush1.bf16.msra.mxu0 0
        %1179 = vmatprep.subr.bf16.mxu0 0
        %1180 = vmatpush1.bf16.msra.mxu0 0
        %1181 = vmatprep.subr.bf16.mxu0 0
        %1182 = vmatpush1.bf16.msra.mxu0 0
        %1183 = vmatprep.subr.bf16.mxu0 0
        %1184 = vmatpush1.bf16.msra.mxu0 0
        %1185 = vmatprep.subr.bf16.mxu0 0
        %1186 = vmatpush1.bf16.msra.mxu0 0
        %1187 = vmatprep.subr.bf16.mxu0 0
        %1188 = vmatpush1.bf16.msra.mxu0 0
        %1189 = vmatprep.subr.bf16.mxu0 0
        %1190 = vmatpush1.bf16.msra.mxu0 0
        %1191 = vmatprep.subr.bf16.mxu0 0
        %1192 = vmatpush1.bf16.msra.mxu0 %v1094
        %1193 = vmatprep.subr.bf16.mxu0 0
        %1194 = vmatpush2.bf16.msra.mxu0 0
        %1195 = vmatprep.subr.bf16.mxu0 0
        %1196 = vmatpush2.bf16.msra.mxu0 0
        %1197 = vmatprep.subr.bf16.mxu0 0
        %1198 = vmatpush2.bf16.msra.mxu0 0
        %1199 = vmatprep.subr.bf16.mxu0 0
        %1200 = vmatpush2.bf16.msra.mxu0 0
        %1201 = vmatprep.subr.bf16.mxu0 0
        %1202 = vmatpush2.bf16.msra.mxu0 0
        %1203 = vmatprep.subr.bf16.mxu0 0
        %1204 = vmatpush2.bf16.msra.mxu0 0
        %1205 = vmatprep.subr.bf16.mxu0 0
        %1206 = vmatpush2.bf16.msra.mxu0 0
        %1207 = vmatprep.subr.bf16.mxu0 0
        %1208 = vmatpush2.bf16.msra.mxu0 0
        %1209 = vmatprep.mubr.bf16.mxu0 0
        %1210 = vmatmul.mubr.bf16.gmra.mxu0 %v548
        %v1211 = vpop.f32.mrf.mxu0
        %v1212 = vadd.f32 0.0, %v1211
        %v1213 = vpop.f32.mrf.mxu0
        %v1214 = vpop.f32.mrf.mxu0
        %v1215 = vadd.f32 0.0, %v1214
        %v1216 = vpop.f32.mrf.mxu0
        %1217 = vdwg.mxu0
        %v1218 = vsub.f32 %v1130, %v1171
        %v1219 = vsub.f32 %v1133, %v1174
        %v1220 = vsub.f32 %v1212, %v1130
        %v1221 = vsub.f32 %v1215, %v1133
        %v1222 = vsub.f32 %v1220, %v1171
        %v1223 = vsub.f32 %v1221, %v1174
        %v1224 = vpack.c.bf16 %v1219, %v1218
        %v1225 = vpack.c.bf16 %v1223, %v1222
        %v1227 = vsel %vm448, %v1224, 0
        %1229 = vmatprep.subr.bf16.mxu0 0
        %1230 = vmatpush1.bf16.msra.mxu0 0
        %1231 = vmatprep.subr.bf16.mxu0 0
        %1232 = vmatpush1.bf16.msra.mxu0 0
        %1233 = vmatprep.subr.bf16.mxu0 0
        %1234 = vmatpush1.bf16.msra.mxu0 0
        %1235 = vmatprep.subr.bf16.mxu0 0
        %1236 = vmatpush1.bf16.msra.mxu0 0
        %1237 = vmatprep.subr.bf16.mxu0 0
        %1238 = vmatpush1.bf16.msra.mxu0 0
        %1239 = vmatprep.subr.bf16.mxu0 0
        %1240 = vmatpush1.bf16.msra.mxu0 0
        %1241 = vmatprep.subr.bf16.mxu0 0
        %1242 = vmatpush1.bf16.msra.mxu0 0
        %1243 = vmatprep.subr.bf16.mxu0 0
        %1244 = vmatpush1.bf16.msra.mxu0 %v447
        %1245 = vmatprep.subr.bf16.mxu0 0
        %1246 = vmatpush2.bf16.msra.mxu0 0
        %1247 = vmatprep.subr.bf16.mxu0 0
        %1248 = vmatpush2.bf16.msra.mxu0 0
        %1249 = vmatprep.subr.bf16.mxu0 0
        %1250 = vmatpush2.bf16.msra.mxu0 0
        %1251 = vmatprep.subr.bf16.mxu0 0
        %1252 = vmatpush2.bf16.msra.mxu0 0
        %1253 = vmatprep.subr.bf16.mxu0 0
        %1254 = vmatpush2.bf16.msra.mxu0 0
        %1255 = vmatprep.subr.bf16.mxu0 0
        %1256 = vmatpush2.bf16.msra.mxu0 0
        %1257 = vmatprep.subr.bf16.mxu0 0
        %1258 = vmatpush2.bf16.msra.mxu0 0
        %1259 = vmatprep.subr.bf16.mxu0 0
        %1260 = vmatpush2.bf16.msra.mxu0 0
        %1261 = vmatprep.mubr.bf16.mxu0 0
        %1262 = vmatmul.mubr.bf16.gmra.mxu0 %v1227
        %v1263 = vpop.f32.mrf.mxu0
        %v1264 = vadd.f32 0.0, %v1263
        %v1265 = vpop.f32.mrf.mxu0
        %v1266 = vpop.f32.mrf.mxu0
        %v1267 = vadd.f32 0.0, %v1266
        %v1268 = vpop.f32.mrf.mxu0
        %1269 = vdwg.mxu0
        %v1271 = vsel %vm448, %v1225, 0
        %1273 = vmatprep.subr.bf16.mxu0 0
        %1274 = vmatpush1.bf16.msra.mxu0 0
        %1275 = vmatprep.subr.bf16.mxu0 0
        %1276 = vmatpush1.bf16.msra.mxu0 0
        %1277 = vmatprep.subr.bf16.mxu0 0
        %1278 = vmatpush1.bf16.msra.mxu0 0
        %1279 = vmatprep.subr.bf16.mxu0 0
        %1280 = vmatpush1.bf16.msra.mxu0 0
        %1281 = vmatprep.subr.bf16.mxu0 0
        %1282 = vmatpush1.bf16.msra.mxu0 0
        %1283 = vmatprep.subr.bf16.mxu0 0
        %1284 = vmatpush1.bf16.msra.mxu0 0
        %1285 = vmatprep.subr.bf16.mxu0 0
        %1286 = vmatpush1.bf16.msra.mxu0 0
        %1287 = vmatprep.subr.bf16.mxu0 0
        %1288 = vmatpush1.bf16.msra.mxu0 %v497
        %1289 = vmatprep.subr.bf16.mxu0 0
        %1290 = vmatpush2.bf16.msra.mxu0 0
        %1291 = vmatprep.subr.bf16.mxu0 0
        %1292 = vmatpush2.bf16.msra.mxu0 0
        %1293 = vmatprep.subr.bf16.mxu0 0
        %1294 = vmatpush2.bf16.msra.mxu0 0
        %1295 = vmatprep.subr.bf16.mxu0 0
        %1296 = vmatpush2.bf16.msra.mxu0 0
        %1297 = vmatprep.subr.bf16.mxu0 0
        %1298 = vmatpush2.bf16.msra.mxu0 0
        %1299 = vmatprep.subr.bf16.mxu0 0
        %1300 = vmatpush2.bf16.msra.mxu0 0
        %1301 = vmatprep.subr.bf16.mxu0 0
        %1302 = vmatpush2.bf16.msra.mxu0 0
        %1303 = vmatprep.subr.bf16.mxu0 0
        %1304 = vmatpush2.bf16.msra.mxu0 0
        %1305 = vmatprep.mubr.bf16.mxu0 0
        %1306 = vmatmul.mubr.bf16.gmra.mxu0 %v1271
        %v1307 = vpop.f32.mrf.mxu0
        %v1308 = vadd.f32 0.0, %v1307
        %v1309 = vpop.f32.mrf.mxu0
        %v1310 = vpop.f32.mrf.mxu0
        %v1311 = vadd.f32 0.0, %v1310
        %v1312 = vpop.f32.mrf.mxu0
        %1313 = vdwg.mxu0
        %v1314 = vadd.f32 %v1218, %v1222
        %v1315 = vadd.f32 %v1219, %v1223
        %v1316 = vpack.c.bf16 %v1315, %v1314
        %v1318 = vsel %vm448, %v1316, 0
        %1320 = vmatprep.subr.bf16.mxu0 0
        %1321 = vmatpush1.bf16.msra.mxu0 0
        %1322 = vmatprep.subr.bf16.mxu0 0
        %1323 = vmatpush1.bf16.msra.mxu0 0
        %1324 = vmatprep.subr.bf16.mxu0 0
        %1325 = vmatpush1.bf16.msra.mxu0 0
        %1326 = vmatprep.subr.bf16.mxu0 0
        %1327 = vmatpush1.bf16.msra.mxu0 0
        %1328 = vmatprep.subr.bf16.mxu0 0
        %1329 = vmatpush1.bf16.msra.mxu0 0
        %1330 = vmatprep.subr.bf16.mxu0 0
        %1331 = vmatpush1.bf16.msra.mxu0 0
        %1332 = vmatprep.subr.bf16.mxu0 0
        %1333 = vmatpush1.bf16.msra.mxu0 0
        %1334 = vmatprep.subr.bf16.mxu0 0
        %1335 = vmatpush1.bf16.msra.mxu0 %v546
        %1336 = vmatprep.subr.bf16.mxu0 0
        %1337 = vmatpush2.bf16.msra.mxu0 0
        %1338 = vmatprep.subr.bf16.mxu0 0
        %1339 = vmatpush2.bf16.msra.mxu0 0
        %1340 = vmatprep.subr.bf16.mxu0 0
        %1341 = vmatpush2.bf16.msra.mxu0 0
        %1342 = vmatprep.subr.bf16.mxu0 0
        %1343 = vmatpush2.bf16.msra.mxu0 0
        %1344 = vmatprep.subr.bf16.mxu0 0
        %1345 = vmatpush2.bf16.msra.mxu0 0
        %1346 = vmatprep.subr.bf16.mxu0 0
        %1347 = vmatpush2.bf16.msra.mxu0 0
        %1348 = vmatprep.subr.bf16.mxu0 0
        %1349 = vmatpush2.bf16.msra.mxu0 0
        %1350 = vmatprep.subr.bf16.mxu0 0
        %1351 = vmatpush2.bf16.msra.mxu0 0
        %1352 = vmatprep.mubr.bf16.mxu0 0
        %1353 = vmatmul.mubr.bf16.gmra.mxu0 %v1318
        %v1354 = vpop.f32.mrf.mxu0
        %v1355 = vadd.f32 0.0, %v1354
        %v1356 = vpop.f32.mrf.mxu0
        %v1357 = vpop.f32.mrf.mxu0
        %v1358 = vadd.f32 0.0, %v1357
        %v1359 = vpop.f32.mrf.mxu0
        %1360 = vdwg.mxu0
        %v1361 = vsub.f32 %v1264, %v1308
        %v1362 = vsub.f32 %v1267, %v1311
        %v1363 = vsub.f32 %v1355, %v1264
        %v1364 = vsub.f32 %v1358, %v1267
        %v1365 = vsub.f32 %v1363, %v1308
        %v1366 = vsub.f32 %v1364, %v1311
        %v1367 = vmul.f32 %v1361, %v743
        %v1368 = vmul.f32 %v1362, %v744
        %v1369 = vmul.f32 %v1365, %v747
        %v1370 = vmul.f32 %v1366, %v748
        %v1371 = vsub.f32 %v1367, %v1369
        %v1372 = vsub.f32 %v1368, %v1370
        %v1373 = vmul.f32 %v1361, %v747
        %v1374 = vmul.f32 %v1362, %v748
        %v1375 = vmul.f32 %v1365, %v743
        %v1376 = vmul.f32 %v1366, %v744
        %v1377 = vadd.f32 %v1373, %v1375
        %v1378 = vadd.f32 %v1374, %v1376
        %v1379 = vpack.c.bf16 %v1372, %v1371
        %v1380 = vpack.c.bf16 %v1378, %v1377
        %v1381 = vadd.f32 %v1371, %v1377
        %v1382 = vadd.f32 %v1372, %v1378
        %v1383 = vpack.c.bf16 %v1382, %v1381
        %1384 = vmatprep.subr.bf16.mxu0 0
        %1385 = vmatpush1.bf16.msra.mxu0 0
        %1386 = vmatprep.subr.bf16.mxu0 0
        %1387 = vmatpush1.bf16.msra.mxu0 0
        %1388 = vmatprep.subr.bf16.mxu0 0
        %1389 = vmatpush1.bf16.msra.mxu0 0
        %1390 = vmatprep.subr.bf16.mxu0 0
        %1391 = vmatpush1.bf16.msra.mxu0 0
        %1392 = vmatprep.subr.bf16.mxu0 0
        %1393 = vmatpush1.bf16.msra.mxu0 0
        %1394 = vmatprep.subr.bf16.mxu0 0
        %1395 = vmatpush1.bf16.msra.mxu0 0
        %1396 = vmatprep.subr.bf16.mxu0 0
        %1397 = vmatpush1.bf16.msra.mxu0 0
        %1398 = vmatprep.subr.bf16.mxu0 0
        %1399 = vmatpush1.bf16.msra.mxu0 %v1379
        %1400 = vmatprep.subr.bf16.mxu0 0
        %1401 = vmatpush2.bf16.msra.mxu0 0
        %1402 = vmatprep.subr.bf16.mxu0 0
        %1403 = vmatpush2.bf16.msra.mxu0 0
        %1404 = vmatprep.subr.bf16.mxu0 0
        %1405 = vmatpush2.bf16.msra.mxu0 0
        %1406 = vmatprep.subr.bf16.mxu0 0
        %1407 = vmatpush2.bf16.msra.mxu0 0
        %1408 = vmatprep.subr.bf16.mxu0 0
        %1409 = vmatpush2.bf16.msra.mxu0 0
        %1410 = vmatprep.subr.bf16.mxu0 0
        %1411 = vmatpush2.bf16.msra.mxu0 0
        %1412 = vmatprep.subr.bf16.mxu0 0
        %1413 = vmatpush2.bf16.msra.mxu0 0
        %1414 = vmatprep.subr.bf16.mxu0 0
        %1415 = vmatpush2.bf16.msra.mxu0 0
        %1416 = vmatprep.mubr.bf16.mxu0 0
        %1417 = vmatmul.mubr.bf16.gmra.mxu0 %v450
        %v1418 = vpop.f32.mrf.mxu0
        %v1419 = vadd.f32 0.0, %v1418
        %v1420 = vpop.f32.mrf.mxu0
        %v1421 = vpop.f32.mrf.mxu0
        %v1422 = vadd.f32 0.0, %v1421
        %v1423 = vpop.f32.mrf.mxu0
        %1424 = vdwg.mxu0
        %1425 = vmatprep.subr.bf16.mxu0 0
        %1426 = vmatpush1.bf16.msra.mxu0 0
        %1427 = vmatprep.subr.bf16.mxu0 0
        %1428 = vmatpush1.bf16.msra.mxu0 0
        %1429 = vmatprep.subr.bf16.mxu0 0
        %1430 = vmatpush1.bf16.msra.mxu0 0
        %1431 = vmatprep.subr.bf16.mxu0 0
        %1432 = vmatpush1.bf16.msra.mxu0 0
        %1433 = vmatprep.subr.bf16.mxu0 0
        %1434 = vmatpush1.bf16.msra.mxu0 0
        %1435 = vmatprep.subr.bf16.mxu0 0
        %1436 = vmatpush1.bf16.msra.mxu0 0
        %1437 = vmatprep.subr.bf16.mxu0 0
        %1438 = vmatpush1.bf16.msra.mxu0 0
        %1439 = vmatprep.subr.bf16.mxu0 0
        %1440 = vmatpush1.bf16.msra.mxu0 %v1380
        %1441 = vmatprep.subr.bf16.mxu0 0
        %1442 = vmatpush2.bf16.msra.mxu0 0
        %1443 = vmatprep.subr.bf16.mxu0 0
        %1444 = vmatpush2.bf16.msra.mxu0 0
        %1445 = vmatprep.subr.bf16.mxu0 0
        %1446 = vmatpush2.bf16.msra.mxu0 0
        %1447 = vmatprep.subr.bf16.mxu0 0
        %1448 = vmatpush2.bf16.msra.mxu0 0
        %1449 = vmatprep.subr.bf16.mxu0 0
        %1450 = vmatpush2.bf16.msra.mxu0 0
        %1451 = vmatprep.subr.bf16.mxu0 0
        %1452 = vmatpush2.bf16.msra.mxu0 0
        %1453 = vmatprep.subr.bf16.mxu0 0
        %1454 = vmatpush2.bf16.msra.mxu0 0
        %1455 = vmatprep.subr.bf16.mxu0 0
        %1456 = vmatpush2.bf16.msra.mxu0 0
        %1457 = vmatprep.mubr.bf16.mxu0 0
        %1458 = vmatmul.mubr.bf16.gmra.mxu0 %v499
        %v1459 = vpop.f32.mrf.mxu0
        %v1460 = vadd.f32 0.0, %v1459
        %v1461 = vpop.f32.mrf.mxu0
        %v1462 = vpop.f32.mrf.mxu0
        %v1463 = vadd.f32 0.0, %v1462
        %v1464 = vpop.f32.mrf.mxu0
        %1465 = vdwg.mxu0
        %1466 = vmatprep.subr.bf16.mxu0 0
        %1467 = vmatpush1.bf16.msra.mxu0 0
        %1468 = vmatprep.subr.bf16.mxu0 0
        %1469 = vmatpush1.bf16.msra.mxu0 0
        %1470 = vmatprep.subr.bf16.mxu0 0
        %1471 = vmatpush1.bf16.msra.mxu0 0
        %1472 = vmatprep.subr.bf16.mxu0 0
        %1473 = vmatpush1.bf16.msra.mxu0 0
        %1474 = vmatprep.subr.bf16.mxu0 0
        %1475 = vmatpush1.bf16.msra.mxu0 0
        %1476 = vmatprep.subr.bf16.mxu0 0
        %1477 = vmatpush1.bf16.msra.mxu0 0
        %1478 = vmatprep.subr.bf16.mxu0 0
        %1479 = vmatpush1.bf16.msra.mxu0 0
        %1480 = vmatprep.subr.bf16.mxu0 0
        %1481 = vmatpush1.bf16.msra.mxu0 %v1383
        %1482 = vmatprep.subr.bf16.mxu0 0
        %1483 = vmatpush2.bf16.msra.mxu0 0
        %1484 = vmatprep.subr.bf16.mxu0 0
        %1485 = vmatpush2.bf16.msra.mxu0 0
        %1486 = vmatprep.subr.bf16.mxu0 0
        %1487 = vmatpush2.bf16.msra.mxu0 0
        %1488 = vmatprep.subr.bf16.mxu0 0
        %1489 = vmatpush2.bf16.msra.mxu0 0
        %1490 = vmatprep.subr.bf16.mxu0 0
        %1491 = vmatpush2.bf16.msra.mxu0 0
        %1492 = vmatprep.subr.bf16.mxu0 0
        %1493 = vmatpush2.bf16.msra.mxu0 0
        %1494 = vmatprep.subr.bf16.mxu0 0
        %1495 = vmatpush2.bf16.msra.mxu0 0
        %1496 = vmatprep.subr.bf16.mxu0 0
        %1497 = vmatpush2.bf16.msra.mxu0 0
        %1498 = vmatprep.mubr.bf16.mxu0 0
        %1499 = vmatmul.mubr.bf16.gmra.mxu0 %v852
        %v1500 = vpop.f32.mrf.mxu0
        %v1501 = vadd.f32 0.0, %v1500
        %v1502 = vpop.f32.mrf.mxu0
        %v1503 = vpop.f32.mrf.mxu0
        %v1504 = vadd.f32 0.0, %v1503
        %v1505 = vpop.f32.mrf.mxu0
        %1506 = vdwg.mxu0
        %v1507 = vadd.f32 %v1419, %v1460
        %v1508 = vadd.f32 %v1422, %v1463
        %v1509 = vsub.f32 %v1501, %v1419
        %v1510 = vsub.f32 %v1504, %v1422
        %v1511 = vadd.f32 %v1509, %v1460
        %v1512 = vadd.f32 %v1510, %v1463
        %v1513 = vpack.c.bf16 %v1508, %v1507
        %v1514 = vpack.c.bf16 %v1512, %v1511
        %v1516 = vsel %vm448, %v1513, 0
        %1518 = vmatprep.subr.bf16.mxu0 0
        %1519 = vmatpush1.bf16.msra.mxu0 0
        %1520 = vmatprep.subr.bf16.mxu0 0
        %1521 = vmatpush1.bf16.msra.mxu0 0
        %1522 = vmatprep.subr.bf16.mxu0 0
        %1523 = vmatpush1.bf16.msra.mxu0 0
        %1524 = vmatprep.subr.bf16.mxu0 0
        %1525 = vmatpush1.bf16.msra.mxu0 0
        %1526 = vmatprep.subr.bf16.mxu0 0
        %1527 = vmatpush1.bf16.msra.mxu0 0
        %1528 = vmatprep.subr.bf16.mxu0 0
        %1529 = vmatpush1.bf16.msra.mxu0 0
        %1530 = vmatprep.subr.bf16.mxu0 0
        %1531 = vmatpush1.bf16.msra.mxu0 0
        %1532 = vmatprep.subr.bf16.mxu0 0
        %1533 = vmatpush1.bf16.msra.mxu0 %v447
        %1534 = vmatprep.subr.bf16.mxu0 0
        %1535 = vmatpush2.bf16.msra.mxu0 0
        %1536 = vmatprep.subr.bf16.mxu0 0
        %1537 = vmatpush2.bf16.msra.mxu0 0
        %1538 = vmatprep.subr.bf16.mxu0 0
        %1539 = vmatpush2.bf16.msra.mxu0 0
        %1540 = vmatprep.subr.bf16.mxu0 0
        %1541 = vmatpush2.bf16.msra.mxu0 0
        %1542 = vmatprep.subr.bf16.mxu0 0
        %1543 = vmatpush2.bf16.msra.mxu0 0
        %1544 = vmatprep.subr.bf16.mxu0 0
        %1545 = vmatpush2.bf16.msra.mxu0 0
        %1546 = vmatprep.subr.bf16.mxu0 0
        %1547 = vmatpush2.bf16.msra.mxu0 0
        %1548 = vmatprep.subr.bf16.mxu0 0
        %1549 = vmatpush2.bf16.msra.mxu0 0
        %1550 = vmatprep.mubr.bf16.mxu0 0
        %1551 = vmatmul.mubr.bf16.gmra.mxu0 %v1516
        %v1552 = vpop.f32.mrf.mxu0
        %v1553 = vadd.f32 0.0, %v1552
        %v1554 = vpop.f32.mrf.mxu0
        %v1555 = vpop.f32.mrf.mxu0
        %v1556 = vadd.f32 0.0, %v1555
        %v1557 = vpop.f32.mrf.mxu0
        %1558 = vdwg.mxu0
        %v1560 = vsel %vm448, %v1514, 0
        %1562 = vmatprep.subr.bf16.mxu0 0
        %1563 = vmatpush1.bf16.msra.mxu0 0
        %1564 = vmatprep.subr.bf16.mxu0 0
        %1565 = vmatpush1.bf16.msra.mxu0 0
        %1566 = vmatprep.subr.bf16.mxu0 0
        %1567 = vmatpush1.bf16.msra.mxu0 0
        %1568 = vmatprep.subr.bf16.mxu0 0
        %1569 = vmatpush1.bf16.msra.mxu0 0
        %1570 = vmatprep.subr.bf16.mxu0 0
        %1571 = vmatpush1.bf16.msra.mxu0 0
        %1572 = vmatprep.subr.bf16.mxu0 0
        %1573 = vmatpush1.bf16.msra.mxu0 0
        %1574 = vmatprep.subr.bf16.mxu0 0
        %1575 = vmatpush1.bf16.msra.mxu0 0
        %1576 = vmatprep.subr.bf16.mxu0 0
        %1577 = vmatpush1.bf16.msra.mxu0 %v497
        %1578 = vmatprep.subr.bf16.mxu0 0
        %1579 = vmatpush2.bf16.msra.mxu0 0
        %1580 = vmatprep.subr.bf16.mxu0 0
        %1581 = vmatpush2.bf16.msra.mxu0 0
        %1582 = vmatprep.subr.bf16.mxu0 0
        %1583 = vmatpush2.bf16.msra.mxu0 0
        %1584 = vmatprep.subr.bf16.mxu0 0
        %1585 = vmatpush2.bf16.msra.mxu0 0
        %1586 = vmatprep.subr.bf16.mxu0 0
        %1587 = vmatpush2.bf16.msra.mxu0 0
        %1588 = vmatprep.subr.bf16.mxu0 0
        %1589 = vmatpush2.bf16.msra.mxu0 0
        %1590 = vmatprep.subr.bf16.mxu0 0
        %1591 = vmatpush2.bf16.msra.mxu0 0
        %1592 = vmatprep.subr.bf16.mxu0 0
        %1593 = vmatpush2.bf16.msra.mxu0 0
        %1594 = vmatprep.mubr.bf16.mxu0 0
        %1595 = vmatmul.mubr.bf16.gmra.mxu0 %v1560
        %v1596 = vpop.f32.mrf.mxu0
        %v1597 = vadd.f32 0.0, %v1596
        %v1598 = vpop.f32.mrf.mxu0
        %v1599 = vpop.f32.mrf.mxu0
        %v1600 = vadd.f32 0.0, %v1599
        %v1601 = vpop.f32.mrf.mxu0
        %1602 = vdwg.mxu0
        %v1603 = vsub.f32 %v1507, %v1511
        %v1604 = vsub.f32 %v1508, %v1512
        %v1605 = vpack.c.bf16 %v1604, %v1603
        %v1607 = vsel %vm448, %v1605, 0
        %1609 = vmatprep.subr.bf16.mxu0 0
        %1610 = vmatpush1.bf16.msra.mxu0 0
        %1611 = vmatprep.subr.bf16.mxu0 0
        %1612 = vmatpush1.bf16.msra.mxu0 0
        %1613 = vmatprep.subr.bf16.mxu0 0
        %1614 = vmatpush1.bf16.msra.mxu0 0
        %1615 = vmatprep.subr.bf16.mxu0 0
        %1616 = vmatpush1.bf16.msra.mxu0 0
        %1617 = vmatprep.subr.bf16.mxu0 0
        %1618 = vmatpush1.bf16.msra.mxu0 0
        %1619 = vmatprep.subr.bf16.mxu0 0
        %1620 = vmatpush1.bf16.msra.mxu0 0
        %1621 = vmatprep.subr.bf16.mxu0 0
        %1622 = vmatpush1.bf16.msra.mxu0 0
        %1623 = vmatprep.subr.bf16.mxu0 0
        %1624 = vmatpush1.bf16.msra.mxu0 %v546
        %1625 = vmatprep.subr.bf16.mxu0 0
        %1626 = vmatpush2.bf16.msra.mxu0 0
        %1627 = vmatprep.subr.bf16.mxu0 0
        %1628 = vmatpush2.bf16.msra.mxu0 0
        %1629 = vmatprep.subr.bf16.mxu0 0
        %1630 = vmatpush2.bf16.msra.mxu0 0
        %1631 = vmatprep.subr.bf16.mxu0 0
        %1632 = vmatpush2.bf16.msra.mxu0 0
        %1633 = vmatprep.subr.bf16.mxu0 0
        %1634 = vmatpush2.bf16.msra.mxu0 0
        %1635 = vmatprep.subr.bf16.mxu0 0
        %1636 = vmatpush2.bf16.msra.mxu0 0
        %1637 = vmatprep.subr.bf16.mxu0 0
        %1638 = vmatpush2.bf16.msra.mxu0 0
        %1639 = vmatprep.subr.bf16.mxu0 0
        %1640 = vmatpush2.bf16.msra.mxu0 0
        %1641 = vmatprep.mubr.bf16.mxu0 0
        %1642 = vmatmul.mubr.bf16.gmra.mxu0 %v1607
        %v1643 = vpop.f32.mrf.mxu0
        %v1644 = vadd.f32 0.0, %v1643
        %v1645 = vpop.f32.mrf.mxu0
        %v1646 = vpop.f32.mrf.mxu0
        %v1647 = vadd.f32 0.0, %v1646
        %v1648 = vpop.f32.mrf.mxu0
        %1649 = vdwg.mxu0
        %v1650 = vadd.f32 %v1553, %v1597
        %v1651 = vadd.f32 %v1556, %v1600
        %v1652 = vsub.f32 %v1553, %v1597
        %v1653 = vsub.f32 %v1556, %v1600
        %v1654 = vsub.f32 %v1652, %v1644
        %v1655 = vsub.f32 %v1653, %v1647
        %s1656 = scalar_lea.vmem %s334, 16
        %v1657 = vld [vmem:[%s1656] sm:$0xf]
        %v1658 = vld [vmem:[%s1656 + $0x4] sm:$0xf]
        %v1659 = vunpack.c.l.bf16 %v1657
        %v1660 = vunpack.c.l.bf16 %v1658
        %s1661 = scalar_lea.vmem %s345, 16
        %v1662 = vld [vmem:[%s1661] sm:$0xf]
        %v1663 = vld [vmem:[%s1661 + $0x4] sm:$0xf]
        %v1664 = vunpack.c.l.bf16 %v1662
        %v1665 = vunpack.c.l.bf16 %v1663
        %v1666 = vmul.f32 %v1659, %v394
        %v1667 = vmul.f32 %v1660, %v395
        %v1668 = vmul.f32 %v1664, %v398
        %v1669 = vmul.f32 %v1665, %v399
        %v1670 = vsub.f32 %v1666, %v1668
        %v1671 = vsub.f32 %v1667, %v1669
        %v1672 = vmul.f32 %v1659, %v398
        %v1673 = vmul.f32 %v1660, %v399
        %v1674 = vmul.f32 %v1664, %v394
        %v1675 = vmul.f32 %v1665, %v395
        %v1676 = vadd.f32 %v1672, %v1674
        %v1677 = vadd.f32 %v1673, %v1675
        %v1678 = vmul.f32 %v1650, %v410
        %v1679 = vmul.f32 %v1651, %v411
        %v1680 = vmul.f32 %v1654, %v414
        %v1681 = vmul.f32 %v1655, %v415
        %v1682 = vsub.f32 %v1678, %v1680
        %v1683 = vsub.f32 %v1679, %v1681
        %v1684 = vmul.f32 %v1650, %v414
        %v1685 = vmul.f32 %v1651, %v415
        %v1686 = vmul.f32 %v1654, %v410
        %v1687 = vmul.f32 %v1655, %v411
        %v1688 = vadd.f32 %v1684, %v1686
        %v1689 = vadd.f32 %v1685, %v1687
        %v1690 = vmul.f32 %v1682, 0.7
        %v1691 = vmul.f32 %v1683, 0.7
        %v1692 = vmul.f32 %v1670, 0.3
        %v1693 = vmul.f32 %v1671, 0.3
        %v1694 = vadd.f32 %v1690, %v1692
        %v1695 = vadd.f32 %v1691, %v1693
        %v1696 = vmul.f32 %v1688, 0.7
        %v1697 = vmul.f32 %v1689, 0.7
        %v1698 = vmul.f32 %v1676, 0.3
        %v1699 = vmul.f32 %v1677, 0.3
        %v1700 = vadd.f32 %v1696, %v1698
        %v1701 = vadd.f32 %v1697, %v1699
        %v1702 = vpack.c.bf16 %v1695, %v1694
        %v1703 = vpack.c.bf16 %v1701, %v1700
        %v1704 = vadd.f32 %v1694, %v1700
        %v1705 = vadd.f32 %v1695, %v1701
        %v1706 = vpack.c.bf16 %v1705, %v1704
        %1707 = vmatprep.subr.bf16.mxu0 0
        %1708 = vmatpush1.bf16.msra.mxu0 0
        %1709 = vmatprep.subr.bf16.mxu0 0
        %1710 = vmatpush1.bf16.msra.mxu0 0
        %1711 = vmatprep.subr.bf16.mxu0 0
        %1712 = vmatpush1.bf16.msra.mxu0 0
        %1713 = vmatprep.subr.bf16.mxu0 0
        %1714 = vmatpush1.bf16.msra.mxu0 0
        %1715 = vmatprep.subr.bf16.mxu0 0
        %1716 = vmatpush1.bf16.msra.mxu0 0
        %1717 = vmatprep.subr.bf16.mxu0 0
        %1718 = vmatpush1.bf16.msra.mxu0 0
        %1719 = vmatprep.subr.bf16.mxu0 0
        %1720 = vmatpush1.bf16.msra.mxu0 0
        %1721 = vmatprep.subr.bf16.mxu0 0
        %1722 = vmatpush1.bf16.msra.mxu0 %v1702
        %1723 = vmatprep.subr.bf16.mxu0 0
        %1724 = vmatpush2.bf16.msra.mxu0 0
        %1725 = vmatprep.subr.bf16.mxu0 0
        %1726 = vmatpush2.bf16.msra.mxu0 0
        %1727 = vmatprep.subr.bf16.mxu0 0
        %1728 = vmatpush2.bf16.msra.mxu0 0
        %1729 = vmatprep.subr.bf16.mxu0 0
        %1730 = vmatpush2.bf16.msra.mxu0 0
        %1731 = vmatprep.subr.bf16.mxu0 0
        %1732 = vmatpush2.bf16.msra.mxu0 0
        %1733 = vmatprep.subr.bf16.mxu0 0
        %1734 = vmatpush2.bf16.msra.mxu0 0
        %1735 = vmatprep.subr.bf16.mxu0 0
        %1736 = vmatpush2.bf16.msra.mxu0 0
        %1737 = vmatprep.subr.bf16.mxu0 0
        %1738 = vmatpush2.bf16.msra.mxu0 0
        %1739 = vmatprep.mubr.bf16.mxu0 0
        %1740 = vmatmul.mubr.bf16.gmra.mxu0 %v450
        %v1741 = vpop.f32.mrf.mxu0
        %v1742 = vadd.f32 0.0, %v1741
        %v1743 = vpop.f32.mrf.mxu0
        %v1744 = vpop.f32.mrf.mxu0
        %v1745 = vadd.f32 0.0, %v1744
        %v1746 = vpop.f32.mrf.mxu0
        %1747 = vdwg.mxu0
        %1748 = vmatprep.subr.bf16.mxu0 0
        %1749 = vmatpush1.bf16.msra.mxu0 0
        %1750 = vmatprep.subr.bf16.mxu0 0
        %1751 = vmatpush1.bf16.msra.mxu0 0
        %1752 = vmatprep.subr.bf16.mxu0 0
        %1753 = vmatpush1.bf16.msra.mxu0 0
        %1754 = vmatprep.subr.bf16.mxu0 0
        %1755 = vmatpush1.bf16.msra.mxu0 0
        %1756 = vmatprep.subr.bf16.mxu0 0
        %1757 = vmatpush1.bf16.msra.mxu0 0
        %1758 = vmatprep.subr.bf16.mxu0 0
        %1759 = vmatpush1.bf16.msra.mxu0 0
        %1760 = vmatprep.subr.bf16.mxu0 0
        %1761 = vmatpush1.bf16.msra.mxu0 0
        %1762 = vmatprep.subr.bf16.mxu0 0
        %1763 = vmatpush1.bf16.msra.mxu0 %v1703
        %1764 = vmatprep.subr.bf16.mxu0 0
        %1765 = vmatpush2.bf16.msra.mxu0 0
        %1766 = vmatprep.subr.bf16.mxu0 0
        %1767 = vmatpush2.bf16.msra.mxu0 0
        %1768 = vmatprep.subr.bf16.mxu0 0
        %1769 = vmatpush2.bf16.msra.mxu0 0
        %1770 = vmatprep.subr.bf16.mxu0 0
        %1771 = vmatpush2.bf16.msra.mxu0 0
        %1772 = vmatprep.subr.bf16.mxu0 0
        %1773 = vmatpush2.bf16.msra.mxu0 0
        %1774 = vmatprep.subr.bf16.mxu0 0
        %1775 = vmatpush2.bf16.msra.mxu0 0
        %1776 = vmatprep.subr.bf16.mxu0 0
        %1777 = vmatpush2.bf16.msra.mxu0 0
        %1778 = vmatprep.subr.bf16.mxu0 0
        %1779 = vmatpush2.bf16.msra.mxu0 0
        %1780 = vmatprep.mubr.bf16.mxu0 0
        %1781 = vmatmul.mubr.bf16.gmra.mxu0 %v499
        %v1782 = vpop.f32.mrf.mxu0
        %v1783 = vadd.f32 0.0, %v1782
        %v1784 = vpop.f32.mrf.mxu0
        %v1785 = vpop.f32.mrf.mxu0
        %v1786 = vadd.f32 0.0, %v1785
        %v1787 = vpop.f32.mrf.mxu0
        %1788 = vdwg.mxu0
        %1789 = vmatprep.subr.bf16.mxu0 0
        %1790 = vmatpush1.bf16.msra.mxu0 0
        %1791 = vmatprep.subr.bf16.mxu0 0
        %1792 = vmatpush1.bf16.msra.mxu0 0
        %1793 = vmatprep.subr.bf16.mxu0 0
        %1794 = vmatpush1.bf16.msra.mxu0 0
        %1795 = vmatprep.subr.bf16.mxu0 0
        %1796 = vmatpush1.bf16.msra.mxu0 0
        %1797 = vmatprep.subr.bf16.mxu0 0
        %1798 = vmatpush1.bf16.msra.mxu0 0
        %1799 = vmatprep.subr.bf16.mxu0 0
        %1800 = vmatpush1.bf16.msra.mxu0 0
        %1801 = vmatprep.subr.bf16.mxu0 0
        %1802 = vmatpush1.bf16.msra.mxu0 0
        %1803 = vmatprep.subr.bf16.mxu0 0
        %1804 = vmatpush1.bf16.msra.mxu0 %v1706
        %1805 = vmatprep.subr.bf16.mxu0 0
        %1806 = vmatpush2.bf16.msra.mxu0 0
        %1807 = vmatprep.subr.bf16.mxu0 0
        %1808 = vmatpush2.bf16.msra.mxu0 0
        %1809 = vmatprep.subr.bf16.mxu0 0
        %1810 = vmatpush2.bf16.msra.mxu0 0
        %1811 = vmatprep.subr.bf16.mxu0 0
        %1812 = vmatpush2.bf16.msra.mxu0 0
        %1813 = vmatprep.subr.bf16.mxu0 0
        %1814 = vmatpush2.bf16.msra.mxu0 0
        %1815 = vmatprep.subr.bf16.mxu0 0
        %1816 = vmatpush2.bf16.msra.mxu0 0
        %1817 = vmatprep.subr.bf16.mxu0 0
        %1818 = vmatpush2.bf16.msra.mxu0 0
        %1819 = vmatprep.subr.bf16.mxu0 0
        %1820 = vmatpush2.bf16.msra.mxu0 0
        %1821 = vmatprep.mubr.bf16.mxu0 0
        %1822 = vmatmul.mubr.bf16.gmra.mxu0 %v548
        %v1823 = vpop.f32.mrf.mxu0
        %v1824 = vadd.f32 0.0, %v1823
        %v1825 = vpop.f32.mrf.mxu0
        %v1826 = vpop.f32.mrf.mxu0
        %v1827 = vadd.f32 0.0, %v1826
        %v1828 = vpop.f32.mrf.mxu0
        %1829 = vdwg.mxu0
        %v1830 = vsub.f32 %v1742, %v1783
        %v1831 = vsub.f32 %v1745, %v1786
        %v1832 = vsub.f32 %v1824, %v1742
        %v1833 = vsub.f32 %v1827, %v1745
        %v1834 = vsub.f32 %v1832, %v1783
        %v1835 = vsub.f32 %v1833, %v1786
        %v1836 = vpack.c.bf16 %v1831, %v1830
        %v1837 = vpack.c.bf16 %v1835, %v1834
        %v1839 = vsel %vm448, %v1836, 0
        %1841 = vmatprep.subr.bf16.mxu0 0
        %1842 = vmatpush1.bf16.msra.mxu0 0
        %1843 = vmatprep.subr.bf16.mxu0 0
        %1844 = vmatpush1.bf16.msra.mxu0 0
        %1845 = vmatprep.subr.bf16.mxu0 0
        %1846 = vmatpush1.bf16.msra.mxu0 0
        %1847 = vmatprep.subr.bf16.mxu0 0
        %1848 = vmatpush1.bf16.msra.mxu0 0
        %1849 = vmatprep.subr.bf16.mxu0 0
        %1850 = vmatpush1.bf16.msra.mxu0 0
        %1851 = vmatprep.subr.bf16.mxu0 0
        %1852 = vmatpush1.bf16.msra.mxu0 0
        %1853 = vmatprep.subr.bf16.mxu0 0
        %1854 = vmatpush1.bf16.msra.mxu0 0
        %1855 = vmatprep.subr.bf16.mxu0 0
        %1856 = vmatpush1.bf16.msra.mxu0 %v447
        %1857 = vmatprep.subr.bf16.mxu0 0
        %1858 = vmatpush2.bf16.msra.mxu0 0
        %1859 = vmatprep.subr.bf16.mxu0 0
        %1860 = vmatpush2.bf16.msra.mxu0 0
        %1861 = vmatprep.subr.bf16.mxu0 0
        %1862 = vmatpush2.bf16.msra.mxu0 0
        %1863 = vmatprep.subr.bf16.mxu0 0
        %1864 = vmatpush2.bf16.msra.mxu0 0
        %1865 = vmatprep.subr.bf16.mxu0 0
        %1866 = vmatpush2.bf16.msra.mxu0 0
        %1867 = vmatprep.subr.bf16.mxu0 0
        %1868 = vmatpush2.bf16.msra.mxu0 0
        %1869 = vmatprep.subr.bf16.mxu0 0
        %1870 = vmatpush2.bf16.msra.mxu0 0
        %1871 = vmatprep.subr.bf16.mxu0 0
        %1872 = vmatpush2.bf16.msra.mxu0 0
        %1873 = vmatprep.mubr.bf16.mxu0 0
        %1874 = vmatmul.mubr.bf16.gmra.mxu0 %v1839
        %v1875 = vpop.f32.mrf.mxu0
        %v1876 = vadd.f32 0.0, %v1875
        %v1877 = vpop.f32.mrf.mxu0
        %v1878 = vpop.f32.mrf.mxu0
        %v1879 = vadd.f32 0.0, %v1878
        %v1880 = vpop.f32.mrf.mxu0
        %1881 = vdwg.mxu0
        %v1883 = vsel %vm448, %v1837, 0
        %1885 = vmatprep.subr.bf16.mxu0 0
        %1886 = vmatpush1.bf16.msra.mxu0 0
        %1887 = vmatprep.subr.bf16.mxu0 0
        %1888 = vmatpush1.bf16.msra.mxu0 0
        %1889 = vmatprep.subr.bf16.mxu0 0
        %1890 = vmatpush1.bf16.msra.mxu0 0
        %1891 = vmatprep.subr.bf16.mxu0 0
        %1892 = vmatpush1.bf16.msra.mxu0 0
        %1893 = vmatprep.subr.bf16.mxu0 0
        %1894 = vmatpush1.bf16.msra.mxu0 0
        %1895 = vmatprep.subr.bf16.mxu0 0
        %1896 = vmatpush1.bf16.msra.mxu0 0
        %1897 = vmatprep.subr.bf16.mxu0 0
        %1898 = vmatpush1.bf16.msra.mxu0 0
        %1899 = vmatprep.subr.bf16.mxu0 0
        %1900 = vmatpush1.bf16.msra.mxu0 %v497
        %1901 = vmatprep.subr.bf16.mxu0 0
        %1902 = vmatpush2.bf16.msra.mxu0 0
        %1903 = vmatprep.subr.bf16.mxu0 0
        %1904 = vmatpush2.bf16.msra.mxu0 0
        %1905 = vmatprep.subr.bf16.mxu0 0
        %1906 = vmatpush2.bf16.msra.mxu0 0
        %1907 = vmatprep.subr.bf16.mxu0 0
        %1908 = vmatpush2.bf16.msra.mxu0 0
        %1909 = vmatprep.subr.bf16.mxu0 0
        %1910 = vmatpush2.bf16.msra.mxu0 0
        %1911 = vmatprep.subr.bf16.mxu0 0
        %1912 = vmatpush2.bf16.msra.mxu0 0
        %1913 = vmatprep.subr.bf16.mxu0 0
        %1914 = vmatpush2.bf16.msra.mxu0 0
        %1915 = vmatprep.subr.bf16.mxu0 0
        %1916 = vmatpush2.bf16.msra.mxu0 0
        %1917 = vmatprep.mubr.bf16.mxu0 0
        %1918 = vmatmul.mubr.bf16.gmra.mxu0 %v1883
        %v1919 = vpop.f32.mrf.mxu0
        %v1920 = vadd.f32 0.0, %v1919
        %v1921 = vpop.f32.mrf.mxu0
        %v1922 = vpop.f32.mrf.mxu0
        %v1923 = vadd.f32 0.0, %v1922
        %v1924 = vpop.f32.mrf.mxu0
        %1925 = vdwg.mxu0
        %v1926 = vadd.f32 %v1830, %v1834
        %v1927 = vadd.f32 %v1831, %v1835
        %v1928 = vpack.c.bf16 %v1927, %v1926
        %v1930 = vsel %vm448, %v1928, 0
        %1932 = vmatprep.subr.bf16.mxu0 0
        %1933 = vmatpush1.bf16.msra.mxu0 0
        %1934 = vmatprep.subr.bf16.mxu0 0
        %1935 = vmatpush1.bf16.msra.mxu0 0
        %1936 = vmatprep.subr.bf16.mxu0 0
        %1937 = vmatpush1.bf16.msra.mxu0 0
        %1938 = vmatprep.subr.bf16.mxu0 0
        %1939 = vmatpush1.bf16.msra.mxu0 0
        %1940 = vmatprep.subr.bf16.mxu0 0
        %1941 = vmatpush1.bf16.msra.mxu0 0
        %1942 = vmatprep.subr.bf16.mxu0 0
        %1943 = vmatpush1.bf16.msra.mxu0 0
        %1944 = vmatprep.subr.bf16.mxu0 0
        %1945 = vmatpush1.bf16.msra.mxu0 0
        %1946 = vmatprep.subr.bf16.mxu0 0
        %1947 = vmatpush1.bf16.msra.mxu0 %v546
        %1948 = vmatprep.subr.bf16.mxu0 0
        %1949 = vmatpush2.bf16.msra.mxu0 0
        %1950 = vmatprep.subr.bf16.mxu0 0
        %1951 = vmatpush2.bf16.msra.mxu0 0
        %1952 = vmatprep.subr.bf16.mxu0 0
        %1953 = vmatpush2.bf16.msra.mxu0 0
        %1954 = vmatprep.subr.bf16.mxu0 0
        %1955 = vmatpush2.bf16.msra.mxu0 0
        %1956 = vmatprep.subr.bf16.mxu0 0
        %1957 = vmatpush2.bf16.msra.mxu0 0
        %1958 = vmatprep.subr.bf16.mxu0 0
        %1959 = vmatpush2.bf16.msra.mxu0 0
        %1960 = vmatprep.subr.bf16.mxu0 0
        %1961 = vmatpush2.bf16.msra.mxu0 0
        %1962 = vmatprep.subr.bf16.mxu0 0
        %1963 = vmatpush2.bf16.msra.mxu0 0
        %1964 = vmatprep.mubr.bf16.mxu0 0
        %1965 = vmatmul.mubr.bf16.gmra.mxu0 %v1930
        %v1966 = vpop.f32.mrf.mxu0
        %v1967 = vadd.f32 0.0, %v1966
        %v1968 = vpop.f32.mrf.mxu0
        %v1969 = vpop.f32.mrf.mxu0
        %v1970 = vadd.f32 0.0, %v1969
        %v1971 = vpop.f32.mrf.mxu0
        %1972 = vdwg.mxu0
        %v1973 = vsub.f32 %v1876, %v1920
        %v1974 = vsub.f32 %v1879, %v1923
        %v1975 = vsub.f32 %v1967, %v1876
        %v1976 = vsub.f32 %v1970, %v1879
        %v1977 = vsub.f32 %v1975, %v1920
        %v1978 = vsub.f32 %v1976, %v1923
        %v1979 = vmul.f32 %v1973, %v743
        %v1980 = vmul.f32 %v1974, %v744
        %v1981 = vmul.f32 %v1977, %v747
        %v1982 = vmul.f32 %v1978, %v748
        %v1983 = vsub.f32 %v1979, %v1981
        %v1984 = vsub.f32 %v1980, %v1982
        %v1985 = vmul.f32 %v1973, %v747
        %v1986 = vmul.f32 %v1974, %v748
        %v1987 = vmul.f32 %v1977, %v743
        %v1988 = vmul.f32 %v1978, %v744
        %v1989 = vadd.f32 %v1985, %v1987
        %v1990 = vadd.f32 %v1986, %v1988
        %v1991 = vpack.c.bf16 %v1984, %v1983
        %v1992 = vpack.c.bf16 %v1990, %v1989
        %v1993 = vadd.f32 %v1983, %v1989
        %v1994 = vadd.f32 %v1984, %v1990
        %v1995 = vpack.c.bf16 %v1994, %v1993
        %1996 = vmatprep.subr.bf16.mxu0 0
        %1997 = vmatpush1.bf16.msra.mxu0 0
        %1998 = vmatprep.subr.bf16.mxu0 0
        %1999 = vmatpush1.bf16.msra.mxu0 0
        %2000 = vmatprep.subr.bf16.mxu0 0
        %2001 = vmatpush1.bf16.msra.mxu0 0
        %2002 = vmatprep.subr.bf16.mxu0 0
        %2003 = vmatpush1.bf16.msra.mxu0 0
        %2004 = vmatprep.subr.bf16.mxu0 0
        %2005 = vmatpush1.bf16.msra.mxu0 0
        %2006 = vmatprep.subr.bf16.mxu0 0
        %2007 = vmatpush1.bf16.msra.mxu0 0
        %2008 = vmatprep.subr.bf16.mxu0 0
        %2009 = vmatpush1.bf16.msra.mxu0 0
        %2010 = vmatprep.subr.bf16.mxu0 0
        %2011 = vmatpush1.bf16.msra.mxu0 %v1991
        %2012 = vmatprep.subr.bf16.mxu0 0
        %2013 = vmatpush2.bf16.msra.mxu0 0
        %2014 = vmatprep.subr.bf16.mxu0 0
        %2015 = vmatpush2.bf16.msra.mxu0 0
        %2016 = vmatprep.subr.bf16.mxu0 0
        %2017 = vmatpush2.bf16.msra.mxu0 0
        %2018 = vmatprep.subr.bf16.mxu0 0
        %2019 = vmatpush2.bf16.msra.mxu0 0
        %2020 = vmatprep.subr.bf16.mxu0 0
        %2021 = vmatpush2.bf16.msra.mxu0 0
        %2022 = vmatprep.subr.bf16.mxu0 0
        %2023 = vmatpush2.bf16.msra.mxu0 0
        %2024 = vmatprep.subr.bf16.mxu0 0
        %2025 = vmatpush2.bf16.msra.mxu0 0
        %2026 = vmatprep.subr.bf16.mxu0 0
        %2027 = vmatpush2.bf16.msra.mxu0 0
        %2028 = vmatprep.mubr.bf16.mxu0 0
        %2029 = vmatmul.mubr.bf16.gmra.mxu0 %v450
        %v2030 = vpop.f32.mrf.mxu0
        %v2031 = vadd.f32 0.0, %v2030
        %v2032 = vpop.f32.mrf.mxu0
        %v2033 = vpop.f32.mrf.mxu0
        %v2034 = vadd.f32 0.0, %v2033
        %v2035 = vpop.f32.mrf.mxu0
        %2036 = vdwg.mxu0
        %2037 = vmatprep.subr.bf16.mxu0 0
        %2038 = vmatpush1.bf16.msra.mxu0 0
        %2039 = vmatprep.subr.bf16.mxu0 0
        %2040 = vmatpush1.bf16.msra.mxu0 0
        %2041 = vmatprep.subr.bf16.mxu0 0
        %2042 = vmatpush1.bf16.msra.mxu0 0
        %2043 = vmatprep.subr.bf16.mxu0 0
        %2044 = vmatpush1.bf16.msra.mxu0 0
        %2045 = vmatprep.subr.bf16.mxu0 0
        %2046 = vmatpush1.bf16.msra.mxu0 0
        %2047 = vmatprep.subr.bf16.mxu0 0
        %2048 = vmatpush1.bf16.msra.mxu0 0
        %2049 = vmatprep.subr.bf16.mxu0 0
        %2050 = vmatpush1.bf16.msra.mxu0 0
        %2051 = vmatprep.subr.bf16.mxu0 0
        %2052 = vmatpush1.bf16.msra.mxu0 %v1992
        %2053 = vmatprep.subr.bf16.mxu0 0
        %2054 = vmatpush2.bf16.msra.mxu0 0
        %2055 = vmatprep.subr.bf16.mxu0 0
        %2056 = vmatpush2.bf16.msra.mxu0 0
        %2057 = vmatprep.subr.bf16.mxu0 0
        %2058 = vmatpush2.bf16.msra.mxu0 0
        %2059 = vmatprep.subr.bf16.mxu0 0
        %2060 = vmatpush2.bf16.msra.mxu0 0
        %2061 = vmatprep.subr.bf16.mxu0 0
        %2062 = vmatpush2.bf16.msra.mxu0 0
        %2063 = vmatprep.subr.bf16.mxu0 0
        %2064 = vmatpush2.bf16.msra.mxu0 0
        %2065 = vmatprep.subr.bf16.mxu0 0
        %2066 = vmatpush2.bf16.msra.mxu0 0
        %2067 = vmatprep.subr.bf16.mxu0 0
        %2068 = vmatpush2.bf16.msra.mxu0 0
        %2069 = vmatprep.mubr.bf16.mxu0 0
        %2070 = vmatmul.mubr.bf16.gmra.mxu0 %v499
        %v2071 = vpop.f32.mrf.mxu0
        %v2072 = vadd.f32 0.0, %v2071
        %v2073 = vpop.f32.mrf.mxu0
        %v2074 = vpop.f32.mrf.mxu0
        %v2075 = vadd.f32 0.0, %v2074
        %v2076 = vpop.f32.mrf.mxu0
        %2077 = vdwg.mxu0
        %2078 = vmatprep.subr.bf16.mxu0 0
        %2079 = vmatpush1.bf16.msra.mxu0 0
        %2080 = vmatprep.subr.bf16.mxu0 0
        %2081 = vmatpush1.bf16.msra.mxu0 0
        %2082 = vmatprep.subr.bf16.mxu0 0
        %2083 = vmatpush1.bf16.msra.mxu0 0
        %2084 = vmatprep.subr.bf16.mxu0 0
        %2085 = vmatpush1.bf16.msra.mxu0 0
        %2086 = vmatprep.subr.bf16.mxu0 0
        %2087 = vmatpush1.bf16.msra.mxu0 0
        %2088 = vmatprep.subr.bf16.mxu0 0
        %2089 = vmatpush1.bf16.msra.mxu0 0
        %2090 = vmatprep.subr.bf16.mxu0 0
        %2091 = vmatpush1.bf16.msra.mxu0 0
        %2092 = vmatprep.subr.bf16.mxu0 0
        %2093 = vmatpush1.bf16.msra.mxu0 %v1995
        %2094 = vmatprep.subr.bf16.mxu0 0
        %2095 = vmatpush2.bf16.msra.mxu0 0
        %2096 = vmatprep.subr.bf16.mxu0 0
        %2097 = vmatpush2.bf16.msra.mxu0 0
        %2098 = vmatprep.subr.bf16.mxu0 0
        %2099 = vmatpush2.bf16.msra.mxu0 0
        %2100 = vmatprep.subr.bf16.mxu0 0
        %2101 = vmatpush2.bf16.msra.mxu0 0
        %2102 = vmatprep.subr.bf16.mxu0 0
        %2103 = vmatpush2.bf16.msra.mxu0 0
        %2104 = vmatprep.subr.bf16.mxu0 0
        %2105 = vmatpush2.bf16.msra.mxu0 0
        %2106 = vmatprep.subr.bf16.mxu0 0
        %2107 = vmatpush2.bf16.msra.mxu0 0
        %2108 = vmatprep.subr.bf16.mxu0 0
        %2109 = vmatpush2.bf16.msra.mxu0 0
        %2110 = vmatprep.mubr.bf16.mxu0 0
        %2111 = vmatmul.mubr.bf16.gmra.mxu0 %v852
        %v2112 = vpop.f32.mrf.mxu0
        %v2113 = vadd.f32 0.0, %v2112
        %v2114 = vpop.f32.mrf.mxu0
        %v2115 = vpop.f32.mrf.mxu0
        %v2116 = vadd.f32 0.0, %v2115
        %v2117 = vpop.f32.mrf.mxu0
        %2118 = vdwg.mxu0
        %v2119 = vadd.f32 %v2031, %v2072
        %v2120 = vadd.f32 %v2034, %v2075
        %v2121 = vsub.f32 %v2113, %v2031
        %v2122 = vsub.f32 %v2116, %v2034
        %v2123 = vadd.f32 %v2121, %v2072
        %v2124 = vadd.f32 %v2122, %v2075
        %v2125 = vpack.c.bf16 %v2120, %v2119
        %v2126 = vpack.c.bf16 %v2124, %v2123
        %v2128 = vsel %vm448, %v2125, 0
        %2130 = vmatprep.subr.bf16.mxu0 0
        %2131 = vmatpush1.bf16.msra.mxu0 0
        %2132 = vmatprep.subr.bf16.mxu0 0
        %2133 = vmatpush1.bf16.msra.mxu0 0
        %2134 = vmatprep.subr.bf16.mxu0 0
        %2135 = vmatpush1.bf16.msra.mxu0 0
        %2136 = vmatprep.subr.bf16.mxu0 0
        %2137 = vmatpush1.bf16.msra.mxu0 0
        %2138 = vmatprep.subr.bf16.mxu0 0
        %2139 = vmatpush1.bf16.msra.mxu0 0
        %2140 = vmatprep.subr.bf16.mxu0 0
        %2141 = vmatpush1.bf16.msra.mxu0 0
        %2142 = vmatprep.subr.bf16.mxu0 0
        %2143 = vmatpush1.bf16.msra.mxu0 0
        %2144 = vmatprep.subr.bf16.mxu0 0
        %2145 = vmatpush1.bf16.msra.mxu0 %v447
        %2146 = vmatprep.subr.bf16.mxu0 0
        %2147 = vmatpush2.bf16.msra.mxu0 0
        %2148 = vmatprep.subr.bf16.mxu0 0
        %2149 = vmatpush2.bf16.msra.mxu0 0
        %2150 = vmatprep.subr.bf16.mxu0 0
        %2151 = vmatpush2.bf16.msra.mxu0 0
        %2152 = vmatprep.subr.bf16.mxu0 0
        %2153 = vmatpush2.bf16.msra.mxu0 0
        %2154 = vmatprep.subr.bf16.mxu0 0
        %2155 = vmatpush2.bf16.msra.mxu0 0
        %2156 = vmatprep.subr.bf16.mxu0 0
        %2157 = vmatpush2.bf16.msra.mxu0 0
        %2158 = vmatprep.subr.bf16.mxu0 0
        %2159 = vmatpush2.bf16.msra.mxu0 0
        %2160 = vmatprep.subr.bf16.mxu0 0
        %2161 = vmatpush2.bf16.msra.mxu0 0
        %2162 = vmatprep.mubr.bf16.mxu0 0
        %2163 = vmatmul.mubr.bf16.gmra.mxu0 %v2128
        %v2164 = vpop.f32.mrf.mxu0
        %v2165 = vadd.f32 0.0, %v2164
        %v2166 = vpop.f32.mrf.mxu0
        %v2167 = vpop.f32.mrf.mxu0
        %v2168 = vadd.f32 0.0, %v2167
        %v2169 = vpop.f32.mrf.mxu0
        %2170 = vdwg.mxu0
        %v2172 = vsel %vm448, %v2126, 0
        %2174 = vmatprep.subr.bf16.mxu0 0
        %2175 = vmatpush1.bf16.msra.mxu0 0
        %2176 = vmatprep.subr.bf16.mxu0 0
        %2177 = vmatpush1.bf16.msra.mxu0 0
        %2178 = vmatprep.subr.bf16.mxu0 0
        %2179 = vmatpush1.bf16.msra.mxu0 0
        %2180 = vmatprep.subr.bf16.mxu0 0
        %2181 = vmatpush1.bf16.msra.mxu0 0
        %2182 = vmatprep.subr.bf16.mxu0 0
        %2183 = vmatpush1.bf16.msra.mxu0 0
        %2184 = vmatprep.subr.bf16.mxu0 0
        %2185 = vmatpush1.bf16.msra.mxu0 0
        %2186 = vmatprep.subr.bf16.mxu0 0
        %2187 = vmatpush1.bf16.msra.mxu0 0
        %2188 = vmatprep.subr.bf16.mxu0 0
        %2189 = vmatpush1.bf16.msra.mxu0 %v497
        %2190 = vmatprep.subr.bf16.mxu0 0
        %2191 = vmatpush2.bf16.msra.mxu0 0
        %2192 = vmatprep.subr.bf16.mxu0 0
        %2193 = vmatpush2.bf16.msra.mxu0 0
        %2194 = vmatprep.subr.bf16.mxu0 0
        %2195 = vmatpush2.bf16.msra.mxu0 0
        %2196 = vmatprep.subr.bf16.mxu0 0
        %2197 = vmatpush2.bf16.msra.mxu0 0
        %2198 = vmatprep.subr.bf16.mxu0 0
        %2199 = vmatpush2.bf16.msra.mxu0 0
        %2200 = vmatprep.subr.bf16.mxu0 0
        %2201 = vmatpush2.bf16.msra.mxu0 0
        %2202 = vmatprep.subr.bf16.mxu0 0
        %2203 = vmatpush2.bf16.msra.mxu0 0
        %2204 = vmatprep.subr.bf16.mxu0 0
        %2205 = vmatpush2.bf16.msra.mxu0 0
        %2206 = vmatprep.mubr.bf16.mxu0 0
        %2207 = vmatmul.mubr.bf16.gmra.mxu0 %v2172
        %v2208 = vpop.f32.mrf.mxu0
        %v2209 = vadd.f32 0.0, %v2208
        %v2210 = vpop.f32.mrf.mxu0
        %v2211 = vpop.f32.mrf.mxu0
        %v2212 = vadd.f32 0.0, %v2211
        %v2213 = vpop.f32.mrf.mxu0
        %2214 = vdwg.mxu0
        %v2215 = vsub.f32 %v2119, %v2123
        %v2216 = vsub.f32 %v2120, %v2124
        %v2217 = vpack.c.bf16 %v2216, %v2215
        %v2219 = vsel %vm448, %v2217, 0
        %2221 = vmatprep.subr.bf16.mxu0 0
        %2222 = vmatpush1.bf16.msra.mxu0 0
        %2223 = vmatprep.subr.bf16.mxu0 0
        %2224 = vmatpush1.bf16.msra.mxu0 0
        %2225 = vmatprep.subr.bf16.mxu0 0
        %2226 = vmatpush1.bf16.msra.mxu0 0
        %2227 = vmatprep.subr.bf16.mxu0 0
        %2228 = vmatpush1.bf16.msra.mxu0 0
        %2229 = vmatprep.subr.bf16.mxu0 0
        %2230 = vmatpush1.bf16.msra.mxu0 0
        %2231 = vmatprep.subr.bf16.mxu0 0
        %2232 = vmatpush1.bf16.msra.mxu0 0
        %2233 = vmatprep.subr.bf16.mxu0 0
        %2234 = vmatpush1.bf16.msra.mxu0 0
        %2235 = vmatprep.subr.bf16.mxu0 0
        %2236 = vmatpush1.bf16.msra.mxu0 %v546
        %2237 = vmatprep.subr.bf16.mxu0 0
        %2238 = vmatpush2.bf16.msra.mxu0 0
        %2239 = vmatprep.subr.bf16.mxu0 0
        %2240 = vmatpush2.bf16.msra.mxu0 0
        %2241 = vmatprep.subr.bf16.mxu0 0
        %2242 = vmatpush2.bf16.msra.mxu0 0
        %2243 = vmatprep.subr.bf16.mxu0 0
        %2244 = vmatpush2.bf16.msra.mxu0 0
        %2245 = vmatprep.subr.bf16.mxu0 0
        %2246 = vmatpush2.bf16.msra.mxu0 0
        %2247 = vmatprep.subr.bf16.mxu0 0
        %2248 = vmatpush2.bf16.msra.mxu0 0
        %2249 = vmatprep.subr.bf16.mxu0 0
        %2250 = vmatpush2.bf16.msra.mxu0 0
        %2251 = vmatprep.subr.bf16.mxu0 0
        %2252 = vmatpush2.bf16.msra.mxu0 0
        %2253 = vmatprep.mubr.bf16.mxu0 0
        %2254 = vmatmul.mubr.bf16.gmra.mxu0 %v2219
        %v2255 = vpop.f32.mrf.mxu0
        %v2256 = vadd.f32 0.0, %v2255
        %v2257 = vpop.f32.mrf.mxu0
        %v2258 = vpop.f32.mrf.mxu0
        %v2259 = vadd.f32 0.0, %v2258
        %v2260 = vpop.f32.mrf.mxu0
        %2261 = vdwg.mxu0
        %v2262 = vadd.f32 %v2165, %v2209
        %v2263 = vadd.f32 %v2168, %v2212
        %v2264 = vsub.f32 %v2165, %v2209
        %v2265 = vsub.f32 %v2168, %v2212
        %v2266 = vsub.f32 %v2264, %v2256
        %v2267 = vsub.f32 %v2265, %v2259
        %s2268 = scalar_lea.vmem %s334, 24
        %v2269 = vld [vmem:[%s2268] sm:$0xf]
        %v2270 = vld [vmem:[%s2268 + $0x4] sm:$0xf]
        %v2271 = vunpack.c.l.bf16 %v2269
        %v2272 = vunpack.c.l.bf16 %v2270
        %s2273 = scalar_lea.vmem %s345, 24
        %v2274 = vld [vmem:[%s2273] sm:$0xf]
        %v2275 = vld [vmem:[%s2273 + $0x4] sm:$0xf]
        %v2276 = vunpack.c.l.bf16 %v2274
        %v2277 = vunpack.c.l.bf16 %v2275
        %v2278 = vmul.f32 %v2271, %v394
        %v2279 = vmul.f32 %v2272, %v395
        %v2280 = vmul.f32 %v2276, %v398
        %v2281 = vmul.f32 %v2277, %v399
        %v2282 = vsub.f32 %v2278, %v2280
        %v2283 = vsub.f32 %v2279, %v2281
        %v2284 = vmul.f32 %v2271, %v398
        %v2285 = vmul.f32 %v2272, %v399
        %v2286 = vmul.f32 %v2276, %v394
        %v2287 = vmul.f32 %v2277, %v395
        %v2288 = vadd.f32 %v2284, %v2286
        %v2289 = vadd.f32 %v2285, %v2287
        %v2290 = vmul.f32 %v2262, %v410
        %v2291 = vmul.f32 %v2263, %v411
        %v2292 = vmul.f32 %v2266, %v414
        %v2293 = vmul.f32 %v2267, %v415
        %v2294 = vsub.f32 %v2290, %v2292
        %v2295 = vsub.f32 %v2291, %v2293
        %v2296 = vmul.f32 %v2262, %v414
        %v2297 = vmul.f32 %v2263, %v415
        %v2298 = vmul.f32 %v2266, %v410
        %v2299 = vmul.f32 %v2267, %v411
        %v2300 = vadd.f32 %v2296, %v2298
        %v2301 = vadd.f32 %v2297, %v2299
        %v2302 = vmul.f32 %v2294, 0.7
        %v2303 = vmul.f32 %v2295, 0.7
        %v2304 = vmul.f32 %v2282, 0.3
        %v2305 = vmul.f32 %v2283, 0.3
        %v2306 = vadd.f32 %v2302, %v2304
        %v2307 = vadd.f32 %v2303, %v2305
        %v2308 = vmul.f32 %v2300, 0.7
        %v2309 = vmul.f32 %v2301, 0.7
        %v2310 = vmul.f32 %v2288, 0.3
        %v2311 = vmul.f32 %v2289, 0.3
        %v2312 = vadd.f32 %v2308, %v2310
        %v2313 = vadd.f32 %v2309, %v2311
        %v2314 = vpack.c.bf16 %v2307, %v2306
        %v2315 = vpack.c.bf16 %v2313, %v2312
        %v2316 = vadd.f32 %v2306, %v2312
        %v2317 = vadd.f32 %v2307, %v2313
        %v2318 = vpack.c.bf16 %v2317, %v2316
        %2319 = vmatprep.subr.bf16.mxu0 0
        %2320 = vmatpush1.bf16.msra.mxu0 0
        %2321 = vmatprep.subr.bf16.mxu0 0
        %2322 = vmatpush1.bf16.msra.mxu0 0
        %2323 = vmatprep.subr.bf16.mxu0 0
        %2324 = vmatpush1.bf16.msra.mxu0 0
        %2325 = vmatprep.subr.bf16.mxu0 0
        %2326 = vmatpush1.bf16.msra.mxu0 0
        %2327 = vmatprep.subr.bf16.mxu0 0
        %2328 = vmatpush1.bf16.msra.mxu0 0
        %2329 = vmatprep.subr.bf16.mxu0 0
        %2330 = vmatpush1.bf16.msra.mxu0 0
        %2331 = vmatprep.subr.bf16.mxu0 0
        %2332 = vmatpush1.bf16.msra.mxu0 0
        %2333 = vmatprep.subr.bf16.mxu0 0
        %2334 = vmatpush1.bf16.msra.mxu0 %v2314
        %2335 = vmatprep.subr.bf16.mxu0 0
        %2336 = vmatpush2.bf16.msra.mxu0 0
        %2337 = vmatprep.subr.bf16.mxu0 0
        %2338 = vmatpush2.bf16.msra.mxu0 0
        %2339 = vmatprep.subr.bf16.mxu0 0
        %2340 = vmatpush2.bf16.msra.mxu0 0
        %2341 = vmatprep.subr.bf16.mxu0 0
        %2342 = vmatpush2.bf16.msra.mxu0 0
        %2343 = vmatprep.subr.bf16.mxu0 0
        %2344 = vmatpush2.bf16.msra.mxu0 0
        %2345 = vmatprep.subr.bf16.mxu0 0
        %2346 = vmatpush2.bf16.msra.mxu0 0
        %2347 = vmatprep.subr.bf16.mxu0 0
        %2348 = vmatpush2.bf16.msra.mxu0 0
        %2349 = vmatprep.subr.bf16.mxu0 0
        %2350 = vmatpush2.bf16.msra.mxu0 0
        %2351 = vmatprep.mubr.bf16.mxu0 0
        %2352 = vmatmul.mubr.bf16.gmra.mxu0 %v450
        %v2353 = vpop.f32.mrf.mxu0
        %v2354 = vadd.f32 0.0, %v2353
        %v2355 = vpop.f32.mrf.mxu0
        %v2356 = vpop.f32.mrf.mxu0
        %v2357 = vadd.f32 0.0, %v2356
        %v2358 = vpop.f32.mrf.mxu0
        %2359 = vdwg.mxu0
        %2360 = vmatprep.subr.bf16.mxu0 0
        %2361 = vmatpush1.bf16.msra.mxu0 0
        %2362 = vmatprep.subr.bf16.mxu0 0
        %2363 = vmatpush1.bf16.msra.mxu0 0
        %2364 = vmatprep.subr.bf16.mxu0 0
        %2365 = vmatpush1.bf16.msra.mxu0 0
        %2366 = vmatprep.subr.bf16.mxu0 0
        %2367 = vmatpush1.bf16.msra.mxu0 0
        %2368 = vmatprep.subr.bf16.mxu0 0
        %2369 = vmatpush1.bf16.msra.mxu0 0
        %2370 = vmatprep.subr.bf16.mxu0 0
        %2371 = vmatpush1.bf16.msra.mxu0 0
        %2372 = vmatprep.subr.bf16.mxu0 0
        %2373 = vmatpush1.bf16.msra.mxu0 0
        %2374 = vmatprep.subr.bf16.mxu0 0
        %2375 = vmatpush1.bf16.msra.mxu0 %v2315
        %2376 = vmatprep.subr.bf16.mxu0 0
        %2377 = vmatpush2.bf16.msra.mxu0 0
        %2378 = vmatprep.subr.bf16.mxu0 0
        %2379 = vmatpush2.bf16.msra.mxu0 0
        %2380 = vmatprep.subr.bf16.mxu0 0
        %2381 = vmatpush2.bf16.msra.mxu0 0
        %2382 = vmatprep.subr.bf16.mxu0 0
        %2383 = vmatpush2.bf16.msra.mxu0 0
        %2384 = vmatprep.subr.bf16.mxu0 0
        %2385 = vmatpush2.bf16.msra.mxu0 0
        %2386 = vmatprep.subr.bf16.mxu0 0
        %2387 = vmatpush2.bf16.msra.mxu0 0
        %2388 = vmatprep.subr.bf16.mxu0 0
        %2389 = vmatpush2.bf16.msra.mxu0 0
        %2390 = vmatprep.subr.bf16.mxu0 0
        %2391 = vmatpush2.bf16.msra.mxu0 0
        %2392 = vmatprep.mubr.bf16.mxu0 0
        %2393 = vmatmul.mubr.bf16.gmra.mxu0 %v499
        %v2394 = vpop.f32.mrf.mxu0
        %v2395 = vadd.f32 0.0, %v2394
        %v2396 = vpop.f32.mrf.mxu0
        %v2397 = vpop.f32.mrf.mxu0
        %v2398 = vadd.f32 0.0, %v2397
        %v2399 = vpop.f32.mrf.mxu0
        %2400 = vdwg.mxu0
        %2401 = vmatprep.subr.bf16.mxu0 0
        %2402 = vmatpush1.bf16.msra.mxu0 0
        %2403 = vmatprep.subr.bf16.mxu0 0
        %2404 = vmatpush1.bf16.msra.mxu0 0
        %2405 = vmatprep.subr.bf16.mxu0 0
        %2406 = vmatpush1.bf16.msra.mxu0 0
        %2407 = vmatprep.subr.bf16.mxu0 0
        %2408 = vmatpush1.bf16.msra.mxu0 0
        %2409 = vmatprep.subr.bf16.mxu0 0
        %2410 = vmatpush1.bf16.msra.mxu0 0
        %2411 = vmatprep.subr.bf16.mxu0 0
        %2412 = vmatpush1.bf16.msra.mxu0 0
        %2413 = vmatprep.subr.bf16.mxu0 0
        %2414 = vmatpush1.bf16.msra.mxu0 0
        %2415 = vmatprep.subr.bf16.mxu0 0
        %2416 = vmatpush1.bf16.msra.mxu0 %v2318
        %2417 = vmatprep.subr.bf16.mxu0 0
        %2418 = vmatpush2.bf16.msra.mxu0 0
        %2419 = vmatprep.subr.bf16.mxu0 0
        %2420 = vmatpush2.bf16.msra.mxu0 0
        %2421 = vmatprep.subr.bf16.mxu0 0
        %2422 = vmatpush2.bf16.msra.mxu0 0
        %2423 = vmatprep.subr.bf16.mxu0 0
        %2424 = vmatpush2.bf16.msra.mxu0 0
        %2425 = vmatprep.subr.bf16.mxu0 0
        %2426 = vmatpush2.bf16.msra.mxu0 0
        %2427 = vmatprep.subr.bf16.mxu0 0
        %2428 = vmatpush2.bf16.msra.mxu0 0
        %2429 = vmatprep.subr.bf16.mxu0 0
        %2430 = vmatpush2.bf16.msra.mxu0 0
        %2431 = vmatprep.subr.bf16.mxu0 0
        %2432 = vmatpush2.bf16.msra.mxu0 0
        %2433 = vmatprep.mubr.bf16.mxu0 0
        %2434 = vmatmul.mubr.bf16.gmra.mxu0 %v548
        %v2435 = vpop.f32.mrf.mxu0
        %v2436 = vadd.f32 0.0, %v2435
        %v2437 = vpop.f32.mrf.mxu0
        %v2438 = vpop.f32.mrf.mxu0
        %v2439 = vadd.f32 0.0, %v2438
        %v2440 = vpop.f32.mrf.mxu0
        %2441 = vdwg.mxu0
        %v2442 = vsub.f32 %v2354, %v2395
        %v2443 = vsub.f32 %v2357, %v2398
        %v2444 = vsub.f32 %v2436, %v2354
        %v2445 = vsub.f32 %v2439, %v2357
        %v2446 = vsub.f32 %v2444, %v2395
        %v2447 = vsub.f32 %v2445, %v2398
        %v2448 = vpack.c.bf16 %v2443, %v2442
        %v2449 = vpack.c.bf16 %v2447, %v2446
        %v2451 = vsel %vm448, %v2448, 0
        %2453 = vmatprep.subr.bf16.mxu0 0
        %2454 = vmatpush1.bf16.msra.mxu0 0
        %2455 = vmatprep.subr.bf16.mxu0 0
        %2456 = vmatpush1.bf16.msra.mxu0 0
        %2457 = vmatprep.subr.bf16.mxu0 0
        %2458 = vmatpush1.bf16.msra.mxu0 0
        %2459 = vmatprep.subr.bf16.mxu0 0
        %2460 = vmatpush1.bf16.msra.mxu0 0
        %2461 = vmatprep.subr.bf16.mxu0 0
        %2462 = vmatpush1.bf16.msra.mxu0 0
        %2463 = vmatprep.subr.bf16.mxu0 0
        %2464 = vmatpush1.bf16.msra.mxu0 0
        %2465 = vmatprep.subr.bf16.mxu0 0
        %2466 = vmatpush1.bf16.msra.mxu0 0
        %2467 = vmatprep.subr.bf16.mxu0 0
        %2468 = vmatpush1.bf16.msra.mxu0 %v447
        %2469 = vmatprep.subr.bf16.mxu0 0
        %2470 = vmatpush2.bf16.msra.mxu0 0
        %2471 = vmatprep.subr.bf16.mxu0 0
        %2472 = vmatpush2.bf16.msra.mxu0 0
        %2473 = vmatprep.subr.bf16.mxu0 0
        %2474 = vmatpush2.bf16.msra.mxu0 0
        %2475 = vmatprep.subr.bf16.mxu0 0
        %2476 = vmatpush2.bf16.msra.mxu0 0
        %2477 = vmatprep.subr.bf16.mxu0 0
        %2478 = vmatpush2.bf16.msra.mxu0 0
        %2479 = vmatprep.subr.bf16.mxu0 0
        %2480 = vmatpush2.bf16.msra.mxu0 0
        %2481 = vmatprep.subr.bf16.mxu0 0
        %2482 = vmatpush2.bf16.msra.mxu0 0
        %2483 = vmatprep.subr.bf16.mxu0 0
        %2484 = vmatpush2.bf16.msra.mxu0 0
        %2485 = vmatprep.mubr.bf16.mxu0 0
        %2486 = vmatmul.mubr.bf16.gmra.mxu0 %v2451
        %v2487 = vpop.f32.mrf.mxu0
        %v2488 = vadd.f32 0.0, %v2487
        %v2489 = vpop.f32.mrf.mxu0
        %v2490 = vpop.f32.mrf.mxu0
        %v2491 = vadd.f32 0.0, %v2490
        %v2492 = vpop.f32.mrf.mxu0
        %2493 = vdwg.mxu0
        %v2495 = vsel %vm448, %v2449, 0
        %2497 = vmatprep.subr.bf16.mxu0 0
        %2498 = vmatpush1.bf16.msra.mxu0 0
        %2499 = vmatprep.subr.bf16.mxu0 0
        %2500 = vmatpush1.bf16.msra.mxu0 0
        %2501 = vmatprep.subr.bf16.mxu0 0
        %2502 = vmatpush1.bf16.msra.mxu0 0
        %2503 = vmatprep.subr.bf16.mxu0 0
        %2504 = vmatpush1.bf16.msra.mxu0 0
        %2505 = vmatprep.subr.bf16.mxu0 0
        %2506 = vmatpush1.bf16.msra.mxu0 0
        %2507 = vmatprep.subr.bf16.mxu0 0
        %2508 = vmatpush1.bf16.msra.mxu0 0
        %2509 = vmatprep.subr.bf16.mxu0 0
        %2510 = vmatpush1.bf16.msra.mxu0 0
        %2511 = vmatprep.subr.bf16.mxu0 0
        %2512 = vmatpush1.bf16.msra.mxu0 %v497
        %2513 = vmatprep.subr.bf16.mxu0 0
        %2514 = vmatpush2.bf16.msra.mxu0 0
        %2515 = vmatprep.subr.bf16.mxu0 0
        %2516 = vmatpush2.bf16.msra.mxu0 0
        %2517 = vmatprep.subr.bf16.mxu0 0
        %2518 = vmatpush2.bf16.msra.mxu0 0
        %2519 = vmatprep.subr.bf16.mxu0 0
        %2520 = vmatpush2.bf16.msra.mxu0 0
        %2521 = vmatprep.subr.bf16.mxu0 0
        %2522 = vmatpush2.bf16.msra.mxu0 0
        %2523 = vmatprep.subr.bf16.mxu0 0
        %2524 = vmatpush2.bf16.msra.mxu0 0
        %2525 = vmatprep.subr.bf16.mxu0 0
        %2526 = vmatpush2.bf16.msra.mxu0 0
        %2527 = vmatprep.subr.bf16.mxu0 0
        %2528 = vmatpush2.bf16.msra.mxu0 0
        %2529 = vmatprep.mubr.bf16.mxu0 0
        %2530 = vmatmul.mubr.bf16.gmra.mxu0 %v2495
        %v2531 = vpop.f32.mrf.mxu0
        %v2532 = vadd.f32 0.0, %v2531
        %v2533 = vpop.f32.mrf.mxu0
        %v2534 = vpop.f32.mrf.mxu0
        %v2535 = vadd.f32 0.0, %v2534
        %v2536 = vpop.f32.mrf.mxu0
        %2537 = vdwg.mxu0
        %v2538 = vadd.f32 %v2442, %v2446
        %v2539 = vadd.f32 %v2443, %v2447
        %v2540 = vpack.c.bf16 %v2539, %v2538
        %v2542 = vsel %vm448, %v2540, 0
        %2544 = vmatprep.subr.bf16.mxu0 0
        %2545 = vmatpush1.bf16.msra.mxu0 0
        %2546 = vmatprep.subr.bf16.mxu0 0
        %2547 = vmatpush1.bf16.msra.mxu0 0
        %2548 = vmatprep.subr.bf16.mxu0 0
        %2549 = vmatpush1.bf16.msra.mxu0 0
        %2550 = vmatprep.subr.bf16.mxu0 0
        %2551 = vmatpush1.bf16.msra.mxu0 0
        %2552 = vmatprep.subr.bf16.mxu0 0
        %2553 = vmatpush1.bf16.msra.mxu0 0
        %2554 = vmatprep.subr.bf16.mxu0 0
        %2555 = vmatpush1.bf16.msra.mxu0 0
        %2556 = vmatprep.subr.bf16.mxu0 0
        %2557 = vmatpush1.bf16.msra.mxu0 0
        %2558 = vmatprep.subr.bf16.mxu0 0
        %2559 = vmatpush1.bf16.msra.mxu0 %v546
        %2560 = vmatprep.subr.bf16.mxu0 0
        %2561 = vmatpush2.bf16.msra.mxu0 0
        %2562 = vmatprep.subr.bf16.mxu0 0
        %2563 = vmatpush2.bf16.msra.mxu0 0
        %2564 = vmatprep.subr.bf16.mxu0 0
        %2565 = vmatpush2.bf16.msra.mxu0 0
        %2566 = vmatprep.subr.bf16.mxu0 0
        %2567 = vmatpush2.bf16.msra.mxu0 0
        %2568 = vmatprep.subr.bf16.mxu0 0
        %2569 = vmatpush2.bf16.msra.mxu0 0
        %2570 = vmatprep.subr.bf16.mxu0 0
        %2571 = vmatpush2.bf16.msra.mxu0 0
        %2572 = vmatprep.subr.bf16.mxu0 0
        %2573 = vmatpush2.bf16.msra.mxu0 0
        %2574 = vmatprep.subr.bf16.mxu0 0
        %2575 = vmatpush2.bf16.msra.mxu0 0
        %2576 = vmatprep.mubr.bf16.mxu0 0
        %2577 = vmatmul.mubr.bf16.gmra.mxu0 %v2542
        %v2578 = vpop.f32.mrf.mxu0
        %v2579 = vadd.f32 0.0, %v2578
        %v2580 = vpop.f32.mrf.mxu0
        %v2581 = vpop.f32.mrf.mxu0
        %v2582 = vadd.f32 0.0, %v2581
        %v2583 = vpop.f32.mrf.mxu0
        %2584 = vdwg.mxu0
        %v2585 = vsub.f32 %v2488, %v2532
        %v2586 = vsub.f32 %v2491, %v2535
        %v2587 = vsub.f32 %v2579, %v2488
        %v2588 = vsub.f32 %v2582, %v2491
        %v2589 = vsub.f32 %v2587, %v2532
        %v2590 = vsub.f32 %v2588, %v2535
        %v2591 = vmul.f32 %v2585, %v743
        %v2592 = vmul.f32 %v2586, %v744
        %v2593 = vmul.f32 %v2589, %v747
        %v2594 = vmul.f32 %v2590, %v748
        %v2595 = vsub.f32 %v2591, %v2593
        %v2596 = vsub.f32 %v2592, %v2594
        %v2597 = vmul.f32 %v2585, %v747
        %v2598 = vmul.f32 %v2586, %v748
        %v2599 = vmul.f32 %v2589, %v743
        %v2600 = vmul.f32 %v2590, %v744
        %v2601 = vadd.f32 %v2597, %v2599
        %v2602 = vadd.f32 %v2598, %v2600
        %v2603 = vpack.c.bf16 %v2596, %v2595
        %v2604 = vpack.c.bf16 %v2602, %v2601
        %v2605 = vadd.f32 %v2595, %v2601
        %v2606 = vadd.f32 %v2596, %v2602
        %v2607 = vpack.c.bf16 %v2606, %v2605
        %2608 = vmatprep.subr.bf16.mxu0 0
        %2609 = vmatpush1.bf16.msra.mxu0 0
        %2610 = vmatprep.subr.bf16.mxu0 0
        %2611 = vmatpush1.bf16.msra.mxu0 0
        %2612 = vmatprep.subr.bf16.mxu0 0
        %2613 = vmatpush1.bf16.msra.mxu0 0
        %2614 = vmatprep.subr.bf16.mxu0 0
        %2615 = vmatpush1.bf16.msra.mxu0 0
        %2616 = vmatprep.subr.bf16.mxu0 0
        %2617 = vmatpush1.bf16.msra.mxu0 0
        %2618 = vmatprep.subr.bf16.mxu0 0
        %2619 = vmatpush1.bf16.msra.mxu0 0
        %2620 = vmatprep.subr.bf16.mxu0 0
        %2621 = vmatpush1.bf16.msra.mxu0 0
        %2622 = vmatprep.subr.bf16.mxu0 0
        %2623 = vmatpush1.bf16.msra.mxu0 %v2603
        %2624 = vmatprep.subr.bf16.mxu0 0
        %2625 = vmatpush2.bf16.msra.mxu0 0
        %2626 = vmatprep.subr.bf16.mxu0 0
        %2627 = vmatpush2.bf16.msra.mxu0 0
        %2628 = vmatprep.subr.bf16.mxu0 0
        %2629 = vmatpush2.bf16.msra.mxu0 0
        %2630 = vmatprep.subr.bf16.mxu0 0
        %2631 = vmatpush2.bf16.msra.mxu0 0
        %2632 = vmatprep.subr.bf16.mxu0 0
        %2633 = vmatpush2.bf16.msra.mxu0 0
        %2634 = vmatprep.subr.bf16.mxu0 0
        %2635 = vmatpush2.bf16.msra.mxu0 0
        %2636 = vmatprep.subr.bf16.mxu0 0
        %2637 = vmatpush2.bf16.msra.mxu0 0
        %2638 = vmatprep.subr.bf16.mxu0 0
        %2639 = vmatpush2.bf16.msra.mxu0 0
        %2640 = vmatprep.mubr.bf16.mxu0 0
        %2641 = vmatmul.mubr.bf16.gmra.mxu0 %v450
        %v2642 = vpop.f32.mrf.mxu0
        %v2643 = vadd.f32 0.0, %v2642
        %v2644 = vpop.f32.mrf.mxu0
        %v2645 = vpop.f32.mrf.mxu0
        %v2646 = vadd.f32 0.0, %v2645
        %v2647 = vpop.f32.mrf.mxu0
        %2648 = vdwg.mxu0
        %2649 = vmatprep.subr.bf16.mxu0 0
        %2650 = vmatpush1.bf16.msra.mxu0 0
        %2651 = vmatprep.subr.bf16.mxu0 0
        %2652 = vmatpush1.bf16.msra.mxu0 0
        %2653 = vmatprep.subr.bf16.mxu0 0
        %2654 = vmatpush1.bf16.msra.mxu0 0
        %2655 = vmatprep.subr.bf16.mxu0 0
        %2656 = vmatpush1.bf16.msra.mxu0 0
        %2657 = vmatprep.subr.bf16.mxu0 0
        %2658 = vmatpush1.bf16.msra.mxu0 0
        %2659 = vmatprep.subr.bf16.mxu0 0
        %2660 = vmatpush1.bf16.msra.mxu0 0
        %2661 = vmatprep.subr.bf16.mxu0 0
        %2662 = vmatpush1.bf16.msra.mxu0 0
        %2663 = vmatprep.subr.bf16.mxu0 0
        %2664 = vmatpush1.bf16.msra.mxu0 %v2604
        %2665 = vmatprep.subr.bf16.mxu0 0
        %2666 = vmatpush2.bf16.msra.mxu0 0
        %2667 = vmatprep.subr.bf16.mxu0 0
        %2668 = vmatpush2.bf16.msra.mxu0 0
        %2669 = vmatprep.subr.bf16.mxu0 0
        %2670 = vmatpush2.bf16.msra.mxu0 0
        %2671 = vmatprep.subr.bf16.mxu0 0
        %2672 = vmatpush2.bf16.msra.mxu0 0
        %2673 = vmatprep.subr.bf16.mxu0 0
        %2674 = vmatpush2.bf16.msra.mxu0 0
        %2675 = vmatprep.subr.bf16.mxu0 0
        %2676 = vmatpush2.bf16.msra.mxu0 0
        %2677 = vmatprep.subr.bf16.mxu0 0
        %2678 = vmatpush2.bf16.msra.mxu0 0
        %2679 = vmatprep.subr.bf16.mxu0 0
        %2680 = vmatpush2.bf16.msra.mxu0 0
        %2681 = vmatprep.mubr.bf16.mxu0 0
        %2682 = vmatmul.mubr.bf16.gmra.mxu0 %v499
        %v2683 = vpop.f32.mrf.mxu0
        %v2684 = vadd.f32 0.0, %v2683
        %v2685 = vpop.f32.mrf.mxu0
        %v2686 = vpop.f32.mrf.mxu0
        %v2687 = vadd.f32 0.0, %v2686
        %v2688 = vpop.f32.mrf.mxu0
        %2689 = vdwg.mxu0
        %2690 = vmatprep.subr.bf16.mxu0 0
        %2691 = vmatpush1.bf16.msra.mxu0 0
        %2692 = vmatprep.subr.bf16.mxu0 0
        %2693 = vmatpush1.bf16.msra.mxu0 0
        %2694 = vmatprep.subr.bf16.mxu0 0
        %2695 = vmatpush1.bf16.msra.mxu0 0
        %2696 = vmatprep.subr.bf16.mxu0 0
        %2697 = vmatpush1.bf16.msra.mxu0 0
        %2698 = vmatprep.subr.bf16.mxu0 0
        %2699 = vmatpush1.bf16.msra.mxu0 0
        %2700 = vmatprep.subr.bf16.mxu0 0
        %2701 = vmatpush1.bf16.msra.mxu0 0
        %2702 = vmatprep.subr.bf16.mxu0 0
        %2703 = vmatpush1.bf16.msra.mxu0 0
        %2704 = vmatprep.subr.bf16.mxu0 0
        %2705 = vmatpush1.bf16.msra.mxu0 %v2607
        %2706 = vmatprep.subr.bf16.mxu0 0
        %2707 = vmatpush2.bf16.msra.mxu0 0
        %2708 = vmatprep.subr.bf16.mxu0 0
        %2709 = vmatpush2.bf16.msra.mxu0 0
        %2710 = vmatprep.subr.bf16.mxu0 0
        %2711 = vmatpush2.bf16.msra.mxu0 0
        %2712 = vmatprep.subr.bf16.mxu0 0
        %2713 = vmatpush2.bf16.msra.mxu0 0
        %2714 = vmatprep.subr.bf16.mxu0 0
        %2715 = vmatpush2.bf16.msra.mxu0 0
        %2716 = vmatprep.subr.bf16.mxu0 0
        %2717 = vmatpush2.bf16.msra.mxu0 0
        %2718 = vmatprep.subr.bf16.mxu0 0
        %2719 = vmatpush2.bf16.msra.mxu0 0
        %2720 = vmatprep.subr.bf16.mxu0 0
        %2721 = vmatpush2.bf16.msra.mxu0 0
        %2722 = vmatprep.mubr.bf16.mxu0 0
        %2723 = vmatmul.mubr.bf16.gmra.mxu0 %v852
        %v2724 = vpop.f32.mrf.mxu0
        %v2725 = vadd.f32 0.0, %v2724
        %v2726 = vpop.f32.mrf.mxu0
        %v2727 = vpop.f32.mrf.mxu0
        %v2728 = vadd.f32 0.0, %v2727
        %v2729 = vpop.f32.mrf.mxu0
        %2730 = vdwg.mxu0
        %v2731 = vadd.f32 %v2643, %v2684
        %v2732 = vadd.f32 %v2646, %v2687
        %v2733 = vsub.f32 %v2725, %v2643
        %v2734 = vsub.f32 %v2728, %v2646
        %v2735 = vadd.f32 %v2733, %v2684
        %v2736 = vadd.f32 %v2734, %v2687
        %v2737 = vpack.c.bf16 %v2732, %v2731
        %v2738 = vpack.c.bf16 %v2736, %v2735
        %v2740 = vsel %vm448, %v2737, 0
        %2742 = vmatprep.subr.bf16.mxu0 0
        %2743 = vmatpush1.bf16.msra.mxu0 0
        %2744 = vmatprep.subr.bf16.mxu0 0
        %2745 = vmatpush1.bf16.msra.mxu0 0
        %2746 = vmatprep.subr.bf16.mxu0 0
        %2747 = vmatpush1.bf16.msra.mxu0 0
        %2748 = vmatprep.subr.bf16.mxu0 0
        %2749 = vmatpush1.bf16.msra.mxu0 0
        %2750 = vmatprep.subr.bf16.mxu0 0
        %2751 = vmatpush1.bf16.msra.mxu0 0
        %2752 = vmatprep.subr.bf16.mxu0 0
        %2753 = vmatpush1.bf16.msra.mxu0 0
        %2754 = vmatprep.subr.bf16.mxu0 0
        %2755 = vmatpush1.bf16.msra.mxu0 0
        %2756 = vmatprep.subr.bf16.mxu0 0
        %2757 = vmatpush1.bf16.msra.mxu0 %v447
        %2758 = vmatprep.subr.bf16.mxu0 0
        %2759 = vmatpush2.bf16.msra.mxu0 0
        %2760 = vmatprep.subr.bf16.mxu0 0
        %2761 = vmatpush2.bf16.msra.mxu0 0
        %2762 = vmatprep.subr.bf16.mxu0 0
        %2763 = vmatpush2.bf16.msra.mxu0 0
        %2764 = vmatprep.subr.bf16.mxu0 0
        %2765 = vmatpush2.bf16.msra.mxu0 0
        %2766 = vmatprep.subr.bf16.mxu0 0
        %2767 = vmatpush2.bf16.msra.mxu0 0
        %2768 = vmatprep.subr.bf16.mxu0 0
        %2769 = vmatpush2.bf16.msra.mxu0 0
        %2770 = vmatprep.subr.bf16.mxu0 0
        %2771 = vmatpush2.bf16.msra.mxu0 0
        %2772 = vmatprep.subr.bf16.mxu0 0
        %2773 = vmatpush2.bf16.msra.mxu0 0
        %2774 = vmatprep.mubr.bf16.mxu0 0
        %2775 = vmatmul.mubr.bf16.gmra.mxu0 %v2740
        %v2776 = vpop.f32.mrf.mxu0
        %v2777 = vadd.f32 0.0, %v2776
        %v2778 = vpop.f32.mrf.mxu0
        %v2779 = vpop.f32.mrf.mxu0
        %v2780 = vadd.f32 0.0, %v2779
        %v2781 = vpop.f32.mrf.mxu0
        %2782 = vdwg.mxu0
        %v2784 = vsel %vm448, %v2738, 0
        %2786 = vmatprep.subr.bf16.mxu0 0
        %2787 = vmatpush1.bf16.msra.mxu0 0
        %2788 = vmatprep.subr.bf16.mxu0 0
        %2789 = vmatpush1.bf16.msra.mxu0 0
        %2790 = vmatprep.subr.bf16.mxu0 0
        %2791 = vmatpush1.bf16.msra.mxu0 0
        %2792 = vmatprep.subr.bf16.mxu0 0
        %2793 = vmatpush1.bf16.msra.mxu0 0
        %2794 = vmatprep.subr.bf16.mxu0 0
        %2795 = vmatpush1.bf16.msra.mxu0 0
        %2796 = vmatprep.subr.bf16.mxu0 0
        %2797 = vmatpush1.bf16.msra.mxu0 0
        %2798 = vmatprep.subr.bf16.mxu0 0
        %2799 = vmatpush1.bf16.msra.mxu0 0
        %2800 = vmatprep.subr.bf16.mxu0 0
        %2801 = vmatpush1.bf16.msra.mxu0 %v497
        %2802 = vmatprep.subr.bf16.mxu0 0
        %2803 = vmatpush2.bf16.msra.mxu0 0
        %2804 = vmatprep.subr.bf16.mxu0 0
        %2805 = vmatpush2.bf16.msra.mxu0 0
        %2806 = vmatprep.subr.bf16.mxu0 0
        %2807 = vmatpush2.bf16.msra.mxu0 0
        %2808 = vmatprep.subr.bf16.mxu0 0
        %2809 = vmatpush2.bf16.msra.mxu0 0
        %2810 = vmatprep.subr.bf16.mxu0 0
        %2811 = vmatpush2.bf16.msra.mxu0 0
        %2812 = vmatprep.subr.bf16.mxu0 0
        %2813 = vmatpush2.bf16.msra.mxu0 0
        %2814 = vmatprep.subr.bf16.mxu0 0
        %2815 = vmatpush2.bf16.msra.mxu0 0
        %2816 = vmatprep.subr.bf16.mxu0 0
        %2817 = vmatpush2.bf16.msra.mxu0 0
        %2818 = vmatprep.mubr.bf16.mxu0 0
        %2819 = vmatmul.mubr.bf16.gmra.mxu0 %v2784
        %v2820 = vpop.f32.mrf.mxu0
        %v2821 = vadd.f32 0.0, %v2820
        %v2822 = vpop.f32.mrf.mxu0
        %v2823 = vpop.f32.mrf.mxu0
        %v2824 = vadd.f32 0.0, %v2823
        %v2825 = vpop.f32.mrf.mxu0
        %2826 = vdwg.mxu0
        %v2827 = vsub.f32 %v2731, %v2735
        %v2828 = vsub.f32 %v2732, %v2736
        %v2829 = vpack.c.bf16 %v2828, %v2827
        %v2831 = vsel %vm448, %v2829, 0
        %2833 = vmatprep.subr.bf16.mxu0 0
        %2834 = vmatpush1.bf16.msra.mxu0 0
        %2835 = vmatprep.subr.bf16.mxu0 0
        %2836 = vmatpush1.bf16.msra.mxu0 0
        %2837 = vmatprep.subr.bf16.mxu0 0
        %2838 = vmatpush1.bf16.msra.mxu0 0
        %2839 = vmatprep.subr.bf16.mxu0 0
        %2840 = vmatpush1.bf16.msra.mxu0 0
        %2841 = vmatprep.subr.bf16.mxu0 0
        %2842 = vmatpush1.bf16.msra.mxu0 0
        %2843 = vmatprep.subr.bf16.mxu0 0
        %2844 = vmatpush1.bf16.msra.mxu0 0
        %2845 = vmatprep.subr.bf16.mxu0 0
        %2846 = vmatpush1.bf16.msra.mxu0 0
        %2847 = vmatprep.subr.bf16.mxu0 0
        %2848 = vmatpush1.bf16.msra.mxu0 %v546
        %2849 = vmatprep.subr.bf16.mxu0 0
        %2850 = vmatpush2.bf16.msra.mxu0 0
        %2851 = vmatprep.subr.bf16.mxu0 0
        %2852 = vmatpush2.bf16.msra.mxu0 0
        %2853 = vmatprep.subr.bf16.mxu0 0
        %2854 = vmatpush2.bf16.msra.mxu0 0
        %2855 = vmatprep.subr.bf16.mxu0 0
        %2856 = vmatpush2.bf16.msra.mxu0 0
        %2857 = vmatprep.subr.bf16.mxu0 0
        %2858 = vmatpush2.bf16.msra.mxu0 0
        %2859 = vmatprep.subr.bf16.mxu0 0
        %2860 = vmatpush2.bf16.msra.mxu0 0
        %2861 = vmatprep.subr.bf16.mxu0 0
        %2862 = vmatpush2.bf16.msra.mxu0 0
        %2863 = vmatprep.subr.bf16.mxu0 0
        %2864 = vmatpush2.bf16.msra.mxu0 0
        %2865 = vmatprep.mubr.bf16.mxu0 0
        %2866 = vmatmul.mubr.bf16.gmra.mxu0 %v2831
        %v2867 = vpop.f32.mrf.mxu0
        %v2868 = vadd.f32 0.0, %v2867
        %v2869 = vpop.f32.mrf.mxu0
        %v2870 = vpop.f32.mrf.mxu0
        %v2871 = vadd.f32 0.0, %v2870
        %v2872 = vpop.f32.mrf.mxu0
        %2873 = vdwg.mxu0
        %v2874 = vadd.f32 %v2777, %v2821
        %v2875 = vadd.f32 %v2780, %v2824
        %v2876 = vsub.f32 %v2777, %v2821
        %v2877 = vsub.f32 %v2780, %v2824
        %v2878 = vsub.f32 %v2876, %v2868
        %v2879 = vsub.f32 %v2877, %v2871
        %s2880 = scalar_lea.vmem %s334, 32
        %v2881 = vld [vmem:[%s2880] sm:$0xf]
        %v2882 = vld [vmem:[%s2880 + $0x4] sm:$0xf]
        %v2883 = vunpack.c.l.bf16 %v2881
        %v2884 = vunpack.c.l.bf16 %v2882
        %s2885 = scalar_lea.vmem %s345, 32
        %v2886 = vld [vmem:[%s2885] sm:$0xf]
        %v2887 = vld [vmem:[%s2885 + $0x4] sm:$0xf]
        %v2888 = vunpack.c.l.bf16 %v2886
        %v2889 = vunpack.c.l.bf16 %v2887
        %v2890 = vmul.f32 %v2883, %v394
        %v2891 = vmul.f32 %v2884, %v395
        %v2892 = vmul.f32 %v2888, %v398
        %v2893 = vmul.f32 %v2889, %v399
        %v2894 = vsub.f32 %v2890, %v2892
        %v2895 = vsub.f32 %v2891, %v2893
        %v2896 = vmul.f32 %v2883, %v398
        %v2897 = vmul.f32 %v2884, %v399
        %v2898 = vmul.f32 %v2888, %v394
        %v2899 = vmul.f32 %v2889, %v395
        %v2900 = vadd.f32 %v2896, %v2898
        %v2901 = vadd.f32 %v2897, %v2899
        %v2902 = vmul.f32 %v2874, %v410
        %v2903 = vmul.f32 %v2875, %v411
        %v2904 = vmul.f32 %v2878, %v414
        %v2905 = vmul.f32 %v2879, %v415
        %v2906 = vsub.f32 %v2902, %v2904
        %v2907 = vsub.f32 %v2903, %v2905
        %v2908 = vmul.f32 %v2874, %v414
        %v2909 = vmul.f32 %v2875, %v415
        %v2910 = vmul.f32 %v2878, %v410
        %v2911 = vmul.f32 %v2879, %v411
        %v2912 = vadd.f32 %v2908, %v2910
        %v2913 = vadd.f32 %v2909, %v2911
        %v2914 = vmul.f32 %v2906, 0.7
        %v2915 = vmul.f32 %v2907, 0.7
        %v2916 = vmul.f32 %v2894, 0.3
        %v2917 = vmul.f32 %v2895, 0.3
        %v2918 = vadd.f32 %v2914, %v2916
        %v2919 = vadd.f32 %v2915, %v2917
        %v2920 = vmul.f32 %v2912, 0.7
        %v2921 = vmul.f32 %v2913, 0.7
        %v2922 = vmul.f32 %v2900, 0.3
        %v2923 = vmul.f32 %v2901, 0.3
        %v2924 = vadd.f32 %v2920, %v2922
        %v2925 = vadd.f32 %v2921, %v2923
        %v2926 = vpack.c.bf16 %v2919, %v2918
        %v2927 = vpack.c.bf16 %v2925, %v2924
        %v2928 = vadd.f32 %v2918, %v2924
        %v2929 = vadd.f32 %v2919, %v2925
        %v2930 = vpack.c.bf16 %v2929, %v2928
        %2931 = vmatprep.subr.bf16.mxu0 0
        %2932 = vmatpush1.bf16.msra.mxu0 0
        %2933 = vmatprep.subr.bf16.mxu0 0
        %2934 = vmatpush1.bf16.msra.mxu0 0
        %2935 = vmatprep.subr.bf16.mxu0 0
        %2936 = vmatpush1.bf16.msra.mxu0 0
        %2937 = vmatprep.subr.bf16.mxu0 0
        %2938 = vmatpush1.bf16.msra.mxu0 0
        %2939 = vmatprep.subr.bf16.mxu0 0
        %2940 = vmatpush1.bf16.msra.mxu0 0
        %2941 = vmatprep.subr.bf16.mxu0 0
        %2942 = vmatpush1.bf16.msra.mxu0 0
        %2943 = vmatprep.subr.bf16.mxu0 0
        %2944 = vmatpush1.bf16.msra.mxu0 0
        %2945 = vmatprep.subr.bf16.mxu0 0
        %2946 = vmatpush1.bf16.msra.mxu0 %v2926
        %2947 = vmatprep.subr.bf16.mxu0 0
        %2948 = vmatpush2.bf16.msra.mxu0 0
        %2949 = vmatprep.subr.bf16.mxu0 0
        %2950 = vmatpush2.bf16.msra.mxu0 0
        %2951 = vmatprep.subr.bf16.mxu0 0
        %2952 = vmatpush2.bf16.msra.mxu0 0
        %2953 = vmatprep.subr.bf16.mxu0 0
        %2954 = vmatpush2.bf16.msra.mxu0 0
        %2955 = vmatprep.subr.bf16.mxu0 0
        %2956 = vmatpush2.bf16.msra.mxu0 0
        %2957 = vmatprep.subr.bf16.mxu0 0
        %2958 = vmatpush2.bf16.msra.mxu0 0
        %2959 = vmatprep.subr.bf16.mxu0 0
        %2960 = vmatpush2.bf16.msra.mxu0 0
        %2961 = vmatprep.subr.bf16.mxu0 0
        %2962 = vmatpush2.bf16.msra.mxu0 0
        %2963 = vmatprep.mubr.bf16.mxu0 0
        %2964 = vmatmul.mubr.bf16.gmra.mxu0 %v450
        %v2965 = vpop.f32.mrf.mxu0
        %v2966 = vadd.f32 0.0, %v2965
        %v2967 = vpop.f32.mrf.mxu0
        %v2968 = vpop.f32.mrf.mxu0
        %v2969 = vadd.f32 0.0, %v2968
        %v2970 = vpop.f32.mrf.mxu0
        %2971 = vdwg.mxu0
        %2972 = vmatprep.subr.bf16.mxu0 0
        %2973 = vmatpush1.bf16.msra.mxu0 0
        %2974 = vmatprep.subr.bf16.mxu0 0
        %2975 = vmatpush1.bf16.msra.mxu0 0
        %2976 = vmatprep.subr.bf16.mxu0 0
        %2977 = vmatpush1.bf16.msra.mxu0 0
        %2978 = vmatprep.subr.bf16.mxu0 0
        %2979 = vmatpush1.bf16.msra.mxu0 0
        %2980 = vmatprep.subr.bf16.mxu0 0
        %2981 = vmatpush1.bf16.msra.mxu0 0
        %2982 = vmatprep.subr.bf16.mxu0 0
        %2983 = vmatpush1.bf16.msra.mxu0 0
        %2984 = vmatprep.subr.bf16.mxu0 0
        %2985 = vmatpush1.bf16.msra.mxu0 0
        %2986 = vmatprep.subr.bf16.mxu0 0
        %2987 = vmatpush1.bf16.msra.mxu0 %v2927
        %2988 = vmatprep.subr.bf16.mxu0 0
        %2989 = vmatpush2.bf16.msra.mxu0 0
        %2990 = vmatprep.subr.bf16.mxu0 0
        %2991 = vmatpush2.bf16.msra.mxu0 0
        %2992 = vmatprep.subr.bf16.mxu0 0
        %2993 = vmatpush2.bf16.msra.mxu0 0
        %2994 = vmatprep.subr.bf16.mxu0 0
        %2995 = vmatpush2.bf16.msra.mxu0 0
        %2996 = vmatprep.subr.bf16.mxu0 0
        %2997 = vmatpush2.bf16.msra.mxu0 0
        %2998 = vmatprep.subr.bf16.mxu0 0
        %2999 = vmatpush2.bf16.msra.mxu0 0
        %3000 = vmatprep.subr.bf16.mxu0 0
        %3001 = vmatpush2.bf16.msra.mxu0 0
        %3002 = vmatprep.subr.bf16.mxu0 0
        %3003 = vmatpush2.bf16.msra.mxu0 0
        %3004 = vmatprep.mubr.bf16.mxu0 0
        %3005 = vmatmul.mubr.bf16.gmra.mxu0 %v499
        %v3006 = vpop.f32.mrf.mxu0
        %v3007 = vadd.f32 0.0, %v3006
        %v3008 = vpop.f32.mrf.mxu0
        %v3009 = vpop.f32.mrf.mxu0
        %v3010 = vadd.f32 0.0, %v3009
        %v3011 = vpop.f32.mrf.mxu0
        %3012 = vdwg.mxu0
        %3013 = vmatprep.subr.bf16.mxu0 0
        %3014 = vmatpush1.bf16.msra.mxu0 0
        %3015 = vmatprep.subr.bf16.mxu0 0
        %3016 = vmatpush1.bf16.msra.mxu0 0
        %3017 = vmatprep.subr.bf16.mxu0 0
        %3018 = vmatpush1.bf16.msra.mxu0 0
        %3019 = vmatprep.subr.bf16.mxu0 0
        %3020 = vmatpush1.bf16.msra.mxu0 0
        %3021 = vmatprep.subr.bf16.mxu0 0
        %3022 = vmatpush1.bf16.msra.mxu0 0
        %3023 = vmatprep.subr.bf16.mxu0 0
        %3024 = vmatpush1.bf16.msra.mxu0 0
        %3025 = vmatprep.subr.bf16.mxu0 0
        %3026 = vmatpush1.bf16.msra.mxu0 0
        %3027 = vmatprep.subr.bf16.mxu0 0
        %3028 = vmatpush1.bf16.msra.mxu0 %v2930
        %3029 = vmatprep.subr.bf16.mxu0 0
        %3030 = vmatpush2.bf16.msra.mxu0 0
        %3031 = vmatprep.subr.bf16.mxu0 0
        %3032 = vmatpush2.bf16.msra.mxu0 0
        %3033 = vmatprep.subr.bf16.mxu0 0
        %3034 = vmatpush2.bf16.msra.mxu0 0
        %3035 = vmatprep.subr.bf16.mxu0 0
        %3036 = vmatpush2.bf16.msra.mxu0 0
        %3037 = vmatprep.subr.bf16.mxu0 0
        %3038 = vmatpush2.bf16.msra.mxu0 0
        %3039 = vmatprep.subr.bf16.mxu0 0
        %3040 = vmatpush2.bf16.msra.mxu0 0
        %3041 = vmatprep.subr.bf16.mxu0 0
        %3042 = vmatpush2.bf16.msra.mxu0 0
        %3043 = vmatprep.subr.bf16.mxu0 0
        %3044 = vmatpush2.bf16.msra.mxu0 0
        %3045 = vmatprep.mubr.bf16.mxu0 0
        %3046 = vmatmul.mubr.bf16.gmra.mxu0 %v548
        %v3047 = vpop.f32.mrf.mxu0
        %v3048 = vadd.f32 0.0, %v3047
        %v3049 = vpop.f32.mrf.mxu0
        %v3050 = vpop.f32.mrf.mxu0
        %v3051 = vadd.f32 0.0, %v3050
        %v3052 = vpop.f32.mrf.mxu0
        %3053 = vdwg.mxu0
        %v3054 = vsub.f32 %v2966, %v3007
        %v3055 = vsub.f32 %v2969, %v3010
        %v3056 = vsub.f32 %v3048, %v2966
        %v3057 = vsub.f32 %v3051, %v2969
        %v3058 = vsub.f32 %v3056, %v3007
        %v3059 = vsub.f32 %v3057, %v3010
        %v3060 = vpack.c.bf16 %v3055, %v3054
        %v3061 = vpack.c.bf16 %v3059, %v3058
        %v3063 = vsel %vm448, %v3060, 0
        %3065 = vmatprep.subr.bf16.mxu0 0
        %3066 = vmatpush1.bf16.msra.mxu0 0
        %3067 = vmatprep.subr.bf16.mxu0 0
        %3068 = vmatpush1.bf16.msra.mxu0 0
        %3069 = vmatprep.subr.bf16.mxu0 0
        %3070 = vmatpush1.bf16.msra.mxu0 0
        %3071 = vmatprep.subr.bf16.mxu0 0
        %3072 = vmatpush1.bf16.msra.mxu0 0
        %3073 = vmatprep.subr.bf16.mxu0 0
        %3074 = vmatpush1.bf16.msra.mxu0 0
        %3075 = vmatprep.subr.bf16.mxu0 0
        %3076 = vmatpush1.bf16.msra.mxu0 0
        %3077 = vmatprep.subr.bf16.mxu0 0
        %3078 = vmatpush1.bf16.msra.mxu0 0
        %3079 = vmatprep.subr.bf16.mxu0 0
        %3080 = vmatpush1.bf16.msra.mxu0 %v447
        %3081 = vmatprep.subr.bf16.mxu0 0
        %3082 = vmatpush2.bf16.msra.mxu0 0
        %3083 = vmatprep.subr.bf16.mxu0 0
        %3084 = vmatpush2.bf16.msra.mxu0 0
        %3085 = vmatprep.subr.bf16.mxu0 0
        %3086 = vmatpush2.bf16.msra.mxu0 0
        %3087 = vmatprep.subr.bf16.mxu0 0
        %3088 = vmatpush2.bf16.msra.mxu0 0
        %3089 = vmatprep.subr.bf16.mxu0 0
        %3090 = vmatpush2.bf16.msra.mxu0 0
        %3091 = vmatprep.subr.bf16.mxu0 0
        %3092 = vmatpush2.bf16.msra.mxu0 0
        %3093 = vmatprep.subr.bf16.mxu0 0
        %3094 = vmatpush2.bf16.msra.mxu0 0
        %3095 = vmatprep.subr.bf16.mxu0 0
        %3096 = vmatpush2.bf16.msra.mxu0 0
        %3097 = vmatprep.mubr.bf16.mxu0 0
        %3098 = vmatmul.mubr.bf16.gmra.mxu0 %v3063
        %v3099 = vpop.f32.mrf.mxu0
        %v3100 = vadd.f32 0.0, %v3099
        %v3101 = vpop.f32.mrf.mxu0
        %v3102 = vpop.f32.mrf.mxu0
        %v3103 = vadd.f32 0.0, %v3102
        %v3104 = vpop.f32.mrf.mxu0
        %3105 = vdwg.mxu0
        %v3107 = vsel %vm448, %v3061, 0
        %3109 = vmatprep.subr.bf16.mxu0 0
        %3110 = vmatpush1.bf16.msra.mxu0 0
        %3111 = vmatprep.subr.bf16.mxu0 0
        %3112 = vmatpush1.bf16.msra.mxu0 0
        %3113 = vmatprep.subr.bf16.mxu0 0
        %3114 = vmatpush1.bf16.msra.mxu0 0
        %3115 = vmatprep.subr.bf16.mxu0 0
        %3116 = vmatpush1.bf16.msra.mxu0 0
        %3117 = vmatprep.subr.bf16.mxu0 0
        %3118 = vmatpush1.bf16.msra.mxu0 0
        %3119 = vmatprep.subr.bf16.mxu0 0
        %3120 = vmatpush1.bf16.msra.mxu0 0
        %3121 = vmatprep.subr.bf16.mxu0 0
        %3122 = vmatpush1.bf16.msra.mxu0 0
        %3123 = vmatprep.subr.bf16.mxu0 0
        %3124 = vmatpush1.bf16.msra.mxu0 %v497
        %3125 = vmatprep.subr.bf16.mxu0 0
        %3126 = vmatpush2.bf16.msra.mxu0 0
        %3127 = vmatprep.subr.bf16.mxu0 0
        %3128 = vmatpush2.bf16.msra.mxu0 0
        %3129 = vmatprep.subr.bf16.mxu0 0
        %3130 = vmatpush2.bf16.msra.mxu0 0
        %3131 = vmatprep.subr.bf16.mxu0 0
        %3132 = vmatpush2.bf16.msra.mxu0 0
        %3133 = vmatprep.subr.bf16.mxu0 0
        %3134 = vmatpush2.bf16.msra.mxu0 0
        %3135 = vmatprep.subr.bf16.mxu0 0
        %3136 = vmatpush2.bf16.msra.mxu0 0
        %3137 = vmatprep.subr.bf16.mxu0 0
        %3138 = vmatpush2.bf16.msra.mxu0 0
        %3139 = vmatprep.subr.bf16.mxu0 0
        %3140 = vmatpush2.bf16.msra.mxu0 0
        %3141 = vmatprep.mubr.bf16.mxu0 0
        %3142 = vmatmul.mubr.bf16.gmra.mxu0 %v3107
        %v3143 = vpop.f32.mrf.mxu0
        %v3144 = vadd.f32 0.0, %v3143
        %v3145 = vpop.f32.mrf.mxu0
        %v3146 = vpop.f32.mrf.mxu0
        %v3147 = vadd.f32 0.0, %v3146
        %v3148 = vpop.f32.mrf.mxu0
        %3149 = vdwg.mxu0
        %v3150 = vadd.f32 %v3054, %v3058
        %v3151 = vadd.f32 %v3055, %v3059
        %v3152 = vpack.c.bf16 %v3151, %v3150
        %v3154 = vsel %vm448, %v3152, 0
        %3156 = vmatprep.subr.bf16.mxu0 0
        %3157 = vmatpush1.bf16.msra.mxu0 0
        %3158 = vmatprep.subr.bf16.mxu0 0
        %3159 = vmatpush1.bf16.msra.mxu0 0
        %3160 = vmatprep.subr.bf16.mxu0 0
        %3161 = vmatpush1.bf16.msra.mxu0 0
        %3162 = vmatprep.subr.bf16.mxu0 0
        %3163 = vmatpush1.bf16.msra.mxu0 0
        %3164 = vmatprep.subr.bf16.mxu0 0
        %3165 = vmatpush1.bf16.msra.mxu0 0
        %3166 = vmatprep.subr.bf16.mxu0 0
        %3167 = vmatpush1.bf16.msra.mxu0 0
        %3168 = vmatprep.subr.bf16.mxu0 0
        %3169 = vmatpush1.bf16.msra.mxu0 0
        %3170 = vmatprep.subr.bf16.mxu0 0
        %3171 = vmatpush1.bf16.msra.mxu0 %v546
        %3172 = vmatprep.subr.bf16.mxu0 0
        %3173 = vmatpush2.bf16.msra.mxu0 0
        %3174 = vmatprep.subr.bf16.mxu0 0
        %3175 = vmatpush2.bf16.msra.mxu0 0
        %3176 = vmatprep.subr.bf16.mxu0 0
        %3177 = vmatpush2.bf16.msra.mxu0 0
        %3178 = vmatprep.subr.bf16.mxu0 0
        %3179 = vmatpush2.bf16.msra.mxu0 0
        %3180 = vmatprep.subr.bf16.mxu0 0
        %3181 = vmatpush2.bf16.msra.mxu0 0
        %3182 = vmatprep.subr.bf16.mxu0 0
        %3183 = vmatpush2.bf16.msra.mxu0 0
        %3184 = vmatprep.subr.bf16.mxu0 0
        %3185 = vmatpush2.bf16.msra.mxu0 0
        %3186 = vmatprep.subr.bf16.mxu0 0
        %3187 = vmatpush2.bf16.msra.mxu0 0
        %3188 = vmatprep.mubr.bf16.mxu0 0
        %3189 = vmatmul.mubr.bf16.gmra.mxu0 %v3154
        %v3190 = vpop.f32.mrf.mxu0
        %v3191 = vadd.f32 0.0, %v3190
        %v3192 = vpop.f32.mrf.mxu0
        %v3193 = vpop.f32.mrf.mxu0
        %v3194 = vadd.f32 0.0, %v3193
        %v3195 = vpop.f32.mrf.mxu0
        %3196 = vdwg.mxu0
        %v3197 = vsub.f32 %v3100, %v3144
        %v3198 = vsub.f32 %v3103, %v3147
        %v3199 = vsub.f32 %v3191, %v3100
        %v3200 = vsub.f32 %v3194, %v3103
        %v3201 = vsub.f32 %v3199, %v3144
        %v3202 = vsub.f32 %v3200, %v3147
        %v3203 = vmul.f32 %v3197, %v743
        %v3204 = vmul.f32 %v3198, %v744
        %v3205 = vmul.f32 %v3201, %v747
        %v3206 = vmul.f32 %v3202, %v748
        %v3207 = vsub.f32 %v3203, %v3205
        %v3208 = vsub.f32 %v3204, %v3206
        %v3209 = vmul.f32 %v3197, %v747
        %v3210 = vmul.f32 %v3198, %v748
        %v3211 = vmul.f32 %v3201, %v743
        %v3212 = vmul.f32 %v3202, %v744
        %v3213 = vadd.f32 %v3209, %v3211
        %v3214 = vadd.f32 %v3210, %v3212
        %v3215 = vpack.c.bf16 %v3208, %v3207
        %v3216 = vpack.c.bf16 %v3214, %v3213
        %v3217 = vadd.f32 %v3207, %v3213
        %v3218 = vadd.f32 %v3208, %v3214
        %v3219 = vpack.c.bf16 %v3218, %v3217
        %3220 = vmatprep.subr.bf16.mxu0 0
        %3221 = vmatpush1.bf16.msra.mxu0 0
        %3222 = vmatprep.subr.bf16.mxu0 0
        %3223 = vmatpush1.bf16.msra.mxu0 0
        %3224 = vmatprep.subr.bf16.mxu0 0
        %3225 = vmatpush1.bf16.msra.mxu0 0
        %3226 = vmatprep.subr.bf16.mxu0 0
        %3227 = vmatpush1.bf16.msra.mxu0 0
        %3228 = vmatprep.subr.bf16.mxu0 0
        %3229 = vmatpush1.bf16.msra.mxu0 0
        %3230 = vmatprep.subr.bf16.mxu0 0
        %3231 = vmatpush1.bf16.msra.mxu0 0
        %3232 = vmatprep.subr.bf16.mxu0 0
        %3233 = vmatpush1.bf16.msra.mxu0 0
        %3234 = vmatprep.subr.bf16.mxu0 0
        %3235 = vmatpush1.bf16.msra.mxu0 %v3215
        %3236 = vmatprep.subr.bf16.mxu0 0
        %3237 = vmatpush2.bf16.msra.mxu0 0
        %3238 = vmatprep.subr.bf16.mxu0 0
        %3239 = vmatpush2.bf16.msra.mxu0 0
        %3240 = vmatprep.subr.bf16.mxu0 0
        %3241 = vmatpush2.bf16.msra.mxu0 0
        %3242 = vmatprep.subr.bf16.mxu0 0
        %3243 = vmatpush2.bf16.msra.mxu0 0
        %3244 = vmatprep.subr.bf16.mxu0 0
        %3245 = vmatpush2.bf16.msra.mxu0 0
        %3246 = vmatprep.subr.bf16.mxu0 0
        %3247 = vmatpush2.bf16.msra.mxu0 0
        %3248 = vmatprep.subr.bf16.mxu0 0
        %3249 = vmatpush2.bf16.msra.mxu0 0
        %3250 = vmatprep.subr.bf16.mxu0 0
        %3251 = vmatpush2.bf16.msra.mxu0 0
        %3252 = vmatprep.mubr.bf16.mxu0 0
        %3253 = vmatmul.mubr.bf16.gmra.mxu0 %v450
        %v3254 = vpop.f32.mrf.mxu0
        %v3255 = vadd.f32 0.0, %v3254
        %v3256 = vpop.f32.mrf.mxu0
        %v3257 = vpop.f32.mrf.mxu0
        %v3258 = vadd.f32 0.0, %v3257
        %v3259 = vpop.f32.mrf.mxu0
        %3260 = vdwg.mxu0
        %3261 = vmatprep.subr.bf16.mxu0 0
        %3262 = vmatpush1.bf16.msra.mxu0 0
        %3263 = vmatprep.subr.bf16.mxu0 0
        %3264 = vmatpush1.bf16.msra.mxu0 0
        %3265 = vmatprep.subr.bf16.mxu0 0
        %3266 = vmatpush1.bf16.msra.mxu0 0
        %3267 = vmatprep.subr.bf16.mxu0 0
        %3268 = vmatpush1.bf16.msra.mxu0 0
        %3269 = vmatprep.subr.bf16.mxu0 0
        %3270 = vmatpush1.bf16.msra.mxu0 0
        %3271 = vmatprep.subr.bf16.mxu0 0
        %3272 = vmatpush1.bf16.msra.mxu0 0
        %3273 = vmatprep.subr.bf16.mxu0 0
        %3274 = vmatpush1.bf16.msra.mxu0 0
        %3275 = vmatprep.subr.bf16.mxu0 0
        %3276 = vmatpush1.bf16.msra.mxu0 %v3216
        %3277 = vmatprep.subr.bf16.mxu0 0
        %3278 = vmatpush2.bf16.msra.mxu0 0
        %3279 = vmatprep.subr.bf16.mxu0 0
        %3280 = vmatpush2.bf16.msra.mxu0 0
        %3281 = vmatprep.subr.bf16.mxu0 0
        %3282 = vmatpush2.bf16.msra.mxu0 0
        %3283 = vmatprep.subr.bf16.mxu0 0
        %3284 = vmatpush2.bf16.msra.mxu0 0
        %3285 = vmatprep.subr.bf16.mxu0 0
        %3286 = vmatpush2.bf16.msra.mxu0 0
        %3287 = vmatprep.subr.bf16.mxu0 0
        %3288 = vmatpush2.bf16.msra.mxu0 0
        %3289 = vmatprep.subr.bf16.mxu0 0
        %3290 = vmatpush2.bf16.msra.mxu0 0
        %3291 = vmatprep.subr.bf16.mxu0 0
        %3292 = vmatpush2.bf16.msra.mxu0 0
        %3293 = vmatprep.mubr.bf16.mxu0 0
        %3294 = vmatmul.mubr.bf16.gmra.mxu0 %v499
        %v3295 = vpop.f32.mrf.mxu0
        %v3296 = vadd.f32 0.0, %v3295
        %v3297 = vpop.f32.mrf.mxu0
        %v3298 = vpop.f32.mrf.mxu0
        %v3299 = vadd.f32 0.0, %v3298
        %v3300 = vpop.f32.mrf.mxu0
        %3301 = vdwg.mxu0
        %3302 = vmatprep.subr.bf16.mxu0 0
        %3303 = vmatpush1.bf16.msra.mxu0 0
        %3304 = vmatprep.subr.bf16.mxu0 0
        %3305 = vmatpush1.bf16.msra.mxu0 0
        %3306 = vmatprep.subr.bf16.mxu0 0
        %3307 = vmatpush1.bf16.msra.mxu0 0
        %3308 = vmatprep.subr.bf16.mxu0 0
        %3309 = vmatpush1.bf16.msra.mxu0 0
        %3310 = vmatprep.subr.bf16.mxu0 0
        %3311 = vmatpush1.bf16.msra.mxu0 0
        %3312 = vmatprep.subr.bf16.mxu0 0
        %3313 = vmatpush1.bf16.msra.mxu0 0
        %3314 = vmatprep.subr.bf16.mxu0 0
        %3315 = vmatpush1.bf16.msra.mxu0 0
        %3316 = vmatprep.subr.bf16.mxu0 0
        %3317 = vmatpush1.bf16.msra.mxu0 %v3219
        %3318 = vmatprep.subr.bf16.mxu0 0
        %3319 = vmatpush2.bf16.msra.mxu0 0
        %3320 = vmatprep.subr.bf16.mxu0 0
        %3321 = vmatpush2.bf16.msra.mxu0 0
        %3322 = vmatprep.subr.bf16.mxu0 0
        %3323 = vmatpush2.bf16.msra.mxu0 0
        %3324 = vmatprep.subr.bf16.mxu0 0
        %3325 = vmatpush2.bf16.msra.mxu0 0
        %3326 = vmatprep.subr.bf16.mxu0 0
        %3327 = vmatpush2.bf16.msra.mxu0 0
        %3328 = vmatprep.subr.bf16.mxu0 0
        %3329 = vmatpush2.bf16.msra.mxu0 0
        %3330 = vmatprep.subr.bf16.mxu0 0
        %3331 = vmatpush2.bf16.msra.mxu0 0
        %3332 = vmatprep.subr.bf16.mxu0 0
        %3333 = vmatpush2.bf16.msra.mxu0 0
        %3334 = vmatprep.mubr.bf16.mxu0 0
        %3335 = vmatmul.mubr.bf16.gmra.mxu0 %v852
        %v3336 = vpop.f32.mrf.mxu0
        %v3337 = vadd.f32 0.0, %v3336
        %v3338 = vpop.f32.mrf.mxu0
        %v3339 = vpop.f32.mrf.mxu0
        %v3340 = vadd.f32 0.0, %v3339
        %v3341 = vpop.f32.mrf.mxu0
        %3342 = vdwg.mxu0
        %v3343 = vadd.f32 %v3255, %v3296
        %v3344 = vadd.f32 %v3258, %v3299
        %v3345 = vsub.f32 %v3337, %v3255
        %v3346 = vsub.f32 %v3340, %v3258
        %v3347 = vadd.f32 %v3345, %v3296
        %v3348 = vadd.f32 %v3346, %v3299
        %v3349 = vpack.c.bf16 %v3344, %v3343
        %v3350 = vpack.c.bf16 %v3348, %v3347
        %v3352 = vsel %vm448, %v3349, 0
        %3354 = vmatprep.subr.bf16.mxu0 0
        %3355 = vmatpush1.bf16.msra.mxu0 0
        %3356 = vmatprep.subr.bf16.mxu0 0
        %3357 = vmatpush1.bf16.msra.mxu0 0
        %3358 = vmatprep.subr.bf16.mxu0 0
        %3359 = vmatpush1.bf16.msra.mxu0 0
        %3360 = vmatprep.subr.bf16.mxu0 0
        %3361 = vmatpush1.bf16.msra.mxu0 0
        %3362 = vmatprep.subr.bf16.mxu0 0
        %3363 = vmatpush1.bf16.msra.mxu0 0
        %3364 = vmatprep.subr.bf16.mxu0 0
        %3365 = vmatpush1.bf16.msra.mxu0 0
        %3366 = vmatprep.subr.bf16.mxu0 0
        %3367 = vmatpush1.bf16.msra.mxu0 0
        %3368 = vmatprep.subr.bf16.mxu0 0
        %3369 = vmatpush1.bf16.msra.mxu0 %v447
        %3370 = vmatprep.subr.bf16.mxu0 0
        %3371 = vmatpush2.bf16.msra.mxu0 0
        %3372 = vmatprep.subr.bf16.mxu0 0
        %3373 = vmatpush2.bf16.msra.mxu0 0
        %3374 = vmatprep.subr.bf16.mxu0 0
        %3375 = vmatpush2.bf16.msra.mxu0 0
        %3376 = vmatprep.subr.bf16.mxu0 0
        %3377 = vmatpush2.bf16.msra.mxu0 0
        %3378 = vmatprep.subr.bf16.mxu0 0
        %3379 = vmatpush2.bf16.msra.mxu0 0
        %3380 = vmatprep.subr.bf16.mxu0 0
        %3381 = vmatpush2.bf16.msra.mxu0 0
        %3382 = vmatprep.subr.bf16.mxu0 0
        %3383 = vmatpush2.bf16.msra.mxu0 0
        %3384 = vmatprep.subr.bf16.mxu0 0
        %3385 = vmatpush2.bf16.msra.mxu0 0
        %3386 = vmatprep.mubr.bf16.mxu0 0
        %3387 = vmatmul.mubr.bf16.gmra.mxu0 %v3352
        %v3388 = vpop.f32.mrf.mxu0
        %v3389 = vadd.f32 0.0, %v3388
        %v3390 = vpop.f32.mrf.mxu0
        %v3391 = vpop.f32.mrf.mxu0
        %v3392 = vadd.f32 0.0, %v3391
        %v3393 = vpop.f32.mrf.mxu0
        %3394 = vdwg.mxu0
        %v3396 = vsel %vm448, %v3350, 0
        %3398 = vmatprep.subr.bf16.mxu0 0
        %3399 = vmatpush1.bf16.msra.mxu0 0
        %3400 = vmatprep.subr.bf16.mxu0 0
        %3401 = vmatpush1.bf16.msra.mxu0 0
        %3402 = vmatprep.subr.bf16.mxu0 0
        %3403 = vmatpush1.bf16.msra.mxu0 0
        %3404 = vmatprep.subr.bf16.mxu0 0
        %3405 = vmatpush1.bf16.msra.mxu0 0
        %3406 = vmatprep.subr.bf16.mxu0 0
        %3407 = vmatpush1.bf16.msra.mxu0 0
        %3408 = vmatprep.subr.bf16.mxu0 0
        %3409 = vmatpush1.bf16.msra.mxu0 0
        %3410 = vmatprep.subr.bf16.mxu0 0
        %3411 = vmatpush1.bf16.msra.mxu0 0
        %3412 = vmatprep.subr.bf16.mxu0 0
        %3413 = vmatpush1.bf16.msra.mxu0 %v497
        %3414 = vmatprep.subr.bf16.mxu0 0
        %3415 = vmatpush2.bf16.msra.mxu0 0
        %3416 = vmatprep.subr.bf16.mxu0 0
        %3417 = vmatpush2.bf16.msra.mxu0 0
        %3418 = vmatprep.subr.bf16.mxu0 0
        %3419 = vmatpush2.bf16.msra.mxu0 0
        %3420 = vmatprep.subr.bf16.mxu0 0
        %3421 = vmatpush2.bf16.msra.mxu0 0
        %3422 = vmatprep.subr.bf16.mxu0 0
        %3423 = vmatpush2.bf16.msra.mxu0 0
        %3424 = vmatprep.subr.bf16.mxu0 0
        %3425 = vmatpush2.bf16.msra.mxu0 0
        %3426 = vmatprep.subr.bf16.mxu0 0
        %3427 = vmatpush2.bf16.msra.mxu0 0
        %3428 = vmatprep.subr.bf16.mxu0 0
        %3429 = vmatpush2.bf16.msra.mxu0 0
        %3430 = vmatprep.mubr.bf16.mxu0 0
        %3431 = vmatmul.mubr.bf16.gmra.mxu0 %v3396
        %v3432 = vpop.f32.mrf.mxu0
        %v3433 = vadd.f32 0.0, %v3432
        %v3434 = vpop.f32.mrf.mxu0
        %v3435 = vpop.f32.mrf.mxu0
        %v3436 = vadd.f32 0.0, %v3435
        %v3437 = vpop.f32.mrf.mxu0
        %3438 = vdwg.mxu0
        %v3439 = vsub.f32 %v3343, %v3347
        %v3440 = vsub.f32 %v3344, %v3348
        %v3441 = vpack.c.bf16 %v3440, %v3439
        %v3443 = vsel %vm448, %v3441, 0
        %3445 = vmatprep.subr.bf16.mxu0 0
        %3446 = vmatpush1.bf16.msra.mxu0 0
        %3447 = vmatprep.subr.bf16.mxu0 0
        %3448 = vmatpush1.bf16.msra.mxu0 0
        %3449 = vmatprep.subr.bf16.mxu0 0
        %3450 = vmatpush1.bf16.msra.mxu0 0
        %3451 = vmatprep.subr.bf16.mxu0 0
        %3452 = vmatpush1.bf16.msra.mxu0 0
        %3453 = vmatprep.subr.bf16.mxu0 0
        %3454 = vmatpush1.bf16.msra.mxu0 0
        %3455 = vmatprep.subr.bf16.mxu0 0
        %3456 = vmatpush1.bf16.msra.mxu0 0
        %3457 = vmatprep.subr.bf16.mxu0 0
        %3458 = vmatpush1.bf16.msra.mxu0 0
        %3459 = vmatprep.subr.bf16.mxu0 0
        %3460 = vmatpush1.bf16.msra.mxu0 %v546
        %3461 = vmatprep.subr.bf16.mxu0 0
        %3462 = vmatpush2.bf16.msra.mxu0 0
        %3463 = vmatprep.subr.bf16.mxu0 0
        %3464 = vmatpush2.bf16.msra.mxu0 0
        %3465 = vmatprep.subr.bf16.mxu0 0
        %3466 = vmatpush2.bf16.msra.mxu0 0
        %3467 = vmatprep.subr.bf16.mxu0 0
        %3468 = vmatpush2.bf16.msra.mxu0 0
        %3469 = vmatprep.subr.bf16.mxu0 0
        %3470 = vmatpush2.bf16.msra.mxu0 0
        %3471 = vmatprep.subr.bf16.mxu0 0
        %3472 = vmatpush2.bf16.msra.mxu0 0
        %3473 = vmatprep.subr.bf16.mxu0 0
        %3474 = vmatpush2.bf16.msra.mxu0 0
        %3475 = vmatprep.subr.bf16.mxu0 0
        %3476 = vmatpush2.bf16.msra.mxu0 0
        %3477 = vmatprep.mubr.bf16.mxu0 0
        %3478 = vmatmul.mubr.bf16.gmra.mxu0 %v3443
        %v3479 = vpop.f32.mrf.mxu0
        %v3480 = vadd.f32 0.0, %v3479
        %v3481 = vpop.f32.mrf.mxu0
        %v3482 = vpop.f32.mrf.mxu0
        %v3483 = vadd.f32 0.0, %v3482
        %v3484 = vpop.f32.mrf.mxu0
        %3485 = vdwg.mxu0
        %v3486 = vadd.f32 %v3389, %v3433
        %v3487 = vadd.f32 %v3392, %v3436
        %v3488 = vsub.f32 %v3389, %v3433
        %v3489 = vsub.f32 %v3392, %v3436
        %v3490 = vsub.f32 %v3488, %v3480
        %v3491 = vsub.f32 %v3489, %v3483
        %s3492 = scalar_lea.vmem %s334, 40
        %v3493 = vld [vmem:[%s3492] sm:$0xf]
        %v3494 = vld [vmem:[%s3492 + $0x4] sm:$0xf]
        %v3495 = vunpack.c.l.bf16 %v3493
        %v3496 = vunpack.c.l.bf16 %v3494
        %s3497 = scalar_lea.vmem %s345, 40
        %v3498 = vld [vmem:[%s3497] sm:$0xf]
        %v3499 = vld [vmem:[%s3497 + $0x4] sm:$0xf]
        %v3500 = vunpack.c.l.bf16 %v3498
        %v3501 = vunpack.c.l.bf16 %v3499
        %v3502 = vmul.f32 %v3495, %v394
        %v3503 = vmul.f32 %v3496, %v395
        %v3504 = vmul.f32 %v3500, %v398
        %v3505 = vmul.f32 %v3501, %v399
        %v3506 = vsub.f32 %v3502, %v3504
        %v3507 = vsub.f32 %v3503, %v3505
        %v3508 = vmul.f32 %v3495, %v398
        %v3509 = vmul.f32 %v3496, %v399
        %v3510 = vmul.f32 %v3500, %v394
        %v3511 = vmul.f32 %v3501, %v395
        %v3512 = vadd.f32 %v3508, %v3510
        %v3513 = vadd.f32 %v3509, %v3511
        %v3514 = vmul.f32 %v3486, %v410
        %v3515 = vmul.f32 %v3487, %v411
        %v3516 = vmul.f32 %v3490, %v414
        %v3517 = vmul.f32 %v3491, %v415
        %v3518 = vsub.f32 %v3514, %v3516
        %v3519 = vsub.f32 %v3515, %v3517
        %v3520 = vmul.f32 %v3486, %v414
        %v3521 = vmul.f32 %v3487, %v415
        %v3522 = vmul.f32 %v3490, %v410
        %v3523 = vmul.f32 %v3491, %v411
        %v3524 = vadd.f32 %v3520, %v3522
        %v3525 = vadd.f32 %v3521, %v3523
        %v3526 = vmul.f32 %v3518, 0.7
        %v3527 = vmul.f32 %v3519, 0.7
        %v3528 = vmul.f32 %v3506, 0.3
        %v3529 = vmul.f32 %v3507, 0.3
        %v3530 = vadd.f32 %v3526, %v3528
        %v3531 = vadd.f32 %v3527, %v3529
        %v3532 = vmul.f32 %v3524, 0.7
        %v3533 = vmul.f32 %v3525, 0.7
        %v3534 = vmul.f32 %v3512, 0.3
        %v3535 = vmul.f32 %v3513, 0.3
        %v3536 = vadd.f32 %v3532, %v3534
        %v3537 = vadd.f32 %v3533, %v3535
        %v3538 = vpack.c.bf16 %v3531, %v3530
        %v3539 = vpack.c.bf16 %v3537, %v3536
        %v3540 = vadd.f32 %v3530, %v3536
        %v3541 = vadd.f32 %v3531, %v3537
        %v3542 = vpack.c.bf16 %v3541, %v3540
        %3543 = vmatprep.subr.bf16.mxu0 0
        %3544 = vmatpush1.bf16.msra.mxu0 0
        %3545 = vmatprep.subr.bf16.mxu0 0
        %3546 = vmatpush1.bf16.msra.mxu0 0
        %3547 = vmatprep.subr.bf16.mxu0 0
        %3548 = vmatpush1.bf16.msra.mxu0 0
        %3549 = vmatprep.subr.bf16.mxu0 0
        %3550 = vmatpush1.bf16.msra.mxu0 0
        %3551 = vmatprep.subr.bf16.mxu0 0
        %3552 = vmatpush1.bf16.msra.mxu0 0
        %3553 = vmatprep.subr.bf16.mxu0 0
        %3554 = vmatpush1.bf16.msra.mxu0 0
        %3555 = vmatprep.subr.bf16.mxu0 0
        %3556 = vmatpush1.bf16.msra.mxu0 0
        %3557 = vmatprep.subr.bf16.mxu0 0
        %3558 = vmatpush1.bf16.msra.mxu0 %v3538
        %3559 = vmatprep.subr.bf16.mxu0 0
        %3560 = vmatpush2.bf16.msra.mxu0 0
        %3561 = vmatprep.subr.bf16.mxu0 0
        %3562 = vmatpush2.bf16.msra.mxu0 0
        %3563 = vmatprep.subr.bf16.mxu0 0
        %3564 = vmatpush2.bf16.msra.mxu0 0
        %3565 = vmatprep.subr.bf16.mxu0 0
        %3566 = vmatpush2.bf16.msra.mxu0 0
        %3567 = vmatprep.subr.bf16.mxu0 0
        %3568 = vmatpush2.bf16.msra.mxu0 0
        %3569 = vmatprep.subr.bf16.mxu0 0
        %3570 = vmatpush2.bf16.msra.mxu0 0
        %3571 = vmatprep.subr.bf16.mxu0 0
        %3572 = vmatpush2.bf16.msra.mxu0 0
        %3573 = vmatprep.subr.bf16.mxu0 0
        %3574 = vmatpush2.bf16.msra.mxu0 0
        %3575 = vmatprep.mubr.bf16.mxu0 0
        %3576 = vmatmul.mubr.bf16.gmra.mxu0 %v450
        %v3577 = vpop.f32.mrf.mxu0
        %v3578 = vadd.f32 0.0, %v3577
        %v3579 = vpop.f32.mrf.mxu0
        %v3580 = vpop.f32.mrf.mxu0
        %v3581 = vadd.f32 0.0, %v3580
        %v3582 = vpop.f32.mrf.mxu0
        %3583 = vdwg.mxu0
        %3584 = vmatprep.subr.bf16.mxu0 0
        %3585 = vmatpush1.bf16.msra.mxu0 0
        %3586 = vmatprep.subr.bf16.mxu0 0
        %3587 = vmatpush1.bf16.msra.mxu0 0
        %3588 = vmatprep.subr.bf16.mxu0 0
        %3589 = vmatpush1.bf16.msra.mxu0 0
        %3590 = vmatprep.subr.bf16.mxu0 0
        %3591 = vmatpush1.bf16.msra.mxu0 0
        %3592 = vmatprep.subr.bf16.mxu0 0
        %3593 = vmatpush1.bf16.msra.mxu0 0
        %3594 = vmatprep.subr.bf16.mxu0 0
        %3595 = vmatpush1.bf16.msra.mxu0 0
        %3596 = vmatprep.subr.bf16.mxu0 0
        %3597 = vmatpush1.bf16.msra.mxu0 0
        %3598 = vmatprep.subr.bf16.mxu0 0
        %3599 = vmatpush1.bf16.msra.mxu0 %v3539
        %3600 = vmatprep.subr.bf16.mxu0 0
        %3601 = vmatpush2.bf16.msra.mxu0 0
        %3602 = vmatprep.subr.bf16.mxu0 0
        %3603 = vmatpush2.bf16.msra.mxu0 0
        %3604 = vmatprep.subr.bf16.mxu0 0
        %3605 = vmatpush2.bf16.msra.mxu0 0
        %3606 = vmatprep.subr.bf16.mxu0 0
        %3607 = vmatpush2.bf16.msra.mxu0 0
        %3608 = vmatprep.subr.bf16.mxu0 0
        %3609 = vmatpush2.bf16.msra.mxu0 0
        %3610 = vmatprep.subr.bf16.mxu0 0
        %3611 = vmatpush2.bf16.msra.mxu0 0
        %3612 = vmatprep.subr.bf16.mxu0 0
        %3613 = vmatpush2.bf16.msra.mxu0 0
        %3614 = vmatprep.subr.bf16.mxu0 0
        %3615 = vmatpush2.bf16.msra.mxu0 0
        %3616 = vmatprep.mubr.bf16.mxu0 0
        %3617 = vmatmul.mubr.bf16.gmra.mxu0 %v499
        %v3618 = vpop.f32.mrf.mxu0
        %v3619 = vadd.f32 0.0, %v3618
        %v3620 = vpop.f32.mrf.mxu0
        %v3621 = vpop.f32.mrf.mxu0
        %v3622 = vadd.f32 0.0, %v3621
        %v3623 = vpop.f32.mrf.mxu0
        %3624 = vdwg.mxu0
        %3625 = vmatprep.subr.bf16.mxu0 0
        %3626 = vmatpush1.bf16.msra.mxu0 0
        %3627 = vmatprep.subr.bf16.mxu0 0
        %3628 = vmatpush1.bf16.msra.mxu0 0
        %3629 = vmatprep.subr.bf16.mxu0 0
        %3630 = vmatpush1.bf16.msra.mxu0 0
        %3631 = vmatprep.subr.bf16.mxu0 0
        %3632 = vmatpush1.bf16.msra.mxu0 0
        %3633 = vmatprep.subr.bf16.mxu0 0
        %3634 = vmatpush1.bf16.msra.mxu0 0
        %3635 = vmatprep.subr.bf16.mxu0 0
        %3636 = vmatpush1.bf16.msra.mxu0 0
        %3637 = vmatprep.subr.bf16.mxu0 0
        %3638 = vmatpush1.bf16.msra.mxu0 0
        %3639 = vmatprep.subr.bf16.mxu0 0
        %3640 = vmatpush1.bf16.msra.mxu0 %v3542
        %3641 = vmatprep.subr.bf16.mxu0 0
        %3642 = vmatpush2.bf16.msra.mxu0 0
        %3643 = vmatprep.subr.bf16.mxu0 0
        %3644 = vmatpush2.bf16.msra.mxu0 0
        %3645 = vmatprep.subr.bf16.mxu0 0
        %3646 = vmatpush2.bf16.msra.mxu0 0
        %3647 = vmatprep.subr.bf16.mxu0 0
        %3648 = vmatpush2.bf16.msra.mxu0 0
        %3649 = vmatprep.subr.bf16.mxu0 0
        %3650 = vmatpush2.bf16.msra.mxu0 0
        %3651 = vmatprep.subr.bf16.mxu0 0
        %3652 = vmatpush2.bf16.msra.mxu0 0
        %3653 = vmatprep.subr.bf16.mxu0 0
        %3654 = vmatpush2.bf16.msra.mxu0 0
        %3655 = vmatprep.subr.bf16.mxu0 0
        %3656 = vmatpush2.bf16.msra.mxu0 0
        %3657 = vmatprep.mubr.bf16.mxu0 0
        %3658 = vmatmul.mubr.bf16.gmra.mxu0 %v548
        %v3659 = vpop.f32.mrf.mxu0
        %v3660 = vadd.f32 0.0, %v3659
        %v3661 = vpop.f32.mrf.mxu0
        %v3662 = vpop.f32.mrf.mxu0
        %v3663 = vadd.f32 0.0, %v3662
        %v3664 = vpop.f32.mrf.mxu0
        %3665 = vdwg.mxu0
        %v3666 = vsub.f32 %v3578, %v3619
        %v3667 = vsub.f32 %v3581, %v3622
        %v3668 = vsub.f32 %v3660, %v3578
        %v3669 = vsub.f32 %v3663, %v3581
        %v3670 = vsub.f32 %v3668, %v3619
        %v3671 = vsub.f32 %v3669, %v3622
        %v3672 = vpack.c.bf16 %v3667, %v3666
        %v3673 = vpack.c.bf16 %v3671, %v3670
        %v3675 = vsel %vm448, %v3672, 0
        %3677 = vmatprep.subr.bf16.mxu0 0
        %3678 = vmatpush1.bf16.msra.mxu0 0
        %3679 = vmatprep.subr.bf16.mxu0 0
        %3680 = vmatpush1.bf16.msra.mxu0 0
        %3681 = vmatprep.subr.bf16.mxu0 0
        %3682 = vmatpush1.bf16.msra.mxu0 0
        %3683 = vmatprep.subr.bf16.mxu0 0
        %3684 = vmatpush1.bf16.msra.mxu0 0
        %3685 = vmatprep.subr.bf16.mxu0 0
        %3686 = vmatpush1.bf16.msra.mxu0 0
        %3687 = vmatprep.subr.bf16.mxu0 0
        %3688 = vmatpush1.bf16.msra.mxu0 0
        %3689 = vmatprep.subr.bf16.mxu0 0
        %3690 = vmatpush1.bf16.msra.mxu0 0
        %3691 = vmatprep.subr.bf16.mxu0 0
        %3692 = vmatpush1.bf16.msra.mxu0 %v447
        %3693 = vmatprep.subr.bf16.mxu0 0
        %3694 = vmatpush2.bf16.msra.mxu0 0
        %3695 = vmatprep.subr.bf16.mxu0 0
        %3696 = vmatpush2.bf16.msra.mxu0 0
        %3697 = vmatprep.subr.bf16.mxu0 0
        %3698 = vmatpush2.bf16.msra.mxu0 0
        %3699 = vmatprep.subr.bf16.mxu0 0
        %3700 = vmatpush2.bf16.msra.mxu0 0
        %3701 = vmatprep.subr.bf16.mxu0 0
        %3702 = vmatpush2.bf16.msra.mxu0 0
        %3703 = vmatprep.subr.bf16.mxu0 0
        %3704 = vmatpush2.bf16.msra.mxu0 0
        %3705 = vmatprep.subr.bf16.mxu0 0
        %3706 = vmatpush2.bf16.msra.mxu0 0
        %3707 = vmatprep.subr.bf16.mxu0 0
        %3708 = vmatpush2.bf16.msra.mxu0 0
        %3709 = vmatprep.mubr.bf16.mxu0 0
        %3710 = vmatmul.mubr.bf16.gmra.mxu0 %v3675
        %v3711 = vpop.f32.mrf.mxu0
        %v3712 = vadd.f32 0.0, %v3711
        %v3713 = vpop.f32.mrf.mxu0
        %v3714 = vpop.f32.mrf.mxu0
        %v3715 = vadd.f32 0.0, %v3714
        %v3716 = vpop.f32.mrf.mxu0
        %3717 = vdwg.mxu0
        %v3719 = vsel %vm448, %v3673, 0
        %3721 = vmatprep.subr.bf16.mxu0 0
        %3722 = vmatpush1.bf16.msra.mxu0 0
        %3723 = vmatprep.subr.bf16.mxu0 0
        %3724 = vmatpush1.bf16.msra.mxu0 0
        %3725 = vmatprep.subr.bf16.mxu0 0
        %3726 = vmatpush1.bf16.msra.mxu0 0
        %3727 = vmatprep.subr.bf16.mxu0 0
        %3728 = vmatpush1.bf16.msra.mxu0 0
        %3729 = vmatprep.subr.bf16.mxu0 0
        %3730 = vmatpush1.bf16.msra.mxu0 0
        %3731 = vmatprep.subr.bf16.mxu0 0
        %3732 = vmatpush1.bf16.msra.mxu0 0
        %3733 = vmatprep.subr.bf16.mxu0 0
        %3734 = vmatpush1.bf16.msra.mxu0 0
        %3735 = vmatprep.subr.bf16.mxu0 0
        %3736 = vmatpush1.bf16.msra.mxu0 %v497
        %3737 = vmatprep.subr.bf16.mxu0 0
        %3738 = vmatpush2.bf16.msra.mxu0 0
        %3739 = vmatprep.subr.bf16.mxu0 0
        %3740 = vmatpush2.bf16.msra.mxu0 0
        %3741 = vmatprep.subr.bf16.mxu0 0
        %3742 = vmatpush2.bf16.msra.mxu0 0
        %3743 = vmatprep.subr.bf16.mxu0 0
        %3744 = vmatpush2.bf16.msra.mxu0 0
        %3745 = vmatprep.subr.bf16.mxu0 0
        %3746 = vmatpush2.bf16.msra.mxu0 0
        %3747 = vmatprep.subr.bf16.mxu0 0
        %3748 = vmatpush2.bf16.msra.mxu0 0
        %3749 = vmatprep.subr.bf16.mxu0 0
        %3750 = vmatpush2.bf16.msra.mxu0 0
        %3751 = vmatprep.subr.bf16.mxu0 0
        %3752 = vmatpush2.bf16.msra.mxu0 0
        %3753 = vmatprep.mubr.bf16.mxu0 0
        %3754 = vmatmul.mubr.bf16.gmra.mxu0 %v3719
        %v3755 = vpop.f32.mrf.mxu0
        %v3756 = vadd.f32 0.0, %v3755
        %v3757 = vpop.f32.mrf.mxu0
        %v3758 = vpop.f32.mrf.mxu0
        %v3759 = vadd.f32 0.0, %v3758
        %v3760 = vpop.f32.mrf.mxu0
        %3761 = vdwg.mxu0
        %v3762 = vadd.f32 %v3666, %v3670
        %v3763 = vadd.f32 %v3667, %v3671
        %v3764 = vpack.c.bf16 %v3763, %v3762
        %v3766 = vsel %vm448, %v3764, 0
        %3768 = vmatprep.subr.bf16.mxu0 0
        %3769 = vmatpush1.bf16.msra.mxu0 0
        %3770 = vmatprep.subr.bf16.mxu0 0
        %3771 = vmatpush1.bf16.msra.mxu0 0
        %3772 = vmatprep.subr.bf16.mxu0 0
        %3773 = vmatpush1.bf16.msra.mxu0 0
        %3774 = vmatprep.subr.bf16.mxu0 0
        %3775 = vmatpush1.bf16.msra.mxu0 0
        %3776 = vmatprep.subr.bf16.mxu0 0
        %3777 = vmatpush1.bf16.msra.mxu0 0
        %3778 = vmatprep.subr.bf16.mxu0 0
        %3779 = vmatpush1.bf16.msra.mxu0 0
        %3780 = vmatprep.subr.bf16.mxu0 0
        %3781 = vmatpush1.bf16.msra.mxu0 0
        %3782 = vmatprep.subr.bf16.mxu0 0
        %3783 = vmatpush1.bf16.msra.mxu0 %v546
        %3784 = vmatprep.subr.bf16.mxu0 0
        %3785 = vmatpush2.bf16.msra.mxu0 0
        %3786 = vmatprep.subr.bf16.mxu0 0
        %3787 = vmatpush2.bf16.msra.mxu0 0
        %3788 = vmatprep.subr.bf16.mxu0 0
        %3789 = vmatpush2.bf16.msra.mxu0 0
        %3790 = vmatprep.subr.bf16.mxu0 0
        %3791 = vmatpush2.bf16.msra.mxu0 0
        %3792 = vmatprep.subr.bf16.mxu0 0
        %3793 = vmatpush2.bf16.msra.mxu0 0
        %3794 = vmatprep.subr.bf16.mxu0 0
        %3795 = vmatpush2.bf16.msra.mxu0 0
        %3796 = vmatprep.subr.bf16.mxu0 0
        %3797 = vmatpush2.bf16.msra.mxu0 0
        %3798 = vmatprep.subr.bf16.mxu0 0
        %3799 = vmatpush2.bf16.msra.mxu0 0
        %3800 = vmatprep.mubr.bf16.mxu0 0
        %3801 = vmatmul.mubr.bf16.gmra.mxu0 %v3766
        %v3802 = vpop.f32.mrf.mxu0
        %v3803 = vadd.f32 0.0, %v3802
        %v3804 = vpop.f32.mrf.mxu0
        %v3805 = vpop.f32.mrf.mxu0
        %v3806 = vadd.f32 0.0, %v3805
        %v3807 = vpop.f32.mrf.mxu0
        %3808 = vdwg.mxu0
        %v3809 = vsub.f32 %v3712, %v3756
        %v3810 = vsub.f32 %v3715, %v3759
        %v3811 = vsub.f32 %v3803, %v3712
        %v3812 = vsub.f32 %v3806, %v3715
        %v3813 = vsub.f32 %v3811, %v3756
        %v3814 = vsub.f32 %v3812, %v3759
        %v3815 = vmul.f32 %v3809, %v743
        %v3816 = vmul.f32 %v3810, %v744
        %v3817 = vmul.f32 %v3813, %v747
        %v3818 = vmul.f32 %v3814, %v748
        %v3819 = vsub.f32 %v3815, %v3817
        %v3820 = vsub.f32 %v3816, %v3818
        %v3821 = vmul.f32 %v3809, %v747
        %v3822 = vmul.f32 %v3810, %v748
        %v3823 = vmul.f32 %v3813, %v743
        %v3824 = vmul.f32 %v3814, %v744
        %v3825 = vadd.f32 %v3821, %v3823
        %v3826 = vadd.f32 %v3822, %v3824
        %v3827 = vpack.c.bf16 %v3820, %v3819
        %v3828 = vpack.c.bf16 %v3826, %v3825
        %v3829 = vadd.f32 %v3819, %v3825
        %v3830 = vadd.f32 %v3820, %v3826
        %v3831 = vpack.c.bf16 %v3830, %v3829
        %3832 = vmatprep.subr.bf16.mxu0 0
        %3833 = vmatpush1.bf16.msra.mxu0 0
        %3834 = vmatprep.subr.bf16.mxu0 0
        %3835 = vmatpush1.bf16.msra.mxu0 0
        %3836 = vmatprep.subr.bf16.mxu0 0
        %3837 = vmatpush1.bf16.msra.mxu0 0
        %3838 = vmatprep.subr.bf16.mxu0 0
        %3839 = vmatpush1.bf16.msra.mxu0 0
        %3840 = vmatprep.subr.bf16.mxu0 0
        %3841 = vmatpush1.bf16.msra.mxu0 0
        %3842 = vmatprep.subr.bf16.mxu0 0
        %3843 = vmatpush1.bf16.msra.mxu0 0
        %3844 = vmatprep.subr.bf16.mxu0 0
        %3845 = vmatpush1.bf16.msra.mxu0 0
        %3846 = vmatprep.subr.bf16.mxu0 0
        %3847 = vmatpush1.bf16.msra.mxu0 %v3827
        %3848 = vmatprep.subr.bf16.mxu0 0
        %3849 = vmatpush2.bf16.msra.mxu0 0
        %3850 = vmatprep.subr.bf16.mxu0 0
        %3851 = vmatpush2.bf16.msra.mxu0 0
        %3852 = vmatprep.subr.bf16.mxu0 0
        %3853 = vmatpush2.bf16.msra.mxu0 0
        %3854 = vmatprep.subr.bf16.mxu0 0
        %3855 = vmatpush2.bf16.msra.mxu0 0
        %3856 = vmatprep.subr.bf16.mxu0 0
        %3857 = vmatpush2.bf16.msra.mxu0 0
        %3858 = vmatprep.subr.bf16.mxu0 0
        %3859 = vmatpush2.bf16.msra.mxu0 0
        %3860 = vmatprep.subr.bf16.mxu0 0
        %3861 = vmatpush2.bf16.msra.mxu0 0
        %3862 = vmatprep.subr.bf16.mxu0 0
        %3863 = vmatpush2.bf16.msra.mxu0 0
        %3864 = vmatprep.mubr.bf16.mxu0 0
        %3865 = vmatmul.mubr.bf16.gmra.mxu0 %v450
        %v3866 = vpop.f32.mrf.mxu0
        %v3867 = vadd.f32 0.0, %v3866
        %v3868 = vpop.f32.mrf.mxu0
        %v3869 = vpop.f32.mrf.mxu0
        %v3870 = vadd.f32 0.0, %v3869
        %v3871 = vpop.f32.mrf.mxu0
        %3872 = vdwg.mxu0
        %3873 = vmatprep.subr.bf16.mxu0 0
        %3874 = vmatpush1.bf16.msra.mxu0 0
        %3875 = vmatprep.subr.bf16.mxu0 0
        %3876 = vmatpush1.bf16.msra.mxu0 0
        %3877 = vmatprep.subr.bf16.mxu0 0
        %3878 = vmatpush1.bf16.msra.mxu0 0
        %3879 = vmatprep.subr.bf16.mxu0 0
        %3880 = vmatpush1.bf16.msra.mxu0 0
        %3881 = vmatprep.subr.bf16.mxu0 0
        %3882 = vmatpush1.bf16.msra.mxu0 0
        %3883 = vmatprep.subr.bf16.mxu0 0
        %3884 = vmatpush1.bf16.msra.mxu0 0
        %3885 = vmatprep.subr.bf16.mxu0 0
        %3886 = vmatpush1.bf16.msra.mxu0 0
        %3887 = vmatprep.subr.bf16.mxu0 0
        %3888 = vmatpush1.bf16.msra.mxu0 %v3828
        %3889 = vmatprep.subr.bf16.mxu0 0
        %3890 = vmatpush2.bf16.msra.mxu0 0
        %3891 = vmatprep.subr.bf16.mxu0 0
        %3892 = vmatpush2.bf16.msra.mxu0 0
        %3893 = vmatprep.subr.bf16.mxu0 0
        %3894 = vmatpush2.bf16.msra.mxu0 0
        %3895 = vmatprep.subr.bf16.mxu0 0
        %3896 = vmatpush2.bf16.msra.mxu0 0
        %3897 = vmatprep.subr.bf16.mxu0 0
        %3898 = vmatpush2.bf16.msra.mxu0 0
        %3899 = vmatprep.subr.bf16.mxu0 0
        %3900 = vmatpush2.bf16.msra.mxu0 0
        %3901 = vmatprep.subr.bf16.mxu0 0
        %3902 = vmatpush2.bf16.msra.mxu0 0
        %3903 = vmatprep.subr.bf16.mxu0 0
        %3904 = vmatpush2.bf16.msra.mxu0 0
        %3905 = vmatprep.mubr.bf16.mxu0 0
        %3906 = vmatmul.mubr.bf16.gmra.mxu0 %v499
        %v3907 = vpop.f32.mrf.mxu0
        %v3908 = vadd.f32 0.0, %v3907
        %v3909 = vpop.f32.mrf.mxu0
        %v3910 = vpop.f32.mrf.mxu0
        %v3911 = vadd.f32 0.0, %v3910
        %v3912 = vpop.f32.mrf.mxu0
        %3913 = vdwg.mxu0
        %3914 = vmatprep.subr.bf16.mxu0 0
        %3915 = vmatpush1.bf16.msra.mxu0 0
        %3916 = vmatprep.subr.bf16.mxu0 0
        %3917 = vmatpush1.bf16.msra.mxu0 0
        %3918 = vmatprep.subr.bf16.mxu0 0
        %3919 = vmatpush1.bf16.msra.mxu0 0
        %3920 = vmatprep.subr.bf16.mxu0 0
        %3921 = vmatpush1.bf16.msra.mxu0 0
        %3922 = vmatprep.subr.bf16.mxu0 0
        %3923 = vmatpush1.bf16.msra.mxu0 0
        %3924 = vmatprep.subr.bf16.mxu0 0
        %3925 = vmatpush1.bf16.msra.mxu0 0
        %3926 = vmatprep.subr.bf16.mxu0 0
        %3927 = vmatpush1.bf16.msra.mxu0 0
        %3928 = vmatprep.subr.bf16.mxu0 0
        %3929 = vmatpush1.bf16.msra.mxu0 %v3831
        %3930 = vmatprep.subr.bf16.mxu0 0
        %3931 = vmatpush2.bf16.msra.mxu0 0
        %3932 = vmatprep.subr.bf16.mxu0 0
        %3933 = vmatpush2.bf16.msra.mxu0 0
        %3934 = vmatprep.subr.bf16.mxu0 0
        %3935 = vmatpush2.bf16.msra.mxu0 0
        %3936 = vmatprep.subr.bf16.mxu0 0
        %3937 = vmatpush2.bf16.msra.mxu0 0
        %3938 = vmatprep.subr.bf16.mxu0 0
        %3939 = vmatpush2.bf16.msra.mxu0 0
        %3940 = vmatprep.subr.bf16.mxu0 0
        %3941 = vmatpush2.bf16.msra.mxu0 0
        %3942 = vmatprep.subr.bf16.mxu0 0
        %3943 = vmatpush2.bf16.msra.mxu0 0
        %3944 = vmatprep.subr.bf16.mxu0 0
        %3945 = vmatpush2.bf16.msra.mxu0 0
        %3946 = vmatprep.mubr.bf16.mxu0 0
        %3947 = vmatmul.mubr.bf16.gmra.mxu0 %v852
        %v3948 = vpop.f32.mrf.mxu0
        %v3949 = vadd.f32 0.0, %v3948
        %v3950 = vpop.f32.mrf.mxu0
        %v3951 = vpop.f32.mrf.mxu0
        %v3952 = vadd.f32 0.0, %v3951
        %v3953 = vpop.f32.mrf.mxu0
        %3954 = vdwg.mxu0
        %v3955 = vadd.f32 %v3867, %v3908
        %v3956 = vadd.f32 %v3870, %v3911
        %v3957 = vsub.f32 %v3949, %v3867
        %v3958 = vsub.f32 %v3952, %v3870
        %v3959 = vadd.f32 %v3957, %v3908
        %v3960 = vadd.f32 %v3958, %v3911
        %v3961 = vpack.c.bf16 %v3956, %v3955
        %v3962 = vpack.c.bf16 %v3960, %v3959
        %v3964 = vsel %vm448, %v3961, 0
        %3966 = vmatprep.subr.bf16.mxu0 0
        %3967 = vmatpush1.bf16.msra.mxu0 0
        %3968 = vmatprep.subr.bf16.mxu0 0
        %3969 = vmatpush1.bf16.msra.mxu0 0
        %3970 = vmatprep.subr.bf16.mxu0 0
        %3971 = vmatpush1.bf16.msra.mxu0 0
        %3972 = vmatprep.subr.bf16.mxu0 0
        %3973 = vmatpush1.bf16.msra.mxu0 0
        %3974 = vmatprep.subr.bf16.mxu0 0
        %3975 = vmatpush1.bf16.msra.mxu0 0
        %3976 = vmatprep.subr.bf16.mxu0 0
        %3977 = vmatpush1.bf16.msra.mxu0 0
        %3978 = vmatprep.subr.bf16.mxu0 0
        %3979 = vmatpush1.bf16.msra.mxu0 0
        %3980 = vmatprep.subr.bf16.mxu0 0
        %3981 = vmatpush1.bf16.msra.mxu0 %v447
        %3982 = vmatprep.subr.bf16.mxu0 0
        %3983 = vmatpush2.bf16.msra.mxu0 0
        %3984 = vmatprep.subr.bf16.mxu0 0
        %3985 = vmatpush2.bf16.msra.mxu0 0
        %3986 = vmatprep.subr.bf16.mxu0 0
        %3987 = vmatpush2.bf16.msra.mxu0 0
        %3988 = vmatprep.subr.bf16.mxu0 0
        %3989 = vmatpush2.bf16.msra.mxu0 0
        %3990 = vmatprep.subr.bf16.mxu0 0
        %3991 = vmatpush2.bf16.msra.mxu0 0
        %3992 = vmatprep.subr.bf16.mxu0 0
        %3993 = vmatpush2.bf16.msra.mxu0 0
        %3994 = vmatprep.subr.bf16.mxu0 0
        %3995 = vmatpush2.bf16.msra.mxu0 0
        %3996 = vmatprep.subr.bf16.mxu0 0
        %3997 = vmatpush2.bf16.msra.mxu0 0
        %3998 = vmatprep.mubr.bf16.mxu0 0
        %3999 = vmatmul.mubr.bf16.gmra.mxu0 %v3964
        %v4000 = vpop.f32.mrf.mxu0
        %v4001 = vadd.f32 0.0, %v4000
        %v4002 = vpop.f32.mrf.mxu0
        %v4003 = vpop.f32.mrf.mxu0
        %v4004 = vadd.f32 0.0, %v4003
        %v4005 = vpop.f32.mrf.mxu0
        %4006 = vdwg.mxu0
        %v4008 = vsel %vm448, %v3962, 0
        %4010 = vmatprep.subr.bf16.mxu0 0
        %4011 = vmatpush1.bf16.msra.mxu0 0
        %4012 = vmatprep.subr.bf16.mxu0 0
        %4013 = vmatpush1.bf16.msra.mxu0 0
        %4014 = vmatprep.subr.bf16.mxu0 0
        %4015 = vmatpush1.bf16.msra.mxu0 0
        %4016 = vmatprep.subr.bf16.mxu0 0
        %4017 = vmatpush1.bf16.msra.mxu0 0
        %4018 = vmatprep.subr.bf16.mxu0 0
        %4019 = vmatpush1.bf16.msra.mxu0 0
        %4020 = vmatprep.subr.bf16.mxu0 0
        %4021 = vmatpush1.bf16.msra.mxu0 0
        %4022 = vmatprep.subr.bf16.mxu0 0
        %4023 = vmatpush1.bf16.msra.mxu0 0
        %4024 = vmatprep.subr.bf16.mxu0 0
        %4025 = vmatpush1.bf16.msra.mxu0 %v497
        %4026 = vmatprep.subr.bf16.mxu0 0
        %4027 = vmatpush2.bf16.msra.mxu0 0
        %4028 = vmatprep.subr.bf16.mxu0 0
        %4029 = vmatpush2.bf16.msra.mxu0 0
        %4030 = vmatprep.subr.bf16.mxu0 0
        %4031 = vmatpush2.bf16.msra.mxu0 0
        %4032 = vmatprep.subr.bf16.mxu0 0
        %4033 = vmatpush2.bf16.msra.mxu0 0
        %4034 = vmatprep.subr.bf16.mxu0 0
        %4035 = vmatpush2.bf16.msra.mxu0 0
        %4036 = vmatprep.subr.bf16.mxu0 0
        %4037 = vmatpush2.bf16.msra.mxu0 0
        %4038 = vmatprep.subr.bf16.mxu0 0
        %4039 = vmatpush2.bf16.msra.mxu0 0
        %4040 = vmatprep.subr.bf16.mxu0 0
        %4041 = vmatpush2.bf16.msra.mxu0 0
        %4042 = vmatprep.mubr.bf16.mxu0 0
        %4043 = vmatmul.mubr.bf16.gmra.mxu0 %v4008
        %v4044 = vpop.f32.mrf.mxu0
        %v4045 = vadd.f32 0.0, %v4044
        %v4046 = vpop.f32.mrf.mxu0
        %v4047 = vpop.f32.mrf.mxu0
        %v4048 = vadd.f32 0.0, %v4047
        %v4049 = vpop.f32.mrf.mxu0
        %4050 = vdwg.mxu0
        %v4051 = vsub.f32 %v3955, %v3959
        %v4052 = vsub.f32 %v3956, %v3960
        %v4053 = vpack.c.bf16 %v4052, %v4051
        %v4055 = vsel %vm448, %v4053, 0
        %4057 = vmatprep.subr.bf16.mxu0 0
        %4058 = vmatpush1.bf16.msra.mxu0 0
        %4059 = vmatprep.subr.bf16.mxu0 0
        %4060 = vmatpush1.bf16.msra.mxu0 0
        %4061 = vmatprep.subr.bf16.mxu0 0
        %4062 = vmatpush1.bf16.msra.mxu0 0
        %4063 = vmatprep.subr.bf16.mxu0 0
        %4064 = vmatpush1.bf16.msra.mxu0 0
        %4065 = vmatprep.subr.bf16.mxu0 0
        %4066 = vmatpush1.bf16.msra.mxu0 0
        %4067 = vmatprep.subr.bf16.mxu0 0
        %4068 = vmatpush1.bf16.msra.mxu0 0
        %4069 = vmatprep.subr.bf16.mxu0 0
        %4070 = vmatpush1.bf16.msra.mxu0 0
        %4071 = vmatprep.subr.bf16.mxu0 0
        %4072 = vmatpush1.bf16.msra.mxu0 %v546
        %4073 = vmatprep.subr.bf16.mxu0 0
        %4074 = vmatpush2.bf16.msra.mxu0 0
        %4075 = vmatprep.subr.bf16.mxu0 0
        %4076 = vmatpush2.bf16.msra.mxu0 0
        %4077 = vmatprep.subr.bf16.mxu0 0
        %4078 = vmatpush2.bf16.msra.mxu0 0
        %4079 = vmatprep.subr.bf16.mxu0 0
        %4080 = vmatpush2.bf16.msra.mxu0 0
        %4081 = vmatprep.subr.bf16.mxu0 0
        %4082 = vmatpush2.bf16.msra.mxu0 0
        %4083 = vmatprep.subr.bf16.mxu0 0
        %4084 = vmatpush2.bf16.msra.mxu0 0
        %4085 = vmatprep.subr.bf16.mxu0 0
        %4086 = vmatpush2.bf16.msra.mxu0 0
        %4087 = vmatprep.subr.bf16.mxu0 0
        %4088 = vmatpush2.bf16.msra.mxu0 0
        %4089 = vmatprep.mubr.bf16.mxu0 0
        %4090 = vmatmul.mubr.bf16.gmra.mxu0 %v4055
        %v4091 = vpop.f32.mrf.mxu0
        %v4092 = vadd.f32 0.0, %v4091
        %v4093 = vpop.f32.mrf.mxu0
        %v4094 = vpop.f32.mrf.mxu0
        %v4095 = vadd.f32 0.0, %v4094
        %v4096 = vpop.f32.mrf.mxu0
        %4097 = vdwg.mxu0
        %v4098 = vadd.f32 %v4001, %v4045
        %v4099 = vadd.f32 %v4004, %v4048
        %v4100 = vsub.f32 %v4001, %v4045
        %v4101 = vsub.f32 %v4004, %v4048
        %v4102 = vsub.f32 %v4100, %v4092
        %v4103 = vsub.f32 %v4101, %v4095
        %s4104 = scalar_lea.vmem %s334, 48
        %v4105 = vld [vmem:[%s4104] sm:$0xf]
        %v4106 = vld [vmem:[%s4104 + $0x4] sm:$0xf]
        %v4107 = vunpack.c.l.bf16 %v4105
        %v4108 = vunpack.c.l.bf16 %v4106
        %s4109 = scalar_lea.vmem %s345, 48
        %v4110 = vld [vmem:[%s4109] sm:$0xf]
        %v4111 = vld [vmem:[%s4109 + $0x4] sm:$0xf]
        %v4112 = vunpack.c.l.bf16 %v4110
        %v4113 = vunpack.c.l.bf16 %v4111
        %v4114 = vmul.f32 %v4107, %v394
        %v4115 = vmul.f32 %v4108, %v395
        %v4116 = vmul.f32 %v4112, %v398
        %v4117 = vmul.f32 %v4113, %v399
        %v4118 = vsub.f32 %v4114, %v4116
        %v4119 = vsub.f32 %v4115, %v4117
        %v4120 = vmul.f32 %v4107, %v398
        %v4121 = vmul.f32 %v4108, %v399
        %v4122 = vmul.f32 %v4112, %v394
        %v4123 = vmul.f32 %v4113, %v395
        %v4124 = vadd.f32 %v4120, %v4122
        %v4125 = vadd.f32 %v4121, %v4123
        %v4126 = vmul.f32 %v4098, %v410
        %v4127 = vmul.f32 %v4099, %v411
        %v4128 = vmul.f32 %v4102, %v414
        %v4129 = vmul.f32 %v4103, %v415
        %v4130 = vsub.f32 %v4126, %v4128
        %v4131 = vsub.f32 %v4127, %v4129
        %v4132 = vmul.f32 %v4098, %v414
        %v4133 = vmul.f32 %v4099, %v415
        %v4134 = vmul.f32 %v4102, %v410
        %v4135 = vmul.f32 %v4103, %v411
        %v4136 = vadd.f32 %v4132, %v4134
        %v4137 = vadd.f32 %v4133, %v4135
        %v4138 = vmul.f32 %v4130, 0.7
        %v4139 = vmul.f32 %v4131, 0.7
        %v4140 = vmul.f32 %v4118, 0.3
        %v4141 = vmul.f32 %v4119, 0.3
        %v4142 = vadd.f32 %v4138, %v4140
        %v4143 = vadd.f32 %v4139, %v4141
        %v4144 = vmul.f32 %v4136, 0.7
        %v4145 = vmul.f32 %v4137, 0.7
        %v4146 = vmul.f32 %v4124, 0.3
        %v4147 = vmul.f32 %v4125, 0.3
        %v4148 = vadd.f32 %v4144, %v4146
        %v4149 = vadd.f32 %v4145, %v4147
        %v4150 = vpack.c.bf16 %v4143, %v4142
        %v4151 = vpack.c.bf16 %v4149, %v4148
        %v4152 = vadd.f32 %v4142, %v4148
        %v4153 = vadd.f32 %v4143, %v4149
        %v4154 = vpack.c.bf16 %v4153, %v4152
        %4155 = vmatprep.subr.bf16.mxu0 0
        %4156 = vmatpush1.bf16.msra.mxu0 0
        %4157 = vmatprep.subr.bf16.mxu0 0
        %4158 = vmatpush1.bf16.msra.mxu0 0
        %4159 = vmatprep.subr.bf16.mxu0 0
        %4160 = vmatpush1.bf16.msra.mxu0 0
        %4161 = vmatprep.subr.bf16.mxu0 0
        %4162 = vmatpush1.bf16.msra.mxu0 0
        %4163 = vmatprep.subr.bf16.mxu0 0
        %4164 = vmatpush1.bf16.msra.mxu0 0
        %4165 = vmatprep.subr.bf16.mxu0 0
        %4166 = vmatpush1.bf16.msra.mxu0 0
        %4167 = vmatprep.subr.bf16.mxu0 0
        %4168 = vmatpush1.bf16.msra.mxu0 0
        %4169 = vmatprep.subr.bf16.mxu0 0
        %4170 = vmatpush1.bf16.msra.mxu0 %v4150
        %4171 = vmatprep.subr.bf16.mxu0 0
        %4172 = vmatpush2.bf16.msra.mxu0 0
        %4173 = vmatprep.subr.bf16.mxu0 0
        %4174 = vmatpush2.bf16.msra.mxu0 0
        %4175 = vmatprep.subr.bf16.mxu0 0
        %4176 = vmatpush2.bf16.msra.mxu0 0
        %4177 = vmatprep.subr.bf16.mxu0 0
        %4178 = vmatpush2.bf16.msra.mxu0 0
        %4179 = vmatprep.subr.bf16.mxu0 0
        %4180 = vmatpush2.bf16.msra.mxu0 0
        %4181 = vmatprep.subr.bf16.mxu0 0
        %4182 = vmatpush2.bf16.msra.mxu0 0
        %4183 = vmatprep.subr.bf16.mxu0 0
        %4184 = vmatpush2.bf16.msra.mxu0 0
        %4185 = vmatprep.subr.bf16.mxu0 0
        %4186 = vmatpush2.bf16.msra.mxu0 0
        %4187 = vmatprep.mubr.bf16.mxu0 0
        %4188 = vmatmul.mubr.bf16.gmra.mxu0 %v450
        %v4189 = vpop.f32.mrf.mxu0
        %v4190 = vadd.f32 0.0, %v4189
        %v4191 = vpop.f32.mrf.mxu0
        %v4192 = vpop.f32.mrf.mxu0
        %v4193 = vadd.f32 0.0, %v4192
        %v4194 = vpop.f32.mrf.mxu0
        %4195 = vdwg.mxu0
        %4196 = vmatprep.subr.bf16.mxu0 0
        %4197 = vmatpush1.bf16.msra.mxu0 0
        %4198 = vmatprep.subr.bf16.mxu0 0
        %4199 = vmatpush1.bf16.msra.mxu0 0
        %4200 = vmatprep.subr.bf16.mxu0 0
        %4201 = vmatpush1.bf16.msra.mxu0 0
        %4202 = vmatprep.subr.bf16.mxu0 0
        %4203 = vmatpush1.bf16.msra.mxu0 0
        %4204 = vmatprep.subr.bf16.mxu0 0
        %4205 = vmatpush1.bf16.msra.mxu0 0
        %4206 = vmatprep.subr.bf16.mxu0 0
        %4207 = vmatpush1.bf16.msra.mxu0 0
        %4208 = vmatprep.subr.bf16.mxu0 0
        %4209 = vmatpush1.bf16.msra.mxu0 0
        %4210 = vmatprep.subr.bf16.mxu0 0
        %4211 = vmatpush1.bf16.msra.mxu0 %v4151
        %4212 = vmatprep.subr.bf16.mxu0 0
        %4213 = vmatpush2.bf16.msra.mxu0 0
        %4214 = vmatprep.subr.bf16.mxu0 0
        %4215 = vmatpush2.bf16.msra.mxu0 0
        %4216 = vmatprep.subr.bf16.mxu0 0
        %4217 = vmatpush2.bf16.msra.mxu0 0
        %4218 = vmatprep.subr.bf16.mxu0 0
        %4219 = vmatpush2.bf16.msra.mxu0 0
        %4220 = vmatprep.subr.bf16.mxu0 0
        %4221 = vmatpush2.bf16.msra.mxu0 0
        %4222 = vmatprep.subr.bf16.mxu0 0
        %4223 = vmatpush2.bf16.msra.mxu0 0
        %4224 = vmatprep.subr.bf16.mxu0 0
        %4225 = vmatpush2.bf16.msra.mxu0 0
        %4226 = vmatprep.subr.bf16.mxu0 0
        %4227 = vmatpush2.bf16.msra.mxu0 0
        %4228 = vmatprep.mubr.bf16.mxu0 0
        %4229 = vmatmul.mubr.bf16.gmra.mxu0 %v499
        %v4230 = vpop.f32.mrf.mxu0
        %v4231 = vadd.f32 0.0, %v4230
        %v4232 = vpop.f32.mrf.mxu0
        %v4233 = vpop.f32.mrf.mxu0
        %v4234 = vadd.f32 0.0, %v4233
        %v4235 = vpop.f32.mrf.mxu0
        %4236 = vdwg.mxu0
        %4237 = vmatprep.subr.bf16.mxu0 0
        %4238 = vmatpush1.bf16.msra.mxu0 0
        %4239 = vmatprep.subr.bf16.mxu0 0
        %4240 = vmatpush1.bf16.msra.mxu0 0
        %4241 = vmatprep.subr.bf16.mxu0 0
        %4242 = vmatpush1.bf16.msra.mxu0 0
        %4243 = vmatprep.subr.bf16.mxu0 0
        %4244 = vmatpush1.bf16.msra.mxu0 0
        %4245 = vmatprep.subr.bf16.mxu0 0
        %4246 = vmatpush1.bf16.msra.mxu0 0
        %4247 = vmatprep.subr.bf16.mxu0 0
        %4248 = vmatpush1.bf16.msra.mxu0 0
        %4249 = vmatprep.subr.bf16.mxu0 0
        %4250 = vmatpush1.bf16.msra.mxu0 0
        %4251 = vmatprep.subr.bf16.mxu0 0
        %4252 = vmatpush1.bf16.msra.mxu0 %v4154
        %4253 = vmatprep.subr.bf16.mxu0 0
        %4254 = vmatpush2.bf16.msra.mxu0 0
        %4255 = vmatprep.subr.bf16.mxu0 0
        %4256 = vmatpush2.bf16.msra.mxu0 0
        %4257 = vmatprep.subr.bf16.mxu0 0
        %4258 = vmatpush2.bf16.msra.mxu0 0
        %4259 = vmatprep.subr.bf16.mxu0 0
        %4260 = vmatpush2.bf16.msra.mxu0 0
        %4261 = vmatprep.subr.bf16.mxu0 0
        %4262 = vmatpush2.bf16.msra.mxu0 0
        %4263 = vmatprep.subr.bf16.mxu0 0
        %4264 = vmatpush2.bf16.msra.mxu0 0
        %4265 = vmatprep.subr.bf16.mxu0 0
        %4266 = vmatpush2.bf16.msra.mxu0 0
        %4267 = vmatprep.subr.bf16.mxu0 0
        %4268 = vmatpush2.bf16.msra.mxu0 0
        %4269 = vmatprep.mubr.bf16.mxu0 0
        %4270 = vmatmul.mubr.bf16.gmra.mxu0 %v548
        %v4271 = vpop.f32.mrf.mxu0
        %v4272 = vadd.f32 0.0, %v4271
        %v4273 = vpop.f32.mrf.mxu0
        %v4274 = vpop.f32.mrf.mxu0
        %v4275 = vadd.f32 0.0, %v4274
        %v4276 = vpop.f32.mrf.mxu0
        %4277 = vdwg.mxu0
        %v4278 = vsub.f32 %v4190, %v4231
        %v4279 = vsub.f32 %v4193, %v4234
        %v4280 = vsub.f32 %v4272, %v4190
        %v4281 = vsub.f32 %v4275, %v4193
        %v4282 = vsub.f32 %v4280, %v4231
        %v4283 = vsub.f32 %v4281, %v4234
        %v4284 = vpack.c.bf16 %v4279, %v4278
        %v4285 = vpack.c.bf16 %v4283, %v4282
        %v4287 = vsel %vm448, %v4284, 0
        %4289 = vmatprep.subr.bf16.mxu0 0
        %4290 = vmatpush1.bf16.msra.mxu0 0
        %4291 = vmatprep.subr.bf16.mxu0 0
        %4292 = vmatpush1.bf16.msra.mxu0 0
        %4293 = vmatprep.subr.bf16.mxu0 0
        %4294 = vmatpush1.bf16.msra.mxu0 0
        %4295 = vmatprep.subr.bf16.mxu0 0
        %4296 = vmatpush1.bf16.msra.mxu0 0
        %4297 = vmatprep.subr.bf16.mxu0 0
        %4298 = vmatpush1.bf16.msra.mxu0 0
        %4299 = vmatprep.subr.bf16.mxu0 0
        %4300 = vmatpush1.bf16.msra.mxu0 0
        %4301 = vmatprep.subr.bf16.mxu0 0
        %4302 = vmatpush1.bf16.msra.mxu0 0
        %4303 = vmatprep.subr.bf16.mxu0 0
        %4304 = vmatpush1.bf16.msra.mxu0 %v447
        %4305 = vmatprep.subr.bf16.mxu0 0
        %4306 = vmatpush2.bf16.msra.mxu0 0
        %4307 = vmatprep.subr.bf16.mxu0 0
        %4308 = vmatpush2.bf16.msra.mxu0 0
        %4309 = vmatprep.subr.bf16.mxu0 0
        %4310 = vmatpush2.bf16.msra.mxu0 0
        %4311 = vmatprep.subr.bf16.mxu0 0
        %4312 = vmatpush2.bf16.msra.mxu0 0
        %4313 = vmatprep.subr.bf16.mxu0 0
        %4314 = vmatpush2.bf16.msra.mxu0 0
        %4315 = vmatprep.subr.bf16.mxu0 0
        %4316 = vmatpush2.bf16.msra.mxu0 0
        %4317 = vmatprep.subr.bf16.mxu0 0
        %4318 = vmatpush2.bf16.msra.mxu0 0
        %4319 = vmatprep.subr.bf16.mxu0 0
        %4320 = vmatpush2.bf16.msra.mxu0 0
        %4321 = vmatprep.mubr.bf16.mxu0 0
        %4322 = vmatmul.mubr.bf16.gmra.mxu0 %v4287
        %v4323 = vpop.f32.mrf.mxu0
        %v4324 = vadd.f32 0.0, %v4323
        %v4325 = vpop.f32.mrf.mxu0
        %v4326 = vpop.f32.mrf.mxu0
        %v4327 = vadd.f32 0.0, %v4326
        %v4328 = vpop.f32.mrf.mxu0
        %4329 = vdwg.mxu0
        %v4331 = vsel %vm448, %v4285, 0
        %4333 = vmatprep.subr.bf16.mxu0 0
        %4334 = vmatpush1.bf16.msra.mxu0 0
        %4335 = vmatprep.subr.bf16.mxu0 0
        %4336 = vmatpush1.bf16.msra.mxu0 0
        %4337 = vmatprep.subr.bf16.mxu0 0
        %4338 = vmatpush1.bf16.msra.mxu0 0
        %4339 = vmatprep.subr.bf16.mxu0 0
        %4340 = vmatpush1.bf16.msra.mxu0 0
        %4341 = vmatprep.subr.bf16.mxu0 0
        %4342 = vmatpush1.bf16.msra.mxu0 0
        %4343 = vmatprep.subr.bf16.mxu0 0
        %4344 = vmatpush1.bf16.msra.mxu0 0
        %4345 = vmatprep.subr.bf16.mxu0 0
        %4346 = vmatpush1.bf16.msra.mxu0 0
        %4347 = vmatprep.subr.bf16.mxu0 0
        %4348 = vmatpush1.bf16.msra.mxu0 %v497
        %4349 = vmatprep.subr.bf16.mxu0 0
        %4350 = vmatpush2.bf16.msra.mxu0 0
        %4351 = vmatprep.subr.bf16.mxu0 0
        %4352 = vmatpush2.bf16.msra.mxu0 0
        %4353 = vmatprep.subr.bf16.mxu0 0
        %4354 = vmatpush2.bf16.msra.mxu0 0
        %4355 = vmatprep.subr.bf16.mxu0 0
        %4356 = vmatpush2.bf16.msra.mxu0 0
        %4357 = vmatprep.subr.bf16.mxu0 0
        %4358 = vmatpush2.bf16.msra.mxu0 0
        %4359 = vmatprep.subr.bf16.mxu0 0
        %4360 = vmatpush2.bf16.msra.mxu0 0
        %4361 = vmatprep.subr.bf16.mxu0 0
        %4362 = vmatpush2.bf16.msra.mxu0 0
        %4363 = vmatprep.subr.bf16.mxu0 0
        %4364 = vmatpush2.bf16.msra.mxu0 0
        %4365 = vmatprep.mubr.bf16.mxu0 0
        %4366 = vmatmul.mubr.bf16.gmra.mxu0 %v4331
        %v4367 = vpop.f32.mrf.mxu0
        %v4368 = vadd.f32 0.0, %v4367
        %v4369 = vpop.f32.mrf.mxu0
        %v4370 = vpop.f32.mrf.mxu0
        %v4371 = vadd.f32 0.0, %v4370
        %v4372 = vpop.f32.mrf.mxu0
        %4373 = vdwg.mxu0
        %v4374 = vadd.f32 %v4278, %v4282
        %v4375 = vadd.f32 %v4279, %v4283
        %v4376 = vpack.c.bf16 %v4375, %v4374
        %v4378 = vsel %vm448, %v4376, 0
        %4380 = vmatprep.subr.bf16.mxu0 0
        %4381 = vmatpush1.bf16.msra.mxu0 0
        %4382 = vmatprep.subr.bf16.mxu0 0
        %4383 = vmatpush1.bf16.msra.mxu0 0
        %4384 = vmatprep.subr.bf16.mxu0 0
        %4385 = vmatpush1.bf16.msra.mxu0 0
        %4386 = vmatprep.subr.bf16.mxu0 0
        %4387 = vmatpush1.bf16.msra.mxu0 0
        %4388 = vmatprep.subr.bf16.mxu0 0
        %4389 = vmatpush1.bf16.msra.mxu0 0
        %4390 = vmatprep.subr.bf16.mxu0 0
        %4391 = vmatpush1.bf16.msra.mxu0 0
        %4392 = vmatprep.subr.bf16.mxu0 0
        %4393 = vmatpush1.bf16.msra.mxu0 0
        %4394 = vmatprep.subr.bf16.mxu0 0
        %4395 = vmatpush1.bf16.msra.mxu0 %v546
        %4396 = vmatprep.subr.bf16.mxu0 0
        %4397 = vmatpush2.bf16.msra.mxu0 0
        %4398 = vmatprep.subr.bf16.mxu0 0
        %4399 = vmatpush2.bf16.msra.mxu0 0
        %4400 = vmatprep.subr.bf16.mxu0 0
        %4401 = vmatpush2.bf16.msra.mxu0 0
        %4402 = vmatprep.subr.bf16.mxu0 0
        %4403 = vmatpush2.bf16.msra.mxu0 0
        %4404 = vmatprep.subr.bf16.mxu0 0
        %4405 = vmatpush2.bf16.msra.mxu0 0
        %4406 = vmatprep.subr.bf16.mxu0 0
        %4407 = vmatpush2.bf16.msra.mxu0 0
        %4408 = vmatprep.subr.bf16.mxu0 0
        %4409 = vmatpush2.bf16.msra.mxu0 0
        %4410 = vmatprep.subr.bf16.mxu0 0
        %4411 = vmatpush2.bf16.msra.mxu0 0
        %4412 = vmatprep.mubr.bf16.mxu0 0
        %4413 = vmatmul.mubr.bf16.gmra.mxu0 %v4378
        %v4414 = vpop.f32.mrf.mxu0
        %v4415 = vadd.f32 0.0, %v4414
        %v4416 = vpop.f32.mrf.mxu0
        %v4417 = vpop.f32.mrf.mxu0
        %v4418 = vadd.f32 0.0, %v4417
        %v4419 = vpop.f32.mrf.mxu0
        %4420 = vdwg.mxu0
        %v4421 = vsub.f32 %v4324, %v4368
        %v4422 = vsub.f32 %v4327, %v4371
        %v4423 = vsub.f32 %v4415, %v4324
        %v4424 = vsub.f32 %v4418, %v4327
        %v4425 = vsub.f32 %v4423, %v4368
        %v4426 = vsub.f32 %v4424, %v4371
        %v4427 = vmul.f32 %v4421, %v743
        %v4428 = vmul.f32 %v4422, %v744
        %v4429 = vmul.f32 %v4425, %v747
        %v4430 = vmul.f32 %v4426, %v748
        %v4431 = vsub.f32 %v4427, %v4429
        %v4432 = vsub.f32 %v4428, %v4430
        %v4433 = vmul.f32 %v4421, %v747
        %v4434 = vmul.f32 %v4422, %v748
        %v4435 = vmul.f32 %v4425, %v743
        %v4436 = vmul.f32 %v4426, %v744
        %v4437 = vadd.f32 %v4433, %v4435
        %v4438 = vadd.f32 %v4434, %v4436
        %v4439 = vpack.c.bf16 %v4432, %v4431
        %v4440 = vpack.c.bf16 %v4438, %v4437
        %v4441 = vadd.f32 %v4431, %v4437
        %v4442 = vadd.f32 %v4432, %v4438
        %v4443 = vpack.c.bf16 %v4442, %v4441
        %4444 = vmatprep.subr.bf16.mxu0 0
        %4445 = vmatpush1.bf16.msra.mxu0 0
        %4446 = vmatprep.subr.bf16.mxu0 0
        %4447 = vmatpush1.bf16.msra.mxu0 0
        %4448 = vmatprep.subr.bf16.mxu0 0
        %4449 = vmatpush1.bf16.msra.mxu0 0
        %4450 = vmatprep.subr.bf16.mxu0 0
        %4451 = vmatpush1.bf16.msra.mxu0 0
        %4452 = vmatprep.subr.bf16.mxu0 0
        %4453 = vmatpush1.bf16.msra.mxu0 0
        %4454 = vmatprep.subr.bf16.mxu0 0
        %4455 = vmatpush1.bf16.msra.mxu0 0
        %4456 = vmatprep.subr.bf16.mxu0 0
        %4457 = vmatpush1.bf16.msra.mxu0 0
        %4458 = vmatprep.subr.bf16.mxu0 0
        %4459 = vmatpush1.bf16.msra.mxu0 %v4439
        %4460 = vmatprep.subr.bf16.mxu0 0
        %4461 = vmatpush2.bf16.msra.mxu0 0
        %4462 = vmatprep.subr.bf16.mxu0 0
        %4463 = vmatpush2.bf16.msra.mxu0 0
        %4464 = vmatprep.subr.bf16.mxu0 0
        %4465 = vmatpush2.bf16.msra.mxu0 0
        %4466 = vmatprep.subr.bf16.mxu0 0
        %4467 = vmatpush2.bf16.msra.mxu0 0
        %4468 = vmatprep.subr.bf16.mxu0 0
        %4469 = vmatpush2.bf16.msra.mxu0 0
        %4470 = vmatprep.subr.bf16.mxu0 0
        %4471 = vmatpush2.bf16.msra.mxu0 0
        %4472 = vmatprep.subr.bf16.mxu0 0
        %4473 = vmatpush2.bf16.msra.mxu0 0
        %4474 = vmatprep.subr.bf16.mxu0 0
        %4475 = vmatpush2.bf16.msra.mxu0 0
        %4476 = vmatprep.mubr.bf16.mxu0 0
        %4477 = vmatmul.mubr.bf16.gmra.mxu0 %v450
        %v4478 = vpop.f32.mrf.mxu0
        %v4479 = vadd.f32 0.0, %v4478
        %v4480 = vpop.f32.mrf.mxu0
        %v4481 = vpop.f32.mrf.mxu0
        %v4482 = vadd.f32 0.0, %v4481
        %v4483 = vpop.f32.mrf.mxu0
        %4484 = vdwg.mxu0
        %4485 = vmatprep.subr.bf16.mxu0 0
        %4486 = vmatpush1.bf16.msra.mxu0 0
        %4487 = vmatprep.subr.bf16.mxu0 0
        %4488 = vmatpush1.bf16.msra.mxu0 0
        %4489 = vmatprep.subr.bf16.mxu0 0
        %4490 = vmatpush1.bf16.msra.mxu0 0
        %4491 = vmatprep.subr.bf16.mxu0 0
        %4492 = vmatpush1.bf16.msra.mxu0 0
        %4493 = vmatprep.subr.bf16.mxu0 0
        %4494 = vmatpush1.bf16.msra.mxu0 0
        %4495 = vmatprep.subr.bf16.mxu0 0
        %4496 = vmatpush1.bf16.msra.mxu0 0
        %4497 = vmatprep.subr.bf16.mxu0 0
        %4498 = vmatpush1.bf16.msra.mxu0 0
        %4499 = vmatprep.subr.bf16.mxu0 0
        %4500 = vmatpush1.bf16.msra.mxu0 %v4440
        %4501 = vmatprep.subr.bf16.mxu0 0
        %4502 = vmatpush2.bf16.msra.mxu0 0
        %4503 = vmatprep.subr.bf16.mxu0 0
        %4504 = vmatpush2.bf16.msra.mxu0 0
        %4505 = vmatprep.subr.bf16.mxu0 0
        %4506 = vmatpush2.bf16.msra.mxu0 0
        %4507 = vmatprep.subr.bf16.mxu0 0
        %4508 = vmatpush2.bf16.msra.mxu0 0
        %4509 = vmatprep.subr.bf16.mxu0 0
        %4510 = vmatpush2.bf16.msra.mxu0 0
        %4511 = vmatprep.subr.bf16.mxu0 0
        %4512 = vmatpush2.bf16.msra.mxu0 0
        %4513 = vmatprep.subr.bf16.mxu0 0
        %4514 = vmatpush2.bf16.msra.mxu0 0
        %4515 = vmatprep.subr.bf16.mxu0 0
        %4516 = vmatpush2.bf16.msra.mxu0 0
        %4517 = vmatprep.mubr.bf16.mxu0 0
        %4518 = vmatmul.mubr.bf16.gmra.mxu0 %v499
        %v4519 = vpop.f32.mrf.mxu0
        %v4520 = vadd.f32 0.0, %v4519
        %v4521 = vpop.f32.mrf.mxu0
        %v4522 = vpop.f32.mrf.mxu0
        %v4523 = vadd.f32 0.0, %v4522
        %v4524 = vpop.f32.mrf.mxu0
        %4525 = vdwg.mxu0
        %4526 = vmatprep.subr.bf16.mxu0 0
        %4527 = vmatpush1.bf16.msra.mxu0 0
        %4528 = vmatprep.subr.bf16.mxu0 0
        %4529 = vmatpush1.bf16.msra.mxu0 0
        %4530 = vmatprep.subr.bf16.mxu0 0
        %4531 = vmatpush1.bf16.msra.mxu0 0
        %4532 = vmatprep.subr.bf16.mxu0 0
        %4533 = vmatpush1.bf16.msra.mxu0 0
        %4534 = vmatprep.subr.bf16.mxu0 0
        %4535 = vmatpush1.bf16.msra.mxu0 0
        %4536 = vmatprep.subr.bf16.mxu0 0
        %4537 = vmatpush1.bf16.msra.mxu0 0
        %4538 = vmatprep.subr.bf16.mxu0 0
        %4539 = vmatpush1.bf16.msra.mxu0 0
        %4540 = vmatprep.subr.bf16.mxu0 0
        %4541 = vmatpush1.bf16.msra.mxu0 %v4443
        %4542 = vmatprep.subr.bf16.mxu0 0
        %4543 = vmatpush2.bf16.msra.mxu0 0
        %4544 = vmatprep.subr.bf16.mxu0 0
        %4545 = vmatpush2.bf16.msra.mxu0 0
        %4546 = vmatprep.subr.bf16.mxu0 0
        %4547 = vmatpush2.bf16.msra.mxu0 0
        %4548 = vmatprep.subr.bf16.mxu0 0
        %4549 = vmatpush2.bf16.msra.mxu0 0
        %4550 = vmatprep.subr.bf16.mxu0 0
        %4551 = vmatpush2.bf16.msra.mxu0 0
        %4552 = vmatprep.subr.bf16.mxu0 0
        %4553 = vmatpush2.bf16.msra.mxu0 0
        %4554 = vmatprep.subr.bf16.mxu0 0
        %4555 = vmatpush2.bf16.msra.mxu0 0
        %4556 = vmatprep.subr.bf16.mxu0 0
        %4557 = vmatpush2.bf16.msra.mxu0 0
        %4558 = vmatprep.mubr.bf16.mxu0 0
        %4559 = vmatmul.mubr.bf16.gmra.mxu0 %v852
        %v4560 = vpop.f32.mrf.mxu0
        %v4561 = vadd.f32 0.0, %v4560
        %v4562 = vpop.f32.mrf.mxu0
        %v4563 = vpop.f32.mrf.mxu0
        %v4564 = vadd.f32 0.0, %v4563
        %v4565 = vpop.f32.mrf.mxu0
        %4566 = vdwg.mxu0
        %v4567 = vadd.f32 %v4479, %v4520
        %v4568 = vadd.f32 %v4482, %v4523
        %v4569 = vsub.f32 %v4561, %v4479
        %v4570 = vsub.f32 %v4564, %v4482
        %v4571 = vadd.f32 %v4569, %v4520
        %v4572 = vadd.f32 %v4570, %v4523
        %v4573 = vpack.c.bf16 %v4568, %v4567
        %v4574 = vpack.c.bf16 %v4572, %v4571
        %v4576 = vsel %vm448, %v4573, 0
        %4578 = vmatprep.subr.bf16.mxu0 0
        %4579 = vmatpush1.bf16.msra.mxu0 0
        %4580 = vmatprep.subr.bf16.mxu0 0
        %4581 = vmatpush1.bf16.msra.mxu0 0
        %4582 = vmatprep.subr.bf16.mxu0 0
        %4583 = vmatpush1.bf16.msra.mxu0 0
        %4584 = vmatprep.subr.bf16.mxu0 0
        %4585 = vmatpush1.bf16.msra.mxu0 0
        %4586 = vmatprep.subr.bf16.mxu0 0
        %4587 = vmatpush1.bf16.msra.mxu0 0
        %4588 = vmatprep.subr.bf16.mxu0 0
        %4589 = vmatpush1.bf16.msra.mxu0 0
        %4590 = vmatprep.subr.bf16.mxu0 0
        %4591 = vmatpush1.bf16.msra.mxu0 0
        %4592 = vmatprep.subr.bf16.mxu0 0
        %4593 = vmatpush1.bf16.msra.mxu0 %v447
        %4594 = vmatprep.subr.bf16.mxu0 0
        %4595 = vmatpush2.bf16.msra.mxu0 0
        %4596 = vmatprep.subr.bf16.mxu0 0
        %4597 = vmatpush2.bf16.msra.mxu0 0
        %4598 = vmatprep.subr.bf16.mxu0 0
        %4599 = vmatpush2.bf16.msra.mxu0 0
        %4600 = vmatprep.subr.bf16.mxu0 0
        %4601 = vmatpush2.bf16.msra.mxu0 0
        %4602 = vmatprep.subr.bf16.mxu0 0
        %4603 = vmatpush2.bf16.msra.mxu0 0
        %4604 = vmatprep.subr.bf16.mxu0 0
        %4605 = vmatpush2.bf16.msra.mxu0 0
        %4606 = vmatprep.subr.bf16.mxu0 0
        %4607 = vmatpush2.bf16.msra.mxu0 0
        %4608 = vmatprep.subr.bf16.mxu0 0
        %4609 = vmatpush2.bf16.msra.mxu0 0
        %4610 = vmatprep.mubr.bf16.mxu0 0
        %4611 = vmatmul.mubr.bf16.gmra.mxu0 %v4576
        %v4612 = vpop.f32.mrf.mxu0
        %v4613 = vadd.f32 0.0, %v4612
        %v4614 = vpop.f32.mrf.mxu0
        %v4615 = vpop.f32.mrf.mxu0
        %v4616 = vadd.f32 0.0, %v4615
        %v4617 = vpop.f32.mrf.mxu0
        %4618 = vdwg.mxu0
        %v4620 = vsel %vm448, %v4574, 0
        %4622 = vmatprep.subr.bf16.mxu0 0
        %4623 = vmatpush1.bf16.msra.mxu0 0
        %4624 = vmatprep.subr.bf16.mxu0 0
        %4625 = vmatpush1.bf16.msra.mxu0 0
        %4626 = vmatprep.subr.bf16.mxu0 0
        %4627 = vmatpush1.bf16.msra.mxu0 0
        %4628 = vmatprep.subr.bf16.mxu0 0
        %4629 = vmatpush1.bf16.msra.mxu0 0
        %4630 = vmatprep.subr.bf16.mxu0 0
        %4631 = vmatpush1.bf16.msra.mxu0 0
        %4632 = vmatprep.subr.bf16.mxu0 0
        %4633 = vmatpush1.bf16.msra.mxu0 0
        %4634 = vmatprep.subr.bf16.mxu0 0
        %4635 = vmatpush1.bf16.msra.mxu0 0
        %4636 = vmatprep.subr.bf16.mxu0 0
        %4637 = vmatpush1.bf16.msra.mxu0 %v497
        %4638 = vmatprep.subr.bf16.mxu0 0
        %4639 = vmatpush2.bf16.msra.mxu0 0
        %4640 = vmatprep.subr.bf16.mxu0 0
        %4641 = vmatpush2.bf16.msra.mxu0 0
        %4642 = vmatprep.subr.bf16.mxu0 0
        %4643 = vmatpush2.bf16.msra.mxu0 0
        %4644 = vmatprep.subr.bf16.mxu0 0
        %4645 = vmatpush2.bf16.msra.mxu0 0
        %4646 = vmatprep.subr.bf16.mxu0 0
        %4647 = vmatpush2.bf16.msra.mxu0 0
        %4648 = vmatprep.subr.bf16.mxu0 0
        %4649 = vmatpush2.bf16.msra.mxu0 0
        %4650 = vmatprep.subr.bf16.mxu0 0
        %4651 = vmatpush2.bf16.msra.mxu0 0
        %4652 = vmatprep.subr.bf16.mxu0 0
        %4653 = vmatpush2.bf16.msra.mxu0 0
        %4654 = vmatprep.mubr.bf16.mxu0 0
        %4655 = vmatmul.mubr.bf16.gmra.mxu0 %v4620
        %v4656 = vpop.f32.mrf.mxu0
        %v4657 = vadd.f32 0.0, %v4656
        %v4658 = vpop.f32.mrf.mxu0
        %v4659 = vpop.f32.mrf.mxu0
        %v4660 = vadd.f32 0.0, %v4659
        %v4661 = vpop.f32.mrf.mxu0
        %4662 = vdwg.mxu0
        %v4663 = vsub.f32 %v4567, %v4571
        %v4664 = vsub.f32 %v4568, %v4572
        %v4665 = vpack.c.bf16 %v4664, %v4663
        %v4667 = vsel %vm448, %v4665, 0
        %4669 = vmatprep.subr.bf16.mxu0 0
        %4670 = vmatpush1.bf16.msra.mxu0 0
        %4671 = vmatprep.subr.bf16.mxu0 0
        %4672 = vmatpush1.bf16.msra.mxu0 0
        %4673 = vmatprep.subr.bf16.mxu0 0
        %4674 = vmatpush1.bf16.msra.mxu0 0
        %4675 = vmatprep.subr.bf16.mxu0 0
        %4676 = vmatpush1.bf16.msra.mxu0 0
        %4677 = vmatprep.subr.bf16.mxu0 0
        %4678 = vmatpush1.bf16.msra.mxu0 0
        %4679 = vmatprep.subr.bf16.mxu0 0
        %4680 = vmatpush1.bf16.msra.mxu0 0
        %4681 = vmatprep.subr.bf16.mxu0 0
        %4682 = vmatpush1.bf16.msra.mxu0 0
        %4683 = vmatprep.subr.bf16.mxu0 0
        %4684 = vmatpush1.bf16.msra.mxu0 %v546
        %4685 = vmatprep.subr.bf16.mxu0 0
        %4686 = vmatpush2.bf16.msra.mxu0 0
        %4687 = vmatprep.subr.bf16.mxu0 0
        %4688 = vmatpush2.bf16.msra.mxu0 0
        %4689 = vmatprep.subr.bf16.mxu0 0
        %4690 = vmatpush2.bf16.msra.mxu0 0
        %4691 = vmatprep.subr.bf16.mxu0 0
        %4692 = vmatpush2.bf16.msra.mxu0 0
        %4693 = vmatprep.subr.bf16.mxu0 0
        %4694 = vmatpush2.bf16.msra.mxu0 0
        %4695 = vmatprep.subr.bf16.mxu0 0
        %4696 = vmatpush2.bf16.msra.mxu0 0
        %4697 = vmatprep.subr.bf16.mxu0 0
        %4698 = vmatpush2.bf16.msra.mxu0 0
        %4699 = vmatprep.subr.bf16.mxu0 0
        %4700 = vmatpush2.bf16.msra.mxu0 0
        %4701 = vmatprep.mubr.bf16.mxu0 0
        %4702 = vmatmul.mubr.bf16.gmra.mxu0 %v4667
        %v4703 = vpop.f32.mrf.mxu0
        %v4704 = vadd.f32 0.0, %v4703
        %v4705 = vpop.f32.mrf.mxu0
        %v4706 = vpop.f32.mrf.mxu0
        %v4707 = vadd.f32 0.0, %v4706
        %v4708 = vpop.f32.mrf.mxu0
        %4709 = vdwg.mxu0
        %v4710 = vadd.f32 %v4613, %v4657
        %v4711 = vadd.f32 %v4616, %v4660
        %v4712 = vsub.f32 %v4613, %v4657
        %v4713 = vsub.f32 %v4616, %v4660
        %v4714 = vsub.f32 %v4712, %v4704
        %v4715 = vsub.f32 %v4713, %v4707
        %s4716 = scalar_lea.vmem %s334, 56
        %v4717 = vld [vmem:[%s4716] sm:$0xf]
        %v4718 = vld [vmem:[%s4716 + $0x4] sm:$0xf]
        %v4719 = vunpack.c.l.bf16 %v4717
        %v4720 = vunpack.c.l.bf16 %v4718
        %s4721 = scalar_lea.vmem %s345, 56
        %v4722 = vld [vmem:[%s4721] sm:$0xf]
        %v4723 = vld [vmem:[%s4721 + $0x4] sm:$0xf]
        %v4724 = vunpack.c.l.bf16 %v4722
        %v4725 = vunpack.c.l.bf16 %v4723
        %v4726 = vmul.f32 %v4719, %v394
        %v4727 = vmul.f32 %v4720, %v395
        %v4728 = vmul.f32 %v4724, %v398
        %v4729 = vmul.f32 %v4725, %v399
        %v4730 = vsub.f32 %v4726, %v4728
        %v4731 = vsub.f32 %v4727, %v4729
        %v4732 = vmul.f32 %v4719, %v398
        %v4733 = vmul.f32 %v4720, %v399
        %v4734 = vmul.f32 %v4724, %v394
        %v4735 = vmul.f32 %v4725, %v395
        %v4736 = vadd.f32 %v4732, %v4734
        %v4737 = vadd.f32 %v4733, %v4735
        %v4738 = vmul.f32 %v4710, %v410
        %v4739 = vmul.f32 %v4711, %v411
        %v4740 = vmul.f32 %v4714, %v414
        %v4741 = vmul.f32 %v4715, %v415
        %v4742 = vsub.f32 %v4738, %v4740
        %v4743 = vsub.f32 %v4739, %v4741
        %v4744 = vmul.f32 %v4710, %v414
        %v4745 = vmul.f32 %v4711, %v415
        %v4746 = vmul.f32 %v4714, %v410
        %v4747 = vmul.f32 %v4715, %v411
        %v4748 = vadd.f32 %v4744, %v4746
        %v4749 = vadd.f32 %v4745, %v4747
        %v4750 = vmul.f32 %v4742, 0.7
        %v4751 = vmul.f32 %v4743, 0.7
        %v4752 = vmul.f32 %v4730, 0.3
        %v4753 = vmul.f32 %v4731, 0.3
        %v4754 = vadd.f32 %v4750, %v4752
        %v4755 = vadd.f32 %v4751, %v4753
        %v4756 = vmul.f32 %v4748, 0.7
        %v4757 = vmul.f32 %v4749, 0.7
        %v4758 = vmul.f32 %v4736, 0.3
        %v4759 = vmul.f32 %v4737, 0.3
        %v4760 = vadd.f32 %v4756, %v4758
        %v4761 = vadd.f32 %v4757, %v4759
        %v4762 = vpack.c.bf16 %v4755, %v4754
        %v4763 = vpack.c.bf16 %v4761, %v4760
        %v4764 = vadd.f32 %v4754, %v4760
        %v4765 = vadd.f32 %v4755, %v4761
        %v4766 = vpack.c.bf16 %v4765, %v4764
        %4767 = vmatprep.subr.bf16.mxu0 0
        %4768 = vmatpush1.bf16.msra.mxu0 0
        %4769 = vmatprep.subr.bf16.mxu0 0
        %4770 = vmatpush1.bf16.msra.mxu0 0
        %4771 = vmatprep.subr.bf16.mxu0 0
        %4772 = vmatpush1.bf16.msra.mxu0 0
        %4773 = vmatprep.subr.bf16.mxu0 0
        %4774 = vmatpush1.bf16.msra.mxu0 0
        %4775 = vmatprep.subr.bf16.mxu0 0
        %4776 = vmatpush1.bf16.msra.mxu0 0
        %4777 = vmatprep.subr.bf16.mxu0 0
        %4778 = vmatpush1.bf16.msra.mxu0 0
        %4779 = vmatprep.subr.bf16.mxu0 0
        %4780 = vmatpush1.bf16.msra.mxu0 0
        %4781 = vmatprep.subr.bf16.mxu0 0
        %4782 = vmatpush1.bf16.msra.mxu0 %v4762
        %4783 = vmatprep.subr.bf16.mxu0 0
        %4784 = vmatpush2.bf16.msra.mxu0 0
        %4785 = vmatprep.subr.bf16.mxu0 0
        %4786 = vmatpush2.bf16.msra.mxu0 0
        %4787 = vmatprep.subr.bf16.mxu0 0
        %4788 = vmatpush2.bf16.msra.mxu0 0
        %4789 = vmatprep.subr.bf16.mxu0 0
        %4790 = vmatpush2.bf16.msra.mxu0 0
        %4791 = vmatprep.subr.bf16.mxu0 0
        %4792 = vmatpush2.bf16.msra.mxu0 0
        %4793 = vmatprep.subr.bf16.mxu0 0
        %4794 = vmatpush2.bf16.msra.mxu0 0
        %4795 = vmatprep.subr.bf16.mxu0 0
        %4796 = vmatpush2.bf16.msra.mxu0 0
        %4797 = vmatprep.subr.bf16.mxu0 0
        %4798 = vmatpush2.bf16.msra.mxu0 0
        %4799 = vmatprep.mubr.bf16.mxu0 0
        %4800 = vmatmul.mubr.bf16.gmra.mxu0 %v450
        %v4801 = vpop.f32.mrf.mxu0
        %v4802 = vadd.f32 0.0, %v4801
        %v4803 = vpop.f32.mrf.mxu0
        %v4804 = vpop.f32.mrf.mxu0
        %v4805 = vadd.f32 0.0, %v4804
        %v4806 = vpop.f32.mrf.mxu0
        %4807 = vdwg.mxu0
        %4808 = vmatprep.subr.bf16.mxu0 0
        %4809 = vmatpush1.bf16.msra.mxu0 0
        %4810 = vmatprep.subr.bf16.mxu0 0
        %4811 = vmatpush1.bf16.msra.mxu0 0
        %4812 = vmatprep.subr.bf16.mxu0 0
        %4813 = vmatpush1.bf16.msra.mxu0 0
        %4814 = vmatprep.subr.bf16.mxu0 0
        %4815 = vmatpush1.bf16.msra.mxu0 0
        %4816 = vmatprep.subr.bf16.mxu0 0
        %4817 = vmatpush1.bf16.msra.mxu0 0
        %4818 = vmatprep.subr.bf16.mxu0 0
        %4819 = vmatpush1.bf16.msra.mxu0 0
        %4820 = vmatprep.subr.bf16.mxu0 0
        %4821 = vmatpush1.bf16.msra.mxu0 0
        %4822 = vmatprep.subr.bf16.mxu0 0
        %4823 = vmatpush1.bf16.msra.mxu0 %v4763
        %4824 = vmatprep.subr.bf16.mxu0 0
        %4825 = vmatpush2.bf16.msra.mxu0 0
        %4826 = vmatprep.subr.bf16.mxu0 0
        %4827 = vmatpush2.bf16.msra.mxu0 0
        %4828 = vmatprep.subr.bf16.mxu0 0
        %4829 = vmatpush2.bf16.msra.mxu0 0
        %4830 = vmatprep.subr.bf16.mxu0 0
        %4831 = vmatpush2.bf16.msra.mxu0 0
        %4832 = vmatprep.subr.bf16.mxu0 0
        %4833 = vmatpush2.bf16.msra.mxu0 0
        %4834 = vmatprep.subr.bf16.mxu0 0
        %4835 = vmatpush2.bf16.msra.mxu0 0
        %4836 = vmatprep.subr.bf16.mxu0 0
        %4837 = vmatpush2.bf16.msra.mxu0 0
        %4838 = vmatprep.subr.bf16.mxu0 0
        %4839 = vmatpush2.bf16.msra.mxu0 0
        %4840 = vmatprep.mubr.bf16.mxu0 0
        %4841 = vmatmul.mubr.bf16.gmra.mxu0 %v499
        %v4842 = vpop.f32.mrf.mxu0
        %v4843 = vadd.f32 0.0, %v4842
        %v4844 = vpop.f32.mrf.mxu0
        %v4845 = vpop.f32.mrf.mxu0
        %v4846 = vadd.f32 0.0, %v4845
        %v4847 = vpop.f32.mrf.mxu0
        %4848 = vdwg.mxu0
        %4849 = vmatprep.subr.bf16.mxu0 0
        %4850 = vmatpush1.bf16.msra.mxu0 0
        %4851 = vmatprep.subr.bf16.mxu0 0
        %4852 = vmatpush1.bf16.msra.mxu0 0
        %4853 = vmatprep.subr.bf16.mxu0 0
        %4854 = vmatpush1.bf16.msra.mxu0 0
        %4855 = vmatprep.subr.bf16.mxu0 0
        %4856 = vmatpush1.bf16.msra.mxu0 0
        %4857 = vmatprep.subr.bf16.mxu0 0
        %4858 = vmatpush1.bf16.msra.mxu0 0
        %4859 = vmatprep.subr.bf16.mxu0 0
        %4860 = vmatpush1.bf16.msra.mxu0 0
        %4861 = vmatprep.subr.bf16.mxu0 0
        %4862 = vmatpush1.bf16.msra.mxu0 0
        %4863 = vmatprep.subr.bf16.mxu0 0
        %4864 = vmatpush1.bf16.msra.mxu0 %v4766
        %4865 = vmatprep.subr.bf16.mxu0 0
        %4866 = vmatpush2.bf16.msra.mxu0 0
        %4867 = vmatprep.subr.bf16.mxu0 0
        %4868 = vmatpush2.bf16.msra.mxu0 0
        %4869 = vmatprep.subr.bf16.mxu0 0
        %4870 = vmatpush2.bf16.msra.mxu0 0
        %4871 = vmatprep.subr.bf16.mxu0 0
        %4872 = vmatpush2.bf16.msra.mxu0 0
        %4873 = vmatprep.subr.bf16.mxu0 0
        %4874 = vmatpush2.bf16.msra.mxu0 0
        %4875 = vmatprep.subr.bf16.mxu0 0
        %4876 = vmatpush2.bf16.msra.mxu0 0
        %4877 = vmatprep.subr.bf16.mxu0 0
        %4878 = vmatpush2.bf16.msra.mxu0 0
        %4879 = vmatprep.subr.bf16.mxu0 0
        %4880 = vmatpush2.bf16.msra.mxu0 0
        %4881 = vmatprep.mubr.bf16.mxu0 0
        %4882 = vmatmul.mubr.bf16.gmra.mxu0 %v548
        %v4883 = vpop.f32.mrf.mxu0
        %v4884 = vadd.f32 0.0, %v4883
        %v4885 = vpop.f32.mrf.mxu0
        %v4886 = vpop.f32.mrf.mxu0
        %v4887 = vadd.f32 0.0, %v4886
        %v4888 = vpop.f32.mrf.mxu0
        %4889 = vdwg.mxu0
        %v4890 = vsub.f32 %v4802, %v4843
        %v4891 = vsub.f32 %v4805, %v4846
        %v4892 = vsub.f32 %v4884, %v4802
        %v4893 = vsub.f32 %v4887, %v4805
        %v4894 = vsub.f32 %v4892, %v4843
        %v4895 = vsub.f32 %v4893, %v4846
        %v4896 = vpack.c.bf16 %v4891, %v4890
        %v4897 = vpack.c.bf16 %v4895, %v4894
        %v4899 = vsel %vm448, %v4896, 0
        %4901 = vmatprep.subr.bf16.mxu0 0
        %4902 = vmatpush1.bf16.msra.mxu0 0
        %4903 = vmatprep.subr.bf16.mxu0 0
        %4904 = vmatpush1.bf16.msra.mxu0 0
        %4905 = vmatprep.subr.bf16.mxu0 0
        %4906 = vmatpush1.bf16.msra.mxu0 0
        %4907 = vmatprep.subr.bf16.mxu0 0
        %4908 = vmatpush1.bf16.msra.mxu0 0
        %4909 = vmatprep.subr.bf16.mxu0 0
        %4910 = vmatpush1.bf16.msra.mxu0 0
        %4911 = vmatprep.subr.bf16.mxu0 0
        %4912 = vmatpush1.bf16.msra.mxu0 0
        %4913 = vmatprep.subr.bf16.mxu0 0
        %4914 = vmatpush1.bf16.msra.mxu0 0
        %4915 = vmatprep.subr.bf16.mxu0 0
        %4916 = vmatpush1.bf16.msra.mxu0 %v447
        %4917 = vmatprep.subr.bf16.mxu0 0
        %4918 = vmatpush2.bf16.msra.mxu0 0
        %4919 = vmatprep.subr.bf16.mxu0 0
        %4920 = vmatpush2.bf16.msra.mxu0 0
        %4921 = vmatprep.subr.bf16.mxu0 0
        %4922 = vmatpush2.bf16.msra.mxu0 0
        %4923 = vmatprep.subr.bf16.mxu0 0
        %4924 = vmatpush2.bf16.msra.mxu0 0
        %4925 = vmatprep.subr.bf16.mxu0 0
        %4926 = vmatpush2.bf16.msra.mxu0 0
        %4927 = vmatprep.subr.bf16.mxu0 0
        %4928 = vmatpush2.bf16.msra.mxu0 0
        %4929 = vmatprep.subr.bf16.mxu0 0
        %4930 = vmatpush2.bf16.msra.mxu0 0
        %4931 = vmatprep.subr.bf16.mxu0 0
        %4932 = vmatpush2.bf16.msra.mxu0 0
        %4933 = vmatprep.mubr.bf16.mxu0 0
        %4934 = vmatmul.mubr.bf16.gmra.mxu0 %v4899
        %v4935 = vpop.f32.mrf.mxu0
        %v4936 = vadd.f32 0.0, %v4935
        %v4937 = vpop.f32.mrf.mxu0
        %v4938 = vpop.f32.mrf.mxu0
        %v4939 = vadd.f32 0.0, %v4938
        %v4940 = vpop.f32.mrf.mxu0
        %4941 = vdwg.mxu0
        %v4943 = vsel %vm448, %v4897, 0
        %4945 = vmatprep.subr.bf16.mxu0 0
        %4946 = vmatpush1.bf16.msra.mxu0 0
        %4947 = vmatprep.subr.bf16.mxu0 0
        %4948 = vmatpush1.bf16.msra.mxu0 0
        %4949 = vmatprep.subr.bf16.mxu0 0
        %4950 = vmatpush1.bf16.msra.mxu0 0
        %4951 = vmatprep.subr.bf16.mxu0 0
        %4952 = vmatpush1.bf16.msra.mxu0 0
        %4953 = vmatprep.subr.bf16.mxu0 0
        %4954 = vmatpush1.bf16.msra.mxu0 0
        %4955 = vmatprep.subr.bf16.mxu0 0
        %4956 = vmatpush1.bf16.msra.mxu0 0
        %4957 = vmatprep.subr.bf16.mxu0 0
        %4958 = vmatpush1.bf16.msra.mxu0 0
        %4959 = vmatprep.subr.bf16.mxu0 0
        %4960 = vmatpush1.bf16.msra.mxu0 %v497
        %4961 = vmatprep.subr.bf16.mxu0 0
        %4962 = vmatpush2.bf16.msra.mxu0 0
        %4963 = vmatprep.subr.bf16.mxu0 0
        %4964 = vmatpush2.bf16.msra.mxu0 0
        %4965 = vmatprep.subr.bf16.mxu0 0
        %4966 = vmatpush2.bf16.msra.mxu0 0
        %4967 = vmatprep.subr.bf16.mxu0 0
        %4968 = vmatpush2.bf16.msra.mxu0 0
        %4969 = vmatprep.subr.bf16.mxu0 0
        %4970 = vmatpush2.bf16.msra.mxu0 0
        %4971 = vmatprep.subr.bf16.mxu0 0
        %4972 = vmatpush2.bf16.msra.mxu0 0
        %4973 = vmatprep.subr.bf16.mxu0 0
        %4974 = vmatpush2.bf16.msra.mxu0 0
        %4975 = vmatprep.subr.bf16.mxu0 0
        %4976 = vmatpush2.bf16.msra.mxu0 0
        %4977 = vmatprep.mubr.bf16.mxu0 0
        %4978 = vmatmul.mubr.bf16.gmra.mxu0 %v4943
        %v4979 = vpop.f32.mrf.mxu0
        %v4980 = vadd.f32 0.0, %v4979
        %v4981 = vpop.f32.mrf.mxu0
        %v4982 = vpop.f32.mrf.mxu0
        %v4983 = vadd.f32 0.0, %v4982
        %v4984 = vpop.f32.mrf.mxu0
        %4985 = vdwg.mxu0
        %v4986 = vadd.f32 %v4890, %v4894
        %v4987 = vadd.f32 %v4891, %v4895
        %v4988 = vpack.c.bf16 %v4987, %v4986
        %v4990 = vsel %vm448, %v4988, 0
        %4992 = vmatprep.subr.bf16.mxu0 0
        %4993 = vmatpush1.bf16.msra.mxu0 0
        %4994 = vmatprep.subr.bf16.mxu0 0
        %4995 = vmatpush1.bf16.msra.mxu0 0
        %4996 = vmatprep.subr.bf16.mxu0 0
        %4997 = vmatpush1.bf16.msra.mxu0 0
        %4998 = vmatprep.subr.bf16.mxu0 0
        %4999 = vmatpush1.bf16.msra.mxu0 0
        %5000 = vmatprep.subr.bf16.mxu0 0
        %5001 = vmatpush1.bf16.msra.mxu0 0
        %5002 = vmatprep.subr.bf16.mxu0 0
        %5003 = vmatpush1.bf16.msra.mxu0 0
        %5004 = vmatprep.subr.bf16.mxu0 0
        %5005 = vmatpush1.bf16.msra.mxu0 0
        %5006 = vmatprep.subr.bf16.mxu0 0
        %5007 = vmatpush1.bf16.msra.mxu0 %v546
        %5008 = vmatprep.subr.bf16.mxu0 0
        %5009 = vmatpush2.bf16.msra.mxu0 0
        %5010 = vmatprep.subr.bf16.mxu0 0
        %5011 = vmatpush2.bf16.msra.mxu0 0
        %5012 = vmatprep.subr.bf16.mxu0 0
        %5013 = vmatpush2.bf16.msra.mxu0 0
        %5014 = vmatprep.subr.bf16.mxu0 0
        %5015 = vmatpush2.bf16.msra.mxu0 0
        %5016 = vmatprep.subr.bf16.mxu0 0
        %5017 = vmatpush2.bf16.msra.mxu0 0
        %5018 = vmatprep.subr.bf16.mxu0 0
        %5019 = vmatpush2.bf16.msra.mxu0 0
        %5020 = vmatprep.subr.bf16.mxu0 0
        %5021 = vmatpush2.bf16.msra.mxu0 0
        %5022 = vmatprep.subr.bf16.mxu0 0
        %5023 = vmatpush2.bf16.msra.mxu0 0
        %5024 = vmatprep.mubr.bf16.mxu0 0
        %5025 = vmatmul.mubr.bf16.gmra.mxu0 %v4990
        %v5026 = vpop.f32.mrf.mxu0
        %v5027 = vadd.f32 0.0, %v5026
        %v5028 = vpop.f32.mrf.mxu0
        %v5029 = vpop.f32.mrf.mxu0
        %v5030 = vadd.f32 0.0, %v5029
        %v5031 = vpop.f32.mrf.mxu0
        %5032 = vdwg.mxu0
        %v5033 = vsub.f32 %v4936, %v4980
        %v5034 = vsub.f32 %v4939, %v4983
        %v5035 = vsub.f32 %v5027, %v4936
        %v5036 = vsub.f32 %v5030, %v4939
        %v5037 = vsub.f32 %v5035, %v4980
        %v5038 = vsub.f32 %v5036, %v4983
        %v5039 = vmul.f32 %v5033, %v743
        %v5040 = vmul.f32 %v5034, %v744
        %v5041 = vmul.f32 %v5037, %v747
        %v5042 = vmul.f32 %v5038, %v748
        %v5043 = vsub.f32 %v5039, %v5041
        %v5044 = vsub.f32 %v5040, %v5042
        %v5045 = vmul.f32 %v5033, %v747
        %v5046 = vmul.f32 %v5034, %v748
        %v5047 = vmul.f32 %v5037, %v743
        %v5048 = vmul.f32 %v5038, %v744
        %v5049 = vadd.f32 %v5045, %v5047
        %v5050 = vadd.f32 %v5046, %v5048
        %v5051 = vpack.c.bf16 %v5044, %v5043
        %v5052 = vpack.c.bf16 %v5050, %v5049
        %v5053 = vadd.f32 %v5043, %v5049
        %v5054 = vadd.f32 %v5044, %v5050
        %v5055 = vpack.c.bf16 %v5054, %v5053
        %5056 = vmatprep.subr.bf16.mxu0 0
        %5057 = vmatpush1.bf16.msra.mxu0 0
        %5058 = vmatprep.subr.bf16.mxu0 0
        %5059 = vmatpush1.bf16.msra.mxu0 0
        %5060 = vmatprep.subr.bf16.mxu0 0
        %5061 = vmatpush1.bf16.msra.mxu0 0
        %5062 = vmatprep.subr.bf16.mxu0 0
        %5063 = vmatpush1.bf16.msra.mxu0 0
        %5064 = vmatprep.subr.bf16.mxu0 0
        %5065 = vmatpush1.bf16.msra.mxu0 0
        %5066 = vmatprep.subr.bf16.mxu0 0
        %5067 = vmatpush1.bf16.msra.mxu0 0
        %5068 = vmatprep.subr.bf16.mxu0 0
        %5069 = vmatpush1.bf16.msra.mxu0 0
        %5070 = vmatprep.subr.bf16.mxu0 0
        %5071 = vmatpush1.bf16.msra.mxu0 %v5051
        %5072 = vmatprep.subr.bf16.mxu0 0
        %5073 = vmatpush2.bf16.msra.mxu0 0
        %5074 = vmatprep.subr.bf16.mxu0 0
        %5075 = vmatpush2.bf16.msra.mxu0 0
        %5076 = vmatprep.subr.bf16.mxu0 0
        %5077 = vmatpush2.bf16.msra.mxu0 0
        %5078 = vmatprep.subr.bf16.mxu0 0
        %5079 = vmatpush2.bf16.msra.mxu0 0
        %5080 = vmatprep.subr.bf16.mxu0 0
        %5081 = vmatpush2.bf16.msra.mxu0 0
        %5082 = vmatprep.subr.bf16.mxu0 0
        %5083 = vmatpush2.bf16.msra.mxu0 0
        %5084 = vmatprep.subr.bf16.mxu0 0
        %5085 = vmatpush2.bf16.msra.mxu0 0
        %5086 = vmatprep.subr.bf16.mxu0 0
        %5087 = vmatpush2.bf16.msra.mxu0 0
        %5088 = vmatprep.mubr.bf16.mxu0 0
        %5089 = vmatmul.mubr.bf16.gmra.mxu0 %v450
        %v5090 = vpop.f32.mrf.mxu0
        %v5091 = vadd.f32 0.0, %v5090
        %v5092 = vpop.f32.mrf.mxu0
        %v5093 = vpop.f32.mrf.mxu0
        %v5094 = vadd.f32 0.0, %v5093
        %v5095 = vpop.f32.mrf.mxu0
        %5096 = vdwg.mxu0
        %5097 = vmatprep.subr.bf16.mxu0 0
        %5098 = vmatpush1.bf16.msra.mxu0 0
        %5099 = vmatprep.subr.bf16.mxu0 0
        %5100 = vmatpush1.bf16.msra.mxu0 0
        %5101 = vmatprep.subr.bf16.mxu0 0
        %5102 = vmatpush1.bf16.msra.mxu0 0
        %5103 = vmatprep.subr.bf16.mxu0 0
        %5104 = vmatpush1.bf16.msra.mxu0 0
        %5105 = vmatprep.subr.bf16.mxu0 0
        %5106 = vmatpush1.bf16.msra.mxu0 0
        %5107 = vmatprep.subr.bf16.mxu0 0
        %5108 = vmatpush1.bf16.msra.mxu0 0
        %5109 = vmatprep.subr.bf16.mxu0 0
        %5110 = vmatpush1.bf16.msra.mxu0 0
        %5111 = vmatprep.subr.bf16.mxu0 0
        %5112 = vmatpush1.bf16.msra.mxu0 %v5052
        %5113 = vmatprep.subr.bf16.mxu0 0
        %5114 = vmatpush2.bf16.msra.mxu0 0
        %5115 = vmatprep.subr.bf16.mxu0 0
        %5116 = vmatpush2.bf16.msra.mxu0 0
        %5117 = vmatprep.subr.bf16.mxu0 0
        %5118 = vmatpush2.bf16.msra.mxu0 0
        %5119 = vmatprep.subr.bf16.mxu0 0
        %5120 = vmatpush2.bf16.msra.mxu0 0
        %5121 = vmatprep.subr.bf16.mxu0 0
        %5122 = vmatpush2.bf16.msra.mxu0 0
        %5123 = vmatprep.subr.bf16.mxu0 0
        %5124 = vmatpush2.bf16.msra.mxu0 0
        %5125 = vmatprep.subr.bf16.mxu0 0
        %5126 = vmatpush2.bf16.msra.mxu0 0
        %5127 = vmatprep.subr.bf16.mxu0 0
        %5128 = vmatpush2.bf16.msra.mxu0 0
        %5129 = vmatprep.mubr.bf16.mxu0 0
        %5130 = vmatmul.mubr.bf16.gmra.mxu0 %v499
        %v5131 = vpop.f32.mrf.mxu0
        %v5132 = vadd.f32 0.0, %v5131
        %v5133 = vpop.f32.mrf.mxu0
        %v5134 = vpop.f32.mrf.mxu0
        %v5135 = vadd.f32 0.0, %v5134
        %v5136 = vpop.f32.mrf.mxu0
        %5137 = vdwg.mxu0
        %5138 = vmatprep.subr.bf16.mxu0 0
        %5139 = vmatpush1.bf16.msra.mxu0 0
        %5140 = vmatprep.subr.bf16.mxu0 0
        %5141 = vmatpush1.bf16.msra.mxu0 0
        %5142 = vmatprep.subr.bf16.mxu0 0
        %5143 = vmatpush1.bf16.msra.mxu0 0
        %5144 = vmatprep.subr.bf16.mxu0 0
        %5145 = vmatpush1.bf16.msra.mxu0 0
        %5146 = vmatprep.subr.bf16.mxu0 0
        %5147 = vmatpush1.bf16.msra.mxu0 0
        %5148 = vmatprep.subr.bf16.mxu0 0
        %5149 = vmatpush1.bf16.msra.mxu0 0
        %5150 = vmatprep.subr.bf16.mxu0 0
        %5151 = vmatpush1.bf16.msra.mxu0 0
        %5152 = vmatprep.subr.bf16.mxu0 0
        %5153 = vmatpush1.bf16.msra.mxu0 %v5055
        %5154 = vmatprep.subr.bf16.mxu0 0
        %5155 = vmatpush2.bf16.msra.mxu0 0
        %5156 = vmatprep.subr.bf16.mxu0 0
        %5157 = vmatpush2.bf16.msra.mxu0 0
        %5158 = vmatprep.subr.bf16.mxu0 0
        %5159 = vmatpush2.bf16.msra.mxu0 0
        %5160 = vmatprep.subr.bf16.mxu0 0
        %5161 = vmatpush2.bf16.msra.mxu0 0
        %5162 = vmatprep.subr.bf16.mxu0 0
        %5163 = vmatpush2.bf16.msra.mxu0 0
        %5164 = vmatprep.subr.bf16.mxu0 0
        %5165 = vmatpush2.bf16.msra.mxu0 0
        %5166 = vmatprep.subr.bf16.mxu0 0
        %5167 = vmatpush2.bf16.msra.mxu0 0
        %5168 = vmatprep.subr.bf16.mxu0 0
        %5169 = vmatpush2.bf16.msra.mxu0 0
        %5170 = vmatprep.mubr.bf16.mxu0 0
        %5171 = vmatmul.mubr.bf16.gmra.mxu0 %v852
        %v5172 = vpop.f32.mrf.mxu0
        %v5173 = vadd.f32 0.0, %v5172
        %v5174 = vpop.f32.mrf.mxu0
        %v5175 = vpop.f32.mrf.mxu0
        %v5176 = vadd.f32 0.0, %v5175
        %v5177 = vpop.f32.mrf.mxu0
        %5178 = vdwg.mxu0
        %v5179 = vadd.f32 %v5091, %v5132
        %v5180 = vadd.f32 %v5094, %v5135
        %v5181 = vsub.f32 %v5173, %v5091
        %v5182 = vsub.f32 %v5176, %v5094
        %v5183 = vadd.f32 %v5181, %v5132
        %v5184 = vadd.f32 %v5182, %v5135
        %v5185 = vpack.c.bf16 %v5180, %v5179
        %v5186 = vpack.c.bf16 %v5184, %v5183
        %v5188 = vsel %vm448, %v5185, 0
        %5190 = vmatprep.subr.bf16.mxu0 0
        %5191 = vmatpush1.bf16.msra.mxu0 0
        %5192 = vmatprep.subr.bf16.mxu0 0
        %5193 = vmatpush1.bf16.msra.mxu0 0
        %5194 = vmatprep.subr.bf16.mxu0 0
        %5195 = vmatpush1.bf16.msra.mxu0 0
        %5196 = vmatprep.subr.bf16.mxu0 0
        %5197 = vmatpush1.bf16.msra.mxu0 0
        %5198 = vmatprep.subr.bf16.mxu0 0
        %5199 = vmatpush1.bf16.msra.mxu0 0
        %5200 = vmatprep.subr.bf16.mxu0 0
        %5201 = vmatpush1.bf16.msra.mxu0 0
        %5202 = vmatprep.subr.bf16.mxu0 0
        %5203 = vmatpush1.bf16.msra.mxu0 0
        %5204 = vmatprep.subr.bf16.mxu0 0
        %5205 = vmatpush1.bf16.msra.mxu0 %v447
        %5206 = vmatprep.subr.bf16.mxu0 0
        %5207 = vmatpush2.bf16.msra.mxu0 0
        %5208 = vmatprep.subr.bf16.mxu0 0
        %5209 = vmatpush2.bf16.msra.mxu0 0
        %5210 = vmatprep.subr.bf16.mxu0 0
        %5211 = vmatpush2.bf16.msra.mxu0 0
        %5212 = vmatprep.subr.bf16.mxu0 0
        %5213 = vmatpush2.bf16.msra.mxu0 0
        %5214 = vmatprep.subr.bf16.mxu0 0
        %5215 = vmatpush2.bf16.msra.mxu0 0
        %5216 = vmatprep.subr.bf16.mxu0 0
        %5217 = vmatpush2.bf16.msra.mxu0 0
        %5218 = vmatprep.subr.bf16.mxu0 0
        %5219 = vmatpush2.bf16.msra.mxu0 0
        %5220 = vmatprep.subr.bf16.mxu0 0
        %5221 = vmatpush2.bf16.msra.mxu0 0
        %5222 = vmatprep.mubr.bf16.mxu0 0
        %5223 = vmatmul.mubr.bf16.gmra.mxu0 %v5188
        %v5224 = vpop.f32.mrf.mxu0
        %v5225 = vadd.f32 0.0, %v5224
        %v5226 = vpop.f32.mrf.mxu0
        %v5227 = vpop.f32.mrf.mxu0
        %v5228 = vadd.f32 0.0, %v5227
        %v5229 = vpop.f32.mrf.mxu0
        %5230 = vdwg.mxu0
        %v5232 = vsel %vm448, %v5186, 0
        %5234 = vmatprep.subr.bf16.mxu0 0
        %5235 = vmatpush1.bf16.msra.mxu0 0
        %5236 = vmatprep.subr.bf16.mxu0 0
        %5237 = vmatpush1.bf16.msra.mxu0 0
        %5238 = vmatprep.subr.bf16.mxu0 0
        %5239 = vmatpush1.bf16.msra.mxu0 0
        %5240 = vmatprep.subr.bf16.mxu0 0
        %5241 = vmatpush1.bf16.msra.mxu0 0
        %5242 = vmatprep.subr.bf16.mxu0 0
        %5243 = vmatpush1.bf16.msra.mxu0 0
        %5244 = vmatprep.subr.bf16.mxu0 0
        %5245 = vmatpush1.bf16.msra.mxu0 0
        %5246 = vmatprep.subr.bf16.mxu0 0
        %5247 = vmatpush1.bf16.msra.mxu0 0
        %5248 = vmatprep.subr.bf16.mxu0 0
        %5249 = vmatpush1.bf16.msra.mxu0 %v497
        %5250 = vmatprep.subr.bf16.mxu0 0
        %5251 = vmatpush2.bf16.msra.mxu0 0
        %5252 = vmatprep.subr.bf16.mxu0 0
        %5253 = vmatpush2.bf16.msra.mxu0 0
        %5254 = vmatprep.subr.bf16.mxu0 0
        %5255 = vmatpush2.bf16.msra.mxu0 0
        %5256 = vmatprep.subr.bf16.mxu0 0
        %5257 = vmatpush2.bf16.msra.mxu0 0
        %5258 = vmatprep.subr.bf16.mxu0 0
        %5259 = vmatpush2.bf16.msra.mxu0 0
        %5260 = vmatprep.subr.bf16.mxu0 0
        %5261 = vmatpush2.bf16.msra.mxu0 0
        %5262 = vmatprep.subr.bf16.mxu0 0
        %5263 = vmatpush2.bf16.msra.mxu0 0
        %5264 = vmatprep.subr.bf16.mxu0 0
        %5265 = vmatpush2.bf16.msra.mxu0 0
        %5266 = vmatprep.mubr.bf16.mxu0 0
        %5267 = vmatmul.mubr.bf16.gmra.mxu0 %v5232
        %v5268 = vpop.f32.mrf.mxu0
        %v5269 = vadd.f32 0.0, %v5268
        %v5270 = vpop.f32.mrf.mxu0
        %v5271 = vpop.f32.mrf.mxu0
        %v5272 = vadd.f32 0.0, %v5271
        %v5273 = vpop.f32.mrf.mxu0
        %5274 = vdwg.mxu0
        %v5275 = vsub.f32 %v5179, %v5183
        %v5276 = vsub.f32 %v5180, %v5184
        %v5277 = vpack.c.bf16 %v5276, %v5275
        %v5279 = vsel %vm448, %v5277, 0
        %5281 = vmatprep.subr.bf16.mxu0 0
        %5282 = vmatpush1.bf16.msra.mxu0 0
        %5283 = vmatprep.subr.bf16.mxu0 0
        %5284 = vmatpush1.bf16.msra.mxu0 0
        %5285 = vmatprep.subr.bf16.mxu0 0
        %5286 = vmatpush1.bf16.msra.mxu0 0
        %5287 = vmatprep.subr.bf16.mxu0 0
        %5288 = vmatpush1.bf16.msra.mxu0 0
        %5289 = vmatprep.subr.bf16.mxu0 0
        %5290 = vmatpush1.bf16.msra.mxu0 0
        %5291 = vmatprep.subr.bf16.mxu0 0
        %5292 = vmatpush1.bf16.msra.mxu0 0
        %5293 = vmatprep.subr.bf16.mxu0 0
        %5294 = vmatpush1.bf16.msra.mxu0 0
        %5295 = vmatprep.subr.bf16.mxu0 0
        %5296 = vmatpush1.bf16.msra.mxu0 %v546
        %5297 = vmatprep.subr.bf16.mxu0 0
        %5298 = vmatpush2.bf16.msra.mxu0 0
        %5299 = vmatprep.subr.bf16.mxu0 0
        %5300 = vmatpush2.bf16.msra.mxu0 0
        %5301 = vmatprep.subr.bf16.mxu0 0
        %5302 = vmatpush2.bf16.msra.mxu0 0
        %5303 = vmatprep.subr.bf16.mxu0 0
        %5304 = vmatpush2.bf16.msra.mxu0 0
        %5305 = vmatprep.subr.bf16.mxu0 0
        %5306 = vmatpush2.bf16.msra.mxu0 0
        %5307 = vmatprep.subr.bf16.mxu0 0
        %5308 = vmatpush2.bf16.msra.mxu0 0
        %5309 = vmatprep.subr.bf16.mxu0 0
        %5310 = vmatpush2.bf16.msra.mxu0 0
        %5311 = vmatprep.subr.bf16.mxu0 0
        %5312 = vmatpush2.bf16.msra.mxu0 0
        %5313 = vmatprep.mubr.bf16.mxu0 0
        %5314 = vmatmul.mubr.bf16.gmra.mxu0 %v5279
        %v5315 = vpop.f32.mrf.mxu0
        %v5316 = vadd.f32 0.0, %v5315
        %v5317 = vpop.f32.mrf.mxu0
        %v5318 = vpop.f32.mrf.mxu0
        %v5319 = vadd.f32 0.0, %v5318
        %v5320 = vpop.f32.mrf.mxu0
        %5321 = vdwg.mxu0
        %v5322 = vadd.f32 %v5225, %v5269
        %v5323 = vadd.f32 %v5228, %v5272
        %v5324 = vsub.f32 %v5225, %v5269
        %v5325 = vsub.f32 %v5228, %v5272
        %v5326 = vsub.f32 %v5324, %v5316
        %v5327 = vsub.f32 %v5325, %v5319
        %5328 = vst.msk [vmem:[#allocation2] sm:$0xff] %vm448, %v5322
        %5329 = vst.msk [vmem:[#allocation2 + $0x8] sm:$0xff] %vm448, %v5323
        %5330 = vst.msk [vmem:[#allocation3] sm:$0xff] %vm448, %v5326
        %5331 = vst.msk [vmem:[#allocation3 + $0x8] sm:$0xff] %vm448, %v5327
        // Predicated region
        $region53: #{drnn_forward.1} parent=47 // pred_check
          %p5332 = pneg %p359
        $region54: #{drnn_forward.1} parent=47 // pred_check_branch
          %5334 = sbr.rel (%p5332) target = $region56
        $region55: #{drnn_forward.1} parent=47 // pred_region
          %s5335 = scalar_lea.vmem %s2, 16
          %v5336 = vld [vmem:[%s5335] sm:$0xf]
          %v5337 = vld [vmem:[%s5335 + $0x4] sm:$0xf]
          %s5338 = scalar_lea.vmem %s3, 16
          %v5339 = vld [vmem:[%s5338] sm:$0xf]
          %v5340 = vld [vmem:[%s5338 + $0x4] sm:$0xf]
          %v5341 = vunpack.c.l.bf16 %v5336
          %v5342 = vunpack.c.l.bf16 %v5337
          %v5343 = vmul.f32 %v5322, %v5341
          %v5344 = vmul.f32 %v5323, %v5342
          %v5345 = vunpack.c.l.bf16 %v5339
          %v5346 = vunpack.c.l.bf16 %v5340
          %v5347 = vmul.f32 %v5326, %v5345
          %v5348 = vmul.f32 %v5327, %v5346
          %v5349 = vsub.f32 %v5343, %v5347
          %v5350 = vsub.f32 %v5344, %v5348
          %v5351 = vmul.f32 %v5322, %v5345
          %v5352 = vmul.f32 %v5323, %v5346
          %v5353 = vmul.f32 %v5326, %v5341
          %v5354 = vmul.f32 %v5327, %v5342
          %v5355 = vadd.f32 %v5351, %v5353
          %v5356 = vadd.f32 %v5352, %v5354
          %s5357 = scalar_lea.vmem %s5, 8
          %v5358 = vld [vmem:[%s5357] sm:$0xf]
          %v5359 = vld [vmem:[%s5357 + $0x4] sm:$0xf]
          %s5360 = scalar_lea.vmem %s6, 8
          %v5361 = vld [vmem:[%s5360] sm:$0xf]
          %v5362 = vld [vmem:[%s5360 + $0x4] sm:$0xf]
          %v5363 = vpack.c.bf16 %v5350, %v5349
          %v5364 = vpack.c.bf16 %v5356, %v5355
          %v5365 = vadd.f32 %v5349, %v5355
          %v5366 = vadd.f32 %v5350, %v5356
          %v5367 = vpack.c.bf16 %v5366, %v5365
          %5368 = vmatprep.subr.bf16.mxu0 0
          %5369 = vmatpush1.bf16.msra.mxu0 0
          %5370 = vmatprep.subr.bf16.mxu0 0
          %5371 = vmatpush1.bf16.msra.mxu0 0
          %5372 = vmatprep.subr.bf16.mxu0 0
          %5373 = vmatpush1.bf16.msra.mxu0 0
          %5374 = vmatprep.subr.bf16.mxu0 0
          %5375 = vmatpush1.bf16.msra.mxu0 0
          %5376 = vmatprep.subr.bf16.mxu0 0
          %5377 = vmatpush1.bf16.msra.mxu0 0
          %5378 = vmatprep.subr.bf16.mxu0 0
          %5379 = vmatpush1.bf16.msra.mxu0 0
          %5380 = vmatprep.subr.bf16.mxu0 0
          %5381 = vmatpush1.bf16.msra.mxu0 0
          %5382 = vmatprep.subr.bf16.mxu0 0
          %5383 = vmatpush1.bf16.msra.mxu0 %v5363
          %5384 = vmatprep.subr.bf16.mxu0 0
          %5385 = vmatpush2.bf16.msra.mxu0 0
          %5386 = vmatprep.subr.bf16.mxu0 0
          %5387 = vmatpush2.bf16.msra.mxu0 0
          %5388 = vmatprep.subr.bf16.mxu0 0
          %5389 = vmatpush2.bf16.msra.mxu0 0
          %5390 = vmatprep.subr.bf16.mxu0 0
          %5391 = vmatpush2.bf16.msra.mxu0 0
          %5392 = vmatprep.subr.bf16.mxu0 0
          %5393 = vmatpush2.bf16.msra.mxu0 0
          %5394 = vmatprep.subr.bf16.mxu0 0
          %5395 = vmatpush2.bf16.msra.mxu0 0
          %5396 = vmatprep.subr.bf16.mxu0 0
          %5397 = vmatpush2.bf16.msra.mxu0 0
          %5398 = vmatprep.subr.bf16.mxu0 0
          %5399 = vmatpush2.bf16.msra.mxu0 0
          %5400 = vmatprep.mubr.bf16.mxu0 0
          %5401 = vmatmul.mubr.bf16.gmra.mxu0 %v450
          %v5402 = vpop.f32.mrf.mxu0
          %v5403 = vadd.f32 0.0, %v5402
          %v5404 = vpop.f32.mrf.mxu0
          %v5405 = vpop.f32.mrf.mxu0
          %v5406 = vadd.f32 0.0, %v5405
          %v5407 = vpop.f32.mrf.mxu0
          %5408 = vdwg.mxu0
          %5409 = vmatprep.subr.bf16.mxu0 0
          %5410 = vmatpush1.bf16.msra.mxu0 0
          %5411 = vmatprep.subr.bf16.mxu0 0
          %5412 = vmatpush1.bf16.msra.mxu0 0
          %5413 = vmatprep.subr.bf16.mxu0 0
          %5414 = vmatpush1.bf16.msra.mxu0 0
          %5415 = vmatprep.subr.bf16.mxu0 0
          %5416 = vmatpush1.bf16.msra.mxu0 0
          %5417 = vmatprep.subr.bf16.mxu0 0
          %5418 = vmatpush1.bf16.msra.mxu0 0
          %5419 = vmatprep.subr.bf16.mxu0 0
          %5420 = vmatpush1.bf16.msra.mxu0 0
          %5421 = vmatprep.subr.bf16.mxu0 0
          %5422 = vmatpush1.bf16.msra.mxu0 0
          %5423 = vmatprep.subr.bf16.mxu0 0
          %5424 = vmatpush1.bf16.msra.mxu0 %v5364
          %5425 = vmatprep.subr.bf16.mxu0 0
          %5426 = vmatpush2.bf16.msra.mxu0 0
          %5427 = vmatprep.subr.bf16.mxu0 0
          %5428 = vmatpush2.bf16.msra.mxu0 0
          %5429 = vmatprep.subr.bf16.mxu0 0
          %5430 = vmatpush2.bf16.msra.mxu0 0
          %5431 = vmatprep.subr.bf16.mxu0 0
          %5432 = vmatpush2.bf16.msra.mxu0 0
          %5433 = vmatprep.subr.bf16.mxu0 0
          %5434 = vmatpush2.bf16.msra.mxu0 0
          %5435 = vmatprep.subr.bf16.mxu0 0
          %5436 = vmatpush2.bf16.msra.mxu0 0
          %5437 = vmatprep.subr.bf16.mxu0 0
          %5438 = vmatpush2.bf16.msra.mxu0 0
          %5439 = vmatprep.subr.bf16.mxu0 0
          %5440 = vmatpush2.bf16.msra.mxu0 0
          %5441 = vmatprep.mubr.bf16.mxu0 0
          %5442 = vmatmul.mubr.bf16.gmra.mxu0 %v499
          %v5443 = vpop.f32.mrf.mxu0
          %v5444 = vadd.f32 0.0, %v5443
          %v5445 = vpop.f32.mrf.mxu0
          %v5446 = vpop.f32.mrf.mxu0
          %v5447 = vadd.f32 0.0, %v5446
          %v5448 = vpop.f32.mrf.mxu0
          %5449 = vdwg.mxu0
          %5450 = vmatprep.subr.bf16.mxu0 0
          %5451 = vmatpush1.bf16.msra.mxu0 0
          %5452 = vmatprep.subr.bf16.mxu0 0
          %5453 = vmatpush1.bf16.msra.mxu0 0
          %5454 = vmatprep.subr.bf16.mxu0 0
          %5455 = vmatpush1.bf16.msra.mxu0 0
          %5456 = vmatprep.subr.bf16.mxu0 0
          %5457 = vmatpush1.bf16.msra.mxu0 0
          %5458 = vmatprep.subr.bf16.mxu0 0
          %5459 = vmatpush1.bf16.msra.mxu0 0
          %5460 = vmatprep.subr.bf16.mxu0 0
          %5461 = vmatpush1.bf16.msra.mxu0 0
          %5462 = vmatprep.subr.bf16.mxu0 0
          %5463 = vmatpush1.bf16.msra.mxu0 0
          %5464 = vmatprep.subr.bf16.mxu0 0
          %5465 = vmatpush1.bf16.msra.mxu0 %v5367
          %5466 = vmatprep.subr.bf16.mxu0 0
          %5467 = vmatpush2.bf16.msra.mxu0 0
          %5468 = vmatprep.subr.bf16.mxu0 0
          %5469 = vmatpush2.bf16.msra.mxu0 0
          %5470 = vmatprep.subr.bf16.mxu0 0
          %5471 = vmatpush2.bf16.msra.mxu0 0
          %5472 = vmatprep.subr.bf16.mxu0 0
          %5473 = vmatpush2.bf16.msra.mxu0 0
          %5474 = vmatprep.subr.bf16.mxu0 0
          %5475 = vmatpush2.bf16.msra.mxu0 0
          %5476 = vmatprep.subr.bf16.mxu0 0
          %5477 = vmatpush2.bf16.msra.mxu0 0
          %5478 = vmatprep.subr.bf16.mxu0 0
          %5479 = vmatpush2.bf16.msra.mxu0 0
          %5480 = vmatprep.subr.bf16.mxu0 0
          %5481 = vmatpush2.bf16.msra.mxu0 0
          %5482 = vmatprep.mubr.bf16.mxu0 0
          %5483 = vmatmul.mubr.bf16.gmra.mxu0 %v548
          %v5484 = vpop.f32.mrf.mxu0
          %v5485 = vadd.f32 0.0, %v5484
          %v5486 = vpop.f32.mrf.mxu0
          %v5487 = vpop.f32.mrf.mxu0
          %v5488 = vadd.f32 0.0, %v5487
          %v5489 = vpop.f32.mrf.mxu0
          %5490 = vdwg.mxu0
          %v5491 = vsub.f32 %v5403, %v5444
          %v5492 = vsub.f32 %v5406, %v5447
          %v5493 = vsub.f32 %v5485, %v5403
          %v5494 = vsub.f32 %v5488, %v5406
          %v5495 = vsub.f32 %v5493, %v5444
          %v5496 = vsub.f32 %v5494, %v5447
          %v5497 = vpack.c.bf16 %v5492, %v5491
          %v5498 = vpack.c.bf16 %v5496, %v5495
          %v5500 = vsel %vm448, %v5497, 0
          %5502 = vmatprep.subr.bf16.mxu0 0
          %5503 = vmatpush1.bf16.msra.mxu0 0
          %5504 = vmatprep.subr.bf16.mxu0 0
          %5505 = vmatpush1.bf16.msra.mxu0 0
          %5506 = vmatprep.subr.bf16.mxu0 0
          %5507 = vmatpush1.bf16.msra.mxu0 0
          %5508 = vmatprep.subr.bf16.mxu0 0
          %5509 = vmatpush1.bf16.msra.mxu0 0
          %5510 = vmatprep.subr.bf16.mxu0 0
          %5511 = vmatpush1.bf16.msra.mxu0 0
          %5512 = vmatprep.subr.bf16.mxu0 0
          %5513 = vmatpush1.bf16.msra.mxu0 0
          %5514 = vmatprep.subr.bf16.mxu0 0
          %5515 = vmatpush1.bf16.msra.mxu0 0
          %5516 = vmatprep.subr.bf16.mxu0 0
          %5517 = vmatpush1.bf16.msra.mxu0 %v447
          %5518 = vmatprep.subr.bf16.mxu0 0
          %5519 = vmatpush2.bf16.msra.mxu0 0
          %5520 = vmatprep.subr.bf16.mxu0 0
          %5521 = vmatpush2.bf16.msra.mxu0 0
          %5522 = vmatprep.subr.bf16.mxu0 0
          %5523 = vmatpush2.bf16.msra.mxu0 0
          %5524 = vmatprep.subr.bf16.mxu0 0
          %5525 = vmatpush2.bf16.msra.mxu0 0
          %5526 = vmatprep.subr.bf16.mxu0 0
          %5527 = vmatpush2.bf16.msra.mxu0 0
          %5528 = vmatprep.subr.bf16.mxu0 0
          %5529 = vmatpush2.bf16.msra.mxu0 0
          %5530 = vmatprep.subr.bf16.mxu0 0
          %5531 = vmatpush2.bf16.msra.mxu0 0
          %5532 = vmatprep.subr.bf16.mxu0 0
          %5533 = vmatpush2.bf16.msra.mxu0 0
          %5534 = vmatprep.mubr.bf16.mxu0 0
          %5535 = vmatmul.mubr.bf16.gmra.mxu0 %v5500
          %v5536 = vpop.f32.mrf.mxu0
          %v5537 = vadd.f32 0.0, %v5536
          %v5538 = vpop.f32.mrf.mxu0
          %v5539 = vpop.f32.mrf.mxu0
          %v5540 = vadd.f32 0.0, %v5539
          %v5541 = vpop.f32.mrf.mxu0
          %5542 = vdwg.mxu0
          %v5544 = vsel %vm448, %v5498, 0
          %5546 = vmatprep.subr.bf16.mxu0 0
          %5547 = vmatpush1.bf16.msra.mxu0 0
          %5548 = vmatprep.subr.bf16.mxu0 0
          %5549 = vmatpush1.bf16.msra.mxu0 0
          %5550 = vmatprep.subr.bf16.mxu0 0
          %5551 = vmatpush1.bf16.msra.mxu0 0
          %5552 = vmatprep.subr.bf16.mxu0 0
          %5553 = vmatpush1.bf16.msra.mxu0 0
          %5554 = vmatprep.subr.bf16.mxu0 0
          %5555 = vmatpush1.bf16.msra.mxu0 0
          %5556 = vmatprep.subr.bf16.mxu0 0
          %5557 = vmatpush1.bf16.msra.mxu0 0
          %5558 = vmatprep.subr.bf16.mxu0 0
          %5559 = vmatpush1.bf16.msra.mxu0 0
          %5560 = vmatprep.subr.bf16.mxu0 0
          %5561 = vmatpush1.bf16.msra.mxu0 %v497
          %5562 = vmatprep.subr.bf16.mxu0 0
          %5563 = vmatpush2.bf16.msra.mxu0 0
          %5564 = vmatprep.subr.bf16.mxu0 0
          %5565 = vmatpush2.bf16.msra.mxu0 0
          %5566 = vmatprep.subr.bf16.mxu0 0
          %5567 = vmatpush2.bf16.msra.mxu0 0
          %5568 = vmatprep.subr.bf16.mxu0 0
          %5569 = vmatpush2.bf16.msra.mxu0 0
          %5570 = vmatprep.subr.bf16.mxu0 0
          %5571 = vmatpush2.bf16.msra.mxu0 0
          %5572 = vmatprep.subr.bf16.mxu0 0
          %5573 = vmatpush2.bf16.msra.mxu0 0
          %5574 = vmatprep.subr.bf16.mxu0 0
          %5575 = vmatpush2.bf16.msra.mxu0 0
          %5576 = vmatprep.subr.bf16.mxu0 0
          %5577 = vmatpush2.bf16.msra.mxu0 0
          %5578 = vmatprep.mubr.bf16.mxu0 0
          %5579 = vmatmul.mubr.bf16.gmra.mxu0 %v5544
          %v5580 = vpop.f32.mrf.mxu0
          %v5581 = vadd.f32 0.0, %v5580
          %v5582 = vpop.f32.mrf.mxu0
          %v5583 = vpop.f32.mrf.mxu0
          %v5584 = vadd.f32 0.0, %v5583
          %v5585 = vpop.f32.mrf.mxu0
          %5586 = vdwg.mxu0
          %v5587 = vadd.f32 %v5491, %v5495
          %v5588 = vadd.f32 %v5492, %v5496
          %v5589 = vpack.c.bf16 %v5588, %v5587
          %v5591 = vsel %vm448, %v5589, 0
          %5593 = vmatprep.subr.bf16.mxu0 0
          %5594 = vmatpush1.bf16.msra.mxu0 0
          %5595 = vmatprep.subr.bf16.mxu0 0
          %5596 = vmatpush1.bf16.msra.mxu0 0
          %5597 = vmatprep.subr.bf16.mxu0 0
          %5598 = vmatpush1.bf16.msra.mxu0 0
          %5599 = vmatprep.subr.bf16.mxu0 0
          %5600 = vmatpush1.bf16.msra.mxu0 0
          %5601 = vmatprep.subr.bf16.mxu0 0
          %5602 = vmatpush1.bf16.msra.mxu0 0
          %5603 = vmatprep.subr.bf16.mxu0 0
          %5604 = vmatpush1.bf16.msra.mxu0 0
          %5605 = vmatprep.subr.bf16.mxu0 0
          %5606 = vmatpush1.bf16.msra.mxu0 0
          %5607 = vmatprep.subr.bf16.mxu0 0
          %5608 = vmatpush1.bf16.msra.mxu0 %v546
          %5609 = vmatprep.subr.bf16.mxu0 0
          %5610 = vmatpush2.bf16.msra.mxu0 0
          %5611 = vmatprep.subr.bf16.mxu0 0
          %5612 = vmatpush2.bf16.msra.mxu0 0
          %5613 = vmatprep.subr.bf16.mxu0 0
          %5614 = vmatpush2.bf16.msra.mxu0 0
          %5615 = vmatprep.subr.bf16.mxu0 0
          %5616 = vmatpush2.bf16.msra.mxu0 0
          %5617 = vmatprep.subr.bf16.mxu0 0
          %5618 = vmatpush2.bf16.msra.mxu0 0
          %5619 = vmatprep.subr.bf16.mxu0 0
          %5620 = vmatpush2.bf16.msra.mxu0 0
          %5621 = vmatprep.subr.bf16.mxu0 0
          %5622 = vmatpush2.bf16.msra.mxu0 0
          %5623 = vmatprep.subr.bf16.mxu0 0
          %5624 = vmatpush2.bf16.msra.mxu0 0
          %5625 = vmatprep.mubr.bf16.mxu0 0
          %5626 = vmatmul.mubr.bf16.gmra.mxu0 %v5591
          %v5627 = vpop.f32.mrf.mxu0
          %v5628 = vadd.f32 0.0, %v5627
          %v5629 = vpop.f32.mrf.mxu0
          %v5630 = vpop.f32.mrf.mxu0
          %v5631 = vadd.f32 0.0, %v5630
          %v5632 = vpop.f32.mrf.mxu0
          %5633 = vdwg.mxu0
          %v5634 = vsub.f32 %v5537, %v5581
          %v5635 = vsub.f32 %v5540, %v5584
          %v5636 = vsub.f32 %v5628, %v5537
          %v5637 = vsub.f32 %v5631, %v5540
          %v5638 = vsub.f32 %v5636, %v5581
          %v5639 = vsub.f32 %v5637, %v5584
          %v5640 = vunpack.c.l.bf16 %v5358
          %v5641 = vunpack.c.l.bf16 %v5359
          %v5642 = vmul.f32 %v5634, %v5640
          %v5643 = vmul.f32 %v5635, %v5641
          %v5644 = vunpack.c.l.bf16 %v5361
          %v5645 = vunpack.c.l.bf16 %v5362
          %v5646 = vmul.f32 %v5638, %v5644
          %v5647 = vmul.f32 %v5639, %v5645
          %v5648 = vsub.f32 %v5642, %v5646
          %v5649 = vsub.f32 %v5643, %v5647
          %v5650 = vmul.f32 %v5634, %v5644
          %v5651 = vmul.f32 %v5635, %v5645
          %v5652 = vmul.f32 %v5638, %v5640
          %v5653 = vmul.f32 %v5639, %v5641
          %v5654 = vadd.f32 %v5650, %v5652
          %v5655 = vadd.f32 %v5651, %v5653
          %v5656 = vpack.c.bf16 %v5649, %v5648
          %v5657 = vpack.c.bf16 %v5655, %v5654
          %v5658 = vadd.f32 %v5648, %v5654
          %v5659 = vadd.f32 %v5649, %v5655
          %v5660 = vpack.c.bf16 %v5659, %v5658
          %5661 = vmatprep.subr.bf16.mxu0 0
          %5662 = vmatpush1.bf16.msra.mxu0 0
          %5663 = vmatprep.subr.bf16.mxu0 0
          %5664 = vmatpush1.bf16.msra.mxu0 0
          %5665 = vmatprep.subr.bf16.mxu0 0
          %5666 = vmatpush1.bf16.msra.mxu0 0
          %5667 = vmatprep.subr.bf16.mxu0 0
          %5668 = vmatpush1.bf16.msra.mxu0 0
          %5669 = vmatprep.subr.bf16.mxu0 0
          %5670 = vmatpush1.bf16.msra.mxu0 0
          %5671 = vmatprep.subr.bf16.mxu0 0
          %5672 = vmatpush1.bf16.msra.mxu0 0
          %5673 = vmatprep.subr.bf16.mxu0 0
          %5674 = vmatpush1.bf16.msra.mxu0 0
          %5675 = vmatprep.subr.bf16.mxu0 0
          %5676 = vmatpush1.bf16.msra.mxu0 %v5656
          %5677 = vmatprep.subr.bf16.mxu0 0
          %5678 = vmatpush2.bf16.msra.mxu0 0
          %5679 = vmatprep.subr.bf16.mxu0 0
          %5680 = vmatpush2.bf16.msra.mxu0 0
          %5681 = vmatprep.subr.bf16.mxu0 0
          %5682 = vmatpush2.bf16.msra.mxu0 0
          %5683 = vmatprep.subr.bf16.mxu0 0
          %5684 = vmatpush2.bf16.msra.mxu0 0
          %5685 = vmatprep.subr.bf16.mxu0 0
          %5686 = vmatpush2.bf16.msra.mxu0 0
          %5687 = vmatprep.subr.bf16.mxu0 0
          %5688 = vmatpush2.bf16.msra.mxu0 0
          %5689 = vmatprep.subr.bf16.mxu0 0
          %5690 = vmatpush2.bf16.msra.mxu0 0
          %5691 = vmatprep.subr.bf16.mxu0 0
          %5692 = vmatpush2.bf16.msra.mxu0 0
          %5693 = vmatprep.mubr.bf16.mxu0 0
          %5694 = vmatmul.mubr.bf16.gmra.mxu0 %v450
          %v5695 = vpop.f32.mrf.mxu0
          %v5696 = vadd.f32 0.0, %v5695
          %v5697 = vpop.f32.mrf.mxu0
          %v5698 = vpop.f32.mrf.mxu0
          %v5699 = vadd.f32 0.0, %v5698
          %v5700 = vpop.f32.mrf.mxu0
          %5701 = vdwg.mxu0
          %5702 = vmatprep.subr.bf16.mxu0 0
          %5703 = vmatpush1.bf16.msra.mxu0 0
          %5704 = vmatprep.subr.bf16.mxu0 0
          %5705 = vmatpush1.bf16.msra.mxu0 0
          %5706 = vmatprep.subr.bf16.mxu0 0
          %5707 = vmatpush1.bf16.msra.mxu0 0
          %5708 = vmatprep.subr.bf16.mxu0 0
          %5709 = vmatpush1.bf16.msra.mxu0 0
          %5710 = vmatprep.subr.bf16.mxu0 0
          %5711 = vmatpush1.bf16.msra.mxu0 0
          %5712 = vmatprep.subr.bf16.mxu0 0
          %5713 = vmatpush1.bf16.msra.mxu0 0
          %5714 = vmatprep.subr.bf16.mxu0 0
          %5715 = vmatpush1.bf16.msra.mxu0 0
          %5716 = vmatprep.subr.bf16.mxu0 0
          %5717 = vmatpush1.bf16.msra.mxu0 %v5657
          %5718 = vmatprep.subr.bf16.mxu0 0
          %5719 = vmatpush2.bf16.msra.mxu0 0
          %5720 = vmatprep.subr.bf16.mxu0 0
          %5721 = vmatpush2.bf16.msra.mxu0 0
          %5722 = vmatprep.subr.bf16.mxu0 0
          %5723 = vmatpush2.bf16.msra.mxu0 0
          %5724 = vmatprep.subr.bf16.mxu0 0
          %5725 = vmatpush2.bf16.msra.mxu0 0
          %5726 = vmatprep.subr.bf16.mxu0 0
          %5727 = vmatpush2.bf16.msra.mxu0 0
          %5728 = vmatprep.subr.bf16.mxu0 0
          %5729 = vmatpush2.bf16.msra.mxu0 0
          %5730 = vmatprep.subr.bf16.mxu0 0
          %5731 = vmatpush2.bf16.msra.mxu0 0
          %5732 = vmatprep.subr.bf16.mxu0 0
          %5733 = vmatpush2.bf16.msra.mxu0 0
          %5734 = vmatprep.mubr.bf16.mxu0 0
          %5735 = vmatmul.mubr.bf16.gmra.mxu0 %v499
          %v5736 = vpop.f32.mrf.mxu0
          %v5737 = vadd.f32 0.0, %v5736
          %v5738 = vpop.f32.mrf.mxu0
          %v5739 = vpop.f32.mrf.mxu0
          %v5740 = vadd.f32 0.0, %v5739
          %v5741 = vpop.f32.mrf.mxu0
          %5742 = vdwg.mxu0
          %5743 = vmatprep.subr.bf16.mxu0 0
          %5744 = vmatpush1.bf16.msra.mxu0 0
          %5745 = vmatprep.subr.bf16.mxu0 0
          %5746 = vmatpush1.bf16.msra.mxu0 0
          %5747 = vmatprep.subr.bf16.mxu0 0
          %5748 = vmatpush1.bf16.msra.mxu0 0
          %5749 = vmatprep.subr.bf16.mxu0 0
          %5750 = vmatpush1.bf16.msra.mxu0 0
          %5751 = vmatprep.subr.bf16.mxu0 0
          %5752 = vmatpush1.bf16.msra.mxu0 0
          %5753 = vmatprep.subr.bf16.mxu0 0
          %5754 = vmatpush1.bf16.msra.mxu0 0
          %5755 = vmatprep.subr.bf16.mxu0 0
          %5756 = vmatpush1.bf16.msra.mxu0 0
          %5757 = vmatprep.subr.bf16.mxu0 0
          %5758 = vmatpush1.bf16.msra.mxu0 %v5660
          %5759 = vmatprep.subr.bf16.mxu0 0
          %5760 = vmatpush2.bf16.msra.mxu0 0
          %5761 = vmatprep.subr.bf16.mxu0 0
          %5762 = vmatpush2.bf16.msra.mxu0 0
          %5763 = vmatprep.subr.bf16.mxu0 0
          %5764 = vmatpush2.bf16.msra.mxu0 0
          %5765 = vmatprep.subr.bf16.mxu0 0
          %5766 = vmatpush2.bf16.msra.mxu0 0
          %5767 = vmatprep.subr.bf16.mxu0 0
          %5768 = vmatpush2.bf16.msra.mxu0 0
          %5769 = vmatprep.subr.bf16.mxu0 0
          %5770 = vmatpush2.bf16.msra.mxu0 0
          %5771 = vmatprep.subr.bf16.mxu0 0
          %5772 = vmatpush2.bf16.msra.mxu0 0
          %5773 = vmatprep.subr.bf16.mxu0 0
          %5774 = vmatpush2.bf16.msra.mxu0 0
          %5775 = vmatprep.mubr.bf16.mxu0 0
          %5776 = vmatmul.mubr.bf16.gmra.mxu0 %v852
          %v5777 = vpop.f32.mrf.mxu0
          %v5778 = vadd.f32 0.0, %v5777
          %v5779 = vpop.f32.mrf.mxu0
          %v5780 = vpop.f32.mrf.mxu0
          %v5781 = vadd.f32 0.0, %v5780
          %v5782 = vpop.f32.mrf.mxu0
          %5783 = vdwg.mxu0
          %v5784 = vadd.f32 %v5696, %v5737
          %v5785 = vadd.f32 %v5699, %v5740
          %v5786 = vsub.f32 %v5778, %v5696
          %v5787 = vsub.f32 %v5781, %v5699
          %v5788 = vadd.f32 %v5786, %v5737
          %v5789 = vadd.f32 %v5787, %v5740
          %v5790 = vpack.c.bf16 %v5785, %v5784
          %v5791 = vpack.c.bf16 %v5789, %v5788
          %v5793 = vsel %vm448, %v5790, 0
          %5795 = vmatprep.subr.bf16.mxu0 0
          %5796 = vmatpush1.bf16.msra.mxu0 0
          %5797 = vmatprep.subr.bf16.mxu0 0
          %5798 = vmatpush1.bf16.msra.mxu0 0
          %5799 = vmatprep.subr.bf16.mxu0 0
          %5800 = vmatpush1.bf16.msra.mxu0 0
          %5801 = vmatprep.subr.bf16.mxu0 0
          %5802 = vmatpush1.bf16.msra.mxu0 0
          %5803 = vmatprep.subr.bf16.mxu0 0
          %5804 = vmatpush1.bf16.msra.mxu0 0
          %5805 = vmatprep.subr.bf16.mxu0 0
          %5806 = vmatpush1.bf16.msra.mxu0 0
          %5807 = vmatprep.subr.bf16.mxu0 0
          %5808 = vmatpush1.bf16.msra.mxu0 0
          %5809 = vmatprep.subr.bf16.mxu0 0
          %5810 = vmatpush1.bf16.msra.mxu0 %v447
          %5811 = vmatprep.subr.bf16.mxu0 0
          %5812 = vmatpush2.bf16.msra.mxu0 0
          %5813 = vmatprep.subr.bf16.mxu0 0
          %5814 = vmatpush2.bf16.msra.mxu0 0
          %5815 = vmatprep.subr.bf16.mxu0 0
          %5816 = vmatpush2.bf16.msra.mxu0 0
          %5817 = vmatprep.subr.bf16.mxu0 0
          %5818 = vmatpush2.bf16.msra.mxu0 0
          %5819 = vmatprep.subr.bf16.mxu0 0
          %5820 = vmatpush2.bf16.msra.mxu0 0
          %5821 = vmatprep.subr.bf16.mxu0 0
          %5822 = vmatpush2.bf16.msra.mxu0 0
          %5823 = vmatprep.subr.bf16.mxu0 0
          %5824 = vmatpush2.bf16.msra.mxu0 0
          %5825 = vmatprep.subr.bf16.mxu0 0
          %5826 = vmatpush2.bf16.msra.mxu0 0
          %5827 = vmatprep.mubr.bf16.mxu0 0
          %5828 = vmatmul.mubr.bf16.gmra.mxu0 %v5793
          %v5829 = vpop.f32.mrf.mxu0
          %v5830 = vadd.f32 0.0, %v5829
          %v5831 = vpop.f32.mrf.mxu0
          %v5832 = vpop.f32.mrf.mxu0
          %v5833 = vadd.f32 0.0, %v5832
          %v5834 = vpop.f32.mrf.mxu0
          %5835 = vdwg.mxu0
          %v5837 = vsel %vm448, %v5791, 0
          %5839 = vmatprep.subr.bf16.mxu0 0
          %5840 = vmatpush1.bf16.msra.mxu0 0
          %5841 = vmatprep.subr.bf16.mxu0 0
          %5842 = vmatpush1.bf16.msra.mxu0 0
          %5843 = vmatprep.subr.bf16.mxu0 0
          %5844 = vmatpush1.bf16.msra.mxu0 0
          %5845 = vmatprep.subr.bf16.mxu0 0
          %5846 = vmatpush1.bf16.msra.mxu0 0
          %5847 = vmatprep.subr.bf16.mxu0 0
          %5848 = vmatpush1.bf16.msra.mxu0 0
          %5849 = vmatprep.subr.bf16.mxu0 0
          %5850 = vmatpush1.bf16.msra.mxu0 0
          %5851 = vmatprep.subr.bf16.mxu0 0
          %5852 = vmatpush1.bf16.msra.mxu0 0
          %5853 = vmatprep.subr.bf16.mxu0 0
          %5854 = vmatpush1.bf16.msra.mxu0 %v497
          %5855 = vmatprep.subr.bf16.mxu0 0
          %5856 = vmatpush2.bf16.msra.mxu0 0
          %5857 = vmatprep.subr.bf16.mxu0 0
          %5858 = vmatpush2.bf16.msra.mxu0 0
          %5859 = vmatprep.subr.bf16.mxu0 0
          %5860 = vmatpush2.bf16.msra.mxu0 0
          %5861 = vmatprep.subr.bf16.mxu0 0
          %5862 = vmatpush2.bf16.msra.mxu0 0
          %5863 = vmatprep.subr.bf16.mxu0 0
          %5864 = vmatpush2.bf16.msra.mxu0 0
          %5865 = vmatprep.subr.bf16.mxu0 0
          %5866 = vmatpush2.bf16.msra.mxu0 0
          %5867 = vmatprep.subr.bf16.mxu0 0
          %5868 = vmatpush2.bf16.msra.mxu0 0
          %5869 = vmatprep.subr.bf16.mxu0 0
          %5870 = vmatpush2.bf16.msra.mxu0 0
          %5871 = vmatprep.mubr.bf16.mxu0 0
          %5872 = vmatmul.mubr.bf16.gmra.mxu0 %v5837
          %v5873 = vpop.f32.mrf.mxu0
          %v5874 = vadd.f32 0.0, %v5873
          %v5875 = vpop.f32.mrf.mxu0
          %v5876 = vpop.f32.mrf.mxu0
          %v5877 = vadd.f32 0.0, %v5876
          %v5878 = vpop.f32.mrf.mxu0
          %5879 = vdwg.mxu0
          %v5880 = vsub.f32 %v5784, %v5788
          %v5881 = vsub.f32 %v5785, %v5789
          %v5882 = vpack.c.bf16 %v5881, %v5880
          %v5884 = vsel %vm448, %v5882, 0
          %5886 = vmatprep.subr.bf16.mxu0 0
          %5887 = vmatpush1.bf16.msra.mxu0 0
          %5888 = vmatprep.subr.bf16.mxu0 0
          %5889 = vmatpush1.bf16.msra.mxu0 0
          %5890 = vmatprep.subr.bf16.mxu0 0
          %5891 = vmatpush1.bf16.msra.mxu0 0
          %5892 = vmatprep.subr.bf16.mxu0 0
          %5893 = vmatpush1.bf16.msra.mxu0 0
          %5894 = vmatprep.subr.bf16.mxu0 0
          %5895 = vmatpush1.bf16.msra.mxu0 0
          %5896 = vmatprep.subr.bf16.mxu0 0
          %5897 = vmatpush1.bf16.msra.mxu0 0
          %5898 = vmatprep.subr.bf16.mxu0 0
          %5899 = vmatpush1.bf16.msra.mxu0 0
          %5900 = vmatprep.subr.bf16.mxu0 0
          %5901 = vmatpush1.bf16.msra.mxu0 %v546
          %5902 = vmatprep.subr.bf16.mxu0 0
          %5903 = vmatpush2.bf16.msra.mxu0 0
          %5904 = vmatprep.subr.bf16.mxu0 0
          %5905 = vmatpush2.bf16.msra.mxu0 0
          %5906 = vmatprep.subr.bf16.mxu0 0
          %5907 = vmatpush2.bf16.msra.mxu0 0
          %5908 = vmatprep.subr.bf16.mxu0 0
          %5909 = vmatpush2.bf16.msra.mxu0 0
          %5910 = vmatprep.subr.bf16.mxu0 0
          %5911 = vmatpush2.bf16.msra.mxu0 0
          %5912 = vmatprep.subr.bf16.mxu0 0
          %5913 = vmatpush2.bf16.msra.mxu0 0
          %5914 = vmatprep.subr.bf16.mxu0 0
          %5915 = vmatpush2.bf16.msra.mxu0 0
          %5916 = vmatprep.subr.bf16.mxu0 0
          %5917 = vmatpush2.bf16.msra.mxu0 0
          %5918 = vmatprep.mubr.bf16.mxu0 0
          %5919 = vmatmul.mubr.bf16.gmra.mxu0 %v5884
          %v5920 = vpop.f32.mrf.mxu0
          %v5921 = vadd.f32 0.0, %v5920
          %v5922 = vpop.f32.mrf.mxu0
          %v5923 = vpop.f32.mrf.mxu0
          %v5924 = vadd.f32 0.0, %v5923
          %v5925 = vpop.f32.mrf.mxu0
          %5926 = vdwg.mxu0
          %v5927 = vadd.f32 %v5830, %v5874
          %v5928 = vadd.f32 %v5833, %v5877
          %v5929 = vsub.f32 %v5830, %v5874
          %v5930 = vsub.f32 %v5833, %v5877
          %v5931 = vsub.f32 %v5929, %v5921
          %v5932 = vsub.f32 %v5930, %v5924
          %v5933 = vmul.f32 %v5927, %v5927
          %v5934 = vmul.f32 %v5928, %v5928
          %v5935 = vmul.f32 %v5931, %v5931
          %v5936 = vmul.f32 %v5932, %v5932
          %v5937 = vadd.f32 %v5933, %v5935
          %v5938 = vadd.f32 %v5934, %v5936
          %5939 = vst.msk [vmem:[%s324] sm:$0xff] %vm448, %v5937
          %5940 = vst.msk [vmem:[%s324 + $0x8] sm:$0xff] %vm448, %v5938
        $region56: #{drnn_forward.1} parent=47 // pred_fallthru
          _
        %s5941 = sand.u32 %s202, 1
        %s5942 = scalar_lea.sflag [#allocation5], %s5941
        %s5943 = sand.u32 %s202, 1
        %s5944 = smul.addr %s5943, 16
        %s5945 = scalar_lea.vmem [#allocation4], %s5944
        // Predicated region
        $region57: #{drnn_forward.1} parent=47 // pred_check
          %p5946 = pneg %p212
        $region58: #{drnn_forward.1} parent=47 // pred_check_branch
          %5948 = sbr.rel (%p5946) target = $region60
        $region59: #{drnn_forward.1} parent=47 // pred_region
          %s5950 = ssub.s32 256, 256
          %5951 = vsyncadd %s5942, %s5950
          %s5952 = smul.addr %s25, 2
          %s5953 = smul.addr %s5952, 128
          %s5954 = scalar_lea.hbm %s7, %s5953
          %s5955 = sshll.u32 %s5945, 4
          %s5956 = int_to_ptr.vmem [resolvable:$true] %s5955
          %5961 = dma.vmem_to_hbm [thread:$0]  %s5956, 256, %s5954, %s5942, 128, 128, 8
        $region60: #{drnn_forward.1} parent=47 // pred_fallthru
          _
      $region48: #{drnn_forward.1} parent=5 // pred_fallthru
        _
      %p5962 = scmp.le.s32.totalorder 2, %s16
      // Predicated region
      $region61: #{drnn_forward.1} parent=5 // pred_check
        %p5963 = pneg %p5962
      $region62: #{drnn_forward.1} parent=5 // pred_check_branch
        %5965 = sbr.rel (%p5963) target = $region64
      $region63: #{drnn_forward.1} parent=5 // pred_region
        %s5966 = ssub.s32 %s16, 2
        // Predicated region
        $region65: #{drnn_forward.1} parent=63 // pred_check
          %p5967 = pneg %p218
        $region66: #{drnn_forward.1} parent=63 // pred_check_branch
          %5969 = sbr.rel (%p5967) target = $region68
        $region67: #{drnn_forward.1} parent=63 // pred_region
          %s5970 = sand.u32 %s203, 1
          %s5971 = scalar_lea.sflag [#allocation5], %s5970
          %s5972 = sand.u32 %s203, 1
          %s5973 = smul.addr %s5972, 16
          %s5974 = scalar_lea.vmem [#allocation4], %s5973
          %5975 = dma.done %s5971, 256
        $region68: #{drnn_forward.1} parent=63 // pred_fallthru
          _
      $region64: #{drnn_forward.1} parent=5 // pred_fallthru
        _
    $region6: #{drnn_forward.1} parent=1 // loop_footer
      %s20 = sadd.s32 1, %s16
    $region7: #{drnn_forward.1} parent=1 // loop_footer_branch
      %15 = sbr.rel target = $region3
    $region8: #{drnn_forward.1} parent=1 // loop_exit
      _
    %5976 = vsyncpa [#allocation5], 1
    %s5977 = scalar_lea.sflag [#allocation5], 1
    %5978 = vsyncpa %s5977, 1

</llo_original>
